<compile_context>
chip_gen: v5e
topology: v5e:2x2
jax: 0.10.0
libtpu: 0.0.40
codegen_flags: <defaults>
</compile_context>

<pallas_src>
import functools
import math

import jax
import jax.numpy as jnp
from jax import lax
from jax.experimental import pallas as pl
from jax.experimental.pallas import tpu as pltpu


def _round_up(x, m):
    return ((x + m - 1) // m) * m


# ------------------------------ fused kernel ------------------------------- #

def _dqn_fused_kernel(*refs, dims, h, w, s, nb, lead):
    """Fused conv3x3+ReLU stack -> 1x1 head, one batch chunk per grid step.

    refs (in order):
      x_ref                     (Nb, S, C0)  f32   flat zero-padded input slabs
      [w_i (9,Ci,Ci+1) bf16, b_i (1,Ci+1) f32] for each 3x3 layer
      w_head (Cn, A_pad) bf16, b_head (1, A_pad) f32
      o_ref                     (Nb*S, A_pad) f32
      slab_a, slab_b            (lead + Nb*S + tail, Cmax) f32 VMEM scratch
    """
    n3 = len(dims) - 1
    x_ref = refs[0]
    wb = refs[1:1 + 2 * n3]
    w_head = refs[1 + 2 * n3]
    b_head = refs[2 + 2 * n3]
    o_ref = refs[3 + 2 * n3]
    slab_a = refs[4 + 2 * n3]
    slab_b = refs[5 + 2 * n3]

    wp = w + 2                  # padded row width
    m = nb * s                  # joint matmul M (all images of the chunk)
    shift = wp + 1              # conv-output row q  <->  padded flat row q+shift
    c_max = slab_a.shape[1]
    tail = slab_a.shape[0] - lead - m

    # validity mask over conv-output rows: q = oy*Wp + ox with ox < W, oy < H
    q = lax.broadcasted_iota(jnp.int32, (m, 1), 0) % s
    valid = ((q % wp) < w) & (q < h * wp)

    # Zero ONLY the margin rows that are read but never rewritten:
    #   [0, lead)           -> zero "same" padding for image 0 (layers >= 2)
    #   [lead+m, lead+m+tail) -> keeps shifted tap reads in-bounds/deterministic
    # The interior [lead, lead+m) is fully overwritten every step (input stage /
    # masked activation store), so no full-slab memset.  Done every step so it
    # is correct per-core under megacore grid sharding.
    zeros_lead = jnp.zeros((lead, c_max), jnp.float32)
    zeros_tail = jnp.zeros((tail, c_max), jnp.float32)
    slab_a[0:lead, :] = zeros_lead
    slab_b[0:lead, :] = zeros_lead
    slab_a[lead + m:, :] = zeros_tail
    slab_b[lead + m:, :] = zeros_tail

    # Stage the input chunk (already flat zero-padded by the wrapper).
    c0 = dims[0]
    slab_a[lead:lead + m, 0:c0] = x_ref[...].reshape(m, c0)

    def conv3x3_relu(slab_in, base, c_in, w_ref, b_ref):
        c_out = w_ref.shape[-1]
        acc = jnp.zeros((m, c_out), jnp.float32)
        # 9 shift-and-matmul taps over contiguous sublane slices of the flat slab.
        # TODO(synk): if a bundle dump shows vld/vst-slot saturation from this
        # full-M accumulator streaming through VMEM, tile M into vreg-resident
        # sub-blocks or fold the 9 taps into one K=9*c_in matmul (im2col).
        for t in range(9):
            dy, dx = divmod(t, 3)
            off = base + dy * wp + dx
            patch = slab_in[off:off + m, 0:c_in].astype(jnp.bfloat16)
            acc = acc + jnp.dot(patch, w_ref[t],
                                preferred_element_type=jnp.float32)
        return jnp.maximum(acc + b_ref[...], 0.0)

    cur, nxt = slab_a, slab_b
    base = lead                          # input slab holds padded pos f at row lead+f
    act = None
    for i in range(n3):
        act = conv3x3_relu(cur, base, dims[i], wb[2 * i], wb[2 * i + 1])
        if i + 1 < n3:
            # One aligned constant-shift store rebuilds the next padded slab;
            # invalid rows are zeroed so they regenerate the "same" padding.
            # The final 3x3 layer is never written back, so it skips the mask.
            nxt[lead:lead + m, 0:dims[i + 1]] = jnp.where(valid, act, 0.0)
            cur, nxt = nxt, cur
            base = lead - shift          # intermediate slabs hold f at row lead-shift+f

    # 1x1 head, stored lane-narrow (A_pad = round_up(n_actions, 8) lanes) so the
    # HBM writeback is ~useful-sized; garbage rows are sliced off in the wrapper.
    out = jnp.dot(act.astype(jnp.bfloat16), w_head[...],
                  preferred_element_type=jnp.float32) + b_head[...]
    o_ref[...] = out


# ------------------------------ host wrapper ------------------------------- #

def _dqn_forward(x_nchw, packed, *, dims, n_actions, a_pad, block_batch):
    n, c_in, hh, ww = x_nchw.shape
    assert c_in == dims[0]
    hp, wp = hh + 2, ww + 2
    s = _round_up(hp * wp, 8)                 # flat rows per image slab
    lead = _round_up(wp + 1, 8)               # aligned leading zero margin
    tail = _round_up(2 * wp + 2, 8)           # tail covering the max tap offset
    # A valid output row's largest tap read must stay inside its own image slab.
    assert (hh - 1) * wp + (ww - 1) + 2 * wp + 2 < hp * wp <= s

    # Chunk size: big enough to amortize per-step overhead, but keep grid >= 2
    # whenever n >= 2 so the "parallel" axis can shard across both v7x cores.
    nb = max(1, min(block_batch, -(-n // 2)))
    n_pad = _round_up(n, nb)
    m = nb * s
    t_rows = lead + m + tail
    c_max = max(dims)

    # NCHW -> NHWC -> spatially zero-padded -> flattened per-image row slabs.
    x = jnp.transpose(x_nchw, (0, 2, 3, 1)).astype(jnp.float32)
    x = jnp.pad(x, ((0, n_pad - n), (1, 1), (1, 1), (0, 0)))
    x = x.reshape(n_pad, hp * wp, dims[0])
    x = jnp.pad(x, ((0, 0), (0, s - hp * wp), (0, 0)))

    n3 = len(dims) - 1
    in_specs = [pl.BlockSpec((nb, s, dims[0]), lambda i: (i, 0, 0))]
    for j in range(n3):
        in_specs.append(pl.BlockSpec((9, dims[j], dims[j + 1]),
                                     lambda i: (0, 0, 0)))
        in_specs.append(pl.BlockSpec((1, dims[j + 1]), lambda i: (0, 0)))
    in_specs.append(pl.BlockSpec((dims[-1], a_pad), lambda i: (0, 0)))
    in_specs.append(pl.BlockSpec((1, a_pad), lambda i: (0, 0)))

    kernel = functools.partial(_dqn_fused_kernel, dims=tuple(dims), h=hh, w=ww,
                               s=s, nb=nb, lead=lead)

    out = pl.pallas_call(
        kernel,
        out_shape=jax.ShapeDtypeStruct((n_pad * s, a_pad), jnp.float32),
        grid=(n_pad // nb,),
        in_specs=in_specs,
        out_specs=pl.BlockSpec((m, a_pad), lambda i: (i, 0)),
        scratch_shapes=[pltpu.VMEM((t_rows, c_max), jnp.float32),
                        pltpu.VMEM((t_rows, c_max), jnp.float32)],
        compiler_params=pltpu.CompilerParams(
            dimension_semantics=("parallel",),
            # ~17 MB peak at nb=32; 32 MB scoped is safe on v5e/v6e/v7x.  On
            # v5e/v6e (128 MiB VMEM) block_batch 48-64 with a higher limit is fine.
            vmem_limit_bytes=32 * 1024 * 1024),
    )(x, *packed)

    # (N_pad*S, A_pad) -> (N, n_actions, H, W): pure layout plumbing in XLA.
    out = out.reshape(n_pad, s, a_pad)[:n, :hh * wp, :n_actions]
    out = out.reshape(n, hh, wp, n_actions)[:, :, :ww, :]
    return jnp.transpose(out, (0, 3, 1, 2))


def _pack_params(params, n_actions, a_pad):
    """Pack f32 HWIO params into the kernel's resident-weight layout."""
    packed = []
    for w, b in params[:-1]:
        k, _, c_in, c_out = w.shape
        packed.append(w.reshape(k * k, c_in, c_out).astype(jnp.bfloat16))
        packed.append(b.reshape(1, c_out).astype(jnp.float32))
    w, b = params[-1]
    c_in = w.shape[2]
    wh = jnp.pad(w.reshape(c_in, n_actions),
                 ((0, 0), (0, a_pad - n_actions))).astype(jnp.bfloat16)
    bh = jnp.pad(b, (0, a_pad - n_actions)).reshape(1, a_pad).astype(jnp.float32)
    packed += [wh, bh]
    return packed


class DQNPallas:
    """Pallas port of the PyTorch DQN: conv3x3+ReLU stack -> 1x1 conv head."""

    default_kernel_dims = [32, 64, 64]

    def __init__(self, state_shape, n_actions, network_config, key,
                 block_batch=32):
        _, _, input_channels = state_shape            # state_shape is (H, W, C)
        kernel_dims = network_config.get("kernel_dims",
                                         self.default_kernel_dims)
        self.n_actions = n_actions
        self.dims = [input_channels] + list(kernel_dims)
        self.a_pad = max(8, _round_up(n_actions, 8))  # lane-narrow head output

        def uniform(k, shape, bound):
            return jax.random.uniform(k, shape, jnp.float32, -bound, bound)

        # PyTorch-default uniform(+-1/sqrt(fan_in)) init, f32 HWIO.
        self.params = []
        for i in range(len(self.dims) - 1):
            key, kw, kb = jax.random.split(key, 3)
            bound = 1.0 / math.sqrt(self.dims[i] * 9)
            self.params.append(
                (uniform(kw, (3, 3, self.dims[i], self.dims[i + 1]), bound),
                 uniform(kb, (self.dims[i + 1],), bound)))
        key, kw, kb = jax.random.split(key, 3)
        bound = 1.0 / math.sqrt(self.dims[-1])
        self.params.append((uniform(kw, (1, 1, self.dims[-1], n_actions), bound),
                            uniform(kb, (n_actions,), bound)))

        self.packed = _pack_params(self.params, n_actions, self.a_pad)
        self._forward = jax.jit(functools.partial(
            _dqn_forward, dims=tuple(self.dims), n_actions=n_actions,
            a_pad=self.a_pad, block_batch=block_batch))

    def __call__(self, x_nchw):
        return self._forward(x_nchw, self.packed)


# -------------------- pure-JAX (XLA conv) reference check ------------------- #

def _reference_forward(model, x_nchw, *, bf16_inputs):
    x = jnp.transpose(x_nchw, (0, 2, 3, 1)).astype(jnp.float32)
    n_layers = len(model.params)
    for idx, (w, b) in enumerate(model.params):
        lhs, rhs = x, w
        if bf16_inputs:   # mimic the kernel's bf16 matmul inputs / f32 accumulation
            lhs = lhs.astype(jnp.bfloat16)
            rhs = rhs.astype(jnp.bfloat16)
        x = lax.conv_general_dilated(
            lhs, rhs, window_strides=(1, 1), padding="SAME",
            dimension_numbers=("NHWC", "HWIO", "NHWC"),
            preferred_element_type=jnp.float32)
        x = x + b[None, None, None, :]
        if idx < n_layers - 1:
            x = jnp.maximum(x, 0.0)
    return jnp.transpose(x, (0, 3, 1, 2))


if __name__ == "__main__":
    key = jax.random.PRNGKey(0)
    key, k_in, k_par = jax.random.split(key, 3)

    # Small shapes consistent with the module: state_shape = (H, W, C) = (16, 16, 4)
    batch, channels, height, width = 2, 4, 16, 16
    n_actions = 3
    network_config = {"kernel_dims": [32, 64, 64]}

    model = DQNPallas((height, width, channels), n_actions, network_config,
                      k_par)
    x = jax.random.normal(k_in, (batch, channels, height, width), jnp.float32)

    out = jax.block_until_ready(model(x))
    assert out.shape == (batch, n_actions, height, width), out.shape

    # Tight check against a bf16-consistent XLA reference (same numerics).
    ref_bf16 = jax.block_until_ready(_reference_forward(model, x,
                                                        bf16_inputs=True))
    if not jnp.allclose(out, ref_bf16, atol=1e-2, rtol=1e-2):
        raise AssertionError("Pallas DQN does not match bf16 XLA reference")

    # Looser sanity check against the pure-f32 reference (module semantics).
    ref_f32 = jax.block_until_ready(_reference_forward(model, x,
                                                       bf16_inputs=False))
    if not jnp.allclose(out, ref_f32, atol=3e-2, rtol=3e-2):
        raise AssertionError("Pallas DQN drifted too far from f32 reference")

    print("KERNEL_OK")
</pallas_src>

<mosaic_0001>
module attributes {stable_mosaic.version = 11 : i64} {
  func.func @_dqn_fused_kernel(%arg0: i32, %arg1: memref<1x328x4xf32, #tpu.memory_space<vmem>>, %arg2: memref<9x4x32xbf16, #tpu.memory_space<vmem>>, %arg3: memref<1x32xf32, #tpu.memory_space<vmem>>, %arg4: memref<9x32x64xbf16, #tpu.memory_space<vmem>>, %arg5: memref<1x64xf32, #tpu.memory_space<vmem>>, %arg6: memref<9x64x64xbf16, #tpu.memory_space<vmem>>, %arg7: memref<1x64xf32, #tpu.memory_space<vmem>>, %arg8: memref<64x8xbf16, #tpu.memory_space<vmem>>, %arg9: memref<1x8xf32, #tpu.memory_space<vmem>>, %arg10: memref<328x8xf32, #tpu.memory_space<vmem>>, %arg11: memref<392x64xf32, #tpu.memory_space<vmem>>, %arg12: memref<392x64xf32, #tpu.memory_space<vmem>>) attributes {dimension_semantics = [#tpu.dimension_semantics<parallel>], iteration_bounds = array<i64: 2>, scalar_prefetch = 0 : i64, scratch_operands = 2 : i64, tpu.core_type = #tpu.core_type<tc>, window_params = [{transform_indices = @transform_0, window_bounds = array<i64: 1, 328, 4>}, {pipeline_mode = #tpu.pipeline_mode<synchronous>, transform_indices = @transform_1, window_bounds = array<i64: 9, 4, 32>}, {pipeline_mode = #tpu.pipeline_mode<synchronous>, transform_indices = @transform_2, window_bounds = array<i64: 1, 32>}, {pipeline_mode = #tpu.pipeline_mode<synchronous>, transform_indices = @transform_3, window_bounds = array<i64: 9, 32, 64>}, {pipeline_mode = #tpu.pipeline_mode<synchronous>, transform_indices = @transform_4, window_bounds = array<i64: 1, 64>}, {pipeline_mode = #tpu.pipeline_mode<synchronous>, transform_indices = @transform_5, window_bounds = array<i64: 9, 64, 64>}, {pipeline_mode = #tpu.pipeline_mode<synchronous>, transform_indices = @transform_6, window_bounds = array<i64: 1, 64>}, {pipeline_mode = #tpu.pipeline_mode<synchronous>, transform_indices = @transform_7, window_bounds = array<i64: 64, 8>}, {pipeline_mode = #tpu.pipeline_mode<synchronous>, transform_indices = @transform_8, window_bounds = array<i64: 1, 8>}, {transform_indices = @transform_9, window_bounds = array<i64: 328, 8>}]} {
    %0 = tpu.iota {dimensions = array<i32: 0>} : vector<328x1xi32>
    %c328_i32 = arith.constant 328 : i32
    %c0_i32 = arith.constant 0 : i32
    %1 = arith.cmpi eq, %c328_i32, %c0_i32 : i32
    %c1_i32 = arith.constant 1 : i32
    %2 = arith.select %1, %c1_i32, %c328_i32 : i32
    %3 = vector.broadcast %2 : i32 to vector<328x1xi32>
    %4 = arith.remsi %0, %3 : vector<328x1xi32>
    %c0_i32_0 = arith.constant 0 : i32
    %5 = vector.broadcast %c0_i32_0 : i32 to vector<328x1xi32>
    %6 = arith.cmpi ne, %4, %5 : vector<328x1xi32>
    %c0_i32_1 = arith.constant 0 : i32
    %7 = vector.broadcast %c0_i32_1 : i32 to vector<328x1xi32>
    %8 = arith.cmpi slt, %4, %7 : vector<328x1xi32>
    %c0_i32_2 = arith.constant 0 : i32
    %9 = arith.cmpi slt, %2, %c0_i32_2 : i32
    %10 = vector.broadcast %9 : i1 to vector<328x1xi1>
    %11 = vector.broadcast %10 : vector<328x1xi1> to vector<328x1xi1>
    %12 = arith.xori %8, %11 : vector<328x1xi1>
    %13 = arith.andi %12, %6 : vector<328x1xi1>
    %14 = vector.broadcast %2 : i32 to vector<328x1xi32>
    %15 = arith.addi %4, %14 : vector<328x1xi32>
    %16 = arith.select %13, %15, %4 : vector<328x1xi1>, vector<328x1xi32>
    %c18_i32 = arith.constant 18 : i32
    %c0_i32_3 = arith.constant 0 : i32
    %17 = arith.cmpi eq, %c18_i32, %c0_i32_3 : i32
    %c1_i32_4 = arith.constant 1 : i32
    %18 = arith.select %17, %c1_i32_4, %c18_i32 : i32
    %19 = vector.broadcast %18 : i32 to vector<328x1xi32>
    %20 = arith.remsi %16, %19 : vector<328x1xi32>
    %c0_i32_5 = arith.constant 0 : i32
    %21 = vector.broadcast %c0_i32_5 : i32 to vector<328x1xi32>
    %22 = arith.cmpi ne, %20, %21 : vector<328x1xi32>
    %c0_i32_6 = arith.constant 0 : i32
    %23 = vector.broadcast %c0_i32_6 : i32 to vector<328x1xi32>
    %24 = arith.cmpi slt, %20, %23 : vector<328x1xi32>
    %c0_i32_7 = arith.constant 0 : i32
    %25 = arith.cmpi slt, %18, %c0_i32_7 : i32
    %26 = vector.broadcast %25 : i1 to vector<328x1xi1>
    %27 = vector.broadcast %26 : vector<328x1xi1> to vector<328x1xi1>
    %28 = arith.xori %24, %27 : vector<328x1xi1>
    %29 = arith.andi %28, %22 : vector<328x1xi1>
    %30 = vector.broadcast %18 : i32 to vector<328x1xi32>
    %31 = arith.addi %20, %30 : vector<328x1xi32>
    %32 = arith.select %29, %31, %20 : vector<328x1xi1>, vector<328x1xi32>
    %c16_i32 = arith.constant 16 : i32
    %33 = vector.broadcast %c16_i32 : i32 to vector<328x1xi32>
    %34 = arith.cmpi slt, %32, %33 : vector<328x1xi32>
    %c288_i32 = arith.constant 288 : i32
    %35 = vector.broadcast %c288_i32 : i32 to vector<328x1xi32>
    %36 = arith.cmpi slt, %16, %35 : vector<328x1xi32>
    %37 = arith.andi %34, %36 : vector<328x1xi1>
    %cst = arith.constant 0.000000e+00 : f32
    %38 = vector.broadcast %cst : f32 to vector<24x64xf32>
    %cst_8 = arith.constant 0.000000e+00 : f32
    %39 = vector.broadcast %cst_8 : f32 to vector<40x64xf32>
    %c0 = arith.constant 0 : index
    %c0_9 = arith.constant 0 : index
    %40 = vector.load %arg11[%c0, %c0_9] : memref<392x64xf32, #tpu.memory_space<vmem>>, vector<24x64xf32>
    tpu.vector_store %arg11[%c0, %c0_9], %38 {strides = array<i32>} : memref<392x64xf32, #tpu.memory_space<vmem>>, vector<24x64xf32>,
    %c0_10 = arith.constant 0 : index
    %c0_11 = arith.constant 0 : index
    %41 = vector.load %arg12[%c0_10, %c0_11] : memref<392x64xf32, #tpu.memory_space<vmem>>, vector<24x64xf32>
    tpu.vector_store %arg12[%c0_10, %c0_11], %38 {strides = array<i32>} : memref<392x64xf32, #tpu.memory_space<vmem>>, vector<24x64xf32>,
    %c352 = arith.constant 352 : index
    %c0_12 = arith.constant 0 : index
    %42 = vector.load %arg11[%c352, %c0_12] : memref<392x64xf32, #tpu.memory_space<vmem>>, vector<40x64xf32>
    tpu.vector_store %arg11[%c352, %c0_12], %39 {strides = array<i32>} : memref<392x64xf32, #tpu.memory_space<vmem>>, vector<40x64xf32>,
    %c352_13 = arith.constant 352 : index
    %c0_14 = arith.constant 0 : index
    %43 = vector.load %arg12[%c352_13, %c0_14] : memref<392x64xf32, #tpu.memory_space<vmem>>, vector<40x64xf32>
    tpu.vector_store %arg12[%c352_13, %c0_14], %39 {strides = array<i32>} : memref<392x64xf32, #tpu.memory_space<vmem>>, vector<40x64xf32>,
    %c0_15 = arith.constant 0 : index
    %c0_16 = arith.constant 0 : index
    %c0_17 = arith.constant 0 : index
    %44 = vector.load %arg1[%c0_15, %c0_16, %c0_17] : memref<1x328x4xf32, #tpu.memory_space<vmem>>, vector<1x328x4xf32>
    %45 = vector.shape_cast %44 : vector<1x328x4xf32> to vector<328x4xf32>
    %c24 = arith.constant 24 : index
    %c0_18 = arith.constant 0 : index
    %46 = vector.load %arg11[%c24, %c0_18] : memref<392x64xf32, #tpu.memory_space<vmem>>, vector<328x4xf32>
    tpu.vector_store %arg11[%c24, %c0_18], %45 {strides = array<i32>} : memref<392x64xf32, #tpu.memory_space<vmem>>, vector<328x4xf32>,
    %cst_19 = arith.constant 0.000000e+00 : f32
    %47 = vector.broadcast %cst_19 : f32 to vector<328x32xf32>
    %c24_20 = arith.constant 24 : index
    %c0_21 = arith.constant 0 : index
    %48 = vector.load %arg11[%c24_20, %c0_21] : memref<392x64xf32, #tpu.memory_space<vmem>>, vector<328x4xf32>
    %49 = arith.truncf %48 : vector<328x4xf32> to vector<328x4xbf16>
    %c0_22 = arith.constant 0 : index
    %c0_23 = arith.constant 0 : index
    %c0_24 = arith.constant 0 : index
    %50 = vector.load %arg2[%c0_22, %c0_23, %c0_24] : memref<9x4x32xbf16, #tpu.memory_space<vmem>>, vector<1x4x32xbf16>
    %51 = vector.shape_cast %50 : vector<1x4x32xbf16> to vector<4x32xbf16>
    %cst_25 = arith.constant dense<0.000000e+00> : vector<328x32xf32>
    %52 = tpu.matmul %49, %51, %cst_25 {dimension_numbers = #tpu.dot_dimension_numbers<[1], [0], [0], [1], [0, 0, 1, 1], [], []>} : vector<328x4xbf16>, vector<4x32xbf16>, vector<328x32xf32> -> vector<328x32xf32>
    %53 = arith.addf %47, %52 : vector<328x32xf32>
    %c25 = arith.constant 25 : index
    %c0_26 = arith.constant 0 : index
    %54 = vector.load %arg11[%c25, %c0_26] : memref<392x64xf32, #tpu.memory_space<vmem>>, vector<328x4xf32>
    %55 = arith.truncf %54 : vector<328x4xf32> to vector<328x4xbf16>
    %c1 = arith.constant 1 : index
    %c0_27 = arith.constant 0 : index
    %c0_28 = arith.constant 0 : index
    %56 = vector.load %arg2[%c1, %c0_27, %c0_28] : memref<9x4x32xbf16, #tpu.memory_space<vmem>>, vector<1x4x32xbf16>
    %57 = vector.shape_cast %56 : vector<1x4x32xbf16> to vector<4x32xbf16>
    %cst_29 = arith.constant dense<0.000000e+00> : vector<328x32xf32>
    %58 = tpu.matmul %55, %57, %cst_29 {dimension_numbers = #tpu.dot_dimension_numbers<[1], [0], [0], [1], [0, 0, 1, 1], [], []>} : vector<328x4xbf16>, vector<4x32xbf16>, vector<328x32xf32> -> vector<328x32xf32>
    %59 = arith.addf %53, %58 : vector<328x32xf32>
    %c26 = arith.constant 26 : index
    %c0_30 = arith.constant 0 : index
    %60 = vector.load %arg11[%c26, %c0_30] : memref<392x64xf32, #tpu.memory_space<vmem>>, vector<328x4xf32>
    %61 = arith.truncf %60 : vector<328x4xf32> to vector<328x4xbf16>
    %c2 = arith.constant 2 : index
    %c0_31 = arith.constant 0 : index
    %c0_32 = arith.constant 0 : index
    %62 = vector.load %arg2[%c2, %c0_31, %c0_32] : memref<9x4x32xbf16, #tpu.memory_space<vmem>>, vector<1x4x32xbf16>
    %63 = vector.shape_cast %62 : vector<1x4x32xbf16> to vector<4x32xbf16>
    %cst_33 = arith.constant dense<0.000000e+00> : vector<328x32xf32>
    %64 = tpu.matmul %61, %63, %cst_33 {dimension_numbers = #tpu.dot_dimension_numbers<[1], [0], [0], [1], [0, 0, 1, 1], [], []>} : vector<328x4xbf16>, vector<4x32xbf16>, vector<328x32xf32> -> vector<328x32xf32>
    %65 = arith.addf %59, %64 : vector<328x32xf32>
    %c42 = arith.constant 42 : index
    %c0_34 = arith.constant 0 : index
    %66 = vector.load %arg11[%c42, %c0_34] : memref<392x64xf32, #tpu.memory_space<vmem>>, vector<328x4xf32>
    %67 = arith.truncf %66 : vector<328x4xf32> to vector<328x4xbf16>
    %c3 = arith.constant 3 : index
    %c0_35 = arith.constant 0 : index
    %c0_36 = arith.constant 0 : index
    %68 = vector.load %arg2[%c3, %c0_35, %c0_36] : memref<9x4x32xbf16, #tpu.memory_space<vmem>>, vector<1x4x32xbf16>
    %69 = vector.shape_cast %68 : vector<1x4x32xbf16> to vector<4x32xbf16>
    %cst_37 = arith.constant dense<0.000000e+00> : vector<328x32xf32>
    %70 = tpu.matmul %67, %69, %cst_37 {dimension_numbers = #tpu.dot_dimension_numbers<[1], [0], [0], [1], [0, 0, 1, 1], [], []>} : vector<328x4xbf16>, vector<4x32xbf16>, vector<328x32xf32> -> vector<328x32xf32>
    %71 = arith.addf %65, %70 : vector<328x32xf32>
    %c43 = arith.constant 43 : index
    %c0_38 = arith.constant 0 : index
    %72 = vector.load %arg11[%c43, %c0_38] : memref<392x64xf32, #tpu.memory_space<vmem>>, vector<328x4xf32>
    %73 = arith.truncf %72 : vector<328x4xf32> to vector<328x4xbf16>
    %c4 = arith.constant 4 : index
    %c0_39 = arith.constant 0 : index
    %c0_40 = arith.constant 0 : index
    %74 = vector.load %arg2[%c4, %c0_39, %c0_40] : memref<9x4x32xbf16, #tpu.memory_space<vmem>>, vector<1x4x32xbf16>
    %75 = vector.shape_cast %74 : vector<1x4x32xbf16> to vector<4x32xbf16>
    %cst_41 = arith.constant dense<0.000000e+00> : vector<328x32xf32>
    %76 = tpu.matmul %73, %75, %cst_41 {dimension_numbers = #tpu.dot_dimension_numbers<[1], [0], [0], [1], [0, 0, 1, 1], [], []>} : vector<328x4xbf16>, vector<4x32xbf16>, vector<328x32xf32> -> vector<328x32xf32>
    %77 = arith.addf %71, %76 : vector<328x32xf32>
    %c44 = arith.constant 44 : index
    %c0_42 = arith.constant 0 : index
    %78 = vector.load %arg11[%c44, %c0_42] : memref<392x64xf32, #tpu.memory_space<vmem>>, vector<328x4xf32>
    %79 = arith.truncf %78 : vector<328x4xf32> to vector<328x4xbf16>
    %c5 = arith.constant 5 : index
    %c0_43 = arith.constant 0 : index
    %c0_44 = arith.constant 0 : index
    %80 = vector.load %arg2[%c5, %c0_43, %c0_44] : memref<9x4x32xbf16, #tpu.memory_space<vmem>>, vector<1x4x32xbf16>
    %81 = vector.shape_cast %80 : vector<1x4x32xbf16> to vector<4x32xbf16>
    %cst_45 = arith.constant dense<0.000000e+00> : vector<328x32xf32>
    %82 = tpu.matmul %79, %81, %cst_45 {dimension_numbers = #tpu.dot_dimension_numbers<[1], [0], [0], [1], [0, 0, 1, 1], [], []>} : vector<328x4xbf16>, vector<4x32xbf16>, vector<328x32xf32> -> vector<328x32xf32>
    %83 = arith.addf %77, %82 : vector<328x32xf32>
    %c60 = arith.constant 60 : index
    %c0_46 = arith.constant 0 : index
    %84 = vector.load %arg11[%c60, %c0_46] : memref<392x64xf32, #tpu.memory_space<vmem>>, vector<328x4xf32>
    %85 = arith.truncf %84 : vector<328x4xf32> to vector<328x4xbf16>
    %c6 = arith.constant 6 : index
    %c0_47 = arith.constant 0 : index
    %c0_48 = arith.constant 0 : index
    %86 = vector.load %arg2[%c6, %c0_47, %c0_48] : memref<9x4x32xbf16, #tpu.memory_space<vmem>>, vector<1x4x32xbf16>
    %87 = vector.shape_cast %86 : vector<1x4x32xbf16> to vector<4x32xbf16>
    %cst_49 = arith.constant dense<0.000000e+00> : vector<328x32xf32>
    %88 = tpu.matmul %85, %87, %cst_49 {dimension_numbers = #tpu.dot_dimension_numbers<[1], [0], [0], [1], [0, 0, 1, 1], [], []>} : vector<328x4xbf16>, vector<4x32xbf16>, vector<328x32xf32> -> vector<328x32xf32>
    %89 = arith.addf %83, %88 : vector<328x32xf32>
    %c61 = arith.constant 61 : index
    %c0_50 = arith.constant 0 : index
    %90 = vector.load %arg11[%c61, %c0_50] : memref<392x64xf32, #tpu.memory_space<vmem>>, vector<328x4xf32>
    %91 = arith.truncf %90 : vector<328x4xf32> to vector<328x4xbf16>
    %c7 = arith.constant 7 : index
    %c0_51 = arith.constant 0 : index
    %c0_52 = arith.constant 0 : index
    %92 = vector.load %arg2[%c7, %c0_51, %c0_52] : memref<9x4x32xbf16, #tpu.memory_space<vmem>>, vector<1x4x32xbf16>
    %93 = vector.shape_cast %92 : vector<1x4x32xbf16> to vector<4x32xbf16>
    %cst_53 = arith.constant dense<0.000000e+00> : vector<328x32xf32>
    %94 = tpu.matmul %91, %93, %cst_53 {dimension_numbers = #tpu.dot_dimension_numbers<[1], [0], [0], [1], [0, 0, 1, 1], [], []>} : vector<328x4xbf16>, vector<4x32xbf16>, vector<328x32xf32> -> vector<328x32xf32>
    %95 = arith.addf %89, %94 : vector<328x32xf32>
    %c62 = arith.constant 62 : index
    %c0_54 = arith.constant 0 : index
    %96 = vector.load %arg11[%c62, %c0_54] : memref<392x64xf32, #tpu.memory_space<vmem>>, vector<328x4xf32>
    %97 = arith.truncf %96 : vector<328x4xf32> to vector<328x4xbf16>
    %c8 = arith.constant 8 : index
    %c0_55 = arith.constant 0 : index
    %c0_56 = arith.constant 0 : index
    %98 = vector.load %arg2[%c8, %c0_55, %c0_56] : memref<9x4x32xbf16, #tpu.memory_space<vmem>>, vector<1x4x32xbf16>
    %99 = vector.shape_cast %98 : vector<1x4x32xbf16> to vector<4x32xbf16>
    %cst_57 = arith.constant dense<0.000000e+00> : vector<328x32xf32>
    %100 = tpu.matmul %97, %99, %cst_57 {dimension_numbers = #tpu.dot_dimension_numbers<[1], [0], [0], [1], [0, 0, 1, 1], [], []>} : vector<328x4xbf16>, vector<4x32xbf16>, vector<328x32xf32> -> vector<328x32xf32>
    %101 = arith.addf %95, %100 : vector<328x32xf32>
    %c0_58 = arith.constant 0 : index
    %c0_59 = arith.constant 0 : index
    %102 = vector.load %arg3[%c0_58, %c0_59] : memref<1x32xf32, #tpu.memory_space<vmem>>, vector<1x32xf32>
    %103 = vector.broadcast %102 : vector<1x32xf32> to vector<328x32xf32>
    %104 = arith.addf %101, %103 : vector<328x32xf32>
    %cst_60 = arith.constant 0.000000e+00 : f32
    %105 = vector.broadcast %cst_60 : f32 to vector<328x32xf32>
    %106 = arith.maximumf %104, %105 : vector<328x32xf32>
    %cst_61 = arith.constant 0.000000e+00 : f32
    %107 = vector.shape_cast %37 : vector<328x1xi1> to vector<328x1xi1>
    %108 = vector.broadcast %107 : vector<328x1xi1> to vector<328x32xi1>
    %109 = vector.broadcast %cst_61 : f32 to vector<328x32xf32>
    %110 = arith.select %108, %106, %109 : vector<328x32xi1>, vector<328x32xf32>
    %c24_62 = arith.constant 24 : index
    %c0_63 = arith.constant 0 : index
    %111 = vector.load %arg12[%c24_62, %c0_63] : memref<392x64xf32, #tpu.memory_space<vmem>>, vector<328x32xf32>
    tpu.vector_store %arg12[%c24_62, %c0_63], %110 {strides = array<i32>} : memref<392x64xf32, #tpu.memory_space<vmem>>, vector<328x32xf32>,
    %cst_64 = arith.constant 0.000000e+00 : f32
    %112 = vector.broadcast %cst_64 : f32 to vector<328x64xf32>
    %c5_65 = arith.constant 5 : index
    %c0_66 = arith.constant 0 : index
    %113 = vector.load %arg12[%c5_65, %c0_66] : memref<392x64xf32, #tpu.memory_space<vmem>>, vector<328x32xf32>
    %114 = arith.truncf %113 : vector<328x32xf32> to vector<328x32xbf16>
    %c0_67 = arith.constant 0 : index
    %c0_68 = arith.constant 0 : index
    %c0_69 = arith.constant 0 : index
    %115 = vector.load %arg4[%c0_67, %c0_68, %c0_69] : memref<9x32x64xbf16, #tpu.memory_space<vmem>>, vector<1x32x64xbf16>
    %116 = vector.shape_cast %115 : vector<1x32x64xbf16> to vector<32x64xbf16>
    %cst_70 = arith.constant dense<0.000000e+00> : vector<328x64xf32>
    %117 = tpu.matmul %114, %116, %cst_70 {dimension_numbers = #tpu.dot_dimension_numbers<[1], [0], [0], [1], [0, 0, 1, 1], [], []>} : vector<328x32xbf16>, vector<32x64xbf16>, vector<328x64xf32> -> vector<328x64xf32>
    %118 = arith.addf %112, %117 : vector<328x64xf32>
    %c6_71 = arith.constant 6 : index
    %c0_72 = arith.constant 0 : index
    %119 = vector.load %arg12[%c6_71, %c0_72] : memref<392x64xf32, #tpu.memory_space<vmem>>, vector<328x32xf32>
    %120 = arith.truncf %119 : vector<328x32xf32> to vector<328x32xbf16>
    %c1_73 = arith.constant 1 : index
    %c0_74 = arith.constant 0 : index
    %c0_75 = arith.constant 0 : index
    %121 = vector.load %arg4[%c1_73, %c0_74, %c0_75] : memref<9x32x64xbf16, #tpu.memory_space<vmem>>, vector<1x32x64xbf16>
    %122 = vector.shape_cast %121 : vector<1x32x64xbf16> to vector<32x64xbf16>
    %cst_76 = arith.constant dense<0.000000e+00> : vector<328x64xf32>
    %123 = tpu.matmul %120, %122, %cst_76 {dimension_numbers = #tpu.dot_dimension_numbers<[1], [0], [0], [1], [0, 0, 1, 1], [], []>} : vector<328x32xbf16>, vector<32x64xbf16>, vector<328x64xf32> -> vector<328x64xf32>
    %124 = arith.addf %118, %123 : vector<328x64xf32>
    %c7_77 = arith.constant 7 : index
    %c0_78 = arith.constant 0 : index
    %125 = vector.load %arg12[%c7_77, %c0_78] : memref<392x64xf32, #tpu.memory_space<vmem>>, vector<328x32xf32>
    %126 = arith.truncf %125 : vector<328x32xf32> to vector<328x32xbf16>
    %c2_79 = arith.constant 2 : index
    %c0_80 = arith.constant 0 : index
    %c0_81 = arith.constant 0 : index
    %127 = vector.load %arg4[%c2_79, %c0_80, %c0_81] : memref<9x32x64xbf16, #tpu.memory_space<vmem>>, vector<1x32x64xbf16>
    %128 = vector.shape_cast %127 : vector<1x32x64xbf16> to vector<32x64xbf16>
    %cst_82 = arith.constant dense<0.000000e+00> : vector<328x64xf32>
    %129 = tpu.matmul %126, %128, %cst_82 {dimension_numbers = #tpu.dot_dimension_numbers<[1], [0], [0], [1], [0, 0, 1, 1], [], []>} : vector<328x32xbf16>, vector<32x64xbf16>, vector<328x64xf32> -> vector<328x64xf32>
    %130 = arith.addf %124, %129 : vector<328x64xf32>
    %c23 = arith.constant 23 : index
    %c0_83 = arith.constant 0 : index
    %131 = vector.load %arg12[%c23, %c0_83] : memref<392x64xf32, #tpu.memory_space<vmem>>, vector<328x32xf32>
    %132 = arith.truncf %131 : vector<328x32xf32> to vector<328x32xbf16>
    %c3_84 = arith.constant 3 : index
    %c0_85 = arith.constant 0 : index
    %c0_86 = arith.constant 0 : index
    %133 = vector.load %arg4[%c3_84, %c0_85, %c0_86] : memref<9x32x64xbf16, #tpu.memory_space<vmem>>, vector<1x32x64xbf16>
    %134 = vector.shape_cast %133 : vector<1x32x64xbf16> to vector<32x64xbf16>
    %cst_87 = arith.constant dense<0.000000e+00> : vector<328x64xf32>
    %135 = tpu.matmul %132, %134, %cst_87 {dimension_numbers = #tpu.dot_dimension_numbers<[1], [0], [0], [1], [0, 0, 1, 1], [], []>} : vector<328x32xbf16>, vector<32x64xbf16>, vector<328x64xf32> -> vector<328x64xf32>
    %136 = arith.addf %130, %135 : vector<328x64xf32>
    %c24_88 = arith.constant 24 : index
    %c0_89 = arith.constant 0 : index
    %137 = vector.load %arg12[%c24_88, %c0_89] : memref<392x64xf32, #tpu.memory_space<vmem>>, vector<328x32xf32>
    %138 = arith.truncf %137 : vector<328x32xf32> to vector<328x32xbf16>
    %c4_90 = arith.constant 4 : index
    %c0_91 = arith.constant 0 : index
    %c0_92 = arith.constant 0 : index
    %139 = vector.load %arg4[%c4_90, %c0_91, %c0_92] : memref<9x32x64xbf16, #tpu.memory_space<vmem>>, vector<1x32x64xbf16>
    %140 = vector.shape_cast %139 : vector<1x32x64xbf16> to vector<32x64xbf16>
    %cst_93 = arith.constant dense<0.000000e+00> : vector<328x64xf32>
    %141 = tpu.matmul %138, %140, %cst_93 {dimension_numbers = #tpu.dot_dimension_numbers<[1], [0], [0], [1], [0, 0, 1, 1], [], []>} : vector<328x32xbf16>, vector<32x64xbf16>, vector<328x64xf32> -> vector<328x64xf32>
    %142 = arith.addf %136, %141 : vector<328x64xf32>
    %c25_94 = arith.constant 25 : index
    %c0_95 = arith.constant 0 : index
    %143 = vector.load %arg12[%c25_94, %c0_95] : memref<392x64xf32, #tpu.memory_space<vmem>>, vector<328x32xf32>
    %144 = arith.truncf %143 : vector<328x32xf32> to vector<328x32xbf16>
    %c5_96 = arith.constant 5 : index
    %c0_97 = arith.constant 0 : index
    %c0_98 = arith.constant 0 : index
    %145 = vector.load %arg4[%c5_96, %c0_97, %c0_98] : memref<9x32x64xbf16, #tpu.memory_space<vmem>>, vector<1x32x64xbf16>
    %146 = vector.shape_cast %145 : vector<1x32x64xbf16> to vector<32x64xbf16>
    %cst_99 = arith.constant dense<0.000000e+00> : vector<328x64xf32>
    %147 = tpu.matmul %144, %146, %cst_99 {dimension_numbers = #tpu.dot_dimension_numbers<[1], [0], [0], [1], [0, 0, 1, 1], [], []>} : vector<328x32xbf16>, vector<32x64xbf16>, vector<328x64xf32> -> vector<328x64xf32>
    %148 = arith.addf %142, %147 : vector<328x64xf32>
    %c41 = arith.constant 41 : index
    %c0_100 = arith.constant 0 : index
    %149 = vector.load %arg12[%c41, %c0_100] : memref<392x64xf32, #tpu.memory_space<vmem>>, vector<328x32xf32>
    %150 = arith.truncf %149 : vector<328x32xf32> to vector<328x32xbf16>
    %c6_101 = arith.constant 6 : index
    %c0_102 = arith.constant 0 : index
    %c0_103 = arith.constant 0 : index
    %151 = vector.load %arg4[%c6_101, %c0_102, %c0_103] : memref<9x32x64xbf16, #tpu.memory_space<vmem>>, vector<1x32x64xbf16>
    %152 = vector.shape_cast %151 : vector<1x32x64xbf16> to vector<32x64xbf16>
    %cst_104 = arith.constant dense<0.000000e+00> : vector<328x64xf32>
    %153 = tpu.matmul %150, %152, %cst_104 {dimension_numbers = #tpu.dot_dimension_numbers<[1], [0], [0], [1], [0, 0, 1, 1], [], []>} : vector<328x32xbf16>, vector<32x64xbf16>, vector<328x64xf32> -> vector<328x64xf32>
    %154 = arith.addf %148, %153 : vector<328x64xf32>
    %c42_105 = arith.constant 42 : index
    %c0_106 = arith.constant 0 : index
    %155 = vector.load %arg12[%c42_105, %c0_106] : memref<392x64xf32, #tpu.memory_space<vmem>>, vector<328x32xf32>
    %156 = arith.truncf %155 : vector<328x32xf32> to vector<328x32xbf16>
    %c7_107 = arith.constant 7 : index
    %c0_108 = arith.constant 0 : index
    %c0_109 = arith.constant 0 : index
    %157 = vector.load %arg4[%c7_107, %c0_108, %c0_109] : memref<9x32x64xbf16, #tpu.memory_space<vmem>>, vector<1x32x64xbf16>
    %158 = vector.shape_cast %157 : vector<1x32x64xbf16> to vector<32x64xbf16>
    %cst_110 = arith.constant dense<0.000000e+00> : vector<328x64xf32>
    %159 = tpu.matmul %156, %158, %cst_110 {dimension_numbers = #tpu.dot_dimension_numbers<[1], [0], [0], [1], [0, 0, 1, 1], [], []>} : vector<328x32xbf16>, vector<32x64xbf16>, vector<328x64xf32> -> vector<328x64xf32>
    %160 = arith.addf %154, %159 : vector<328x64xf32>
    %c43_111 = arith.constant 43 : index
    %c0_112 = arith.constant 0 : index
    %161 = vector.load %arg12[%c43_111, %c0_112] : memref<392x64xf32, #tpu.memory_space<vmem>>, vector<328x32xf32>
    %162 = arith.truncf %161 : vector<328x32xf32> to vector<328x32xbf16>
    %c8_113 = arith.constant 8 : index
    %c0_114 = arith.constant 0 : index
    %c0_115 = arith.constant 0 : index
    %163 = vector.load %arg4[%c8_113, %c0_114, %c0_115] : memref<9x32x64xbf16, #tpu.memory_space<vmem>>, vector<1x32x64xbf16>
    %164 = vector.shape_cast %163 : vector<1x32x64xbf16> to vector<32x64xbf16>
    %cst_116 = arith.constant dense<0.000000e+00> : vector<328x64xf32>
    %165 = tpu.matmul %162, %164, %cst_116 {dimension_numbers = #tpu.dot_dimension_numbers<[1], [0], [0], [1], [0, 0, 1, 1], [], []>} : vector<328x32xbf16>, vector<32x64xbf16>, vector<328x64xf32> -> vector<328x64xf32>
    %166 = arith.addf %160, %165 : vector<328x64xf32>
    %c0_117 = arith.constant 0 : index
    %c0_118 = arith.constant 0 : index
    %167 = vector.load %arg5[%c0_117, %c0_118] : memref<1x64xf32, #tpu.memory_space<vmem>>, vector<1x64xf32>
    %168 = vector.broadcast %167 : vector<1x64xf32> to vector<328x64xf32>
    %169 = arith.addf %166, %168 : vector<328x64xf32>
    %cst_119 = arith.constant 0.000000e+00 : f32
    %170 = vector.broadcast %cst_119 : f32 to vector<328x64xf32>
    %171 = arith.maximumf %169, %170 : vector<328x64xf32>
    %cst_120 = arith.constant 0.000000e+00 : f32
    %172 = vector.shape_cast %37 : vector<328x1xi1> to vector<328x1xi1>
    %173 = vector.broadcast %172 : vector<328x1xi1> to vector<328x64xi1>
    %174 = vector.broadcast %cst_120 : f32 to vector<328x64xf32>
    %175 = arith.select %173, %171, %174 : vector<328x64xi1>, vector<328x64xf32>
    %c24_121 = arith.constant 24 : index
    %c0_122 = arith.constant 0 : index
    %176 = vector.load %arg11[%c24_121, %c0_122] : memref<392x64xf32, #tpu.memory_space<vmem>>, vector<328x64xf32>
    tpu.vector_store %arg11[%c24_121, %c0_122], %175 {strides = array<i32>} : memref<392x64xf32, #tpu.memory_space<vmem>>, vector<328x64xf32>,
    %cst_123 = arith.constant 0.000000e+00 : f32
    %177 = vector.broadcast %cst_123 : f32 to vector<328x64xf32>
    %c5_124 = arith.constant 5 : index
    %c0_125 = arith.constant 0 : index
    %178 = vector.load %arg11[%c5_124, %c0_125] : memref<392x64xf32, #tpu.memory_space<vmem>>, vector<328x64xf32>
    %179 = arith.truncf %178 : vector<328x64xf32> to vector<328x64xbf16>
    %c0_126 = arith.constant 0 : index
    %c0_127 = arith.constant 0 : index
    %c0_128 = arith.constant 0 : index
    %180 = vector.load %arg6[%c0_126, %c0_127, %c0_128] : memref<9x64x64xbf16, #tpu.memory_space<vmem>>, vector<1x64x64xbf16>
    %181 = vector.shape_cast %180 : vector<1x64x64xbf16> to vector<64x64xbf16>
    %cst_129 = arith.constant dense<0.000000e+00> : vector<328x64xf32>
    %182 = tpu.matmul %179, %181, %cst_129 {dimension_numbers = #tpu.dot_dimension_numbers<[1], [0], [0], [1], [0, 0, 1, 1], [], []>} : vector<328x64xbf16>, vector<64x64xbf16>, vector<328x64xf32> -> vector<328x64xf32>
    %183 = arith.addf %177, %182 : vector<328x64xf32>
    %c6_130 = arith.constant 6 : index
    %c0_131 = arith.constant 0 : index
    %184 = vector.load %arg11[%c6_130, %c0_131] : memref<392x64xf32, #tpu.memory_space<vmem>>, vector<328x64xf32>
    %185 = arith.truncf %184 : vector<328x64xf32> to vector<328x64xbf16>
    %c1_132 = arith.constant 1 : index
    %c0_133 = arith.constant 0 : index
    %c0_134 = arith.constant 0 : index
    %186 = vector.load %arg6[%c1_132, %c0_133, %c0_134] : memref<9x64x64xbf16, #tpu.memory_space<vmem>>, vector<1x64x64xbf16>
    %187 = vector.shape_cast %186 : vector<1x64x64xbf16> to vector<64x64xbf16>
    %cst_135 = arith.constant dense<0.000000e+00> : vector<328x64xf32>
    %188 = tpu.matmul %185, %187, %cst_135 {dimension_numbers = #tpu.dot_dimension_numbers<[1], [0], [0], [1], [0, 0, 1, 1], [], []>} : vector<328x64xbf16>, vector<64x64xbf16>, vector<328x64xf32> -> vector<328x64xf32>
    %189 = arith.addf %183, %188 : vector<328x64xf32>
    %c7_136 = arith.constant 7 : index
    %c0_137 = arith.constant 0 : index
    %190 = vector.load %arg11[%c7_136, %c0_137] : memref<392x64xf32, #tpu.memory_space<vmem>>, vector<328x64xf32>
    %191 = arith.truncf %190 : vector<328x64xf32> to vector<328x64xbf16>
    %c2_138 = arith.constant 2 : index
    %c0_139 = arith.constant 0 : index
    %c0_140 = arith.constant 0 : index
    %192 = vector.load %arg6[%c2_138, %c0_139, %c0_140] : memref<9x64x64xbf16, #tpu.memory_space<vmem>>, vector<1x64x64xbf16>
    %193 = vector.shape_cast %192 : vector<1x64x64xbf16> to vector<64x64xbf16>
    %cst_141 = arith.constant dense<0.000000e+00> : vector<328x64xf32>
    %194 = tpu.matmul %191, %193, %cst_141 {dimension_numbers = #tpu.dot_dimension_numbers<[1], [0], [0], [1], [0, 0, 1, 1], [], []>} : vector<328x64xbf16>, vector<64x64xbf16>, vector<328x64xf32> -> vector<328x64xf32>
    %195 = arith.addf %189, %194 : vector<328x64xf32>
    %c23_142 = arith.constant 23 : index
    %c0_143 = arith.constant 0 : index
    %196 = vector.load %arg11[%c23_142, %c0_143] : memref<392x64xf32, #tpu.memory_space<vmem>>, vector<328x64xf32>
    %197 = arith.truncf %196 : vector<328x64xf32> to vector<328x64xbf16>
    %c3_144 = arith.constant 3 : index
    %c0_145 = arith.constant 0 : index
    %c0_146 = arith.constant 0 : index
    %198 = vector.load %arg6[%c3_144, %c0_145, %c0_146] : memref<9x64x64xbf16, #tpu.memory_space<vmem>>, vector<1x64x64xbf16>
    %199 = vector.shape_cast %198 : vector<1x64x64xbf16> to vector<64x64xbf16>
    %cst_147 = arith.constant dense<0.000000e+00> : vector<328x64xf32>
    %200 = tpu.matmul %197, %199, %cst_147 {dimension_numbers = #tpu.dot_dimension_numbers<[1], [0], [0], [1], [0, 0, 1, 1], [], []>} : vector<328x64xbf16>, vector<64x64xbf16>, vector<328x64xf32> -> vector<328x64xf32>
    %201 = arith.addf %195, %200 : vector<328x64xf32>
    %c24_148 = arith.constant 24 : index
    %c0_149 = arith.constant 0 : index
    %202 = vector.load %arg11[%c24_148, %c0_149] : memref<392x64xf32, #tpu.memory_space<vmem>>, vector<328x64xf32>
    %203 = arith.truncf %202 : vector<328x64xf32> to vector<328x64xbf16>
    %c4_150 = arith.constant 4 : index
    %c0_151 = arith.constant 0 : index
    %c0_152 = arith.constant 0 : index
    %204 = vector.load %arg6[%c4_150, %c0_151, %c0_152] : memref<9x64x64xbf16, #tpu.memory_space<vmem>>, vector<1x64x64xbf16>
    %205 = vector.shape_cast %204 : vector<1x64x64xbf16> to vector<64x64xbf16>
    %cst_153 = arith.constant dense<0.000000e+00> : vector<328x64xf32>
    %206 = tpu.matmul %203, %205, %cst_153 {dimension_numbers = #tpu.dot_dimension_numbers<[1], [0], [0], [1], [0, 0, 1, 1], [], []>} : vector<328x64xbf16>, vector<64x64xbf16>, vector<328x64xf32> -> vector<328x64xf32>
    %207 = arith.addf %201, %206 : vector<328x64xf32>
    %c25_154 = arith.constant 25 : index
    %c0_155 = arith.constant 0 : index
    %208 = vector.load %arg11[%c25_154, %c0_155] : memref<392x64xf32, #tpu.memory_space<vmem>>, vector<328x64xf32>
    %209 = arith.truncf %208 : vector<328x64xf32> to vector<328x64xbf16>
    %c5_156 = arith.constant 5 : index
    %c0_157 = arith.constant 0 : index
    %c0_158 = arith.constant 0 : index
    %210 = vector.load %arg6[%c5_156, %c0_157, %c0_158] : memref<9x64x64xbf16, #tpu.memory_space<vmem>>, vector<1x64x64xbf16>
    %211 = vector.shape_cast %210 : vector<1x64x64xbf16> to vector<64x64xbf16>
    %cst_159 = arith.constant dense<0.000000e+00> : vector<328x64xf32>
    %212 = tpu.matmul %209, %211, %cst_159 {dimension_numbers = #tpu.dot_dimension_numbers<[1], [0], [0], [1], [0, 0, 1, 1], [], []>} : vector<328x64xbf16>, vector<64x64xbf16>, vector<328x64xf32> -> vector<328x64xf32>
    %213 = arith.addf %207, %212 : vector<328x64xf32>
    %c41_160 = arith.constant 41 : index
    %c0_161 = arith.constant 0 : index
    %214 = vector.load %arg11[%c41_160, %c0_161] : memref<392x64xf32, #tpu.memory_space<vmem>>, vector<328x64xf32>
    %215 = arith.truncf %214 : vector<328x64xf32> to vector<328x64xbf16>
    %c6_162 = arith.constant 6 : index
    %c0_163 = arith.constant 0 : index
    %c0_164 = arith.constant 0 : index
    %216 = vector.load %arg6[%c6_162, %c0_163, %c0_164] : memref<9x64x64xbf16, #tpu.memory_space<vmem>>, vector<1x64x64xbf16>
    %217 = vector.shape_cast %216 : vector<1x64x64xbf16> to vector<64x64xbf16>
    %cst_165 = arith.constant dense<0.000000e+00> : vector<328x64xf32>
    %218 = tpu.matmul %215, %217, %cst_165 {dimension_numbers = #tpu.dot_dimension_numbers<[1], [0], [0], [1], [0, 0, 1, 1], [], []>} : vector<328x64xbf16>, vector<64x64xbf16>, vector<328x64xf32> -> vector<328x64xf32>
    %219 = arith.addf %213, %218 : vector<328x64xf32>
    %c42_166 = arith.constant 42 : index
    %c0_167 = arith.constant 0 : index
    %220 = vector.load %arg11[%c42_166, %c0_167] : memref<392x64xf32, #tpu.memory_space<vmem>>, vector<328x64xf32>
    %221 = arith.truncf %220 : vector<328x64xf32> to vector<328x64xbf16>
    %c7_168 = arith.constant 7 : index
    %c0_169 = arith.constant 0 : index
    %c0_170 = arith.constant 0 : index
    %222 = vector.load %arg6[%c7_168, %c0_169, %c0_170] : memref<9x64x64xbf16, #tpu.memory_space<vmem>>, vector<1x64x64xbf16>
    %223 = vector.shape_cast %222 : vector<1x64x64xbf16> to vector<64x64xbf16>
    %cst_171 = arith.constant dense<0.000000e+00> : vector<328x64xf32>
    %224 = tpu.matmul %221, %223, %cst_171 {dimension_numbers = #tpu.dot_dimension_numbers<[1], [0], [0], [1], [0, 0, 1, 1], [], []>} : vector<328x64xbf16>, vector<64x64xbf16>, vector<328x64xf32> -> vector<328x64xf32>
    %225 = arith.addf %219, %224 : vector<328x64xf32>
    %c43_172 = arith.constant 43 : index
    %c0_173 = arith.constant 0 : index
    %226 = vector.load %arg11[%c43_172, %c0_173] : memref<392x64xf32, #tpu.memory_space<vmem>>, vector<328x64xf32>
    %227 = arith.truncf %226 : vector<328x64xf32> to vector<328x64xbf16>
    %c8_174 = arith.constant 8 : index
    %c0_175 = arith.constant 0 : index
    %c0_176 = arith.constant 0 : index
    %228 = vector.load %arg6[%c8_174, %c0_175, %c0_176] : memref<9x64x64xbf16, #tpu.memory_space<vmem>>, vector<1x64x64xbf16>
    %229 = vector.shape_cast %228 : vector<1x64x64xbf16> to vector<64x64xbf16>
    %cst_177 = arith.constant dense<0.000000e+00> : vector<328x64xf32>
    %230 = tpu.matmul %227, %229, %cst_177 {dimension_numbers = #tpu.dot_dimension_numbers<[1], [0], [0], [1], [0, 0, 1, 1], [], []>} : vector<328x64xbf16>, vector<64x64xbf16>, vector<328x64xf32> -> vector<328x64xf32>
    %231 = arith.addf %225, %230 : vector<328x64xf32>
    %c0_178 = arith.constant 0 : index
    %c0_179 = arith.constant 0 : index
    %232 = vector.load %arg7[%c0_178, %c0_179] : memref<1x64xf32, #tpu.memory_space<vmem>>, vector<1x64xf32>
    %233 = vector.broadcast %232 : vector<1x64xf32> to vector<328x64xf32>
    %234 = arith.addf %231, %233 : vector<328x64xf32>
    %cst_180 = arith.constant 0.000000e+00 : f32
    %235 = vector.broadcast %cst_180 : f32 to vector<328x64xf32>
    %236 = arith.maximumf %234, %235 : vector<328x64xf32>
    %237 = arith.truncf %236 : vector<328x64xf32> to vector<328x64xbf16>
    %c0_181 = arith.constant 0 : index
    %c0_182 = arith.constant 0 : index
    %238 = vector.load %arg8[%c0_181, %c0_182] : memref<64x8xbf16, #tpu.memory_space<vmem>>, vector<64x8xbf16>
    %cst_183 = arith.constant dense<0.000000e+00> : vector<328x8xf32>
    %239 = tpu.matmul %237, %238, %cst_183 {dimension_numbers = #tpu.dot_dimension_numbers<[1], [0], [0], [1], [0, 0, 1, 1], [], []>} : vector<328x64xbf16>, vector<64x8xbf16>, vector<328x8xf32> -> vector<328x8xf32>
    %c0_184 = arith.constant 0 : index
    %c0_185 = arith.constant 0 : index
    %240 = vector.load %arg9[%c0_184, %c0_185] : memref<1x8xf32, #tpu.memory_space<vmem>>, vector<1x8xf32>
    %241 = vector.broadcast %240 : vector<1x8xf32> to vector<328x8xf32>
    %242 = arith.addf %239, %241 : vector<328x8xf32>
    %c0_186 = arith.constant 0 : index
    %c0_187 = arith.constant 0 : index
    %243 = vector.load %arg10[%c0_186, %c0_187] : memref<328x8xf32, #tpu.memory_space<vmem>>, vector<328x8xf32>
    tpu.vector_store %arg10[%c0_186, %c0_187], %242 {strides = array<i32>} : memref<328x8xf32, #tpu.memory_space<vmem>>, vector<328x8xf32>,
    return
  }
  func.func @transform_0(%arg0: i32) -> (i32, i32, i32) {
    %c0_i32 = arith.constant 0 : i32
    %c0_i32_0 = arith.constant 0 : i32
    %c0_i32_1 = arith.constant 0 : i32
    return %arg0, %c0_i32, %c0_i32_0 : i32, i32, i32
  }
  func.func @transform_1(%arg0: i32) -> (i32, i32, i32) {
    %c0_i32 = arith.constant 0 : i32
    %c0_i32_0 = arith.constant 0 : i32
    %c0_i32_1 = arith.constant 0 : i32
    %c0_i32_2 = arith.constant 0 : i32
    return %c0_i32, %c0_i32_0, %c0_i32_1 : i32, i32, i32
  }
  func.func @transform_2(%arg0: i32) -> (i32, i32) {
    %c0_i32 = arith.constant 0 : i32
    %c0_i32_0 = arith.constant 0 : i32
    %c0_i32_1 = arith.constant 0 : i32
    return %c0_i32, %c0_i32_0 : i32, i32
  }
  func.func @transform_3(%arg0: i32) -> (i32, i32, i32) {
    %c0_i32 = arith.constant 0 : i32
    %c0_i32_0 = arith.constant 0 : i32
    %c0_i32_1 = arith.constant 0 : i32
    %c0_i32_2 = arith.constant 0 : i32
    return %c0_i32, %c0_i32_0, %c0_i32_1 : i32, i32, i32
  }
  func.func @transform_4(%arg0: i32) -> (i32, i32) {
    %c0_i32 = arith.constant 0 : i32
    %c0_i32_0 = arith.constant 0 : i32
    %c0_i32_1 = arith.constant 0 : i32
    return %c0_i32, %c0_i32_0 : i32, i32
  }
  func.func @transform_5(%arg0: i32) -> (i32, i32, i32) {
    %c0_i32 = arith.constant 0 : i32
    %c0_i32_0 = arith.constant 0 : i32
    %c0_i32_1 = arith.constant 0 : i32
    %c0_i32_2 = arith.constant 0 : i32
    return %c0_i32, %c0_i32_0, %c0_i32_1 : i32, i32, i32
  }
  func.func @transform_6(%arg0: i32) -> (i32, i32) {
    %c0_i32 = arith.constant 0 : i32
    %c0_i32_0 = arith.constant 0 : i32
    %c0_i32_1 = arith.constant 0 : i32
    return %c0_i32, %c0_i32_0 : i32, i32
  }
  func.func @transform_7(%arg0: i32) -> (i32, i32) {
    %c0_i32 = arith.constant 0 : i32
    %c0_i32_0 = arith.constant 0 : i32
    %c0_i32_1 = arith.constant 0 : i32
    return %c0_i32, %c0_i32_0 : i32, i32
  }
  func.func @transform_8(%arg0: i32) -> (i32, i32) {
    %c0_i32 = arith.constant 0 : i32
    %c0_i32_0 = arith.constant 0 : i32
    %c0_i32_1 = arith.constant 0 : i32
    return %c0_i32, %c0_i32_0 : i32, i32
  }
  func.func @transform_9(%arg0: i32) -> (i32, i32) {
    %c0_i32 = arith.constant 0 : i32
    %c0_i32_0 = arith.constant 0 : i32
    return %arg0, %c0_i32 : i32, i32
  }
}

</mosaic_0001>

<llo_original>
// kernel: _dqn_forward.1
$region0: #{_dqn_forward.1}
  #allocation0 [shape = 'u32[]', space=smem, size = 0x4, offset = 0x4, fixed_abs, tag = 'smem constant byte address 0x4 - core index']
  #allocation1 [shape = 'u32[72,128]{1,0:T(1,128)}', space=vmem, size = 0x9000, scoped, tag = 'internal scratch']
  #allocation2 [shape = 'f32[392,64]{1,0:T(8,128)}', space=vmem, size = 0x31000, scoped, tag = 'scratch operand']
  #allocation3 [shape = 'f32[392,64]{1,0:T(8,128)}', space=vmem, size = 0x31000, scoped, tag = 'scratch operand']
  %s0 = inlined_call_operand.vmem [shape: f32[2,328,4], index: 0, kind: input, shape index: {}]
  %s1 = inlined_call_operand.vmem [shape: bf16[9,4,32], index: 1, kind: input, shape index: {}]
  %s2 = inlined_call_operand.vmem [shape: f32[1,32], index: 2, kind: input, shape index: {}]
  %s3 = inlined_call_operand.vmem [shape: bf16[9,32,64], index: 3, kind: input, shape index: {}]
  %s4 = inlined_call_operand.vmem [shape: f32[1,64], index: 4, kind: input, shape index: {}]
  %s5 = inlined_call_operand.vmem [shape: bf16[9,64,64], index: 5, kind: input, shape index: {}]
  %s6 = inlined_call_operand.vmem [shape: f32[1,64], index: 6, kind: input, shape index: {}]
  %s7 = inlined_call_operand.vmem [shape: bf16[64,8], index: 7, kind: input, shape index: {}]
  %s8 = inlined_call_operand.vmem [shape: f32[1,8], index: 8, kind: input, shape index: {}]
  %s9 = inlined_call_operand.vmem [shape: f32[656,8], index: 9, kind: output, shape index: {}]
  %s10 = sld [smem:[#allocation0]]
  $region69: #{_dqn_forward.1} parent=0
    _
  %s12 = ssub.s32 1, %s10
  %s13 = scalar_select 0, %s12, %s10
  loop: start=0, step=1, limit=4
  $region2: #{_dqn_forward.1} parent=0 // loop_pre_header
    _
  $region3: #{_dqn_forward.1} parent=0 // loop_header
    %s15 = sphi 0, %s19
    %p16 = scmp.ge.s32.totalorder %s15, 4
    %s25 = sphi 0, %s27
    %s28 = sphi 0, %s25
    %s29 = sphi 0, %s28
    %s45 = sphi 0, %s29
    %s49 = sphi 0, %s49
    %s51 = sphi 0, %s49
    %s52 = sphi 0, %s51
    %s66 = sphi 0, %s52
    %s70 = sphi 0, %s70
    %s72 = sphi 0, %s70
    %s73 = sphi 0, %s72
    %s87 = sphi 0, %s73
    %s91 = sphi 0, %s91
    %s93 = sphi 0, %s91
    %s94 = sphi 0, %s93
    %s108 = sphi 0, %s94
    %s112 = sphi 0, %s112
    %s114 = sphi 0, %s112
    %s115 = sphi 0, %s114
    %s129 = sphi 0, %s115
    %s133 = sphi 0, %s133
    %s135 = sphi 0, %s133
    %s136 = sphi 0, %s135
    %s150 = sphi 0, %s136
    %s154 = sphi 0, %s154
    %s156 = sphi 0, %s154
    %s157 = sphi 0, %s156
    %s171 = sphi 0, %s157
    %s175 = sphi 0, %s175
    %s177 = sphi 0, %s175
    %s178 = sphi 0, %s177
    %s192 = sphi 0, %s178
    %s196 = sphi 0, %s196
    %s198 = sphi 0, %s196
    %s199 = sphi 0, %s198
    %s213 = sphi 0, %s199
    %s219 = sphi 0, %s221
    %s222 = sphi 0, %s219
    %s223 = sphi 0, %s222
    %s239 = sphi 0, %s223
  $region4: #{_dqn_forward.1} parent=0 // loop_header_branch
    %18 = sbr.rel (%p16) target = $region8
  $region5: #{_dqn_forward.1} parent=0 // loop_body
    %s20 = ssub.s32 %s15, 1
    %s21 = ssub.s32 %s15, 2
    %s22 = sadd.s32 %s15, 1
    %s23 = ssub.s32 %s15, %s22
    %p24 = scmp.eq.s32.totalorder %s23, 0
    %s26 = sadd.s32 %s25, 1
    %s27 = scalar_select %p24, %s25, %s26
    %p30 = pneg %p24
    %p31 = scmp.eq.s32.totalorder %s15, 1
    %p32 = por %p30, %p31
    %p33 = scmp.ne.s32.totalorder %s25, %s28
    %p34 = scmp.eq.s32.totalorder %s15, 0
    %p35 = por %p33, %p34
    %p36 = scmp.ne.s32.totalorder %s25, %s28
    %p37 = scmp.eq.s32.totalorder %s20, 1
    %p38 = por %p36, %p37
    %p39 = scmp.ne.s32.totalorder %s28, %s29
    %p40 = scmp.eq.s32.totalorder %s20, 0
    %p41 = por %p39, %p40
    %p42 = scmp.ne.s32.totalorder %s28, %s29
    %p43 = scmp.eq.s32.totalorder %s21, 1
    %p44 = por %p42, %p43
    %p46 = scmp.ne.s32.totalorder %s29, %s45
    %p47 = scmp.eq.s32.totalorder %s21, 0
    %p48 = por %p46, %p47
    %s50 = sadd.s32 %s49, 1
    %p53 = scmp.eq.s32.totalorder %s15, 1
    %p54 = scmp.ne.s32.totalorder %s49, %s51
    %p55 = scmp.eq.s32.totalorder %s15, 0
    %p56 = por %p54, %p55
    %p57 = scmp.ne.s32.totalorder %s49, %s51
    %p58 = scmp.eq.s32.totalorder %s20, 1
    %p59 = por %p57, %p58
    %p60 = scmp.ne.s32.totalorder %s51, %s52
    %p61 = scmp.eq.s32.totalorder %s20, 0
    %p62 = por %p60, %p61
    %p63 = scmp.ne.s32.totalorder %s51, %s52
    %p64 = scmp.eq.s32.totalorder %s21, 1
    %p65 = por %p63, %p64
    %p67 = scmp.ne.s32.totalorder %s52, %s66
    %p68 = scmp.eq.s32.totalorder %s21, 0
    %p69 = por %p67, %p68
    %s71 = sadd.s32 %s70, 1
    %p74 = scmp.eq.s32.totalorder %s15, 1
    %p75 = scmp.ne.s32.totalorder %s70, %s72
    %p76 = scmp.eq.s32.totalorder %s15, 0
    %p77 = por %p75, %p76
    %p78 = scmp.ne.s32.totalorder %s70, %s72
    %p79 = scmp.eq.s32.totalorder %s20, 1
    %p80 = por %p78, %p79
    %p81 = scmp.ne.s32.totalorder %s72, %s73
    %p82 = scmp.eq.s32.totalorder %s20, 0
    %p83 = por %p81, %p82
    %p84 = scmp.ne.s32.totalorder %s72, %s73
    %p85 = scmp.eq.s32.totalorder %s21, 1
    %p86 = por %p84, %p85
    %p88 = scmp.ne.s32.totalorder %s73, %s87
    %p89 = scmp.eq.s32.totalorder %s21, 0
    %p90 = por %p88, %p89
    %s92 = sadd.s32 %s91, 1
    %p95 = scmp.eq.s32.totalorder %s15, 1
    %p96 = scmp.ne.s32.totalorder %s91, %s93
    %p97 = scmp.eq.s32.totalorder %s15, 0
    %p98 = por %p96, %p97
    %p99 = scmp.ne.s32.totalorder %s91, %s93
    %p100 = scmp.eq.s32.totalorder %s20, 1
    %p101 = por %p99, %p100
    %p102 = scmp.ne.s32.totalorder %s93, %s94
    %p103 = scmp.eq.s32.totalorder %s20, 0
    %p104 = por %p102, %p103
    %p105 = scmp.ne.s32.totalorder %s93, %s94
    %p106 = scmp.eq.s32.totalorder %s21, 1
    %p107 = por %p105, %p106
    %p109 = scmp.ne.s32.totalorder %s94, %s108
    %p110 = scmp.eq.s32.totalorder %s21, 0
    %p111 = por %p109, %p110
    %s113 = sadd.s32 %s112, 1
    %p116 = scmp.eq.s32.totalorder %s15, 1
    %p117 = scmp.ne.s32.totalorder %s112, %s114
    %p118 = scmp.eq.s32.totalorder %s15, 0
    %p119 = por %p117, %p118
    %p120 = scmp.ne.s32.totalorder %s112, %s114
    %p121 = scmp.eq.s32.totalorder %s20, 1
    %p122 = por %p120, %p121
    %p123 = scmp.ne.s32.totalorder %s114, %s115
    %p124 = scmp.eq.s32.totalorder %s20, 0
    %p125 = por %p123, %p124
    %p126 = scmp.ne.s32.totalorder %s114, %s115
    %p127 = scmp.eq.s32.totalorder %s21, 1
    %p128 = por %p126, %p127
    %p130 = scmp.ne.s32.totalorder %s115, %s129
    %p131 = scmp.eq.s32.totalorder %s21, 0
    %p132 = por %p130, %p131
    %s134 = sadd.s32 %s133, 1
    %p137 = scmp.eq.s32.totalorder %s15, 1
    %p138 = scmp.ne.s32.totalorder %s133, %s135
    %p139 = scmp.eq.s32.totalorder %s15, 0
    %p140 = por %p138, %p139
    %p141 = scmp.ne.s32.totalorder %s133, %s135
    %p142 = scmp.eq.s32.totalorder %s20, 1
    %p143 = por %p141, %p142
    %p144 = scmp.ne.s32.totalorder %s135, %s136
    %p145 = scmp.eq.s32.totalorder %s20, 0
    %p146 = por %p144, %p145
    %p147 = scmp.ne.s32.totalorder %s135, %s136
    %p148 = scmp.eq.s32.totalorder %s21, 1
    %p149 = por %p147, %p148
    %p151 = scmp.ne.s32.totalorder %s136, %s150
    %p152 = scmp.eq.s32.totalorder %s21, 0
    %p153 = por %p151, %p152
    %s155 = sadd.s32 %s154, 1
    %p158 = scmp.eq.s32.totalorder %s15, 1
    %p159 = scmp.ne.s32.totalorder %s154, %s156
    %p160 = scmp.eq.s32.totalorder %s15, 0
    %p161 = por %p159, %p160
    %p162 = scmp.ne.s32.totalorder %s154, %s156
    %p163 = scmp.eq.s32.totalorder %s20, 1
    %p164 = por %p162, %p163
    %p165 = scmp.ne.s32.totalorder %s156, %s157
    %p166 = scmp.eq.s32.totalorder %s20, 0
    %p167 = por %p165, %p166
    %p168 = scmp.ne.s32.totalorder %s156, %s157
    %p169 = scmp.eq.s32.totalorder %s21, 1
    %p170 = por %p168, %p169
    %p172 = scmp.ne.s32.totalorder %s157, %s171
    %p173 = scmp.eq.s32.totalorder %s21, 0
    %p174 = por %p172, %p173
    %s176 = sadd.s32 %s175, 1
    %p179 = scmp.eq.s32.totalorder %s15, 1
    %p180 = scmp.ne.s32.totalorder %s175, %s177
    %p181 = scmp.eq.s32.totalorder %s15, 0
    %p182 = por %p180, %p181
    %p183 = scmp.ne.s32.totalorder %s175, %s177
    %p184 = scmp.eq.s32.totalorder %s20, 1
    %p185 = por %p183, %p184
    %p186 = scmp.ne.s32.totalorder %s177, %s178
    %p187 = scmp.eq.s32.totalorder %s20, 0
    %p188 = por %p186, %p187
    %p189 = scmp.ne.s32.totalorder %s177, %s178
    %p190 = scmp.eq.s32.totalorder %s21, 1
    %p191 = por %p189, %p190
    %p193 = scmp.ne.s32.totalorder %s178, %s192
    %p194 = scmp.eq.s32.totalorder %s21, 0
    %p195 = por %p193, %p194
    %s197 = sadd.s32 %s196, 1
    %p200 = scmp.eq.s32.totalorder %s15, 1
    %p201 = scmp.ne.s32.totalorder %s196, %s198
    %p202 = scmp.eq.s32.totalorder %s15, 0
    %p203 = por %p201, %p202
    %p204 = scmp.ne.s32.totalorder %s196, %s198
    %p205 = scmp.eq.s32.totalorder %s20, 1
    %p206 = por %p204, %p205
    %p207 = scmp.ne.s32.totalorder %s198, %s199
    %p208 = scmp.eq.s32.totalorder %s20, 0
    %p209 = por %p207, %p208
    %p210 = scmp.ne.s32.totalorder %s198, %s199
    %p211 = scmp.eq.s32.totalorder %s21, 1
    %p212 = por %p210, %p211
    %p214 = scmp.ne.s32.totalorder %s199, %s213
    %p215 = scmp.eq.s32.totalorder %s21, 0
    %p216 = por %p214, %p215
    %s217 = ssub.s32 %s15, %s22
    %p218 = scmp.eq.s32.totalorder %s217, 0
    %s220 = sadd.s32 %s219, 1
    %s221 = scalar_select %p218, %s219, %s220
    %p224 = pneg %p218
    %p225 = scmp.eq.s32.totalorder %s15, 1
    %p226 = por %p224, %p225
    %p227 = scmp.ne.s32.totalorder %s219, %s222
    %p228 = scmp.eq.s32.totalorder %s15, 0
    %p229 = por %p227, %p228
    %p230 = scmp.ne.s32.totalorder %s219, %s222
    %p231 = scmp.eq.s32.totalorder %s20, 1
    %p232 = por %p230, %p231
    %p233 = scmp.ne.s32.totalorder %s222, %s223
    %p234 = scmp.eq.s32.totalorder %s20, 0
    %p235 = por %p233, %p234
    %p236 = scmp.ne.s32.totalorder %s222, %s223
    %p237 = scmp.eq.s32.totalorder %s21, 1
    %p238 = por %p236, %p237
    %p240 = scmp.ne.s32.totalorder %s223, %s239
    %p241 = scmp.eq.s32.totalorder %s21, 0
    %p242 = por %p240, %p241
    %p243 = scmp.le.s32.totalorder 1, %s15
    %p244 = scmp.lt.s32.totalorder %s15, 3
    %p245 = pnand %p243, %p244
    %p246 = pneg %p245
    // Predicated region
    $region9: #{_dqn_forward.1} parent=5 // pred_check
      _
    $region10: #{_dqn_forward.1} parent=5 // pred_check_branch
      %248 = sbr.rel (%p245) target = $region12
    $region11: #{_dqn_forward.1} parent=5 // pred_region
      %s249 = ssub.s32 %s15, 1
      // Predicated region
      $region13: #{_dqn_forward.1} parent=11 // pred_check
        %p250 = pneg %p62
      $region14: #{_dqn_forward.1} parent=11 // pred_check_branch
        %252 = sbr.rel (%p250) target = $region16
      $region15: #{_dqn_forward.1} parent=11 // pred_region
        _
      $region16: #{_dqn_forward.1} parent=11 // pred_fallthru
        _
      // Predicated region
      $region17: #{_dqn_forward.1} parent=11 // pred_check
        %p253 = pneg %p83
      $region18: #{_dqn_forward.1} parent=11 // pred_check_branch
        %255 = sbr.rel (%p253) target = $region20
      $region19: #{_dqn_forward.1} parent=11 // pred_region
        _
      $region20: #{_dqn_forward.1} parent=11 // pred_fallthru
        _
      // Predicated region
      $region21: #{_dqn_forward.1} parent=11 // pred_check
        %p256 = pneg %p104
      $region22: #{_dqn_forward.1} parent=11 // pred_check_branch
        %258 = sbr.rel (%p256) target = $region24
      $region23: #{_dqn_forward.1} parent=11 // pred_region
        _
      $region24: #{_dqn_forward.1} parent=11 // pred_fallthru
        _
      // Predicated region
      $region25: #{_dqn_forward.1} parent=11 // pred_check
        %p259 = pneg %p125
      $region26: #{_dqn_forward.1} parent=11 // pred_check_branch
        %261 = sbr.rel (%p259) target = $region28
      $region27: #{_dqn_forward.1} parent=11 // pred_region
        _
      $region28: #{_dqn_forward.1} parent=11 // pred_fallthru
        _
      // Predicated region
      $region29: #{_dqn_forward.1} parent=11 // pred_check
        %p262 = pneg %p146
      $region30: #{_dqn_forward.1} parent=11 // pred_check_branch
        %264 = sbr.rel (%p262) target = $region32
      $region31: #{_dqn_forward.1} parent=11 // pred_region
        _
      $region32: #{_dqn_forward.1} parent=11 // pred_fallthru
        _
      // Predicated region
      $region33: #{_dqn_forward.1} parent=11 // pred_check
        %p265 = pneg %p167
      $region34: #{_dqn_forward.1} parent=11 // pred_check_branch
        %267 = sbr.rel (%p265) target = $region36
      $region35: #{_dqn_forward.1} parent=11 // pred_region
        _
      $region36: #{_dqn_forward.1} parent=11 // pred_fallthru
        _
      // Predicated region
      $region37: #{_dqn_forward.1} parent=11 // pred_check
        %p268 = pneg %p188
      $region38: #{_dqn_forward.1} parent=11 // pred_check_branch
        %270 = sbr.rel (%p268) target = $region40
      $region39: #{_dqn_forward.1} parent=11 // pred_region
        _
      $region40: #{_dqn_forward.1} parent=11 // pred_fallthru
        _
      // Predicated region
      $region41: #{_dqn_forward.1} parent=11 // pred_check
        %p271 = pneg %p209
      $region42: #{_dqn_forward.1} parent=11 // pred_check_branch
        %273 = sbr.rel (%p271) target = $region44
      $region43: #{_dqn_forward.1} parent=11 // pred_region
        _
      $region44: #{_dqn_forward.1} parent=11 // pred_fallthru
        _
    $region12: #{_dqn_forward.1} parent=5 // pred_fallthru
      _
    %p274 = scmp.lt.s32.totalorder %s15, 2
    // Predicated region
    $region45: #{_dqn_forward.1} parent=5 // pred_check
      %p275 = pneg %p274
    $region46: #{_dqn_forward.1} parent=5 // pred_check_branch
      %277 = sbr.rel (%p275) target = $region48
    $region47: #{_dqn_forward.1} parent=5 // pred_region
      // Predicated region
      $region49: #{_dqn_forward.1} parent=47 // pred_check
        %p278 = pneg %p35
      $region50: #{_dqn_forward.1} parent=47 // pred_check_branch
        %280 = sbr.rel (%p278) target = $region52
      $region51: #{_dqn_forward.1} parent=47 // pred_region
        %p281 = scmp.lt.s32.totalorder %s15, 1
        %s282 = scalar_select %p281, %s15, 1
        %s283 = smul.addr %s282, 41
        %s284 = smul.addr %s283, 8
        %s285 = scalar_lea.vmem %s0, %s284
      $region52: #{_dqn_forward.1} parent=47 // pred_fallthru
        _
    $region48: #{_dqn_forward.1} parent=5 // pred_fallthru
      _
    %p286 = scmp.le.s32.totalorder 1, %s15
    %p287 = scmp.lt.s32.totalorder %s15, 3
    %p288 = pnand %p286, %p287
    %p289 = pneg %p288
    // Predicated region
    $region53: #{_dqn_forward.1} parent=5 // pred_check
      _
    $region54: #{_dqn_forward.1} parent=5 // pred_check_branch
      %291 = sbr.rel (%p288) target = $region56
    $region55: #{_dqn_forward.1} parent=5 // pred_region
      %s292 = ssub.s32 %s15, 1
      %p293 = scmp.lt.s32.totalorder %s20, 1
      %s294 = scalar_select %p293, %s20, 1
      %s295 = smul.addr %s294, 41
      %s296 = smul.addr %s295, 8
      %s297 = scalar_lea.vmem %s0, %s296
      %p298 = pneg %p41
      %p299 = pneg %p38
      %p300 = pneg %p62
      %p301 = pneg %p59
      %p302 = pneg %p83
      %p303 = pneg %p80
      %p304 = pneg %p104
      %p305 = pneg %p101
      %p306 = pneg %p125
      %p307 = pneg %p122
      %p308 = pneg %p146
      %p309 = pneg %p143
      %p310 = pneg %p167
      %p311 = pneg %p164
      %p312 = pneg %p188
      %p313 = pneg %p185
      %p314 = pneg %p209
      %p315 = pneg %p206
      %p316 = pneg %p235
      %p317 = pneg %p232
      %s318 = smul.u32 41, %s20
      %p319 = scmp.lt.s32.totalorder %s318, 81
      %s320 = scalar_select %p319, %s318, 81
      %s321 = smul.addr %s320, 8
      %s322 = scalar_lea.vmem %s9, %s321
      %p323 = scmp.lt.s32.totalorder %s20, 1
      %s324 = scalar_select %p323, %s20, 1
      %s325 = smul.addr %s324, 41
      %s326 = smul.addr %s325, 8
      %s327 = scalar_lea.vmem %s0, %s326
      %s328 = smul.u32 41, %s20
      %p329 = scmp.lt.s32.totalorder %s328, 81
      %s330 = scalar_select %p329, %s328, 81
      %s331 = smul.addr %s330, 8
      %s332 = scalar_lea.vmem %s9, %s331
      %s333 = smul.u32 41, %s20
      %v335 = vlaneseq
      %v336 = vshrl.u32 %v335, 7
      %v337 = vadd.s32 %v336, 8
      %v338 = vadd.s32 %v336, 16
      %v339 = vadd.s32 %v336, 24
      %v340 = vadd.s32 %v336, 32
      %v341 = vadd.s32 %v336, 40
      %v342 = vadd.s32 %v336, 48
      %v343 = vadd.s32 %v336, 56
      %v344 = vadd.s32 %v336, 64
      %v345 = vadd.s32 %v336, 72
      %v346 = vadd.s32 %v336, 80
      %v347 = vadd.s32 %v336, 88
      %v348 = vadd.s32 %v336, 96
      %v349 = vadd.s32 %v336, 104
      %v350 = vadd.s32 %v336, 112
      %v351 = vadd.s32 %v336, 120
      %v352 = vadd.s32 %v336, 128
      %v353 = vadd.s32 %v336, 136
      %v354 = vadd.s32 %v336, 144
      %v355 = vadd.s32 %v336, 152
      %v356 = vadd.s32 %v336, 160
      %v357 = vadd.s32 %v336, 168
      %v358 = vadd.s32 %v336, 176
      %v359 = vadd.s32 %v336, 184
      %v360 = vadd.s32 %v336, 192
      %v361 = vadd.s32 %v336, 200
      %v362 = vadd.s32 %v336, 208
      %v363 = vadd.s32 %v336, 216
      %v364 = vadd.s32 %v336, 224
      %v365 = vadd.s32 %v336, 232
      %v366 = vadd.s32 %v336, 240
      %v367 = vadd.s32 %v336, 248
      %v368 = vadd.s32 %v336, 256
      %v369 = vadd.s32 %v336, 264
      %v370 = vadd.s32 %v336, 272
      %v371 = vadd.s32 %v336, 280
      %v372 = vadd.s32 %v336, 288
      %v373 = vadd.s32 %v336, 296
      %v374 = vadd.s32 %v336, 304
      %v375 = vadd.s32 %v336, 312
      %v376 = vadd.s32 %v336, 320
      %vm377 = vcmp.lt.s32.totalorder %v336, 0
      %v378 = vsub.s32 0, %v336
      %v379 = vsel %vm377, %v378, %v336
      %v380 = vand.u32 %v379, 65535
      %v381 = vshrl.u32 %v379, 16
      %v383 = vmul.u32 %v380, 3197
      %v384 = vmul.u32 %v380, 51150
      %v385 = vmul.u32 %v381, 3197
      %v386 = vmul.u32 %v381, 51150
      %v387 = vshll.u32 %v384, 16
      %v388 = vshrl.u32 %v384, 16
      %v389 = vshll.u32 %v385, 16
      %v390 = vshrl.u32 %v385, 16
      %vm391 = vc.u32 %v383, %v387
      %v392 = vsel %vm391, 1, 0
      %v393 = vadd.s32 %v383, %v387
      %v394 = vadd.s32 %v386, %v392
      %vm395 = vc.u32 %v393, %v389
      %v396 = vsel %vm395, 1, 0
      %v397 = vadd.s32 %v393, %v389
      %v398 = vadd.s32 %v394, %v396
      %v399 = vadd.s32 %v398, %v388
      %v400 = vadd.s32 %v399, %v390
      %v401 = vshrl.u32 %v400, 8
      %v402 = vmul.u32 %v401, 328
      %v403 = vsub.s32 %v379, %v402
      %v404 = vsub.s32 0, %v403
      %v405 = vsel %vm377, %v404, %v403
      %vm406 = vcmp.lt.s32.totalorder %v337, 0
      %v407 = vsub.s32 0, %v337
      %v408 = vsel %vm406, %v407, %v337
      %v409 = vand.u32 %v408, 65535
      %v410 = vshrl.u32 %v408, 16
      %v412 = vmul.u32 %v409, 3197
      %v413 = vmul.u32 %v409, 51150
      %v414 = vmul.u32 %v410, 3197
      %v415 = vmul.u32 %v410, 51150
      %v416 = vshll.u32 %v413, 16
      %v417 = vshrl.u32 %v413, 16
      %v418 = vshll.u32 %v414, 16
      %v419 = vshrl.u32 %v414, 16
      %vm420 = vc.u32 %v412, %v416
      %v421 = vsel %vm420, 1, 0
      %v422 = vadd.s32 %v412, %v416
      %v423 = vadd.s32 %v415, %v421
      %vm424 = vc.u32 %v422, %v418
      %v425 = vsel %vm424, 1, 0
      %v426 = vadd.s32 %v422, %v418
      %v427 = vadd.s32 %v423, %v425
      %v428 = vadd.s32 %v427, %v417
      %v429 = vadd.s32 %v428, %v419
      %v430 = vshrl.u32 %v429, 8
      %v431 = vmul.u32 %v430, 328
      %v432 = vsub.s32 %v408, %v431
      %v433 = vsub.s32 0, %v432
      %v434 = vsel %vm406, %v433, %v432
      %vm435 = vcmp.lt.s32.totalorder %v338, 0
      %v436 = vsub.s32 0, %v338
      %v437 = vsel %vm435, %v436, %v338
      %v438 = vand.u32 %v437, 65535
      %v439 = vshrl.u32 %v437, 16
      %v441 = vmul.u32 %v438, 3197
      %v442 = vmul.u32 %v438, 51150
      %v443 = vmul.u32 %v439, 3197
      %v444 = vmul.u32 %v439, 51150
      %v445 = vshll.u32 %v442, 16
      %v446 = vshrl.u32 %v442, 16
      %v447 = vshll.u32 %v443, 16
      %v448 = vshrl.u32 %v443, 16
      %vm449 = vc.u32 %v441, %v445
      %v450 = vsel %vm449, 1, 0
      %v451 = vadd.s32 %v441, %v445
      %v452 = vadd.s32 %v444, %v450
      %vm453 = vc.u32 %v451, %v447
      %v454 = vsel %vm453, 1, 0
      %v455 = vadd.s32 %v451, %v447
      %v456 = vadd.s32 %v452, %v454
      %v457 = vadd.s32 %v456, %v446
      %v458 = vadd.s32 %v457, %v448
      %v459 = vshrl.u32 %v458, 8
      %v460 = vmul.u32 %v459, 328
      %v461 = vsub.s32 %v437, %v460
      %v462 = vsub.s32 0, %v461
      %v463 = vsel %vm435, %v462, %v461
      %vm464 = vcmp.lt.s32.totalorder %v339, 0
      %v465 = vsub.s32 0, %v339
      %v466 = vsel %vm464, %v465, %v339
      %v467 = vand.u32 %v466, 65535
      %v468 = vshrl.u32 %v466, 16
      %v470 = vmul.u32 %v467, 3197
      %v471 = vmul.u32 %v467, 51150
      %v472 = vmul.u32 %v468, 3197
      %v473 = vmul.u32 %v468, 51150
      %v474 = vshll.u32 %v471, 16
      %v475 = vshrl.u32 %v471, 16
      %v476 = vshll.u32 %v472, 16
      %v477 = vshrl.u32 %v472, 16
      %vm478 = vc.u32 %v470, %v474
      %v479 = vsel %vm478, 1, 0
      %v480 = vadd.s32 %v470, %v474
      %v481 = vadd.s32 %v473, %v479
      %vm482 = vc.u32 %v480, %v476
      %v483 = vsel %vm482, 1, 0
      %v484 = vadd.s32 %v480, %v476
      %v485 = vadd.s32 %v481, %v483
      %v486 = vadd.s32 %v485, %v475
      %v487 = vadd.s32 %v486, %v477
      %v488 = vshrl.u32 %v487, 8
      %v489 = vmul.u32 %v488, 328
      %v490 = vsub.s32 %v466, %v489
      %v491 = vsub.s32 0, %v490
      %v492 = vsel %vm464, %v491, %v490
      %vm493 = vcmp.lt.s32.totalorder %v340, 0
      %v494 = vsub.s32 0, %v340
      %v495 = vsel %vm493, %v494, %v340
      %v496 = vand.u32 %v495, 65535
      %v497 = vshrl.u32 %v495, 16
      %v499 = vmul.u32 %v496, 3197
      %v500 = vmul.u32 %v496, 51150
      %v501 = vmul.u32 %v497, 3197
      %v502 = vmul.u32 %v497, 51150
      %v503 = vshll.u32 %v500, 16
      %v504 = vshrl.u32 %v500, 16
      %v505 = vshll.u32 %v501, 16
      %v506 = vshrl.u32 %v501, 16
      %vm507 = vc.u32 %v499, %v503
      %v508 = vsel %vm507, 1, 0
      %v509 = vadd.s32 %v499, %v503
      %v510 = vadd.s32 %v502, %v508
      %vm511 = vc.u32 %v509, %v505
      %v512 = vsel %vm511, 1, 0
      %v513 = vadd.s32 %v509, %v505
      %v514 = vadd.s32 %v510, %v512
      %v515 = vadd.s32 %v514, %v504
      %v516 = vadd.s32 %v515, %v506
      %v517 = vshrl.u32 %v516, 8
      %v518 = vmul.u32 %v517, 328
      %v519 = vsub.s32 %v495, %v518
      %v520 = vsub.s32 0, %v519
      %v521 = vsel %vm493, %v520, %v519
      %vm522 = vcmp.lt.s32.totalorder %v341, 0
      %v523 = vsub.s32 0, %v341
      %v524 = vsel %vm522, %v523, %v341
      %v525 = vand.u32 %v524, 65535
      %v526 = vshrl.u32 %v524, 16
      %v528 = vmul.u32 %v525, 3197
      %v529 = vmul.u32 %v525, 51150
      %v530 = vmul.u32 %v526, 3197
      %v531 = vmul.u32 %v526, 51150
      %v532 = vshll.u32 %v529, 16
      %v533 = vshrl.u32 %v529, 16
      %v534 = vshll.u32 %v530, 16
      %v535 = vshrl.u32 %v530, 16
      %vm536 = vc.u32 %v528, %v532
      %v537 = vsel %vm536, 1, 0
      %v538 = vadd.s32 %v528, %v532
      %v539 = vadd.s32 %v531, %v537
      %vm540 = vc.u32 %v538, %v534
      %v541 = vsel %vm540, 1, 0
      %v542 = vadd.s32 %v538, %v534
      %v543 = vadd.s32 %v539, %v541
      %v544 = vadd.s32 %v543, %v533
      %v545 = vadd.s32 %v544, %v535
      %v546 = vshrl.u32 %v545, 8
      %v547 = vmul.u32 %v546, 328
      %v548 = vsub.s32 %v524, %v547
      %v549 = vsub.s32 0, %v548
      %v550 = vsel %vm522, %v549, %v548
      %vm551 = vcmp.lt.s32.totalorder %v342, 0
      %v552 = vsub.s32 0, %v342
      %v553 = vsel %vm551, %v552, %v342
      %v554 = vand.u32 %v553, 65535
      %v555 = vshrl.u32 %v553, 16
      %v557 = vmul.u32 %v554, 3197
      %v558 = vmul.u32 %v554, 51150
      %v559 = vmul.u32 %v555, 3197
      %v560 = vmul.u32 %v555, 51150
      %v561 = vshll.u32 %v558, 16
      %v562 = vshrl.u32 %v558, 16
      %v563 = vshll.u32 %v559, 16
      %v564 = vshrl.u32 %v559, 16
      %vm565 = vc.u32 %v557, %v561
      %v566 = vsel %vm565, 1, 0
      %v567 = vadd.s32 %v557, %v561
      %v568 = vadd.s32 %v560, %v566
      %vm569 = vc.u32 %v567, %v563
      %v570 = vsel %vm569, 1, 0
      %v571 = vadd.s32 %v567, %v563
      %v572 = vadd.s32 %v568, %v570
      %v573 = vadd.s32 %v572, %v562
      %v574 = vadd.s32 %v573, %v564
      %v575 = vshrl.u32 %v574, 8
      %v576 = vmul.u32 %v575, 328
      %v577 = vsub.s32 %v553, %v576
      %v578 = vsub.s32 0, %v577
      %v579 = vsel %vm551, %v578, %v577
      %vm580 = vcmp.lt.s32.totalorder %v343, 0
      %v581 = vsub.s32 0, %v343
      %v582 = vsel %vm580, %v581, %v343
      %v583 = vand.u32 %v582, 65535
      %v584 = vshrl.u32 %v582, 16
      %v586 = vmul.u32 %v583, 3197
      %v587 = vmul.u32 %v583, 51150
      %v588 = vmul.u32 %v584, 3197
      %v589 = vmul.u32 %v584, 51150
      %v590 = vshll.u32 %v587, 16
      %v591 = vshrl.u32 %v587, 16
      %v592 = vshll.u32 %v588, 16
      %v593 = vshrl.u32 %v588, 16
      %vm594 = vc.u32 %v586, %v590
      %v595 = vsel %vm594, 1, 0
      %v596 = vadd.s32 %v586, %v590
      %v597 = vadd.s32 %v589, %v595
      %vm598 = vc.u32 %v596, %v592
      %v599 = vsel %vm598, 1, 0
      %v600 = vadd.s32 %v596, %v592
      %v601 = vadd.s32 %v597, %v599
      %v602 = vadd.s32 %v601, %v591
      %v603 = vadd.s32 %v602, %v593
      %v604 = vshrl.u32 %v603, 8
      %v605 = vmul.u32 %v604, 328
      %v606 = vsub.s32 %v582, %v605
      %v607 = vsub.s32 0, %v606
      %v608 = vsel %vm580, %v607, %v606
      %vm609 = vcmp.lt.s32.totalorder %v344, 0
      %v610 = vsub.s32 0, %v344
      %v611 = vsel %vm609, %v610, %v344
      %v612 = vand.u32 %v611, 65535
      %v613 = vshrl.u32 %v611, 16
      %v615 = vmul.u32 %v612, 3197
      %v616 = vmul.u32 %v612, 51150
      %v617 = vmul.u32 %v613, 3197
      %v618 = vmul.u32 %v613, 51150
      %v619 = vshll.u32 %v616, 16
      %v620 = vshrl.u32 %v616, 16
      %v621 = vshll.u32 %v617, 16
      %v622 = vshrl.u32 %v617, 16
      %vm623 = vc.u32 %v615, %v619
      %v624 = vsel %vm623, 1, 0
      %v625 = vadd.s32 %v615, %v619
      %v626 = vadd.s32 %v618, %v624
      %vm627 = vc.u32 %v625, %v621
      %v628 = vsel %vm627, 1, 0
      %v629 = vadd.s32 %v625, %v621
      %v630 = vadd.s32 %v626, %v628
      %v631 = vadd.s32 %v630, %v620
      %v632 = vadd.s32 %v631, %v622
      %v633 = vshrl.u32 %v632, 8
      %v634 = vmul.u32 %v633, 328
      %v635 = vsub.s32 %v611, %v634
      %v636 = vsub.s32 0, %v635
      %v637 = vsel %vm609, %v636, %v635
      %vm638 = vcmp.lt.s32.totalorder %v345, 0
      %v639 = vsub.s32 0, %v345
      %v640 = vsel %vm638, %v639, %v345
      %v641 = vand.u32 %v640, 65535
      %v642 = vshrl.u32 %v640, 16
      %v644 = vmul.u32 %v641, 3197
      %v645 = vmul.u32 %v641, 51150
      %v646 = vmul.u32 %v642, 3197
      %v647 = vmul.u32 %v642, 51150
      %v648 = vshll.u32 %v645, 16
      %v649 = vshrl.u32 %v645, 16
      %v650 = vshll.u32 %v646, 16
      %v651 = vshrl.u32 %v646, 16
      %vm652 = vc.u32 %v644, %v648
      %v653 = vsel %vm652, 1, 0
      %v654 = vadd.s32 %v644, %v648
      %v655 = vadd.s32 %v647, %v653
      %vm656 = vc.u32 %v654, %v650
      %v657 = vsel %vm656, 1, 0
      %v658 = vadd.s32 %v654, %v650
      %v659 = vadd.s32 %v655, %v657
      %v660 = vadd.s32 %v659, %v649
      %v661 = vadd.s32 %v660, %v651
      %v662 = vshrl.u32 %v661, 8
      %v663 = vmul.u32 %v662, 328
      %v664 = vsub.s32 %v640, %v663
      %v665 = vsub.s32 0, %v664
      %v666 = vsel %vm638, %v665, %v664
      %vm667 = vcmp.lt.s32.totalorder %v346, 0
      %v668 = vsub.s32 0, %v346
      %v669 = vsel %vm667, %v668, %v346
      %v670 = vand.u32 %v669, 65535
      %v671 = vshrl.u32 %v669, 16
      %v673 = vmul.u32 %v670, 3197
      %v674 = vmul.u32 %v670, 51150
      %v675 = vmul.u32 %v671, 3197
      %v676 = vmul.u32 %v671, 51150
      %v677 = vshll.u32 %v674, 16
      %v678 = vshrl.u32 %v674, 16
      %v679 = vshll.u32 %v675, 16
      %v680 = vshrl.u32 %v675, 16
      %vm681 = vc.u32 %v673, %v677
      %v682 = vsel %vm681, 1, 0
      %v683 = vadd.s32 %v673, %v677
      %v684 = vadd.s32 %v676, %v682
      %vm685 = vc.u32 %v683, %v679
      %v686 = vsel %vm685, 1, 0
      %v687 = vadd.s32 %v683, %v679
      %v688 = vadd.s32 %v684, %v686
      %v689 = vadd.s32 %v688, %v678
      %v690 = vadd.s32 %v689, %v680
      %v691 = vshrl.u32 %v690, 8
      %v692 = vmul.u32 %v691, 328
      %v693 = vsub.s32 %v669, %v692
      %v694 = vsub.s32 0, %v693
      %v695 = vsel %vm667, %v694, %v693
      %vm696 = vcmp.lt.s32.totalorder %v347, 0
      %v697 = vsub.s32 0, %v347
      %v698 = vsel %vm696, %v697, %v347
      %v699 = vand.u32 %v698, 65535
      %v700 = vshrl.u32 %v698, 16
      %v702 = vmul.u32 %v699, 3197
      %v703 = vmul.u32 %v699, 51150
      %v704 = vmul.u32 %v700, 3197
      %v705 = vmul.u32 %v700, 51150
      %v706 = vshll.u32 %v703, 16
      %v707 = vshrl.u32 %v703, 16
      %v708 = vshll.u32 %v704, 16
      %v709 = vshrl.u32 %v704, 16
      %vm710 = vc.u32 %v702, %v706
      %v711 = vsel %vm710, 1, 0
      %v712 = vadd.s32 %v702, %v706
      %v713 = vadd.s32 %v705, %v711
      %vm714 = vc.u32 %v712, %v708
      %v715 = vsel %vm714, 1, 0
      %v716 = vadd.s32 %v712, %v708
      %v717 = vadd.s32 %v713, %v715
      %v718 = vadd.s32 %v717, %v707
      %v719 = vadd.s32 %v718, %v709
      %v720 = vshrl.u32 %v719, 8
      %v721 = vmul.u32 %v720, 328
      %v722 = vsub.s32 %v698, %v721
      %v723 = vsub.s32 0, %v722
      %v724 = vsel %vm696, %v723, %v722
      %vm725 = vcmp.lt.s32.totalorder %v348, 0
      %v726 = vsub.s32 0, %v348
      %v727 = vsel %vm725, %v726, %v348
      %v728 = vand.u32 %v727, 65535
      %v729 = vshrl.u32 %v727, 16
      %v731 = vmul.u32 %v728, 3197
      %v732 = vmul.u32 %v728, 51150
      %v733 = vmul.u32 %v729, 3197
      %v734 = vmul.u32 %v729, 51150
      %v735 = vshll.u32 %v732, 16
      %v736 = vshrl.u32 %v732, 16
      %v737 = vshll.u32 %v733, 16
      %v738 = vshrl.u32 %v733, 16
      %vm739 = vc.u32 %v731, %v735
      %v740 = vsel %vm739, 1, 0
      %v741 = vadd.s32 %v731, %v735
      %v742 = vadd.s32 %v734, %v740
      %vm743 = vc.u32 %v741, %v737
      %v744 = vsel %vm743, 1, 0
      %v745 = vadd.s32 %v741, %v737
      %v746 = vadd.s32 %v742, %v744
      %v747 = vadd.s32 %v746, %v736
      %v748 = vadd.s32 %v747, %v738
      %v749 = vshrl.u32 %v748, 8
      %v750 = vmul.u32 %v749, 328
      %v751 = vsub.s32 %v727, %v750
      %v752 = vsub.s32 0, %v751
      %v753 = vsel %vm725, %v752, %v751
      %vm754 = vcmp.lt.s32.totalorder %v349, 0
      %v755 = vsub.s32 0, %v349
      %v756 = vsel %vm754, %v755, %v349
      %v757 = vand.u32 %v756, 65535
      %v758 = vshrl.u32 %v756, 16
      %v760 = vmul.u32 %v757, 3197
      %v761 = vmul.u32 %v757, 51150
      %v762 = vmul.u32 %v758, 3197
      %v763 = vmul.u32 %v758, 51150
      %v764 = vshll.u32 %v761, 16
      %v765 = vshrl.u32 %v761, 16
      %v766 = vshll.u32 %v762, 16
      %v767 = vshrl.u32 %v762, 16
      %vm768 = vc.u32 %v760, %v764
      %v769 = vsel %vm768, 1, 0
      %v770 = vadd.s32 %v760, %v764
      %v771 = vadd.s32 %v763, %v769
      %vm772 = vc.u32 %v770, %v766
      %v773 = vsel %vm772, 1, 0
      %v774 = vadd.s32 %v770, %v766
      %v775 = vadd.s32 %v771, %v773
      %v776 = vadd.s32 %v775, %v765
      %v777 = vadd.s32 %v776, %v767
      %v778 = vshrl.u32 %v777, 8
      %v779 = vmul.u32 %v778, 328
      %v780 = vsub.s32 %v756, %v779
      %v781 = vsub.s32 0, %v780
      %v782 = vsel %vm754, %v781, %v780
      %vm783 = vcmp.lt.s32.totalorder %v350, 0
      %v784 = vsub.s32 0, %v350
      %v785 = vsel %vm783, %v784, %v350
      %v786 = vand.u32 %v785, 65535
      %v787 = vshrl.u32 %v785, 16
      %v789 = vmul.u32 %v786, 3197
      %v790 = vmul.u32 %v786, 51150
      %v791 = vmul.u32 %v787, 3197
      %v792 = vmul.u32 %v787, 51150
      %v793 = vshll.u32 %v790, 16
      %v794 = vshrl.u32 %v790, 16
      %v795 = vshll.u32 %v791, 16
      %v796 = vshrl.u32 %v791, 16
      %vm797 = vc.u32 %v789, %v793
      %v798 = vsel %vm797, 1, 0
      %v799 = vadd.s32 %v789, %v793
      %v800 = vadd.s32 %v792, %v798
      %vm801 = vc.u32 %v799, %v795
      %v802 = vsel %vm801, 1, 0
      %v803 = vadd.s32 %v799, %v795
      %v804 = vadd.s32 %v800, %v802
      %v805 = vadd.s32 %v804, %v794
      %v806 = vadd.s32 %v805, %v796
      %v807 = vshrl.u32 %v806, 8
      %v808 = vmul.u32 %v807, 328
      %v809 = vsub.s32 %v785, %v808
      %v810 = vsub.s32 0, %v809
      %v811 = vsel %vm783, %v810, %v809
      %vm812 = vcmp.lt.s32.totalorder %v351, 0
      %v813 = vsub.s32 0, %v351
      %v814 = vsel %vm812, %v813, %v351
      %v815 = vand.u32 %v814, 65535
      %v816 = vshrl.u32 %v814, 16
      %v818 = vmul.u32 %v815, 3197
      %v819 = vmul.u32 %v815, 51150
      %v820 = vmul.u32 %v816, 3197
      %v821 = vmul.u32 %v816, 51150
      %v822 = vshll.u32 %v819, 16
      %v823 = vshrl.u32 %v819, 16
      %v824 = vshll.u32 %v820, 16
      %v825 = vshrl.u32 %v820, 16
      %vm826 = vc.u32 %v818, %v822
      %v827 = vsel %vm826, 1, 0
      %v828 = vadd.s32 %v818, %v822
      %v829 = vadd.s32 %v821, %v827
      %vm830 = vc.u32 %v828, %v824
      %v831 = vsel %vm830, 1, 0
      %v832 = vadd.s32 %v828, %v824
      %v833 = vadd.s32 %v829, %v831
      %v834 = vadd.s32 %v833, %v823
      %v835 = vadd.s32 %v834, %v825
      %v836 = vshrl.u32 %v835, 8
      %v837 = vmul.u32 %v836, 328
      %v838 = vsub.s32 %v814, %v837
      %v839 = vsub.s32 0, %v838
      %v840 = vsel %vm812, %v839, %v838
      %vm841 = vcmp.lt.s32.totalorder %v352, 0
      %v842 = vsub.s32 0, %v352
      %v843 = vsel %vm841, %v842, %v352
      %v844 = vand.u32 %v843, 65535
      %v845 = vshrl.u32 %v843, 16
      %v847 = vmul.u32 %v844, 3197
      %v848 = vmul.u32 %v844, 51150
      %v849 = vmul.u32 %v845, 3197
      %v850 = vmul.u32 %v845, 51150
      %v851 = vshll.u32 %v848, 16
      %v852 = vshrl.u32 %v848, 16
      %v853 = vshll.u32 %v849, 16
      %v854 = vshrl.u32 %v849, 16
      %vm855 = vc.u32 %v847, %v851
      %v856 = vsel %vm855, 1, 0
      %v857 = vadd.s32 %v847, %v851
      %v858 = vadd.s32 %v850, %v856
      %vm859 = vc.u32 %v857, %v853
      %v860 = vsel %vm859, 1, 0
      %v861 = vadd.s32 %v857, %v853
      %v862 = vadd.s32 %v858, %v860
      %v863 = vadd.s32 %v862, %v852
      %v864 = vadd.s32 %v863, %v854
      %v865 = vshrl.u32 %v864, 8
      %v866 = vmul.u32 %v865, 328
      %v867 = vsub.s32 %v843, %v866
      %v868 = vsub.s32 0, %v867
      %v869 = vsel %vm841, %v868, %v867
      %vm870 = vcmp.lt.s32.totalorder %v353, 0
      %v871 = vsub.s32 0, %v353
      %v872 = vsel %vm870, %v871, %v353
      %v873 = vand.u32 %v872, 65535
      %v874 = vshrl.u32 %v872, 16
      %v876 = vmul.u32 %v873, 3197
      %v877 = vmul.u32 %v873, 51150
      %v878 = vmul.u32 %v874, 3197
      %v879 = vmul.u32 %v874, 51150
      %v880 = vshll.u32 %v877, 16
      %v881 = vshrl.u32 %v877, 16
      %v882 = vshll.u32 %v878, 16
      %v883 = vshrl.u32 %v878, 16
      %vm884 = vc.u32 %v876, %v880
      %v885 = vsel %vm884, 1, 0
      %v886 = vadd.s32 %v876, %v880
      %v887 = vadd.s32 %v879, %v885
      %vm888 = vc.u32 %v886, %v882
      %v889 = vsel %vm888, 1, 0
      %v890 = vadd.s32 %v886, %v882
      %v891 = vadd.s32 %v887, %v889
      %v892 = vadd.s32 %v891, %v881
      %v893 = vadd.s32 %v892, %v883
      %v894 = vshrl.u32 %v893, 8
      %v895 = vmul.u32 %v894, 328
      %v896 = vsub.s32 %v872, %v895
      %v897 = vsub.s32 0, %v896
      %v898 = vsel %vm870, %v897, %v896
      %vm899 = vcmp.lt.s32.totalorder %v354, 0
      %v900 = vsub.s32 0, %v354
      %v901 = vsel %vm899, %v900, %v354
      %v902 = vand.u32 %v901, 65535
      %v903 = vshrl.u32 %v901, 16
      %v905 = vmul.u32 %v902, 3197
      %v906 = vmul.u32 %v902, 51150
      %v907 = vmul.u32 %v903, 3197
      %v908 = vmul.u32 %v903, 51150
      %v909 = vshll.u32 %v906, 16
      %v910 = vshrl.u32 %v906, 16
      %v911 = vshll.u32 %v907, 16
      %v912 = vshrl.u32 %v907, 16
      %vm913 = vc.u32 %v905, %v909
      %v914 = vsel %vm913, 1, 0
      %v915 = vadd.s32 %v905, %v909
      %v916 = vadd.s32 %v908, %v914
      %vm917 = vc.u32 %v915, %v911
      %v918 = vsel %vm917, 1, 0
      %v919 = vadd.s32 %v915, %v911
      %v920 = vadd.s32 %v916, %v918
      %v921 = vadd.s32 %v920, %v910
      %v922 = vadd.s32 %v921, %v912
      %v923 = vshrl.u32 %v922, 8
      %v924 = vmul.u32 %v923, 328
      %v925 = vsub.s32 %v901, %v924
      %v926 = vsub.s32 0, %v925
      %v927 = vsel %vm899, %v926, %v925
      %vm928 = vcmp.lt.s32.totalorder %v355, 0
      %v929 = vsub.s32 0, %v355
      %v930 = vsel %vm928, %v929, %v355
      %v931 = vand.u32 %v930, 65535
      %v932 = vshrl.u32 %v930, 16
      %v934 = vmul.u32 %v931, 3197
      %v935 = vmul.u32 %v931, 51150
      %v936 = vmul.u32 %v932, 3197
      %v937 = vmul.u32 %v932, 51150
      %v938 = vshll.u32 %v935, 16
      %v939 = vshrl.u32 %v935, 16
      %v940 = vshll.u32 %v936, 16
      %v941 = vshrl.u32 %v936, 16
      %vm942 = vc.u32 %v934, %v938
      %v943 = vsel %vm942, 1, 0
      %v944 = vadd.s32 %v934, %v938
      %v945 = vadd.s32 %v937, %v943
      %vm946 = vc.u32 %v944, %v940
      %v947 = vsel %vm946, 1, 0
      %v948 = vadd.s32 %v944, %v940
      %v949 = vadd.s32 %v945, %v947
      %v950 = vadd.s32 %v949, %v939
      %v951 = vadd.s32 %v950, %v941
      %v952 = vshrl.u32 %v951, 8
      %v953 = vmul.u32 %v952, 328
      %v954 = vsub.s32 %v930, %v953
      %v955 = vsub.s32 0, %v954
      %v956 = vsel %vm928, %v955, %v954
      %vm957 = vcmp.lt.s32.totalorder %v356, 0
      %v958 = vsub.s32 0, %v356
      %v959 = vsel %vm957, %v958, %v356
      %v960 = vand.u32 %v959, 65535
      %v961 = vshrl.u32 %v959, 16
      %v963 = vmul.u32 %v960, 3197
      %v964 = vmul.u32 %v960, 51150
      %v965 = vmul.u32 %v961, 3197
      %v966 = vmul.u32 %v961, 51150
      %v967 = vshll.u32 %v964, 16
      %v968 = vshrl.u32 %v964, 16
      %v969 = vshll.u32 %v965, 16
      %v970 = vshrl.u32 %v965, 16
      %vm971 = vc.u32 %v963, %v967
      %v972 = vsel %vm971, 1, 0
      %v973 = vadd.s32 %v963, %v967
      %v974 = vadd.s32 %v966, %v972
      %vm975 = vc.u32 %v973, %v969
      %v976 = vsel %vm975, 1, 0
      %v977 = vadd.s32 %v973, %v969
      %v978 = vadd.s32 %v974, %v976
      %v979 = vadd.s32 %v978, %v968
      %v980 = vadd.s32 %v979, %v970
      %v981 = vshrl.u32 %v980, 8
      %v982 = vmul.u32 %v981, 328
      %v983 = vsub.s32 %v959, %v982
      %v984 = vsub.s32 0, %v983
      %v985 = vsel %vm957, %v984, %v983
      %vm986 = vcmp.lt.s32.totalorder %v357, 0
      %v987 = vsub.s32 0, %v357
      %v988 = vsel %vm986, %v987, %v357
      %v989 = vand.u32 %v988, 65535
      %v990 = vshrl.u32 %v988, 16
      %v992 = vmul.u32 %v989, 3197
      %v993 = vmul.u32 %v989, 51150
      %v994 = vmul.u32 %v990, 3197
      %v995 = vmul.u32 %v990, 51150
      %v996 = vshll.u32 %v993, 16
      %v997 = vshrl.u32 %v993, 16
      %v998 = vshll.u32 %v994, 16
      %v999 = vshrl.u32 %v994, 16
      %vm1000 = vc.u32 %v992, %v996
      %v1001 = vsel %vm1000, 1, 0
      %v1002 = vadd.s32 %v992, %v996
      %v1003 = vadd.s32 %v995, %v1001
      %vm1004 = vc.u32 %v1002, %v998
      %v1005 = vsel %vm1004, 1, 0
      %v1006 = vadd.s32 %v1002, %v998
      %v1007 = vadd.s32 %v1003, %v1005
      %v1008 = vadd.s32 %v1007, %v997
      %v1009 = vadd.s32 %v1008, %v999
      %v1010 = vshrl.u32 %v1009, 8
      %v1011 = vmul.u32 %v1010, 328
      %v1012 = vsub.s32 %v988, %v1011
      %v1013 = vsub.s32 0, %v1012
      %v1014 = vsel %vm986, %v1013, %v1012
      %vm1015 = vcmp.lt.s32.totalorder %v358, 0
      %v1016 = vsub.s32 0, %v358
      %v1017 = vsel %vm1015, %v1016, %v358
      %v1018 = vand.u32 %v1017, 65535
      %v1019 = vshrl.u32 %v1017, 16
      %v1021 = vmul.u32 %v1018, 3197
      %v1022 = vmul.u32 %v1018, 51150
      %v1023 = vmul.u32 %v1019, 3197
      %v1024 = vmul.u32 %v1019, 51150
      %v1025 = vshll.u32 %v1022, 16
      %v1026 = vshrl.u32 %v1022, 16
      %v1027 = vshll.u32 %v1023, 16
      %v1028 = vshrl.u32 %v1023, 16
      %vm1029 = vc.u32 %v1021, %v1025
      %v1030 = vsel %vm1029, 1, 0
      %v1031 = vadd.s32 %v1021, %v1025
      %v1032 = vadd.s32 %v1024, %v1030
      %vm1033 = vc.u32 %v1031, %v1027
      %v1034 = vsel %vm1033, 1, 0
      %v1035 = vadd.s32 %v1031, %v1027
      %v1036 = vadd.s32 %v1032, %v1034
      %v1037 = vadd.s32 %v1036, %v1026
      %v1038 = vadd.s32 %v1037, %v1028
      %v1039 = vshrl.u32 %v1038, 8
      %v1040 = vmul.u32 %v1039, 328
      %v1041 = vsub.s32 %v1017, %v1040
      %v1042 = vsub.s32 0, %v1041
      %v1043 = vsel %vm1015, %v1042, %v1041
      %vm1044 = vcmp.lt.s32.totalorder %v359, 0
      %v1045 = vsub.s32 0, %v359
      %v1046 = vsel %vm1044, %v1045, %v359
      %v1047 = vand.u32 %v1046, 65535
      %v1048 = vshrl.u32 %v1046, 16
      %v1050 = vmul.u32 %v1047, 3197
      %v1051 = vmul.u32 %v1047, 51150
      %v1052 = vmul.u32 %v1048, 3197
      %v1053 = vmul.u32 %v1048, 51150
      %v1054 = vshll.u32 %v1051, 16
      %v1055 = vshrl.u32 %v1051, 16
      %v1056 = vshll.u32 %v1052, 16
      %v1057 = vshrl.u32 %v1052, 16
      %vm1058 = vc.u32 %v1050, %v1054
      %v1059 = vsel %vm1058, 1, 0
      %v1060 = vadd.s32 %v1050, %v1054
      %v1061 = vadd.s32 %v1053, %v1059
      %vm1062 = vc.u32 %v1060, %v1056
      %v1063 = vsel %vm1062, 1, 0
      %v1064 = vadd.s32 %v1060, %v1056
      %v1065 = vadd.s32 %v1061, %v1063
      %v1066 = vadd.s32 %v1065, %v1055
      %v1067 = vadd.s32 %v1066, %v1057
      %v1068 = vshrl.u32 %v1067, 8
      %v1069 = vmul.u32 %v1068, 328
      %v1070 = vsub.s32 %v1046, %v1069
      %v1071 = vsub.s32 0, %v1070
      %v1072 = vsel %vm1044, %v1071, %v1070
      %vm1073 = vcmp.lt.s32.totalorder %v360, 0
      %v1074 = vsub.s32 0, %v360
      %v1075 = vsel %vm1073, %v1074, %v360
      %v1076 = vand.u32 %v1075, 65535
      %v1077 = vshrl.u32 %v1075, 16
      %v1079 = vmul.u32 %v1076, 3197
      %v1080 = vmul.u32 %v1076, 51150
      %v1081 = vmul.u32 %v1077, 3197
      %v1082 = vmul.u32 %v1077, 51150
      %v1083 = vshll.u32 %v1080, 16
      %v1084 = vshrl.u32 %v1080, 16
      %v1085 = vshll.u32 %v1081, 16
      %v1086 = vshrl.u32 %v1081, 16
      %vm1087 = vc.u32 %v1079, %v1083
      %v1088 = vsel %vm1087, 1, 0
      %v1089 = vadd.s32 %v1079, %v1083
      %v1090 = vadd.s32 %v1082, %v1088
      %vm1091 = vc.u32 %v1089, %v1085
      %v1092 = vsel %vm1091, 1, 0
      %v1093 = vadd.s32 %v1089, %v1085
      %v1094 = vadd.s32 %v1090, %v1092
      %v1095 = vadd.s32 %v1094, %v1084
      %v1096 = vadd.s32 %v1095, %v1086
      %v1097 = vshrl.u32 %v1096, 8
      %v1098 = vmul.u32 %v1097, 328
      %v1099 = vsub.s32 %v1075, %v1098
      %v1100 = vsub.s32 0, %v1099
      %v1101 = vsel %vm1073, %v1100, %v1099
      %vm1102 = vcmp.lt.s32.totalorder %v361, 0
      %v1103 = vsub.s32 0, %v361
      %v1104 = vsel %vm1102, %v1103, %v361
      %v1105 = vand.u32 %v1104, 65535
      %v1106 = vshrl.u32 %v1104, 16
      %v1108 = vmul.u32 %v1105, 3197
      %v1109 = vmul.u32 %v1105, 51150
      %v1110 = vmul.u32 %v1106, 3197
      %v1111 = vmul.u32 %v1106, 51150
      %v1112 = vshll.u32 %v1109, 16
      %v1113 = vshrl.u32 %v1109, 16
      %v1114 = vshll.u32 %v1110, 16
      %v1115 = vshrl.u32 %v1110, 16
      %vm1116 = vc.u32 %v1108, %v1112
      %v1117 = vsel %vm1116, 1, 0
      %v1118 = vadd.s32 %v1108, %v1112
      %v1119 = vadd.s32 %v1111, %v1117
      %vm1120 = vc.u32 %v1118, %v1114
      %v1121 = vsel %vm1120, 1, 0
      %v1122 = vadd.s32 %v1118, %v1114
      %v1123 = vadd.s32 %v1119, %v1121
      %v1124 = vadd.s32 %v1123, %v1113
      %v1125 = vadd.s32 %v1124, %v1115
      %v1126 = vshrl.u32 %v1125, 8
      %v1127 = vmul.u32 %v1126, 328
      %v1128 = vsub.s32 %v1104, %v1127
      %v1129 = vsub.s32 0, %v1128
      %v1130 = vsel %vm1102, %v1129, %v1128
      %vm1131 = vcmp.lt.s32.totalorder %v362, 0
      %v1132 = vsub.s32 0, %v362
      %v1133 = vsel %vm1131, %v1132, %v362
      %v1134 = vand.u32 %v1133, 65535
      %v1135 = vshrl.u32 %v1133, 16
      %v1137 = vmul.u32 %v1134, 3197
      %v1138 = vmul.u32 %v1134, 51150
      %v1139 = vmul.u32 %v1135, 3197
      %v1140 = vmul.u32 %v1135, 51150
      %v1141 = vshll.u32 %v1138, 16
      %v1142 = vshrl.u32 %v1138, 16
      %v1143 = vshll.u32 %v1139, 16
      %v1144 = vshrl.u32 %v1139, 16
      %vm1145 = vc.u32 %v1137, %v1141
      %v1146 = vsel %vm1145, 1, 0
      %v1147 = vadd.s32 %v1137, %v1141
      %v1148 = vadd.s32 %v1140, %v1146
      %vm1149 = vc.u32 %v1147, %v1143
      %v1150 = vsel %vm1149, 1, 0
      %v1151 = vadd.s32 %v1147, %v1143
      %v1152 = vadd.s32 %v1148, %v1150
      %v1153 = vadd.s32 %v1152, %v1142
      %v1154 = vadd.s32 %v1153, %v1144
      %v1155 = vshrl.u32 %v1154, 8
      %v1156 = vmul.u32 %v1155, 328
      %v1157 = vsub.s32 %v1133, %v1156
      %v1158 = vsub.s32 0, %v1157
      %v1159 = vsel %vm1131, %v1158, %v1157
      %vm1160 = vcmp.lt.s32.totalorder %v363, 0
      %v1161 = vsub.s32 0, %v363
      %v1162 = vsel %vm1160, %v1161, %v363
      %v1163 = vand.u32 %v1162, 65535
      %v1164 = vshrl.u32 %v1162, 16
      %v1166 = vmul.u32 %v1163, 3197
      %v1167 = vmul.u32 %v1163, 51150
      %v1168 = vmul.u32 %v1164, 3197
      %v1169 = vmul.u32 %v1164, 51150
      %v1170 = vshll.u32 %v1167, 16
      %v1171 = vshrl.u32 %v1167, 16
      %v1172 = vshll.u32 %v1168, 16
      %v1173 = vshrl.u32 %v1168, 16
      %vm1174 = vc.u32 %v1166, %v1170
      %v1175 = vsel %vm1174, 1, 0
      %v1176 = vadd.s32 %v1166, %v1170
      %v1177 = vadd.s32 %v1169, %v1175
      %vm1178 = vc.u32 %v1176, %v1172
      %v1179 = vsel %vm1178, 1, 0
      %v1180 = vadd.s32 %v1176, %v1172
      %v1181 = vadd.s32 %v1177, %v1179
      %v1182 = vadd.s32 %v1181, %v1171
      %v1183 = vadd.s32 %v1182, %v1173
      %v1184 = vshrl.u32 %v1183, 8
      %v1185 = vmul.u32 %v1184, 328
      %v1186 = vsub.s32 %v1162, %v1185
      %v1187 = vsub.s32 0, %v1186
      %v1188 = vsel %vm1160, %v1187, %v1186
      %vm1189 = vcmp.lt.s32.totalorder %v364, 0
      %v1190 = vsub.s32 0, %v364
      %v1191 = vsel %vm1189, %v1190, %v364
      %v1192 = vand.u32 %v1191, 65535
      %v1193 = vshrl.u32 %v1191, 16
      %v1195 = vmul.u32 %v1192, 3197
      %v1196 = vmul.u32 %v1192, 51150
      %v1197 = vmul.u32 %v1193, 3197
      %v1198 = vmul.u32 %v1193, 51150
      %v1199 = vshll.u32 %v1196, 16
      %v1200 = vshrl.u32 %v1196, 16
      %v1201 = vshll.u32 %v1197, 16
      %v1202 = vshrl.u32 %v1197, 16
      %vm1203 = vc.u32 %v1195, %v1199
      %v1204 = vsel %vm1203, 1, 0
      %v1205 = vadd.s32 %v1195, %v1199
      %v1206 = vadd.s32 %v1198, %v1204
      %vm1207 = vc.u32 %v1205, %v1201
      %v1208 = vsel %vm1207, 1, 0
      %v1209 = vadd.s32 %v1205, %v1201
      %v1210 = vadd.s32 %v1206, %v1208
      %v1211 = vadd.s32 %v1210, %v1200
      %v1212 = vadd.s32 %v1211, %v1202
      %v1213 = vshrl.u32 %v1212, 8
      %v1214 = vmul.u32 %v1213, 328
      %v1215 = vsub.s32 %v1191, %v1214
      %v1216 = vsub.s32 0, %v1215
      %v1217 = vsel %vm1189, %v1216, %v1215
      %vm1218 = vcmp.lt.s32.totalorder %v365, 0
      %v1219 = vsub.s32 0, %v365
      %v1220 = vsel %vm1218, %v1219, %v365
      %v1221 = vand.u32 %v1220, 65535
      %v1222 = vshrl.u32 %v1220, 16
      %v1224 = vmul.u32 %v1221, 3197
      %v1225 = vmul.u32 %v1221, 51150
      %v1226 = vmul.u32 %v1222, 3197
      %v1227 = vmul.u32 %v1222, 51150
      %v1228 = vshll.u32 %v1225, 16
      %v1229 = vshrl.u32 %v1225, 16
      %v1230 = vshll.u32 %v1226, 16
      %v1231 = vshrl.u32 %v1226, 16
      %vm1232 = vc.u32 %v1224, %v1228
      %v1233 = vsel %vm1232, 1, 0
      %v1234 = vadd.s32 %v1224, %v1228
      %v1235 = vadd.s32 %v1227, %v1233
      %vm1236 = vc.u32 %v1234, %v1230
      %v1237 = vsel %vm1236, 1, 0
      %v1238 = vadd.s32 %v1234, %v1230
      %v1239 = vadd.s32 %v1235, %v1237
      %v1240 = vadd.s32 %v1239, %v1229
      %v1241 = vadd.s32 %v1240, %v1231
      %v1242 = vshrl.u32 %v1241, 8
      %v1243 = vmul.u32 %v1242, 328
      %v1244 = vsub.s32 %v1220, %v1243
      %v1245 = vsub.s32 0, %v1244
      %v1246 = vsel %vm1218, %v1245, %v1244
      %vm1247 = vcmp.lt.s32.totalorder %v366, 0
      %v1248 = vsub.s32 0, %v366
      %v1249 = vsel %vm1247, %v1248, %v366
      %v1250 = vand.u32 %v1249, 65535
      %v1251 = vshrl.u32 %v1249, 16
      %v1253 = vmul.u32 %v1250, 3197
      %v1254 = vmul.u32 %v1250, 51150
      %v1255 = vmul.u32 %v1251, 3197
      %v1256 = vmul.u32 %v1251, 51150
      %v1257 = vshll.u32 %v1254, 16
      %v1258 = vshrl.u32 %v1254, 16
      %v1259 = vshll.u32 %v1255, 16
      %v1260 = vshrl.u32 %v1255, 16
      %vm1261 = vc.u32 %v1253, %v1257
      %v1262 = vsel %vm1261, 1, 0
      %v1263 = vadd.s32 %v1253, %v1257
      %v1264 = vadd.s32 %v1256, %v1262
      %vm1265 = vc.u32 %v1263, %v1259
      %v1266 = vsel %vm1265, 1, 0
      %v1267 = vadd.s32 %v1263, %v1259
      %v1268 = vadd.s32 %v1264, %v1266
      %v1269 = vadd.s32 %v1268, %v1258
      %v1270 = vadd.s32 %v1269, %v1260
      %v1271 = vshrl.u32 %v1270, 8
      %v1272 = vmul.u32 %v1271, 328
      %v1273 = vsub.s32 %v1249, %v1272
      %v1274 = vsub.s32 0, %v1273
      %v1275 = vsel %vm1247, %v1274, %v1273
      %vm1276 = vcmp.lt.s32.totalorder %v367, 0
      %v1277 = vsub.s32 0, %v367
      %v1278 = vsel %vm1276, %v1277, %v367
      %v1279 = vand.u32 %v1278, 65535
      %v1280 = vshrl.u32 %v1278, 16
      %v1282 = vmul.u32 %v1279, 3197
      %v1283 = vmul.u32 %v1279, 51150
      %v1284 = vmul.u32 %v1280, 3197
      %v1285 = vmul.u32 %v1280, 51150
      %v1286 = vshll.u32 %v1283, 16
      %v1287 = vshrl.u32 %v1283, 16
      %v1288 = vshll.u32 %v1284, 16
      %v1289 = vshrl.u32 %v1284, 16
      %vm1290 = vc.u32 %v1282, %v1286
      %v1291 = vsel %vm1290, 1, 0
      %v1292 = vadd.s32 %v1282, %v1286
      %v1293 = vadd.s32 %v1285, %v1291
      %vm1294 = vc.u32 %v1292, %v1288
      %v1295 = vsel %vm1294, 1, 0
      %v1296 = vadd.s32 %v1292, %v1288
      %v1297 = vadd.s32 %v1293, %v1295
      %v1298 = vadd.s32 %v1297, %v1287
      %v1299 = vadd.s32 %v1298, %v1289
      %v1300 = vshrl.u32 %v1299, 8
      %v1301 = vmul.u32 %v1300, 328
      %v1302 = vsub.s32 %v1278, %v1301
      %v1303 = vsub.s32 0, %v1302
      %v1304 = vsel %vm1276, %v1303, %v1302
      %vm1305 = vcmp.lt.s32.totalorder %v368, 0
      %v1306 = vsub.s32 0, %v368
      %v1307 = vsel %vm1305, %v1306, %v368
      %v1308 = vand.u32 %v1307, 65535
      %v1309 = vshrl.u32 %v1307, 16
      %v1311 = vmul.u32 %v1308, 3197
      %v1312 = vmul.u32 %v1308, 51150
      %v1313 = vmul.u32 %v1309, 3197
      %v1314 = vmul.u32 %v1309, 51150
      %v1315 = vshll.u32 %v1312, 16
      %v1316 = vshrl.u32 %v1312, 16
      %v1317 = vshll.u32 %v1313, 16
      %v1318 = vshrl.u32 %v1313, 16
      %vm1319 = vc.u32 %v1311, %v1315
      %v1320 = vsel %vm1319, 1, 0
      %v1321 = vadd.s32 %v1311, %v1315
      %v1322 = vadd.s32 %v1314, %v1320
      %vm1323 = vc.u32 %v1321, %v1317
      %v1324 = vsel %vm1323, 1, 0
      %v1325 = vadd.s32 %v1321, %v1317
      %v1326 = vadd.s32 %v1322, %v1324
      %v1327 = vadd.s32 %v1326, %v1316
      %v1328 = vadd.s32 %v1327, %v1318
      %v1329 = vshrl.u32 %v1328, 8
      %v1330 = vmul.u32 %v1329, 328
      %v1331 = vsub.s32 %v1307, %v1330
      %v1332 = vsub.s32 0, %v1331
      %v1333 = vsel %vm1305, %v1332, %v1331
      %vm1334 = vcmp.lt.s32.totalorder %v369, 0
      %v1335 = vsub.s32 0, %v369
      %v1336 = vsel %vm1334, %v1335, %v369
      %v1337 = vand.u32 %v1336, 65535
      %v1338 = vshrl.u32 %v1336, 16
      %v1340 = vmul.u32 %v1337, 3197
      %v1341 = vmul.u32 %v1337, 51150
      %v1342 = vmul.u32 %v1338, 3197
      %v1343 = vmul.u32 %v1338, 51150
      %v1344 = vshll.u32 %v1341, 16
      %v1345 = vshrl.u32 %v1341, 16
      %v1346 = vshll.u32 %v1342, 16
      %v1347 = vshrl.u32 %v1342, 16
      %vm1348 = vc.u32 %v1340, %v1344
      %v1349 = vsel %vm1348, 1, 0
      %v1350 = vadd.s32 %v1340, %v1344
      %v1351 = vadd.s32 %v1343, %v1349
      %vm1352 = vc.u32 %v1350, %v1346
      %v1353 = vsel %vm1352, 1, 0
      %v1354 = vadd.s32 %v1350, %v1346
      %v1355 = vadd.s32 %v1351, %v1353
      %v1356 = vadd.s32 %v1355, %v1345
      %v1357 = vadd.s32 %v1356, %v1347
      %v1358 = vshrl.u32 %v1357, 8
      %v1359 = vmul.u32 %v1358, 328
      %v1360 = vsub.s32 %v1336, %v1359
      %v1361 = vsub.s32 0, %v1360
      %v1362 = vsel %vm1334, %v1361, %v1360
      %vm1363 = vcmp.lt.s32.totalorder %v370, 0
      %v1364 = vsub.s32 0, %v370
      %v1365 = vsel %vm1363, %v1364, %v370
      %v1366 = vand.u32 %v1365, 65535
      %v1367 = vshrl.u32 %v1365, 16
      %v1369 = vmul.u32 %v1366, 3197
      %v1370 = vmul.u32 %v1366, 51150
      %v1371 = vmul.u32 %v1367, 3197
      %v1372 = vmul.u32 %v1367, 51150
      %v1373 = vshll.u32 %v1370, 16
      %v1374 = vshrl.u32 %v1370, 16
      %v1375 = vshll.u32 %v1371, 16
      %v1376 = vshrl.u32 %v1371, 16
      %vm1377 = vc.u32 %v1369, %v1373
      %v1378 = vsel %vm1377, 1, 0
      %v1379 = vadd.s32 %v1369, %v1373
      %v1380 = vadd.s32 %v1372, %v1378
      %vm1381 = vc.u32 %v1379, %v1375
      %v1382 = vsel %vm1381, 1, 0
      %v1383 = vadd.s32 %v1379, %v1375
      %v1384 = vadd.s32 %v1380, %v1382
      %v1385 = vadd.s32 %v1384, %v1374
      %v1386 = vadd.s32 %v1385, %v1376
      %v1387 = vshrl.u32 %v1386, 8
      %v1388 = vmul.u32 %v1387, 328
      %v1389 = vsub.s32 %v1365, %v1388
      %v1390 = vsub.s32 0, %v1389
      %v1391 = vsel %vm1363, %v1390, %v1389
      %vm1392 = vcmp.lt.s32.totalorder %v371, 0
      %v1393 = vsub.s32 0, %v371
      %v1394 = vsel %vm1392, %v1393, %v371
      %v1395 = vand.u32 %v1394, 65535
      %v1396 = vshrl.u32 %v1394, 16
      %v1398 = vmul.u32 %v1395, 3197
      %v1399 = vmul.u32 %v1395, 51150
      %v1400 = vmul.u32 %v1396, 3197
      %v1401 = vmul.u32 %v1396, 51150
      %v1402 = vshll.u32 %v1399, 16
      %v1403 = vshrl.u32 %v1399, 16
      %v1404 = vshll.u32 %v1400, 16
      %v1405 = vshrl.u32 %v1400, 16
      %vm1406 = vc.u32 %v1398, %v1402
      %v1407 = vsel %vm1406, 1, 0
      %v1408 = vadd.s32 %v1398, %v1402
      %v1409 = vadd.s32 %v1401, %v1407
      %vm1410 = vc.u32 %v1408, %v1404
      %v1411 = vsel %vm1410, 1, 0
      %v1412 = vadd.s32 %v1408, %v1404
      %v1413 = vadd.s32 %v1409, %v1411
      %v1414 = vadd.s32 %v1413, %v1403
      %v1415 = vadd.s32 %v1414, %v1405
      %v1416 = vshrl.u32 %v1415, 8
      %v1417 = vmul.u32 %v1416, 328
      %v1418 = vsub.s32 %v1394, %v1417
      %v1419 = vsub.s32 0, %v1418
      %v1420 = vsel %vm1392, %v1419, %v1418
      %vm1421 = vcmp.lt.s32.totalorder %v372, 0
      %v1422 = vsub.s32 0, %v372
      %v1423 = vsel %vm1421, %v1422, %v372
      %v1424 = vand.u32 %v1423, 65535
      %v1425 = vshrl.u32 %v1423, 16
      %v1427 = vmul.u32 %v1424, 3197
      %v1428 = vmul.u32 %v1424, 51150
      %v1429 = vmul.u32 %v1425, 3197
      %v1430 = vmul.u32 %v1425, 51150
      %v1431 = vshll.u32 %v1428, 16
      %v1432 = vshrl.u32 %v1428, 16
      %v1433 = vshll.u32 %v1429, 16
      %v1434 = vshrl.u32 %v1429, 16
      %vm1435 = vc.u32 %v1427, %v1431
      %v1436 = vsel %vm1435, 1, 0
      %v1437 = vadd.s32 %v1427, %v1431
      %v1438 = vadd.s32 %v1430, %v1436
      %vm1439 = vc.u32 %v1437, %v1433
      %v1440 = vsel %vm1439, 1, 0
      %v1441 = vadd.s32 %v1437, %v1433
      %v1442 = vadd.s32 %v1438, %v1440
      %v1443 = vadd.s32 %v1442, %v1432
      %v1444 = vadd.s32 %v1443, %v1434
      %v1445 = vshrl.u32 %v1444, 8
      %v1446 = vmul.u32 %v1445, 328
      %v1447 = vsub.s32 %v1423, %v1446
      %v1448 = vsub.s32 0, %v1447
      %v1449 = vsel %vm1421, %v1448, %v1447
      %vm1450 = vcmp.lt.s32.totalorder %v373, 0
      %v1451 = vsub.s32 0, %v373
      %v1452 = vsel %vm1450, %v1451, %v373
      %v1453 = vand.u32 %v1452, 65535
      %v1454 = vshrl.u32 %v1452, 16
      %v1456 = vmul.u32 %v1453, 3197
      %v1457 = vmul.u32 %v1453, 51150
      %v1458 = vmul.u32 %v1454, 3197
      %v1459 = vmul.u32 %v1454, 51150
      %v1460 = vshll.u32 %v1457, 16
      %v1461 = vshrl.u32 %v1457, 16
      %v1462 = vshll.u32 %v1458, 16
      %v1463 = vshrl.u32 %v1458, 16
      %vm1464 = vc.u32 %v1456, %v1460
      %v1465 = vsel %vm1464, 1, 0
      %v1466 = vadd.s32 %v1456, %v1460
      %v1467 = vadd.s32 %v1459, %v1465
      %vm1468 = vc.u32 %v1466, %v1462
      %v1469 = vsel %vm1468, 1, 0
      %v1470 = vadd.s32 %v1466, %v1462
      %v1471 = vadd.s32 %v1467, %v1469
      %v1472 = vadd.s32 %v1471, %v1461
      %v1473 = vadd.s32 %v1472, %v1463
      %v1474 = vshrl.u32 %v1473, 8
      %v1475 = vmul.u32 %v1474, 328
      %v1476 = vsub.s32 %v1452, %v1475
      %v1477 = vsub.s32 0, %v1476
      %v1478 = vsel %vm1450, %v1477, %v1476
      %vm1479 = vcmp.lt.s32.totalorder %v374, 0
      %v1480 = vsub.s32 0, %v374
      %v1481 = vsel %vm1479, %v1480, %v374
      %v1482 = vand.u32 %v1481, 65535
      %v1483 = vshrl.u32 %v1481, 16
      %v1485 = vmul.u32 %v1482, 3197
      %v1486 = vmul.u32 %v1482, 51150
      %v1487 = vmul.u32 %v1483, 3197
      %v1488 = vmul.u32 %v1483, 51150
      %v1489 = vshll.u32 %v1486, 16
      %v1490 = vshrl.u32 %v1486, 16
      %v1491 = vshll.u32 %v1487, 16
      %v1492 = vshrl.u32 %v1487, 16
      %vm1493 = vc.u32 %v1485, %v1489
      %v1494 = vsel %vm1493, 1, 0
      %v1495 = vadd.s32 %v1485, %v1489
      %v1496 = vadd.s32 %v1488, %v1494
      %vm1497 = vc.u32 %v1495, %v1491
      %v1498 = vsel %vm1497, 1, 0
      %v1499 = vadd.s32 %v1495, %v1491
      %v1500 = vadd.s32 %v1496, %v1498
      %v1501 = vadd.s32 %v1500, %v1490
      %v1502 = vadd.s32 %v1501, %v1492
      %v1503 = vshrl.u32 %v1502, 8
      %v1504 = vmul.u32 %v1503, 328
      %v1505 = vsub.s32 %v1481, %v1504
      %v1506 = vsub.s32 0, %v1505
      %v1507 = vsel %vm1479, %v1506, %v1505
      %vm1508 = vcmp.lt.s32.totalorder %v375, 0
      %v1509 = vsub.s32 0, %v375
      %v1510 = vsel %vm1508, %v1509, %v375
      %v1511 = vand.u32 %v1510, 65535
      %v1512 = vshrl.u32 %v1510, 16
      %v1514 = vmul.u32 %v1511, 3197
      %v1515 = vmul.u32 %v1511, 51150
      %v1516 = vmul.u32 %v1512, 3197
      %v1517 = vmul.u32 %v1512, 51150
      %v1518 = vshll.u32 %v1515, 16
      %v1519 = vshrl.u32 %v1515, 16
      %v1520 = vshll.u32 %v1516, 16
      %v1521 = vshrl.u32 %v1516, 16
      %vm1522 = vc.u32 %v1514, %v1518
      %v1523 = vsel %vm1522, 1, 0
      %v1524 = vadd.s32 %v1514, %v1518
      %v1525 = vadd.s32 %v1517, %v1523
      %vm1526 = vc.u32 %v1524, %v1520
      %v1527 = vsel %vm1526, 1, 0
      %v1528 = vadd.s32 %v1524, %v1520
      %v1529 = vadd.s32 %v1525, %v1527
      %v1530 = vadd.s32 %v1529, %v1519
      %v1531 = vadd.s32 %v1530, %v1521
      %v1532 = vshrl.u32 %v1531, 8
      %v1533 = vmul.u32 %v1532, 328
      %v1534 = vsub.s32 %v1510, %v1533
      %v1535 = vsub.s32 0, %v1534
      %v1536 = vsel %vm1508, %v1535, %v1534
      %vm1537 = vcmp.lt.s32.totalorder %v376, 0
      %v1538 = vsub.s32 0, %v376
      %v1539 = vsel %vm1537, %v1538, %v376
      %v1540 = vand.u32 %v1539, 65535
      %v1541 = vshrl.u32 %v1539, 16
      %v1543 = vmul.u32 %v1540, 3197
      %v1544 = vmul.u32 %v1540, 51150
      %v1545 = vmul.u32 %v1541, 3197
      %v1546 = vmul.u32 %v1541, 51150
      %v1547 = vshll.u32 %v1544, 16
      %v1548 = vshrl.u32 %v1544, 16
      %v1549 = vshll.u32 %v1545, 16
      %v1550 = vshrl.u32 %v1545, 16
      %vm1551 = vc.u32 %v1543, %v1547
      %v1552 = vsel %vm1551, 1, 0
      %v1553 = vadd.s32 %v1543, %v1547
      %v1554 = vadd.s32 %v1546, %v1552
      %vm1555 = vc.u32 %v1553, %v1549
      %v1556 = vsel %vm1555, 1, 0
      %v1557 = vadd.s32 %v1553, %v1549
      %v1558 = vadd.s32 %v1554, %v1556
      %v1559 = vadd.s32 %v1558, %v1548
      %v1560 = vadd.s32 %v1559, %v1550
      %v1561 = vshrl.u32 %v1560, 8
      %v1562 = vmul.u32 %v1561, 328
      %v1563 = vsub.s32 %v1539, %v1562
      %v1564 = vsub.s32 0, %v1563
      %v1565 = vsel %vm1537, %v1564, %v1563
      %vm1566 = vcmp.ne.s32.totalorder %v405, 0
      %vm1567 = vcmp.ne.s32.totalorder %v434, 0
      %vm1568 = vcmp.ne.s32.totalorder %v463, 0
      %vm1569 = vcmp.ne.s32.totalorder %v492, 0
      %vm1570 = vcmp.ne.s32.totalorder %v521, 0
      %vm1571 = vcmp.ne.s32.totalorder %v550, 0
      %vm1572 = vcmp.ne.s32.totalorder %v579, 0
      %vm1573 = vcmp.ne.s32.totalorder %v608, 0
      %vm1574 = vcmp.ne.s32.totalorder %v637, 0
      %vm1575 = vcmp.ne.s32.totalorder %v666, 0
      %vm1576 = vcmp.ne.s32.totalorder %v695, 0
      %vm1577 = vcmp.ne.s32.totalorder %v724, 0
      %vm1578 = vcmp.ne.s32.totalorder %v753, 0
      %vm1579 = vcmp.ne.s32.totalorder %v782, 0
      %vm1580 = vcmp.ne.s32.totalorder %v811, 0
      %vm1581 = vcmp.ne.s32.totalorder %v840, 0
      %vm1582 = vcmp.ne.s32.totalorder %v869, 0
      %vm1583 = vcmp.ne.s32.totalorder %v898, 0
      %vm1584 = vcmp.ne.s32.totalorder %v927, 0
      %vm1585 = vcmp.ne.s32.totalorder %v956, 0
      %vm1586 = vcmp.ne.s32.totalorder %v985, 0
      %vm1587 = vcmp.ne.s32.totalorder %v1014, 0
      %vm1588 = vcmp.ne.s32.totalorder %v1043, 0
      %vm1589 = vcmp.ne.s32.totalorder %v1072, 0
      %vm1590 = vcmp.ne.s32.totalorder %v1101, 0
      %vm1591 = vcmp.ne.s32.totalorder %v1130, 0
      %vm1592 = vcmp.ne.s32.totalorder %v1159, 0
      %vm1593 = vcmp.ne.s32.totalorder %v1188, 0
      %vm1594 = vcmp.ne.s32.totalorder %v1217, 0
      %vm1595 = vcmp.ne.s32.totalorder %v1246, 0
      %vm1596 = vcmp.ne.s32.totalorder %v1275, 0
      %vm1597 = vcmp.ne.s32.totalorder %v1304, 0
      %vm1598 = vcmp.ne.s32.totalorder %v1333, 0
      %vm1599 = vcmp.ne.s32.totalorder %v1362, 0
      %vm1600 = vcmp.ne.s32.totalorder %v1391, 0
      %vm1601 = vcmp.ne.s32.totalorder %v1420, 0
      %vm1602 = vcmp.ne.s32.totalorder %v1449, 0
      %vm1603 = vcmp.ne.s32.totalorder %v1478, 0
      %vm1604 = vcmp.ne.s32.totalorder %v1507, 0
      %vm1605 = vcmp.ne.s32.totalorder %v1536, 0
      %vm1606 = vcmp.ne.s32.totalorder %v1565, 0
      %vm1607 = vcmp.lt.s32.totalorder %v405, 0
      %vm1608 = vcmp.lt.s32.totalorder %v434, 0
      %vm1609 = vcmp.lt.s32.totalorder %v463, 0
      %vm1610 = vcmp.lt.s32.totalorder %v492, 0
      %vm1611 = vcmp.lt.s32.totalorder %v521, 0
      %vm1612 = vcmp.lt.s32.totalorder %v550, 0
      %vm1613 = vcmp.lt.s32.totalorder %v579, 0
      %vm1614 = vcmp.lt.s32.totalorder %v608, 0
      %vm1615 = vcmp.lt.s32.totalorder %v637, 0
      %vm1616 = vcmp.lt.s32.totalorder %v666, 0
      %vm1617 = vcmp.lt.s32.totalorder %v695, 0
      %vm1618 = vcmp.lt.s32.totalorder %v724, 0
      %vm1619 = vcmp.lt.s32.totalorder %v753, 0
      %vm1620 = vcmp.lt.s32.totalorder %v782, 0
      %vm1621 = vcmp.lt.s32.totalorder %v811, 0
      %vm1622 = vcmp.lt.s32.totalorder %v840, 0
      %vm1623 = vcmp.lt.s32.totalorder %v869, 0
      %vm1624 = vcmp.lt.s32.totalorder %v898, 0
      %vm1625 = vcmp.lt.s32.totalorder %v927, 0
      %vm1626 = vcmp.lt.s32.totalorder %v956, 0
      %vm1627 = vcmp.lt.s32.totalorder %v985, 0
      %vm1628 = vcmp.lt.s32.totalorder %v1014, 0
      %vm1629 = vcmp.lt.s32.totalorder %v1043, 0
      %vm1630 = vcmp.lt.s32.totalorder %v1072, 0
      %vm1631 = vcmp.lt.s32.totalorder %v1101, 0
      %vm1632 = vcmp.lt.s32.totalorder %v1130, 0
      %vm1633 = vcmp.lt.s32.totalorder %v1159, 0
      %vm1634 = vcmp.lt.s32.totalorder %v1188, 0
      %vm1635 = vcmp.lt.s32.totalorder %v1217, 0
      %vm1636 = vcmp.lt.s32.totalorder %v1246, 0
      %vm1637 = vcmp.lt.s32.totalorder %v1275, 0
      %vm1638 = vcmp.lt.s32.totalorder %v1304, 0
      %vm1639 = vcmp.lt.s32.totalorder %v1333, 0
      %vm1640 = vcmp.lt.s32.totalorder %v1362, 0
      %vm1641 = vcmp.lt.s32.totalorder %v1391, 0
      %vm1642 = vcmp.lt.s32.totalorder %v1420, 0
      %vm1643 = vcmp.lt.s32.totalorder %v1449, 0
      %vm1644 = vcmp.lt.s32.totalorder %v1478, 0
      %vm1645 = vcmp.lt.s32.totalorder %v1507, 0
      %vm1646 = vcmp.lt.s32.totalorder %v1536, 0
      %vm1647 = vcmp.lt.s32.totalorder %v1565, 0
      %vm1648 = vmand %vm1607, %vm1566
      %vm1649 = vmand %vm1608, %vm1567
      %vm1650 = vmand %vm1609, %vm1568
      %vm1651 = vmand %vm1610, %vm1569
      %vm1652 = vmand %vm1611, %vm1570
      %vm1653 = vmand %vm1612, %vm1571
      %vm1654 = vmand %vm1613, %vm1572
      %vm1655 = vmand %vm1614, %vm1573
      %vm1656 = vmand %vm1615, %vm1574
      %vm1657 = vmand %vm1616, %vm1575
      %vm1658 = vmand %vm1617, %vm1576
      %vm1659 = vmand %vm1618, %vm1577
      %vm1660 = vmand %vm1619, %vm1578
      %vm1661 = vmand %vm1620, %vm1579
      %vm1662 = vmand %vm1621, %vm1580
      %vm1663 = vmand %vm1622, %vm1581
      %vm1664 = vmand %vm1623, %vm1582
      %vm1665 = vmand %vm1624, %vm1583
      %vm1666 = vmand %vm1625, %vm1584
      %vm1667 = vmand %vm1626, %vm1585
      %vm1668 = vmand %vm1627, %vm1586
      %vm1669 = vmand %vm1628, %vm1587
      %vm1670 = vmand %vm1629, %vm1588
      %vm1671 = vmand %vm1630, %vm1589
      %vm1672 = vmand %vm1631, %vm1590
      %vm1673 = vmand %vm1632, %vm1591
      %vm1674 = vmand %vm1633, %vm1592
      %vm1675 = vmand %vm1634, %vm1593
      %vm1676 = vmand %vm1635, %vm1594
      %vm1677 = vmand %vm1636, %vm1595
      %vm1678 = vmand %vm1637, %vm1596
      %vm1679 = vmand %vm1638, %vm1597
      %vm1680 = vmand %vm1639, %vm1598
      %vm1681 = vmand %vm1640, %vm1599
      %vm1682 = vmand %vm1641, %vm1600
      %vm1683 = vmand %vm1642, %vm1601
      %vm1684 = vmand %vm1643, %vm1602
      %vm1685 = vmand %vm1644, %vm1603
      %vm1686 = vmand %vm1645, %vm1604
      %vm1687 = vmand %vm1646, %vm1605
      %vm1688 = vmand %vm1647, %vm1606
      %v1689 = vadd.s32 %v405, 328
      %v1690 = vadd.s32 %v434, 328
      %v1691 = vadd.s32 %v463, 328
      %v1692 = vadd.s32 %v492, 328
      %v1693 = vadd.s32 %v521, 328
      %v1694 = vadd.s32 %v550, 328
      %v1695 = vadd.s32 %v579, 328
      %v1696 = vadd.s32 %v608, 328
      %v1697 = vadd.s32 %v637, 328
      %v1698 = vadd.s32 %v666, 328
      %v1699 = vadd.s32 %v695, 328
      %v1700 = vadd.s32 %v724, 328
      %v1701 = vadd.s32 %v753, 328
      %v1702 = vadd.s32 %v782, 328
      %v1703 = vadd.s32 %v811, 328
      %v1704 = vadd.s32 %v840, 328
      %v1705 = vadd.s32 %v869, 328
      %v1706 = vadd.s32 %v898, 328
      %v1707 = vadd.s32 %v927, 328
      %v1708 = vadd.s32 %v956, 328
      %v1709 = vadd.s32 %v985, 328
      %v1710 = vadd.s32 %v1014, 328
      %v1711 = vadd.s32 %v1043, 328
      %v1712 = vadd.s32 %v1072, 328
      %v1713 = vadd.s32 %v1101, 328
      %v1714 = vadd.s32 %v1130, 328
      %v1715 = vadd.s32 %v1159, 328
      %v1716 = vadd.s32 %v1188, 328
      %v1717 = vadd.s32 %v1217, 328
      %v1718 = vadd.s32 %v1246, 328
      %v1719 = vadd.s32 %v1275, 328
      %v1720 = vadd.s32 %v1304, 328
      %v1721 = vadd.s32 %v1333, 328
      %v1722 = vadd.s32 %v1362, 328
      %v1723 = vadd.s32 %v1391, 328
      %v1724 = vadd.s32 %v1420, 328
      %v1725 = vadd.s32 %v1449, 328
      %v1726 = vadd.s32 %v1478, 328
      %v1727 = vadd.s32 %v1507, 328
      %v1728 = vadd.s32 %v1536, 328
      %v1729 = vadd.s32 %v1565, 328
      %v1730 = vsel %vm1648, %v1689, %v405
      %v1731 = vsel %vm1649, %v1690, %v434
      %v1732 = vsel %vm1650, %v1691, %v463
      %v1733 = vsel %vm1651, %v1692, %v492
      %v1734 = vsel %vm1652, %v1693, %v521
      %v1735 = vsel %vm1653, %v1694, %v550
      %v1736 = vsel %vm1654, %v1695, %v579
      %v1737 = vsel %vm1655, %v1696, %v608
      %v1738 = vsel %vm1656, %v1697, %v637
      %v1739 = vsel %vm1657, %v1698, %v666
      %v1740 = vsel %vm1658, %v1699, %v695
      %v1741 = vsel %vm1659, %v1700, %v724
      %v1742 = vsel %vm1660, %v1701, %v753
      %v1743 = vsel %vm1661, %v1702, %v782
      %v1744 = vsel %vm1662, %v1703, %v811
      %v1745 = vsel %vm1663, %v1704, %v840
      %v1746 = vsel %vm1664, %v1705, %v869
      %v1747 = vsel %vm1665, %v1706, %v898
      %v1748 = vsel %vm1666, %v1707, %v927
      %v1749 = vsel %vm1667, %v1708, %v956
      %v1750 = vsel %vm1668, %v1709, %v985
      %v1751 = vsel %vm1669, %v1710, %v1014
      %v1752 = vsel %vm1670, %v1711, %v1043
      %v1753 = vsel %vm1671, %v1712, %v1072
      %v1754 = vsel %vm1672, %v1713, %v1101
      %v1755 = vsel %vm1673, %v1714, %v1130
      %v1756 = vsel %vm1674, %v1715, %v1159
      %v1757 = vsel %vm1675, %v1716, %v1188
      %v1758 = vsel %vm1676, %v1717, %v1217
      %v1759 = vsel %vm1677, %v1718, %v1246
      %v1760 = vsel %vm1678, %v1719, %v1275
      %v1761 = vsel %vm1679, %v1720, %v1304
      %v1762 = vsel %vm1680, %v1721, %v1333
      %v1763 = vsel %vm1681, %v1722, %v1362
      %v1764 = vsel %vm1682, %v1723, %v1391
      %v1765 = vsel %vm1683, %v1724, %v1420
      %v1766 = vsel %vm1684, %v1725, %v1449
      %v1767 = vsel %vm1685, %v1726, %v1478
      %v1768 = vsel %vm1686, %v1727, %v1507
      %v1769 = vsel %vm1687, %v1728, %v1536
      %v1770 = vsel %vm1688, %v1729, %v1565
      %vm1771 = vcmp.lt.s32.totalorder %v1730, 0
      %v1772 = vsub.s32 0, %v1730
      %v1773 = vsel %vm1771, %v1772, %v1730
      %v1774 = vand.u32 %v1773, 65535
      %v1775 = vshrl.u32 %v1773, 16
      %v1777 = vmul.u32 %v1774, 14564
      %v1778 = vmul.u32 %v1774, 58254
      %v1779 = vmul.u32 %v1775, 14564
      %v1780 = vmul.u32 %v1775, 58254
      %v1781 = vshll.u32 %v1778, 16
      %v1782 = vshrl.u32 %v1778, 16
      %v1783 = vshll.u32 %v1779, 16
      %v1784 = vshrl.u32 %v1779, 16
      %vm1785 = vc.u32 %v1777, %v1781
      %v1786 = vsel %vm1785, 1, 0
      %v1787 = vadd.s32 %v1777, %v1781
      %v1788 = vadd.s32 %v1780, %v1786
      %vm1789 = vc.u32 %v1787, %v1783
      %v1790 = vsel %vm1789, 1, 0
      %v1791 = vadd.s32 %v1787, %v1783
      %v1792 = vadd.s32 %v1788, %v1790
      %v1793 = vadd.s32 %v1792, %v1782
      %v1794 = vadd.s32 %v1793, %v1784
      %v1795 = vshrl.u32 %v1794, 4
      %v1796 = vmul.u32 %v1795, 18
      %v1797 = vsub.s32 %v1773, %v1796
      %v1798 = vsub.s32 0, %v1797
      %v1799 = vsel %vm1771, %v1798, %v1797
      %vm1800 = vcmp.lt.s32.totalorder %v1731, 0
      %v1801 = vsub.s32 0, %v1731
      %v1802 = vsel %vm1800, %v1801, %v1731
      %v1803 = vand.u32 %v1802, 65535
      %v1804 = vshrl.u32 %v1802, 16
      %v1806 = vmul.u32 %v1803, 14564
      %v1807 = vmul.u32 %v1803, 58254
      %v1808 = vmul.u32 %v1804, 14564
      %v1809 = vmul.u32 %v1804, 58254
      %v1810 = vshll.u32 %v1807, 16
      %v1811 = vshrl.u32 %v1807, 16
      %v1812 = vshll.u32 %v1808, 16
      %v1813 = vshrl.u32 %v1808, 16
      %vm1814 = vc.u32 %v1806, %v1810
      %v1815 = vsel %vm1814, 1, 0
      %v1816 = vadd.s32 %v1806, %v1810
      %v1817 = vadd.s32 %v1809, %v1815
      %vm1818 = vc.u32 %v1816, %v1812
      %v1819 = vsel %vm1818, 1, 0
      %v1820 = vadd.s32 %v1816, %v1812
      %v1821 = vadd.s32 %v1817, %v1819
      %v1822 = vadd.s32 %v1821, %v1811
      %v1823 = vadd.s32 %v1822, %v1813
      %v1824 = vshrl.u32 %v1823, 4
      %v1825 = vmul.u32 %v1824, 18
      %v1826 = vsub.s32 %v1802, %v1825
      %v1827 = vsub.s32 0, %v1826
      %v1828 = vsel %vm1800, %v1827, %v1826
      %vm1829 = vcmp.lt.s32.totalorder %v1732, 0
      %v1830 = vsub.s32 0, %v1732
      %v1831 = vsel %vm1829, %v1830, %v1732
      %v1832 = vand.u32 %v1831, 65535
      %v1833 = vshrl.u32 %v1831, 16
      %v1835 = vmul.u32 %v1832, 14564
      %v1836 = vmul.u32 %v1832, 58254
      %v1837 = vmul.u32 %v1833, 14564
      %v1838 = vmul.u32 %v1833, 58254
      %v1839 = vshll.u32 %v1836, 16
      %v1840 = vshrl.u32 %v1836, 16
      %v1841 = vshll.u32 %v1837, 16
      %v1842 = vshrl.u32 %v1837, 16
      %vm1843 = vc.u32 %v1835, %v1839
      %v1844 = vsel %vm1843, 1, 0
      %v1845 = vadd.s32 %v1835, %v1839
      %v1846 = vadd.s32 %v1838, %v1844
      %vm1847 = vc.u32 %v1845, %v1841
      %v1848 = vsel %vm1847, 1, 0
      %v1849 = vadd.s32 %v1845, %v1841
      %v1850 = vadd.s32 %v1846, %v1848
      %v1851 = vadd.s32 %v1850, %v1840
      %v1852 = vadd.s32 %v1851, %v1842
      %v1853 = vshrl.u32 %v1852, 4
      %v1854 = vmul.u32 %v1853, 18
      %v1855 = vsub.s32 %v1831, %v1854
      %v1856 = vsub.s32 0, %v1855
      %v1857 = vsel %vm1829, %v1856, %v1855
      %vm1858 = vcmp.lt.s32.totalorder %v1733, 0
      %v1859 = vsub.s32 0, %v1733
      %v1860 = vsel %vm1858, %v1859, %v1733
      %v1861 = vand.u32 %v1860, 65535
      %v1862 = vshrl.u32 %v1860, 16
      %v1864 = vmul.u32 %v1861, 14564
      %v1865 = vmul.u32 %v1861, 58254
      %v1866 = vmul.u32 %v1862, 14564
      %v1867 = vmul.u32 %v1862, 58254
      %v1868 = vshll.u32 %v1865, 16
      %v1869 = vshrl.u32 %v1865, 16
      %v1870 = vshll.u32 %v1866, 16
      %v1871 = vshrl.u32 %v1866, 16
      %vm1872 = vc.u32 %v1864, %v1868
      %v1873 = vsel %vm1872, 1, 0
      %v1874 = vadd.s32 %v1864, %v1868
      %v1875 = vadd.s32 %v1867, %v1873
      %vm1876 = vc.u32 %v1874, %v1870
      %v1877 = vsel %vm1876, 1, 0
      %v1878 = vadd.s32 %v1874, %v1870
      %v1879 = vadd.s32 %v1875, %v1877
      %v1880 = vadd.s32 %v1879, %v1869
      %v1881 = vadd.s32 %v1880, %v1871
      %v1882 = vshrl.u32 %v1881, 4
      %v1883 = vmul.u32 %v1882, 18
      %v1884 = vsub.s32 %v1860, %v1883
      %v1885 = vsub.s32 0, %v1884
      %v1886 = vsel %vm1858, %v1885, %v1884
      %vm1887 = vcmp.lt.s32.totalorder %v1734, 0
      %v1888 = vsub.s32 0, %v1734
      %v1889 = vsel %vm1887, %v1888, %v1734
      %v1890 = vand.u32 %v1889, 65535
      %v1891 = vshrl.u32 %v1889, 16
      %v1893 = vmul.u32 %v1890, 14564
      %v1894 = vmul.u32 %v1890, 58254
      %v1895 = vmul.u32 %v1891, 14564
      %v1896 = vmul.u32 %v1891, 58254
      %v1897 = vshll.u32 %v1894, 16
      %v1898 = vshrl.u32 %v1894, 16
      %v1899 = vshll.u32 %v1895, 16
      %v1900 = vshrl.u32 %v1895, 16
      %vm1901 = vc.u32 %v1893, %v1897
      %v1902 = vsel %vm1901, 1, 0
      %v1903 = vadd.s32 %v1893, %v1897
      %v1904 = vadd.s32 %v1896, %v1902
      %vm1905 = vc.u32 %v1903, %v1899
      %v1906 = vsel %vm1905, 1, 0
      %v1907 = vadd.s32 %v1903, %v1899
      %v1908 = vadd.s32 %v1904, %v1906
      %v1909 = vadd.s32 %v1908, %v1898
      %v1910 = vadd.s32 %v1909, %v1900
      %v1911 = vshrl.u32 %v1910, 4
      %v1912 = vmul.u32 %v1911, 18
      %v1913 = vsub.s32 %v1889, %v1912
      %v1914 = vsub.s32 0, %v1913
      %v1915 = vsel %vm1887, %v1914, %v1913
      %vm1916 = vcmp.lt.s32.totalorder %v1735, 0
      %v1917 = vsub.s32 0, %v1735
      %v1918 = vsel %vm1916, %v1917, %v1735
      %v1919 = vand.u32 %v1918, 65535
      %v1920 = vshrl.u32 %v1918, 16
      %v1922 = vmul.u32 %v1919, 14564
      %v1923 = vmul.u32 %v1919, 58254
      %v1924 = vmul.u32 %v1920, 14564
      %v1925 = vmul.u32 %v1920, 58254
      %v1926 = vshll.u32 %v1923, 16
      %v1927 = vshrl.u32 %v1923, 16
      %v1928 = vshll.u32 %v1924, 16
      %v1929 = vshrl.u32 %v1924, 16
      %vm1930 = vc.u32 %v1922, %v1926
      %v1931 = vsel %vm1930, 1, 0
      %v1932 = vadd.s32 %v1922, %v1926
      %v1933 = vadd.s32 %v1925, %v1931
      %vm1934 = vc.u32 %v1932, %v1928
      %v1935 = vsel %vm1934, 1, 0
      %v1936 = vadd.s32 %v1932, %v1928
      %v1937 = vadd.s32 %v1933, %v1935
      %v1938 = vadd.s32 %v1937, %v1927
      %v1939 = vadd.s32 %v1938, %v1929
      %v1940 = vshrl.u32 %v1939, 4
      %v1941 = vmul.u32 %v1940, 18
      %v1942 = vsub.s32 %v1918, %v1941
      %v1943 = vsub.s32 0, %v1942
      %v1944 = vsel %vm1916, %v1943, %v1942
      %vm1945 = vcmp.lt.s32.totalorder %v1736, 0
      %v1946 = vsub.s32 0, %v1736
      %v1947 = vsel %vm1945, %v1946, %v1736
      %v1948 = vand.u32 %v1947, 65535
      %v1949 = vshrl.u32 %v1947, 16
      %v1951 = vmul.u32 %v1948, 14564
      %v1952 = vmul.u32 %v1948, 58254
      %v1953 = vmul.u32 %v1949, 14564
      %v1954 = vmul.u32 %v1949, 58254
      %v1955 = vshll.u32 %v1952, 16
      %v1956 = vshrl.u32 %v1952, 16
      %v1957 = vshll.u32 %v1953, 16
      %v1958 = vshrl.u32 %v1953, 16
      %vm1959 = vc.u32 %v1951, %v1955
      %v1960 = vsel %vm1959, 1, 0
      %v1961 = vadd.s32 %v1951, %v1955
      %v1962 = vadd.s32 %v1954, %v1960
      %vm1963 = vc.u32 %v1961, %v1957
      %v1964 = vsel %vm1963, 1, 0
      %v1965 = vadd.s32 %v1961, %v1957
      %v1966 = vadd.s32 %v1962, %v1964
      %v1967 = vadd.s32 %v1966, %v1956
      %v1968 = vadd.s32 %v1967, %v1958
      %v1969 = vshrl.u32 %v1968, 4
      %v1970 = vmul.u32 %v1969, 18
      %v1971 = vsub.s32 %v1947, %v1970
      %v1972 = vsub.s32 0, %v1971
      %v1973 = vsel %vm1945, %v1972, %v1971
      %vm1974 = vcmp.lt.s32.totalorder %v1737, 0
      %v1975 = vsub.s32 0, %v1737
      %v1976 = vsel %vm1974, %v1975, %v1737
      %v1977 = vand.u32 %v1976, 65535
      %v1978 = vshrl.u32 %v1976, 16
      %v1980 = vmul.u32 %v1977, 14564
      %v1981 = vmul.u32 %v1977, 58254
      %v1982 = vmul.u32 %v1978, 14564
      %v1983 = vmul.u32 %v1978, 58254
      %v1984 = vshll.u32 %v1981, 16
      %v1985 = vshrl.u32 %v1981, 16
      %v1986 = vshll.u32 %v1982, 16
      %v1987 = vshrl.u32 %v1982, 16
      %vm1988 = vc.u32 %v1980, %v1984
      %v1989 = vsel %vm1988, 1, 0
      %v1990 = vadd.s32 %v1980, %v1984
      %v1991 = vadd.s32 %v1983, %v1989
      %vm1992 = vc.u32 %v1990, %v1986
      %v1993 = vsel %vm1992, 1, 0
      %v1994 = vadd.s32 %v1990, %v1986
      %v1995 = vadd.s32 %v1991, %v1993
      %v1996 = vadd.s32 %v1995, %v1985
      %v1997 = vadd.s32 %v1996, %v1987
      %v1998 = vshrl.u32 %v1997, 4
      %v1999 = vmul.u32 %v1998, 18
      %v2000 = vsub.s32 %v1976, %v1999
      %v2001 = vsub.s32 0, %v2000
      %v2002 = vsel %vm1974, %v2001, %v2000
      %vm2003 = vcmp.lt.s32.totalorder %v1738, 0
      %v2004 = vsub.s32 0, %v1738
      %v2005 = vsel %vm2003, %v2004, %v1738
      %v2006 = vand.u32 %v2005, 65535
      %v2007 = vshrl.u32 %v2005, 16
      %v2009 = vmul.u32 %v2006, 14564
      %v2010 = vmul.u32 %v2006, 58254
      %v2011 = vmul.u32 %v2007, 14564
      %v2012 = vmul.u32 %v2007, 58254
      %v2013 = vshll.u32 %v2010, 16
      %v2014 = vshrl.u32 %v2010, 16
      %v2015 = vshll.u32 %v2011, 16
      %v2016 = vshrl.u32 %v2011, 16
      %vm2017 = vc.u32 %v2009, %v2013
      %v2018 = vsel %vm2017, 1, 0
      %v2019 = vadd.s32 %v2009, %v2013
      %v2020 = vadd.s32 %v2012, %v2018
      %vm2021 = vc.u32 %v2019, %v2015
      %v2022 = vsel %vm2021, 1, 0
      %v2023 = vadd.s32 %v2019, %v2015
      %v2024 = vadd.s32 %v2020, %v2022
      %v2025 = vadd.s32 %v2024, %v2014
      %v2026 = vadd.s32 %v2025, %v2016
      %v2027 = vshrl.u32 %v2026, 4
      %v2028 = vmul.u32 %v2027, 18
      %v2029 = vsub.s32 %v2005, %v2028
      %v2030 = vsub.s32 0, %v2029
      %v2031 = vsel %vm2003, %v2030, %v2029
      %vm2032 = vcmp.lt.s32.totalorder %v1739, 0
      %v2033 = vsub.s32 0, %v1739
      %v2034 = vsel %vm2032, %v2033, %v1739
      %v2035 = vand.u32 %v2034, 65535
      %v2036 = vshrl.u32 %v2034, 16
      %v2038 = vmul.u32 %v2035, 14564
      %v2039 = vmul.u32 %v2035, 58254
      %v2040 = vmul.u32 %v2036, 14564
      %v2041 = vmul.u32 %v2036, 58254
      %v2042 = vshll.u32 %v2039, 16
      %v2043 = vshrl.u32 %v2039, 16
      %v2044 = vshll.u32 %v2040, 16
      %v2045 = vshrl.u32 %v2040, 16
      %vm2046 = vc.u32 %v2038, %v2042
      %v2047 = vsel %vm2046, 1, 0
      %v2048 = vadd.s32 %v2038, %v2042
      %v2049 = vadd.s32 %v2041, %v2047
      %vm2050 = vc.u32 %v2048, %v2044
      %v2051 = vsel %vm2050, 1, 0
      %v2052 = vadd.s32 %v2048, %v2044
      %v2053 = vadd.s32 %v2049, %v2051
      %v2054 = vadd.s32 %v2053, %v2043
      %v2055 = vadd.s32 %v2054, %v2045
      %v2056 = vshrl.u32 %v2055, 4
      %v2057 = vmul.u32 %v2056, 18
      %v2058 = vsub.s32 %v2034, %v2057
      %v2059 = vsub.s32 0, %v2058
      %v2060 = vsel %vm2032, %v2059, %v2058
      %vm2061 = vcmp.lt.s32.totalorder %v1740, 0
      %v2062 = vsub.s32 0, %v1740
      %v2063 = vsel %vm2061, %v2062, %v1740
      %v2064 = vand.u32 %v2063, 65535
      %v2065 = vshrl.u32 %v2063, 16
      %v2067 = vmul.u32 %v2064, 14564
      %v2068 = vmul.u32 %v2064, 58254
      %v2069 = vmul.u32 %v2065, 14564
      %v2070 = vmul.u32 %v2065, 58254
      %v2071 = vshll.u32 %v2068, 16
      %v2072 = vshrl.u32 %v2068, 16
      %v2073 = vshll.u32 %v2069, 16
      %v2074 = vshrl.u32 %v2069, 16
      %vm2075 = vc.u32 %v2067, %v2071
      %v2076 = vsel %vm2075, 1, 0
      %v2077 = vadd.s32 %v2067, %v2071
      %v2078 = vadd.s32 %v2070, %v2076
      %vm2079 = vc.u32 %v2077, %v2073
      %v2080 = vsel %vm2079, 1, 0
      %v2081 = vadd.s32 %v2077, %v2073
      %v2082 = vadd.s32 %v2078, %v2080
      %v2083 = vadd.s32 %v2082, %v2072
      %v2084 = vadd.s32 %v2083, %v2074
      %v2085 = vshrl.u32 %v2084, 4
      %v2086 = vmul.u32 %v2085, 18
      %v2087 = vsub.s32 %v2063, %v2086
      %v2088 = vsub.s32 0, %v2087
      %v2089 = vsel %vm2061, %v2088, %v2087
      %vm2090 = vcmp.lt.s32.totalorder %v1741, 0
      %v2091 = vsub.s32 0, %v1741
      %v2092 = vsel %vm2090, %v2091, %v1741
      %v2093 = vand.u32 %v2092, 65535
      %v2094 = vshrl.u32 %v2092, 16
      %v2096 = vmul.u32 %v2093, 14564
      %v2097 = vmul.u32 %v2093, 58254
      %v2098 = vmul.u32 %v2094, 14564
      %v2099 = vmul.u32 %v2094, 58254
      %v2100 = vshll.u32 %v2097, 16
      %v2101 = vshrl.u32 %v2097, 16
      %v2102 = vshll.u32 %v2098, 16
      %v2103 = vshrl.u32 %v2098, 16
      %vm2104 = vc.u32 %v2096, %v2100
      %v2105 = vsel %vm2104, 1, 0
      %v2106 = vadd.s32 %v2096, %v2100
      %v2107 = vadd.s32 %v2099, %v2105
      %vm2108 = vc.u32 %v2106, %v2102
      %v2109 = vsel %vm2108, 1, 0
      %v2110 = vadd.s32 %v2106, %v2102
      %v2111 = vadd.s32 %v2107, %v2109
      %v2112 = vadd.s32 %v2111, %v2101
      %v2113 = vadd.s32 %v2112, %v2103
      %v2114 = vshrl.u32 %v2113, 4
      %v2115 = vmul.u32 %v2114, 18
      %v2116 = vsub.s32 %v2092, %v2115
      %v2117 = vsub.s32 0, %v2116
      %v2118 = vsel %vm2090, %v2117, %v2116
      %vm2119 = vcmp.lt.s32.totalorder %v1742, 0
      %v2120 = vsub.s32 0, %v1742
      %v2121 = vsel %vm2119, %v2120, %v1742
      %v2122 = vand.u32 %v2121, 65535
      %v2123 = vshrl.u32 %v2121, 16
      %v2125 = vmul.u32 %v2122, 14564
      %v2126 = vmul.u32 %v2122, 58254
      %v2127 = vmul.u32 %v2123, 14564
      %v2128 = vmul.u32 %v2123, 58254
      %v2129 = vshll.u32 %v2126, 16
      %v2130 = vshrl.u32 %v2126, 16
      %v2131 = vshll.u32 %v2127, 16
      %v2132 = vshrl.u32 %v2127, 16
      %vm2133 = vc.u32 %v2125, %v2129
      %v2134 = vsel %vm2133, 1, 0
      %v2135 = vadd.s32 %v2125, %v2129
      %v2136 = vadd.s32 %v2128, %v2134
      %vm2137 = vc.u32 %v2135, %v2131
      %v2138 = vsel %vm2137, 1, 0
      %v2139 = vadd.s32 %v2135, %v2131
      %v2140 = vadd.s32 %v2136, %v2138
      %v2141 = vadd.s32 %v2140, %v2130
      %v2142 = vadd.s32 %v2141, %v2132
      %v2143 = vshrl.u32 %v2142, 4
      %v2144 = vmul.u32 %v2143, 18
      %v2145 = vsub.s32 %v2121, %v2144
      %v2146 = vsub.s32 0, %v2145
      %v2147 = vsel %vm2119, %v2146, %v2145
      %vm2148 = vcmp.lt.s32.totalorder %v1743, 0
      %v2149 = vsub.s32 0, %v1743
      %v2150 = vsel %vm2148, %v2149, %v1743
      %v2151 = vand.u32 %v2150, 65535
      %v2152 = vshrl.u32 %v2150, 16
      %v2154 = vmul.u32 %v2151, 14564
      %v2155 = vmul.u32 %v2151, 58254
      %v2156 = vmul.u32 %v2152, 14564
      %v2157 = vmul.u32 %v2152, 58254
      %v2158 = vshll.u32 %v2155, 16
      %v2159 = vshrl.u32 %v2155, 16
      %v2160 = vshll.u32 %v2156, 16
      %v2161 = vshrl.u32 %v2156, 16
      %vm2162 = vc.u32 %v2154, %v2158
      %v2163 = vsel %vm2162, 1, 0
      %v2164 = vadd.s32 %v2154, %v2158
      %v2165 = vadd.s32 %v2157, %v2163
      %vm2166 = vc.u32 %v2164, %v2160
      %v2167 = vsel %vm2166, 1, 0
      %v2168 = vadd.s32 %v2164, %v2160
      %v2169 = vadd.s32 %v2165, %v2167
      %v2170 = vadd.s32 %v2169, %v2159
      %v2171 = vadd.s32 %v2170, %v2161
      %v2172 = vshrl.u32 %v2171, 4
      %v2173 = vmul.u32 %v2172, 18
      %v2174 = vsub.s32 %v2150, %v2173
      %v2175 = vsub.s32 0, %v2174
      %v2176 = vsel %vm2148, %v2175, %v2174
      %vm2177 = vcmp.lt.s32.totalorder %v1744, 0
      %v2178 = vsub.s32 0, %v1744
      %v2179 = vsel %vm2177, %v2178, %v1744
      %v2180 = vand.u32 %v2179, 65535
      %v2181 = vshrl.u32 %v2179, 16
      %v2183 = vmul.u32 %v2180, 14564
      %v2184 = vmul.u32 %v2180, 58254
      %v2185 = vmul.u32 %v2181, 14564
      %v2186 = vmul.u32 %v2181, 58254
      %v2187 = vshll.u32 %v2184, 16
      %v2188 = vshrl.u32 %v2184, 16
      %v2189 = vshll.u32 %v2185, 16
      %v2190 = vshrl.u32 %v2185, 16
      %vm2191 = vc.u32 %v2183, %v2187
      %v2192 = vsel %vm2191, 1, 0
      %v2193 = vadd.s32 %v2183, %v2187
      %v2194 = vadd.s32 %v2186, %v2192
      %vm2195 = vc.u32 %v2193, %v2189
      %v2196 = vsel %vm2195, 1, 0
      %v2197 = vadd.s32 %v2193, %v2189
      %v2198 = vadd.s32 %v2194, %v2196
      %v2199 = vadd.s32 %v2198, %v2188
      %v2200 = vadd.s32 %v2199, %v2190
      %v2201 = vshrl.u32 %v2200, 4
      %v2202 = vmul.u32 %v2201, 18
      %v2203 = vsub.s32 %v2179, %v2202
      %v2204 = vsub.s32 0, %v2203
      %v2205 = vsel %vm2177, %v2204, %v2203
      %vm2206 = vcmp.lt.s32.totalorder %v1745, 0
      %v2207 = vsub.s32 0, %v1745
      %v2208 = vsel %vm2206, %v2207, %v1745
      %v2209 = vand.u32 %v2208, 65535
      %v2210 = vshrl.u32 %v2208, 16
      %v2212 = vmul.u32 %v2209, 14564
      %v2213 = vmul.u32 %v2209, 58254
      %v2214 = vmul.u32 %v2210, 14564
      %v2215 = vmul.u32 %v2210, 58254
      %v2216 = vshll.u32 %v2213, 16
      %v2217 = vshrl.u32 %v2213, 16
      %v2218 = vshll.u32 %v2214, 16
      %v2219 = vshrl.u32 %v2214, 16
      %vm2220 = vc.u32 %v2212, %v2216
      %v2221 = vsel %vm2220, 1, 0
      %v2222 = vadd.s32 %v2212, %v2216
      %v2223 = vadd.s32 %v2215, %v2221
      %vm2224 = vc.u32 %v2222, %v2218
      %v2225 = vsel %vm2224, 1, 0
      %v2226 = vadd.s32 %v2222, %v2218
      %v2227 = vadd.s32 %v2223, %v2225
      %v2228 = vadd.s32 %v2227, %v2217
      %v2229 = vadd.s32 %v2228, %v2219
      %v2230 = vshrl.u32 %v2229, 4
      %v2231 = vmul.u32 %v2230, 18
      %v2232 = vsub.s32 %v2208, %v2231
      %v2233 = vsub.s32 0, %v2232
      %v2234 = vsel %vm2206, %v2233, %v2232
      %vm2235 = vcmp.lt.s32.totalorder %v1746, 0
      %v2236 = vsub.s32 0, %v1746
      %v2237 = vsel %vm2235, %v2236, %v1746
      %v2238 = vand.u32 %v2237, 65535
      %v2239 = vshrl.u32 %v2237, 16
      %v2241 = vmul.u32 %v2238, 14564
      %v2242 = vmul.u32 %v2238, 58254
      %v2243 = vmul.u32 %v2239, 14564
      %v2244 = vmul.u32 %v2239, 58254
      %v2245 = vshll.u32 %v2242, 16
      %v2246 = vshrl.u32 %v2242, 16
      %v2247 = vshll.u32 %v2243, 16
      %v2248 = vshrl.u32 %v2243, 16
      %vm2249 = vc.u32 %v2241, %v2245
      %v2250 = vsel %vm2249, 1, 0
      %v2251 = vadd.s32 %v2241, %v2245
      %v2252 = vadd.s32 %v2244, %v2250
      %vm2253 = vc.u32 %v2251, %v2247
      %v2254 = vsel %vm2253, 1, 0
      %v2255 = vadd.s32 %v2251, %v2247
      %v2256 = vadd.s32 %v2252, %v2254
      %v2257 = vadd.s32 %v2256, %v2246
      %v2258 = vadd.s32 %v2257, %v2248
      %v2259 = vshrl.u32 %v2258, 4
      %v2260 = vmul.u32 %v2259, 18
      %v2261 = vsub.s32 %v2237, %v2260
      %v2262 = vsub.s32 0, %v2261
      %v2263 = vsel %vm2235, %v2262, %v2261
      %vm2264 = vcmp.lt.s32.totalorder %v1747, 0
      %v2265 = vsub.s32 0, %v1747
      %v2266 = vsel %vm2264, %v2265, %v1747
      %v2267 = vand.u32 %v2266, 65535
      %v2268 = vshrl.u32 %v2266, 16
      %v2270 = vmul.u32 %v2267, 14564
      %v2271 = vmul.u32 %v2267, 58254
      %v2272 = vmul.u32 %v2268, 14564
      %v2273 = vmul.u32 %v2268, 58254
      %v2274 = vshll.u32 %v2271, 16
      %v2275 = vshrl.u32 %v2271, 16
      %v2276 = vshll.u32 %v2272, 16
      %v2277 = vshrl.u32 %v2272, 16
      %vm2278 = vc.u32 %v2270, %v2274
      %v2279 = vsel %vm2278, 1, 0
      %v2280 = vadd.s32 %v2270, %v2274
      %v2281 = vadd.s32 %v2273, %v2279
      %vm2282 = vc.u32 %v2280, %v2276
      %v2283 = vsel %vm2282, 1, 0
      %v2284 = vadd.s32 %v2280, %v2276
      %v2285 = vadd.s32 %v2281, %v2283
      %v2286 = vadd.s32 %v2285, %v2275
      %v2287 = vadd.s32 %v2286, %v2277
      %v2288 = vshrl.u32 %v2287, 4
      %v2289 = vmul.u32 %v2288, 18
      %v2290 = vsub.s32 %v2266, %v2289
      %v2291 = vsub.s32 0, %v2290
      %v2292 = vsel %vm2264, %v2291, %v2290
      %vm2293 = vcmp.lt.s32.totalorder %v1748, 0
      %v2294 = vsub.s32 0, %v1748
      %v2295 = vsel %vm2293, %v2294, %v1748
      %v2296 = vand.u32 %v2295, 65535
      %v2297 = vshrl.u32 %v2295, 16
      %v2299 = vmul.u32 %v2296, 14564
      %v2300 = vmul.u32 %v2296, 58254
      %v2301 = vmul.u32 %v2297, 14564
      %v2302 = vmul.u32 %v2297, 58254
      %v2303 = vshll.u32 %v2300, 16
      %v2304 = vshrl.u32 %v2300, 16
      %v2305 = vshll.u32 %v2301, 16
      %v2306 = vshrl.u32 %v2301, 16
      %vm2307 = vc.u32 %v2299, %v2303
      %v2308 = vsel %vm2307, 1, 0
      %v2309 = vadd.s32 %v2299, %v2303
      %v2310 = vadd.s32 %v2302, %v2308
      %vm2311 = vc.u32 %v2309, %v2305
      %v2312 = vsel %vm2311, 1, 0
      %v2313 = vadd.s32 %v2309, %v2305
      %v2314 = vadd.s32 %v2310, %v2312
      %v2315 = vadd.s32 %v2314, %v2304
      %v2316 = vadd.s32 %v2315, %v2306
      %v2317 = vshrl.u32 %v2316, 4
      %v2318 = vmul.u32 %v2317, 18
      %v2319 = vsub.s32 %v2295, %v2318
      %v2320 = vsub.s32 0, %v2319
      %v2321 = vsel %vm2293, %v2320, %v2319
      %vm2322 = vcmp.lt.s32.totalorder %v1749, 0
      %v2323 = vsub.s32 0, %v1749
      %v2324 = vsel %vm2322, %v2323, %v1749
      %v2325 = vand.u32 %v2324, 65535
      %v2326 = vshrl.u32 %v2324, 16
      %v2328 = vmul.u32 %v2325, 14564
      %v2329 = vmul.u32 %v2325, 58254
      %v2330 = vmul.u32 %v2326, 14564
      %v2331 = vmul.u32 %v2326, 58254
      %v2332 = vshll.u32 %v2329, 16
      %v2333 = vshrl.u32 %v2329, 16
      %v2334 = vshll.u32 %v2330, 16
      %v2335 = vshrl.u32 %v2330, 16
      %vm2336 = vc.u32 %v2328, %v2332
      %v2337 = vsel %vm2336, 1, 0
      %v2338 = vadd.s32 %v2328, %v2332
      %v2339 = vadd.s32 %v2331, %v2337
      %vm2340 = vc.u32 %v2338, %v2334
      %v2341 = vsel %vm2340, 1, 0
      %v2342 = vadd.s32 %v2338, %v2334
      %v2343 = vadd.s32 %v2339, %v2341
      %v2344 = vadd.s32 %v2343, %v2333
      %v2345 = vadd.s32 %v2344, %v2335
      %v2346 = vshrl.u32 %v2345, 4
      %v2347 = vmul.u32 %v2346, 18
      %v2348 = vsub.s32 %v2324, %v2347
      %v2349 = vsub.s32 0, %v2348
      %v2350 = vsel %vm2322, %v2349, %v2348
      %vm2351 = vcmp.lt.s32.totalorder %v1750, 0
      %v2352 = vsub.s32 0, %v1750
      %v2353 = vsel %vm2351, %v2352, %v1750
      %v2354 = vand.u32 %v2353, 65535
      %v2355 = vshrl.u32 %v2353, 16
      %v2357 = vmul.u32 %v2354, 14564
      %v2358 = vmul.u32 %v2354, 58254
      %v2359 = vmul.u32 %v2355, 14564
      %v2360 = vmul.u32 %v2355, 58254
      %v2361 = vshll.u32 %v2358, 16
      %v2362 = vshrl.u32 %v2358, 16
      %v2363 = vshll.u32 %v2359, 16
      %v2364 = vshrl.u32 %v2359, 16
      %vm2365 = vc.u32 %v2357, %v2361
      %v2366 = vsel %vm2365, 1, 0
      %v2367 = vadd.s32 %v2357, %v2361
      %v2368 = vadd.s32 %v2360, %v2366
      %vm2369 = vc.u32 %v2367, %v2363
      %v2370 = vsel %vm2369, 1, 0
      %v2371 = vadd.s32 %v2367, %v2363
      %v2372 = vadd.s32 %v2368, %v2370
      %v2373 = vadd.s32 %v2372, %v2362
      %v2374 = vadd.s32 %v2373, %v2364
      %v2375 = vshrl.u32 %v2374, 4
      %v2376 = vmul.u32 %v2375, 18
      %v2377 = vsub.s32 %v2353, %v2376
      %v2378 = vsub.s32 0, %v2377
      %v2379 = vsel %vm2351, %v2378, %v2377
      %vm2380 = vcmp.lt.s32.totalorder %v1751, 0
      %v2381 = vsub.s32 0, %v1751
      %v2382 = vsel %vm2380, %v2381, %v1751
      %v2383 = vand.u32 %v2382, 65535
      %v2384 = vshrl.u32 %v2382, 16
      %v2386 = vmul.u32 %v2383, 14564
      %v2387 = vmul.u32 %v2383, 58254
      %v2388 = vmul.u32 %v2384, 14564
      %v2389 = vmul.u32 %v2384, 58254
      %v2390 = vshll.u32 %v2387, 16
      %v2391 = vshrl.u32 %v2387, 16
      %v2392 = vshll.u32 %v2388, 16
      %v2393 = vshrl.u32 %v2388, 16
      %vm2394 = vc.u32 %v2386, %v2390
      %v2395 = vsel %vm2394, 1, 0
      %v2396 = vadd.s32 %v2386, %v2390
      %v2397 = vadd.s32 %v2389, %v2395
      %vm2398 = vc.u32 %v2396, %v2392
      %v2399 = vsel %vm2398, 1, 0
      %v2400 = vadd.s32 %v2396, %v2392
      %v2401 = vadd.s32 %v2397, %v2399
      %v2402 = vadd.s32 %v2401, %v2391
      %v2403 = vadd.s32 %v2402, %v2393
      %v2404 = vshrl.u32 %v2403, 4
      %v2405 = vmul.u32 %v2404, 18
      %v2406 = vsub.s32 %v2382, %v2405
      %v2407 = vsub.s32 0, %v2406
      %v2408 = vsel %vm2380, %v2407, %v2406
      %vm2409 = vcmp.lt.s32.totalorder %v1752, 0
      %v2410 = vsub.s32 0, %v1752
      %v2411 = vsel %vm2409, %v2410, %v1752
      %v2412 = vand.u32 %v2411, 65535
      %v2413 = vshrl.u32 %v2411, 16
      %v2415 = vmul.u32 %v2412, 14564
      %v2416 = vmul.u32 %v2412, 58254
      %v2417 = vmul.u32 %v2413, 14564
      %v2418 = vmul.u32 %v2413, 58254
      %v2419 = vshll.u32 %v2416, 16
      %v2420 = vshrl.u32 %v2416, 16
      %v2421 = vshll.u32 %v2417, 16
      %v2422 = vshrl.u32 %v2417, 16
      %vm2423 = vc.u32 %v2415, %v2419
      %v2424 = vsel %vm2423, 1, 0
      %v2425 = vadd.s32 %v2415, %v2419
      %v2426 = vadd.s32 %v2418, %v2424
      %vm2427 = vc.u32 %v2425, %v2421
      %v2428 = vsel %vm2427, 1, 0
      %v2429 = vadd.s32 %v2425, %v2421
      %v2430 = vadd.s32 %v2426, %v2428
      %v2431 = vadd.s32 %v2430, %v2420
      %v2432 = vadd.s32 %v2431, %v2422
      %v2433 = vshrl.u32 %v2432, 4
      %v2434 = vmul.u32 %v2433, 18
      %v2435 = vsub.s32 %v2411, %v2434
      %v2436 = vsub.s32 0, %v2435
      %v2437 = vsel %vm2409, %v2436, %v2435
      %vm2438 = vcmp.lt.s32.totalorder %v1753, 0
      %v2439 = vsub.s32 0, %v1753
      %v2440 = vsel %vm2438, %v2439, %v1753
      %v2441 = vand.u32 %v2440, 65535
      %v2442 = vshrl.u32 %v2440, 16
      %v2444 = vmul.u32 %v2441, 14564
      %v2445 = vmul.u32 %v2441, 58254
      %v2446 = vmul.u32 %v2442, 14564
      %v2447 = vmul.u32 %v2442, 58254
      %v2448 = vshll.u32 %v2445, 16
      %v2449 = vshrl.u32 %v2445, 16
      %v2450 = vshll.u32 %v2446, 16
      %v2451 = vshrl.u32 %v2446, 16
      %vm2452 = vc.u32 %v2444, %v2448
      %v2453 = vsel %vm2452, 1, 0
      %v2454 = vadd.s32 %v2444, %v2448
      %v2455 = vadd.s32 %v2447, %v2453
      %vm2456 = vc.u32 %v2454, %v2450
      %v2457 = vsel %vm2456, 1, 0
      %v2458 = vadd.s32 %v2454, %v2450
      %v2459 = vadd.s32 %v2455, %v2457
      %v2460 = vadd.s32 %v2459, %v2449
      %v2461 = vadd.s32 %v2460, %v2451
      %v2462 = vshrl.u32 %v2461, 4
      %v2463 = vmul.u32 %v2462, 18
      %v2464 = vsub.s32 %v2440, %v2463
      %v2465 = vsub.s32 0, %v2464
      %v2466 = vsel %vm2438, %v2465, %v2464
      %vm2467 = vcmp.lt.s32.totalorder %v1754, 0
      %v2468 = vsub.s32 0, %v1754
      %v2469 = vsel %vm2467, %v2468, %v1754
      %v2470 = vand.u32 %v2469, 65535
      %v2471 = vshrl.u32 %v2469, 16
      %v2473 = vmul.u32 %v2470, 14564
      %v2474 = vmul.u32 %v2470, 58254
      %v2475 = vmul.u32 %v2471, 14564
      %v2476 = vmul.u32 %v2471, 58254
      %v2477 = vshll.u32 %v2474, 16
      %v2478 = vshrl.u32 %v2474, 16
      %v2479 = vshll.u32 %v2475, 16
      %v2480 = vshrl.u32 %v2475, 16
      %vm2481 = vc.u32 %v2473, %v2477
      %v2482 = vsel %vm2481, 1, 0
      %v2483 = vadd.s32 %v2473, %v2477
      %v2484 = vadd.s32 %v2476, %v2482
      %vm2485 = vc.u32 %v2483, %v2479
      %v2486 = vsel %vm2485, 1, 0
      %v2487 = vadd.s32 %v2483, %v2479
      %v2488 = vadd.s32 %v2484, %v2486
      %v2489 = vadd.s32 %v2488, %v2478
      %v2490 = vadd.s32 %v2489, %v2480
      %v2491 = vshrl.u32 %v2490, 4
      %v2492 = vmul.u32 %v2491, 18
      %v2493 = vsub.s32 %v2469, %v2492
      %v2494 = vsub.s32 0, %v2493
      %v2495 = vsel %vm2467, %v2494, %v2493
      %vm2496 = vcmp.lt.s32.totalorder %v1755, 0
      %v2497 = vsub.s32 0, %v1755
      %v2498 = vsel %vm2496, %v2497, %v1755
      %v2499 = vand.u32 %v2498, 65535
      %v2500 = vshrl.u32 %v2498, 16
      %v2502 = vmul.u32 %v2499, 14564
      %v2503 = vmul.u32 %v2499, 58254
      %v2504 = vmul.u32 %v2500, 14564
      %v2505 = vmul.u32 %v2500, 58254
      %v2506 = vshll.u32 %v2503, 16
      %v2507 = vshrl.u32 %v2503, 16
      %v2508 = vshll.u32 %v2504, 16
      %v2509 = vshrl.u32 %v2504, 16
      %vm2510 = vc.u32 %v2502, %v2506
      %v2511 = vsel %vm2510, 1, 0
      %v2512 = vadd.s32 %v2502, %v2506
      %v2513 = vadd.s32 %v2505, %v2511
      %vm2514 = vc.u32 %v2512, %v2508
      %v2515 = vsel %vm2514, 1, 0
      %v2516 = vadd.s32 %v2512, %v2508
      %v2517 = vadd.s32 %v2513, %v2515
      %v2518 = vadd.s32 %v2517, %v2507
      %v2519 = vadd.s32 %v2518, %v2509
      %v2520 = vshrl.u32 %v2519, 4
      %v2521 = vmul.u32 %v2520, 18
      %v2522 = vsub.s32 %v2498, %v2521
      %v2523 = vsub.s32 0, %v2522
      %v2524 = vsel %vm2496, %v2523, %v2522
      %vm2525 = vcmp.lt.s32.totalorder %v1756, 0
      %v2526 = vsub.s32 0, %v1756
      %v2527 = vsel %vm2525, %v2526, %v1756
      %v2528 = vand.u32 %v2527, 65535
      %v2529 = vshrl.u32 %v2527, 16
      %v2531 = vmul.u32 %v2528, 14564
      %v2532 = vmul.u32 %v2528, 58254
      %v2533 = vmul.u32 %v2529, 14564
      %v2534 = vmul.u32 %v2529, 58254
      %v2535 = vshll.u32 %v2532, 16
      %v2536 = vshrl.u32 %v2532, 16
      %v2537 = vshll.u32 %v2533, 16
      %v2538 = vshrl.u32 %v2533, 16
      %vm2539 = vc.u32 %v2531, %v2535
      %v2540 = vsel %vm2539, 1, 0
      %v2541 = vadd.s32 %v2531, %v2535
      %v2542 = vadd.s32 %v2534, %v2540
      %vm2543 = vc.u32 %v2541, %v2537
      %v2544 = vsel %vm2543, 1, 0
      %v2545 = vadd.s32 %v2541, %v2537
      %v2546 = vadd.s32 %v2542, %v2544
      %v2547 = vadd.s32 %v2546, %v2536
      %v2548 = vadd.s32 %v2547, %v2538
      %v2549 = vshrl.u32 %v2548, 4
      %v2550 = vmul.u32 %v2549, 18
      %v2551 = vsub.s32 %v2527, %v2550
      %v2552 = vsub.s32 0, %v2551
      %v2553 = vsel %vm2525, %v2552, %v2551
      %vm2554 = vcmp.lt.s32.totalorder %v1757, 0
      %v2555 = vsub.s32 0, %v1757
      %v2556 = vsel %vm2554, %v2555, %v1757
      %v2557 = vand.u32 %v2556, 65535
      %v2558 = vshrl.u32 %v2556, 16
      %v2560 = vmul.u32 %v2557, 14564
      %v2561 = vmul.u32 %v2557, 58254
      %v2562 = vmul.u32 %v2558, 14564
      %v2563 = vmul.u32 %v2558, 58254
      %v2564 = vshll.u32 %v2561, 16
      %v2565 = vshrl.u32 %v2561, 16
      %v2566 = vshll.u32 %v2562, 16
      %v2567 = vshrl.u32 %v2562, 16
      %vm2568 = vc.u32 %v2560, %v2564
      %v2569 = vsel %vm2568, 1, 0
      %v2570 = vadd.s32 %v2560, %v2564
      %v2571 = vadd.s32 %v2563, %v2569
      %vm2572 = vc.u32 %v2570, %v2566
      %v2573 = vsel %vm2572, 1, 0
      %v2574 = vadd.s32 %v2570, %v2566
      %v2575 = vadd.s32 %v2571, %v2573
      %v2576 = vadd.s32 %v2575, %v2565
      %v2577 = vadd.s32 %v2576, %v2567
      %v2578 = vshrl.u32 %v2577, 4
      %v2579 = vmul.u32 %v2578, 18
      %v2580 = vsub.s32 %v2556, %v2579
      %v2581 = vsub.s32 0, %v2580
      %v2582 = vsel %vm2554, %v2581, %v2580
      %vm2583 = vcmp.lt.s32.totalorder %v1758, 0
      %v2584 = vsub.s32 0, %v1758
      %v2585 = vsel %vm2583, %v2584, %v1758
      %v2586 = vand.u32 %v2585, 65535
      %v2587 = vshrl.u32 %v2585, 16
      %v2589 = vmul.u32 %v2586, 14564
      %v2590 = vmul.u32 %v2586, 58254
      %v2591 = vmul.u32 %v2587, 14564
      %v2592 = vmul.u32 %v2587, 58254
      %v2593 = vshll.u32 %v2590, 16
      %v2594 = vshrl.u32 %v2590, 16
      %v2595 = vshll.u32 %v2591, 16
      %v2596 = vshrl.u32 %v2591, 16
      %vm2597 = vc.u32 %v2589, %v2593
      %v2598 = vsel %vm2597, 1, 0
      %v2599 = vadd.s32 %v2589, %v2593
      %v2600 = vadd.s32 %v2592, %v2598
      %vm2601 = vc.u32 %v2599, %v2595
      %v2602 = vsel %vm2601, 1, 0
      %v2603 = vadd.s32 %v2599, %v2595
      %v2604 = vadd.s32 %v2600, %v2602
      %v2605 = vadd.s32 %v2604, %v2594
      %v2606 = vadd.s32 %v2605, %v2596
      %v2607 = vshrl.u32 %v2606, 4
      %v2608 = vmul.u32 %v2607, 18
      %v2609 = vsub.s32 %v2585, %v2608
      %v2610 = vsub.s32 0, %v2609
      %v2611 = vsel %vm2583, %v2610, %v2609
      %vm2612 = vcmp.lt.s32.totalorder %v1759, 0
      %v2613 = vsub.s32 0, %v1759
      %v2614 = vsel %vm2612, %v2613, %v1759
      %v2615 = vand.u32 %v2614, 65535
      %v2616 = vshrl.u32 %v2614, 16
      %v2618 = vmul.u32 %v2615, 14564
      %v2619 = vmul.u32 %v2615, 58254
      %v2620 = vmul.u32 %v2616, 14564
      %v2621 = vmul.u32 %v2616, 58254
      %v2622 = vshll.u32 %v2619, 16
      %v2623 = vshrl.u32 %v2619, 16
      %v2624 = vshll.u32 %v2620, 16
      %v2625 = vshrl.u32 %v2620, 16
      %vm2626 = vc.u32 %v2618, %v2622
      %v2627 = vsel %vm2626, 1, 0
      %v2628 = vadd.s32 %v2618, %v2622
      %v2629 = vadd.s32 %v2621, %v2627
      %vm2630 = vc.u32 %v2628, %v2624
      %v2631 = vsel %vm2630, 1, 0
      %v2632 = vadd.s32 %v2628, %v2624
      %v2633 = vadd.s32 %v2629, %v2631
      %v2634 = vadd.s32 %v2633, %v2623
      %v2635 = vadd.s32 %v2634, %v2625
      %v2636 = vshrl.u32 %v2635, 4
      %v2637 = vmul.u32 %v2636, 18
      %v2638 = vsub.s32 %v2614, %v2637
      %v2639 = vsub.s32 0, %v2638
      %v2640 = vsel %vm2612, %v2639, %v2638
      %vm2641 = vcmp.lt.s32.totalorder %v1760, 0
      %v2642 = vsub.s32 0, %v1760
      %v2643 = vsel %vm2641, %v2642, %v1760
      %v2644 = vand.u32 %v2643, 65535
      %v2645 = vshrl.u32 %v2643, 16
      %v2647 = vmul.u32 %v2644, 14564
      %v2648 = vmul.u32 %v2644, 58254
      %v2649 = vmul.u32 %v2645, 14564
      %v2650 = vmul.u32 %v2645, 58254
      %v2651 = vshll.u32 %v2648, 16
      %v2652 = vshrl.u32 %v2648, 16
      %v2653 = vshll.u32 %v2649, 16
      %v2654 = vshrl.u32 %v2649, 16
      %vm2655 = vc.u32 %v2647, %v2651
      %v2656 = vsel %vm2655, 1, 0
      %v2657 = vadd.s32 %v2647, %v2651
      %v2658 = vadd.s32 %v2650, %v2656
      %vm2659 = vc.u32 %v2657, %v2653
      %v2660 = vsel %vm2659, 1, 0
      %v2661 = vadd.s32 %v2657, %v2653
      %v2662 = vadd.s32 %v2658, %v2660
      %v2663 = vadd.s32 %v2662, %v2652
      %v2664 = vadd.s32 %v2663, %v2654
      %v2665 = vshrl.u32 %v2664, 4
      %v2666 = vmul.u32 %v2665, 18
      %v2667 = vsub.s32 %v2643, %v2666
      %v2668 = vsub.s32 0, %v2667
      %v2669 = vsel %vm2641, %v2668, %v2667
      %vm2670 = vcmp.lt.s32.totalorder %v1761, 0
      %v2671 = vsub.s32 0, %v1761
      %v2672 = vsel %vm2670, %v2671, %v1761
      %v2673 = vand.u32 %v2672, 65535
      %v2674 = vshrl.u32 %v2672, 16
      %v2676 = vmul.u32 %v2673, 14564
      %v2677 = vmul.u32 %v2673, 58254
      %v2678 = vmul.u32 %v2674, 14564
      %v2679 = vmul.u32 %v2674, 58254
      %v2680 = vshll.u32 %v2677, 16
      %v2681 = vshrl.u32 %v2677, 16
      %v2682 = vshll.u32 %v2678, 16
      %v2683 = vshrl.u32 %v2678, 16
      %vm2684 = vc.u32 %v2676, %v2680
      %v2685 = vsel %vm2684, 1, 0
      %v2686 = vadd.s32 %v2676, %v2680
      %v2687 = vadd.s32 %v2679, %v2685
      %vm2688 = vc.u32 %v2686, %v2682
      %v2689 = vsel %vm2688, 1, 0
      %v2690 = vadd.s32 %v2686, %v2682
      %v2691 = vadd.s32 %v2687, %v2689
      %v2692 = vadd.s32 %v2691, %v2681
      %v2693 = vadd.s32 %v2692, %v2683
      %v2694 = vshrl.u32 %v2693, 4
      %v2695 = vmul.u32 %v2694, 18
      %v2696 = vsub.s32 %v2672, %v2695
      %v2697 = vsub.s32 0, %v2696
      %v2698 = vsel %vm2670, %v2697, %v2696
      %vm2699 = vcmp.lt.s32.totalorder %v1762, 0
      %v2700 = vsub.s32 0, %v1762
      %v2701 = vsel %vm2699, %v2700, %v1762
      %v2702 = vand.u32 %v2701, 65535
      %v2703 = vshrl.u32 %v2701, 16
      %v2705 = vmul.u32 %v2702, 14564
      %v2706 = vmul.u32 %v2702, 58254
      %v2707 = vmul.u32 %v2703, 14564
      %v2708 = vmul.u32 %v2703, 58254
      %v2709 = vshll.u32 %v2706, 16
      %v2710 = vshrl.u32 %v2706, 16
      %v2711 = vshll.u32 %v2707, 16
      %v2712 = vshrl.u32 %v2707, 16
      %vm2713 = vc.u32 %v2705, %v2709
      %v2714 = vsel %vm2713, 1, 0
      %v2715 = vadd.s32 %v2705, %v2709
      %v2716 = vadd.s32 %v2708, %v2714
      %vm2717 = vc.u32 %v2715, %v2711
      %v2718 = vsel %vm2717, 1, 0
      %v2719 = vadd.s32 %v2715, %v2711
      %v2720 = vadd.s32 %v2716, %v2718
      %v2721 = vadd.s32 %v2720, %v2710
      %v2722 = vadd.s32 %v2721, %v2712
      %v2723 = vshrl.u32 %v2722, 4
      %v2724 = vmul.u32 %v2723, 18
      %v2725 = vsub.s32 %v2701, %v2724
      %v2726 = vsub.s32 0, %v2725
      %v2727 = vsel %vm2699, %v2726, %v2725
      %vm2728 = vcmp.lt.s32.totalorder %v1763, 0
      %v2729 = vsub.s32 0, %v1763
      %v2730 = vsel %vm2728, %v2729, %v1763
      %v2731 = vand.u32 %v2730, 65535
      %v2732 = vshrl.u32 %v2730, 16
      %v2734 = vmul.u32 %v2731, 14564
      %v2735 = vmul.u32 %v2731, 58254
      %v2736 = vmul.u32 %v2732, 14564
      %v2737 = vmul.u32 %v2732, 58254
      %v2738 = vshll.u32 %v2735, 16
      %v2739 = vshrl.u32 %v2735, 16
      %v2740 = vshll.u32 %v2736, 16
      %v2741 = vshrl.u32 %v2736, 16
      %vm2742 = vc.u32 %v2734, %v2738
      %v2743 = vsel %vm2742, 1, 0
      %v2744 = vadd.s32 %v2734, %v2738
      %v2745 = vadd.s32 %v2737, %v2743
      %vm2746 = vc.u32 %v2744, %v2740
      %v2747 = vsel %vm2746, 1, 0
      %v2748 = vadd.s32 %v2744, %v2740
      %v2749 = vadd.s32 %v2745, %v2747
      %v2750 = vadd.s32 %v2749, %v2739
      %v2751 = vadd.s32 %v2750, %v2741
      %v2752 = vshrl.u32 %v2751, 4
      %v2753 = vmul.u32 %v2752, 18
      %v2754 = vsub.s32 %v2730, %v2753
      %v2755 = vsub.s32 0, %v2754
      %v2756 = vsel %vm2728, %v2755, %v2754
      %vm2757 = vcmp.lt.s32.totalorder %v1764, 0
      %v2758 = vsub.s32 0, %v1764
      %v2759 = vsel %vm2757, %v2758, %v1764
      %v2760 = vand.u32 %v2759, 65535
      %v2761 = vshrl.u32 %v2759, 16
      %v2763 = vmul.u32 %v2760, 14564
      %v2764 = vmul.u32 %v2760, 58254
      %v2765 = vmul.u32 %v2761, 14564
      %v2766 = vmul.u32 %v2761, 58254
      %v2767 = vshll.u32 %v2764, 16
      %v2768 = vshrl.u32 %v2764, 16
      %v2769 = vshll.u32 %v2765, 16
      %v2770 = vshrl.u32 %v2765, 16
      %vm2771 = vc.u32 %v2763, %v2767
      %v2772 = vsel %vm2771, 1, 0
      %v2773 = vadd.s32 %v2763, %v2767
      %v2774 = vadd.s32 %v2766, %v2772
      %vm2775 = vc.u32 %v2773, %v2769
      %v2776 = vsel %vm2775, 1, 0
      %v2777 = vadd.s32 %v2773, %v2769
      %v2778 = vadd.s32 %v2774, %v2776
      %v2779 = vadd.s32 %v2778, %v2768
      %v2780 = vadd.s32 %v2779, %v2770
      %v2781 = vshrl.u32 %v2780, 4
      %v2782 = vmul.u32 %v2781, 18
      %v2783 = vsub.s32 %v2759, %v2782
      %v2784 = vsub.s32 0, %v2783
      %v2785 = vsel %vm2757, %v2784, %v2783
      %vm2786 = vcmp.lt.s32.totalorder %v1765, 0
      %v2787 = vsub.s32 0, %v1765
      %v2788 = vsel %vm2786, %v2787, %v1765
      %v2789 = vand.u32 %v2788, 65535
      %v2790 = vshrl.u32 %v2788, 16
      %v2792 = vmul.u32 %v2789, 14564
      %v2793 = vmul.u32 %v2789, 58254
      %v2794 = vmul.u32 %v2790, 14564
      %v2795 = vmul.u32 %v2790, 58254
      %v2796 = vshll.u32 %v2793, 16
      %v2797 = vshrl.u32 %v2793, 16
      %v2798 = vshll.u32 %v2794, 16
      %v2799 = vshrl.u32 %v2794, 16
      %vm2800 = vc.u32 %v2792, %v2796
      %v2801 = vsel %vm2800, 1, 0
      %v2802 = vadd.s32 %v2792, %v2796
      %v2803 = vadd.s32 %v2795, %v2801
      %vm2804 = vc.u32 %v2802, %v2798
      %v2805 = vsel %vm2804, 1, 0
      %v2806 = vadd.s32 %v2802, %v2798
      %v2807 = vadd.s32 %v2803, %v2805
      %v2808 = vadd.s32 %v2807, %v2797
      %v2809 = vadd.s32 %v2808, %v2799
      %v2810 = vshrl.u32 %v2809, 4
      %v2811 = vmul.u32 %v2810, 18
      %v2812 = vsub.s32 %v2788, %v2811
      %v2813 = vsub.s32 0, %v2812
      %v2814 = vsel %vm2786, %v2813, %v2812
      %vm2815 = vcmp.lt.s32.totalorder %v1766, 0
      %v2816 = vsub.s32 0, %v1766
      %v2817 = vsel %vm2815, %v2816, %v1766
      %v2818 = vand.u32 %v2817, 65535
      %v2819 = vshrl.u32 %v2817, 16
      %v2821 = vmul.u32 %v2818, 14564
      %v2822 = vmul.u32 %v2818, 58254
      %v2823 = vmul.u32 %v2819, 14564
      %v2824 = vmul.u32 %v2819, 58254
      %v2825 = vshll.u32 %v2822, 16
      %v2826 = vshrl.u32 %v2822, 16
      %v2827 = vshll.u32 %v2823, 16
      %v2828 = vshrl.u32 %v2823, 16
      %vm2829 = vc.u32 %v2821, %v2825
      %v2830 = vsel %vm2829, 1, 0
      %v2831 = vadd.s32 %v2821, %v2825
      %v2832 = vadd.s32 %v2824, %v2830
      %vm2833 = vc.u32 %v2831, %v2827
      %v2834 = vsel %vm2833, 1, 0
      %v2835 = vadd.s32 %v2831, %v2827
      %v2836 = vadd.s32 %v2832, %v2834
      %v2837 = vadd.s32 %v2836, %v2826
      %v2838 = vadd.s32 %v2837, %v2828
      %v2839 = vshrl.u32 %v2838, 4
      %v2840 = vmul.u32 %v2839, 18
      %v2841 = vsub.s32 %v2817, %v2840
      %v2842 = vsub.s32 0, %v2841
      %v2843 = vsel %vm2815, %v2842, %v2841
      %vm2844 = vcmp.lt.s32.totalorder %v1767, 0
      %v2845 = vsub.s32 0, %v1767
      %v2846 = vsel %vm2844, %v2845, %v1767
      %v2847 = vand.u32 %v2846, 65535
      %v2848 = vshrl.u32 %v2846, 16
      %v2850 = vmul.u32 %v2847, 14564
      %v2851 = vmul.u32 %v2847, 58254
      %v2852 = vmul.u32 %v2848, 14564
      %v2853 = vmul.u32 %v2848, 58254
      %v2854 = vshll.u32 %v2851, 16
      %v2855 = vshrl.u32 %v2851, 16
      %v2856 = vshll.u32 %v2852, 16
      %v2857 = vshrl.u32 %v2852, 16
      %vm2858 = vc.u32 %v2850, %v2854
      %v2859 = vsel %vm2858, 1, 0
      %v2860 = vadd.s32 %v2850, %v2854
      %v2861 = vadd.s32 %v2853, %v2859
      %vm2862 = vc.u32 %v2860, %v2856
      %v2863 = vsel %vm2862, 1, 0
      %v2864 = vadd.s32 %v2860, %v2856
      %v2865 = vadd.s32 %v2861, %v2863
      %v2866 = vadd.s32 %v2865, %v2855
      %v2867 = vadd.s32 %v2866, %v2857
      %v2868 = vshrl.u32 %v2867, 4
      %v2869 = vmul.u32 %v2868, 18
      %v2870 = vsub.s32 %v2846, %v2869
      %v2871 = vsub.s32 0, %v2870
      %v2872 = vsel %vm2844, %v2871, %v2870
      %vm2873 = vcmp.lt.s32.totalorder %v1768, 0
      %v2874 = vsub.s32 0, %v1768
      %v2875 = vsel %vm2873, %v2874, %v1768
      %v2876 = vand.u32 %v2875, 65535
      %v2877 = vshrl.u32 %v2875, 16
      %v2879 = vmul.u32 %v2876, 14564
      %v2880 = vmul.u32 %v2876, 58254
      %v2881 = vmul.u32 %v2877, 14564
      %v2882 = vmul.u32 %v2877, 58254
      %v2883 = vshll.u32 %v2880, 16
      %v2884 = vshrl.u32 %v2880, 16
      %v2885 = vshll.u32 %v2881, 16
      %v2886 = vshrl.u32 %v2881, 16
      %vm2887 = vc.u32 %v2879, %v2883
      %v2888 = vsel %vm2887, 1, 0
      %v2889 = vadd.s32 %v2879, %v2883
      %v2890 = vadd.s32 %v2882, %v2888
      %vm2891 = vc.u32 %v2889, %v2885
      %v2892 = vsel %vm2891, 1, 0
      %v2893 = vadd.s32 %v2889, %v2885
      %v2894 = vadd.s32 %v2890, %v2892
      %v2895 = vadd.s32 %v2894, %v2884
      %v2896 = vadd.s32 %v2895, %v2886
      %v2897 = vshrl.u32 %v2896, 4
      %v2898 = vmul.u32 %v2897, 18
      %v2899 = vsub.s32 %v2875, %v2898
      %v2900 = vsub.s32 0, %v2899
      %v2901 = vsel %vm2873, %v2900, %v2899
      %vm2902 = vcmp.lt.s32.totalorder %v1769, 0
      %v2903 = vsub.s32 0, %v1769
      %v2904 = vsel %vm2902, %v2903, %v1769
      %v2905 = vand.u32 %v2904, 65535
      %v2906 = vshrl.u32 %v2904, 16
      %v2908 = vmul.u32 %v2905, 14564
      %v2909 = vmul.u32 %v2905, 58254
      %v2910 = vmul.u32 %v2906, 14564
      %v2911 = vmul.u32 %v2906, 58254
      %v2912 = vshll.u32 %v2909, 16
      %v2913 = vshrl.u32 %v2909, 16
      %v2914 = vshll.u32 %v2910, 16
      %v2915 = vshrl.u32 %v2910, 16
      %vm2916 = vc.u32 %v2908, %v2912
      %v2917 = vsel %vm2916, 1, 0
      %v2918 = vadd.s32 %v2908, %v2912
      %v2919 = vadd.s32 %v2911, %v2917
      %vm2920 = vc.u32 %v2918, %v2914
      %v2921 = vsel %vm2920, 1, 0
      %v2922 = vadd.s32 %v2918, %v2914
      %v2923 = vadd.s32 %v2919, %v2921
      %v2924 = vadd.s32 %v2923, %v2913
      %v2925 = vadd.s32 %v2924, %v2915
      %v2926 = vshrl.u32 %v2925, 4
      %v2927 = vmul.u32 %v2926, 18
      %v2928 = vsub.s32 %v2904, %v2927
      %v2929 = vsub.s32 0, %v2928
      %v2930 = vsel %vm2902, %v2929, %v2928
      %vm2931 = vcmp.lt.s32.totalorder %v1770, 0
      %v2932 = vsub.s32 0, %v1770
      %v2933 = vsel %vm2931, %v2932, %v1770
      %v2934 = vand.u32 %v2933, 65535
      %v2935 = vshrl.u32 %v2933, 16
      %v2937 = vmul.u32 %v2934, 14564
      %v2938 = vmul.u32 %v2934, 58254
      %v2939 = vmul.u32 %v2935, 14564
      %v2940 = vmul.u32 %v2935, 58254
      %v2941 = vshll.u32 %v2938, 16
      %v2942 = vshrl.u32 %v2938, 16
      %v2943 = vshll.u32 %v2939, 16
      %v2944 = vshrl.u32 %v2939, 16
      %vm2945 = vc.u32 %v2937, %v2941
      %v2946 = vsel %vm2945, 1, 0
      %v2947 = vadd.s32 %v2937, %v2941
      %v2948 = vadd.s32 %v2940, %v2946
      %vm2949 = vc.u32 %v2947, %v2943
      %v2950 = vsel %vm2949, 1, 0
      %v2951 = vadd.s32 %v2947, %v2943
      %v2952 = vadd.s32 %v2948, %v2950
      %v2953 = vadd.s32 %v2952, %v2942
      %v2954 = vadd.s32 %v2953, %v2944
      %v2955 = vshrl.u32 %v2954, 4
      %v2956 = vmul.u32 %v2955, 18
      %v2957 = vsub.s32 %v2933, %v2956
      %v2958 = vsub.s32 0, %v2957
      %v2959 = vsel %vm2931, %v2958, %v2957
      %vm2960 = vcmp.ne.s32.totalorder %v1799, 0
      %vm2961 = vcmp.ne.s32.totalorder %v1828, 0
      %vm2962 = vcmp.ne.s32.totalorder %v1857, 0
      %vm2963 = vcmp.ne.s32.totalorder %v1886, 0
      %vm2964 = vcmp.ne.s32.totalorder %v1915, 0
      %vm2965 = vcmp.ne.s32.totalorder %v1944, 0
      %vm2966 = vcmp.ne.s32.totalorder %v1973, 0
      %vm2967 = vcmp.ne.s32.totalorder %v2002, 0
      %vm2968 = vcmp.ne.s32.totalorder %v2031, 0
      %vm2969 = vcmp.ne.s32.totalorder %v2060, 0
      %vm2970 = vcmp.ne.s32.totalorder %v2089, 0
      %vm2971 = vcmp.ne.s32.totalorder %v2118, 0
      %vm2972 = vcmp.ne.s32.totalorder %v2147, 0
      %vm2973 = vcmp.ne.s32.totalorder %v2176, 0
      %vm2974 = vcmp.ne.s32.totalorder %v2205, 0
      %vm2975 = vcmp.ne.s32.totalorder %v2234, 0
      %vm2976 = vcmp.ne.s32.totalorder %v2263, 0
      %vm2977 = vcmp.ne.s32.totalorder %v2292, 0
      %vm2978 = vcmp.ne.s32.totalorder %v2321, 0
      %vm2979 = vcmp.ne.s32.totalorder %v2350, 0
      %vm2980 = vcmp.ne.s32.totalorder %v2379, 0
      %vm2981 = vcmp.ne.s32.totalorder %v2408, 0
      %vm2982 = vcmp.ne.s32.totalorder %v2437, 0
      %vm2983 = vcmp.ne.s32.totalorder %v2466, 0
      %vm2984 = vcmp.ne.s32.totalorder %v2495, 0
      %vm2985 = vcmp.ne.s32.totalorder %v2524, 0
      %vm2986 = vcmp.ne.s32.totalorder %v2553, 0
      %vm2987 = vcmp.ne.s32.totalorder %v2582, 0
      %vm2988 = vcmp.ne.s32.totalorder %v2611, 0
      %vm2989 = vcmp.ne.s32.totalorder %v2640, 0
      %vm2990 = vcmp.ne.s32.totalorder %v2669, 0
      %vm2991 = vcmp.ne.s32.totalorder %v2698, 0
      %vm2992 = vcmp.ne.s32.totalorder %v2727, 0
      %vm2993 = vcmp.ne.s32.totalorder %v2756, 0
      %vm2994 = vcmp.ne.s32.totalorder %v2785, 0
      %vm2995 = vcmp.ne.s32.totalorder %v2814, 0
      %vm2996 = vcmp.ne.s32.totalorder %v2843, 0
      %vm2997 = vcmp.ne.s32.totalorder %v2872, 0
      %vm2998 = vcmp.ne.s32.totalorder %v2901, 0
      %vm2999 = vcmp.ne.s32.totalorder %v2930, 0
      %vm3000 = vcmp.ne.s32.totalorder %v2959, 0
      %vm3001 = vcmp.lt.s32.totalorder %v1799, 0
      %vm3002 = vcmp.lt.s32.totalorder %v1828, 0
      %vm3003 = vcmp.lt.s32.totalorder %v1857, 0
      %vm3004 = vcmp.lt.s32.totalorder %v1886, 0
      %vm3005 = vcmp.lt.s32.totalorder %v1915, 0
      %vm3006 = vcmp.lt.s32.totalorder %v1944, 0
      %vm3007 = vcmp.lt.s32.totalorder %v1973, 0
      %vm3008 = vcmp.lt.s32.totalorder %v2002, 0
      %vm3009 = vcmp.lt.s32.totalorder %v2031, 0
      %vm3010 = vcmp.lt.s32.totalorder %v2060, 0
      %vm3011 = vcmp.lt.s32.totalorder %v2089, 0
      %vm3012 = vcmp.lt.s32.totalorder %v2118, 0
      %vm3013 = vcmp.lt.s32.totalorder %v2147, 0
      %vm3014 = vcmp.lt.s32.totalorder %v2176, 0
      %vm3015 = vcmp.lt.s32.totalorder %v2205, 0
      %vm3016 = vcmp.lt.s32.totalorder %v2234, 0
      %vm3017 = vcmp.lt.s32.totalorder %v2263, 0
      %vm3018 = vcmp.lt.s32.totalorder %v2292, 0
      %vm3019 = vcmp.lt.s32.totalorder %v2321, 0
      %vm3020 = vcmp.lt.s32.totalorder %v2350, 0
      %vm3021 = vcmp.lt.s32.totalorder %v2379, 0
      %vm3022 = vcmp.lt.s32.totalorder %v2408, 0
      %vm3023 = vcmp.lt.s32.totalorder %v2437, 0
      %vm3024 = vcmp.lt.s32.totalorder %v2466, 0
      %vm3025 = vcmp.lt.s32.totalorder %v2495, 0
      %vm3026 = vcmp.lt.s32.totalorder %v2524, 0
      %vm3027 = vcmp.lt.s32.totalorder %v2553, 0
      %vm3028 = vcmp.lt.s32.totalorder %v2582, 0
      %vm3029 = vcmp.lt.s32.totalorder %v2611, 0
      %vm3030 = vcmp.lt.s32.totalorder %v2640, 0
      %vm3031 = vcmp.lt.s32.totalorder %v2669, 0
      %vm3032 = vcmp.lt.s32.totalorder %v2698, 0
      %vm3033 = vcmp.lt.s32.totalorder %v2727, 0
      %vm3034 = vcmp.lt.s32.totalorder %v2756, 0
      %vm3035 = vcmp.lt.s32.totalorder %v2785, 0
      %vm3036 = vcmp.lt.s32.totalorder %v2814, 0
      %vm3037 = vcmp.lt.s32.totalorder %v2843, 0
      %vm3038 = vcmp.lt.s32.totalorder %v2872, 0
      %vm3039 = vcmp.lt.s32.totalorder %v2901, 0
      %vm3040 = vcmp.lt.s32.totalorder %v2930, 0
      %vm3041 = vcmp.lt.s32.totalorder %v2959, 0
      %vm3042 = vmand %vm3001, %vm2960
      %vm3043 = vmand %vm3002, %vm2961
      %vm3044 = vmand %vm3003, %vm2962
      %vm3045 = vmand %vm3004, %vm2963
      %vm3046 = vmand %vm3005, %vm2964
      %vm3047 = vmand %vm3006, %vm2965
      %vm3048 = vmand %vm3007, %vm2966
      %vm3049 = vmand %vm3008, %vm2967
      %vm3050 = vmand %vm3009, %vm2968
      %vm3051 = vmand %vm3010, %vm2969
      %vm3052 = vmand %vm3011, %vm2970
      %vm3053 = vmand %vm3012, %vm2971
      %vm3054 = vmand %vm3013, %vm2972
      %vm3055 = vmand %vm3014, %vm2973
      %vm3056 = vmand %vm3015, %vm2974
      %vm3057 = vmand %vm3016, %vm2975
      %vm3058 = vmand %vm3017, %vm2976
      %vm3059 = vmand %vm3018, %vm2977
      %vm3060 = vmand %vm3019, %vm2978
      %vm3061 = vmand %vm3020, %vm2979
      %vm3062 = vmand %vm3021, %vm2980
      %vm3063 = vmand %vm3022, %vm2981
      %vm3064 = vmand %vm3023, %vm2982
      %vm3065 = vmand %vm3024, %vm2983
      %vm3066 = vmand %vm3025, %vm2984
      %vm3067 = vmand %vm3026, %vm2985
      %vm3068 = vmand %vm3027, %vm2986
      %vm3069 = vmand %vm3028, %vm2987
      %vm3070 = vmand %vm3029, %vm2988
      %vm3071 = vmand %vm3030, %vm2989
      %vm3072 = vmand %vm3031, %vm2990
      %vm3073 = vmand %vm3032, %vm2991
      %vm3074 = vmand %vm3033, %vm2992
      %vm3075 = vmand %vm3034, %vm2993
      %vm3076 = vmand %vm3035, %vm2994
      %vm3077 = vmand %vm3036, %vm2995
      %vm3078 = vmand %vm3037, %vm2996
      %vm3079 = vmand %vm3038, %vm2997
      %vm3080 = vmand %vm3039, %vm2998
      %vm3081 = vmand %vm3040, %vm2999
      %vm3082 = vmand %vm3041, %vm3000
      %v3083 = vadd.s32 %v1799, 18
      %v3084 = vadd.s32 %v1828, 18
      %v3085 = vadd.s32 %v1857, 18
      %v3086 = vadd.s32 %v1886, 18
      %v3087 = vadd.s32 %v1915, 18
      %v3088 = vadd.s32 %v1944, 18
      %v3089 = vadd.s32 %v1973, 18
      %v3090 = vadd.s32 %v2002, 18
      %v3091 = vadd.s32 %v2031, 18
      %v3092 = vadd.s32 %v2060, 18
      %v3093 = vadd.s32 %v2089, 18
      %v3094 = vadd.s32 %v2118, 18
      %v3095 = vadd.s32 %v2147, 18
      %v3096 = vadd.s32 %v2176, 18
      %v3097 = vadd.s32 %v2205, 18
      %v3098 = vadd.s32 %v2234, 18
      %v3099 = vadd.s32 %v2263, 18
      %v3100 = vadd.s32 %v2292, 18
      %v3101 = vadd.s32 %v2321, 18
      %v3102 = vadd.s32 %v2350, 18
      %v3103 = vadd.s32 %v2379, 18
      %v3104 = vadd.s32 %v2408, 18
      %v3105 = vadd.s32 %v2437, 18
      %v3106 = vadd.s32 %v2466, 18
      %v3107 = vadd.s32 %v2495, 18
      %v3108 = vadd.s32 %v2524, 18
      %v3109 = vadd.s32 %v2553, 18
      %v3110 = vadd.s32 %v2582, 18
      %v3111 = vadd.s32 %v2611, 18
      %v3112 = vadd.s32 %v2640, 18
      %v3113 = vadd.s32 %v2669, 18
      %v3114 = vadd.s32 %v2698, 18
      %v3115 = vadd.s32 %v2727, 18
      %v3116 = vadd.s32 %v2756, 18
      %v3117 = vadd.s32 %v2785, 18
      %v3118 = vadd.s32 %v2814, 18
      %v3119 = vadd.s32 %v2843, 18
      %v3120 = vadd.s32 %v2872, 18
      %v3121 = vadd.s32 %v2901, 18
      %v3122 = vadd.s32 %v2930, 18
      %v3123 = vadd.s32 %v2959, 18
      %v3124 = vsel %vm3042, %v3083, %v1799
      %v3125 = vsel %vm3043, %v3084, %v1828
      %v3126 = vsel %vm3044, %v3085, %v1857
      %v3127 = vsel %vm3045, %v3086, %v1886
      %v3128 = vsel %vm3046, %v3087, %v1915
      %v3129 = vsel %vm3047, %v3088, %v1944
      %v3130 = vsel %vm3048, %v3089, %v1973
      %v3131 = vsel %vm3049, %v3090, %v2002
      %v3132 = vsel %vm3050, %v3091, %v2031
      %v3133 = vsel %vm3051, %v3092, %v2060
      %v3134 = vsel %vm3052, %v3093, %v2089
      %v3135 = vsel %vm3053, %v3094, %v2118
      %v3136 = vsel %vm3054, %v3095, %v2147
      %v3137 = vsel %vm3055, %v3096, %v2176
      %v3138 = vsel %vm3056, %v3097, %v2205
      %v3139 = vsel %vm3057, %v3098, %v2234
      %v3140 = vsel %vm3058, %v3099, %v2263
      %v3141 = vsel %vm3059, %v3100, %v2292
      %v3142 = vsel %vm3060, %v3101, %v2321
      %v3143 = vsel %vm3061, %v3102, %v2350
      %v3144 = vsel %vm3062, %v3103, %v2379
      %v3145 = vsel %vm3063, %v3104, %v2408
      %v3146 = vsel %vm3064, %v3105, %v2437
      %v3147 = vsel %vm3065, %v3106, %v2466
      %v3148 = vsel %vm3066, %v3107, %v2495
      %v3149 = vsel %vm3067, %v3108, %v2524
      %v3150 = vsel %vm3068, %v3109, %v2553
      %v3151 = vsel %vm3069, %v3110, %v2582
      %v3152 = vsel %vm3070, %v3111, %v2611
      %v3153 = vsel %vm3071, %v3112, %v2640
      %v3154 = vsel %vm3072, %v3113, %v2669
      %v3155 = vsel %vm3073, %v3114, %v2698
      %v3156 = vsel %vm3074, %v3115, %v2727
      %v3157 = vsel %vm3075, %v3116, %v2756
      %v3158 = vsel %vm3076, %v3117, %v2785
      %v3159 = vsel %vm3077, %v3118, %v2814
      %v3160 = vsel %vm3078, %v3119, %v2843
      %v3161 = vsel %vm3079, %v3120, %v2872
      %v3162 = vsel %vm3080, %v3121, %v2901
      %v3163 = vsel %vm3081, %v3122, %v2930
      %v3164 = vsel %vm3082, %v3123, %v2959
      %vm3165 = vcmp.lt.s32.totalorder %v3124, 16
      %vm3166 = vcmp.lt.s32.totalorder %v3125, 16
      %vm3167 = vcmp.lt.s32.totalorder %v3126, 16
      %vm3168 = vcmp.lt.s32.totalorder %v3127, 16
      %vm3169 = vcmp.lt.s32.totalorder %v3128, 16
      %vm3170 = vcmp.lt.s32.totalorder %v3129, 16
      %vm3171 = vcmp.lt.s32.totalorder %v3130, 16
      %vm3172 = vcmp.lt.s32.totalorder %v3131, 16
      %vm3173 = vcmp.lt.s32.totalorder %v3132, 16
      %vm3174 = vcmp.lt.s32.totalorder %v3133, 16
      %vm3175 = vcmp.lt.s32.totalorder %v3134, 16
      %vm3176 = vcmp.lt.s32.totalorder %v3135, 16
      %vm3177 = vcmp.lt.s32.totalorder %v3136, 16
      %vm3178 = vcmp.lt.s32.totalorder %v3137, 16
      %vm3179 = vcmp.lt.s32.totalorder %v3138, 16
      %vm3180 = vcmp.lt.s32.totalorder %v3139, 16
      %vm3181 = vcmp.lt.s32.totalorder %v3140, 16
      %vm3182 = vcmp.lt.s32.totalorder %v3141, 16
      %vm3183 = vcmp.lt.s32.totalorder %v3142, 16
      %vm3184 = vcmp.lt.s32.totalorder %v3143, 16
      %vm3185 = vcmp.lt.s32.totalorder %v3144, 16
      %vm3186 = vcmp.lt.s32.totalorder %v3145, 16
      %vm3187 = vcmp.lt.s32.totalorder %v3146, 16
      %vm3188 = vcmp.lt.s32.totalorder %v3147, 16
      %vm3189 = vcmp.lt.s32.totalorder %v3148, 16
      %vm3190 = vcmp.lt.s32.totalorder %v3149, 16
      %vm3191 = vcmp.lt.s32.totalorder %v3150, 16
      %vm3192 = vcmp.lt.s32.totalorder %v3151, 16
      %vm3193 = vcmp.lt.s32.totalorder %v3152, 16
      %vm3194 = vcmp.lt.s32.totalorder %v3153, 16
      %vm3195 = vcmp.lt.s32.totalorder %v3154, 16
      %vm3196 = vcmp.lt.s32.totalorder %v3155, 16
      %vm3197 = vcmp.lt.s32.totalorder %v3156, 16
      %vm3198 = vcmp.lt.s32.totalorder %v3157, 16
      %vm3199 = vcmp.lt.s32.totalorder %v3158, 16
      %vm3200 = vcmp.lt.s32.totalorder %v3159, 16
      %vm3201 = vcmp.lt.s32.totalorder %v3160, 16
      %vm3202 = vcmp.lt.s32.totalorder %v3161, 16
      %vm3203 = vcmp.lt.s32.totalorder %v3162, 16
      %vm3204 = vcmp.lt.s32.totalorder %v3163, 16
      %vm3205 = vcmp.lt.s32.totalorder %v3164, 16
      %vm3206 = vcmp.lt.s32.totalorder %v1730, 288
      %vm3207 = vcmp.lt.s32.totalorder %v1731, 288
      %vm3208 = vcmp.lt.s32.totalorder %v1732, 288
      %vm3209 = vcmp.lt.s32.totalorder %v1733, 288
      %vm3210 = vcmp.lt.s32.totalorder %v1734, 288
      %vm3211 = vcmp.lt.s32.totalorder %v1735, 288
      %vm3212 = vcmp.lt.s32.totalorder %v1736, 288
      %vm3213 = vcmp.lt.s32.totalorder %v1737, 288
      %vm3214 = vcmp.lt.s32.totalorder %v1738, 288
      %vm3215 = vcmp.lt.s32.totalorder %v1739, 288
      %vm3216 = vcmp.lt.s32.totalorder %v1740, 288
      %vm3217 = vcmp.lt.s32.totalorder %v1741, 288
      %vm3218 = vcmp.lt.s32.totalorder %v1742, 288
      %vm3219 = vcmp.lt.s32.totalorder %v1743, 288
      %vm3220 = vcmp.lt.s32.totalorder %v1744, 288
      %vm3221 = vcmp.lt.s32.totalorder %v1745, 288
      %vm3222 = vcmp.lt.s32.totalorder %v1746, 288
      %vm3223 = vcmp.lt.s32.totalorder %v1747, 288
      %vm3224 = vcmp.lt.s32.totalorder %v1748, 288
      %vm3225 = vcmp.lt.s32.totalorder %v1749, 288
      %vm3226 = vcmp.lt.s32.totalorder %v1750, 288
      %vm3227 = vcmp.lt.s32.totalorder %v1751, 288
      %vm3228 = vcmp.lt.s32.totalorder %v1752, 288
      %vm3229 = vcmp.lt.s32.totalorder %v1753, 288
      %vm3230 = vcmp.lt.s32.totalorder %v1754, 288
      %vm3231 = vcmp.lt.s32.totalorder %v1755, 288
      %vm3232 = vcmp.lt.s32.totalorder %v1756, 288
      %vm3233 = vcmp.lt.s32.totalorder %v1757, 288
      %vm3234 = vcmp.lt.s32.totalorder %v1758, 288
      %vm3235 = vcmp.lt.s32.totalorder %v1759, 288
      %vm3236 = vcmp.lt.s32.totalorder %v1760, 288
      %vm3237 = vcmp.lt.s32.totalorder %v1761, 288
      %vm3238 = vcmp.lt.s32.totalorder %v1762, 288
      %vm3239 = vcmp.lt.s32.totalorder %v1763, 288
      %vm3240 = vcmp.lt.s32.totalorder %v1764, 288
      %vm3241 = vcmp.lt.s32.totalorder %v1765, 288
      %vm3242 = vcmp.lt.s32.totalorder %v1766, 288
      %vm3243 = vcmp.lt.s32.totalorder %v1767, 288
      %vm3244 = vcmp.lt.s32.totalorder %v1768, 288
      %vm3245 = vcmp.lt.s32.totalorder %v1769, 288
      %vm3246 = vcmp.lt.s32.totalorder %v1770, 288
      %vm3247 = vmand %vm3165, %vm3206
      %vm3248 = vmand %vm3166, %vm3207
      %vm3249 = vmand %vm3167, %vm3208
      %vm3250 = vmand %vm3168, %vm3209
      %vm3251 = vmand %vm3169, %vm3210
      %vm3252 = vmand %vm3170, %vm3211
      %vm3253 = vmand %vm3171, %vm3212
      %vm3254 = vmand %vm3172, %vm3213
      %vm3255 = vmand %vm3173, %vm3214
      %vm3256 = vmand %vm3174, %vm3215
      %vm3257 = vmand %vm3175, %vm3216
      %vm3258 = vmand %vm3176, %vm3217
      %vm3259 = vmand %vm3177, %vm3218
      %vm3260 = vmand %vm3178, %vm3219
      %vm3261 = vmand %vm3179, %vm3220
      %vm3262 = vmand %vm3180, %vm3221
      %vm3263 = vmand %vm3181, %vm3222
      %vm3264 = vmand %vm3182, %vm3223
      %vm3265 = vmand %vm3183, %vm3224
      %vm3266 = vmand %vm3184, %vm3225
      %vm3267 = vmand %vm3185, %vm3226
      %vm3268 = vmand %vm3186, %vm3227
      %vm3269 = vmand %vm3187, %vm3228
      %vm3270 = vmand %vm3188, %vm3229
      %vm3271 = vmand %vm3189, %vm3230
      %vm3272 = vmand %vm3190, %vm3231
      %vm3273 = vmand %vm3191, %vm3232
      %vm3274 = vmand %vm3192, %vm3233
      %vm3275 = vmand %vm3193, %vm3234
      %vm3276 = vmand %vm3194, %vm3235
      %vm3277 = vmand %vm3195, %vm3236
      %vm3278 = vmand %vm3196, %vm3237
      %vm3279 = vmand %vm3197, %vm3238
      %vm3280 = vmand %vm3198, %vm3239
      %vm3281 = vmand %vm3199, %vm3240
      %vm3282 = vmand %vm3200, %vm3241
      %vm3283 = vmand %vm3201, %vm3242
      %vm3284 = vmand %vm3202, %vm3243
      %vm3285 = vmand %vm3203, %vm3244
      %vm3286 = vmand %vm3204, %vm3245
      %vm3287 = vmand %vm3205, %vm3246
      %vm3288 = vcmask 523264
      %3289 = vst.msk [vmem:[#allocation2] sm:$0xff] %vm3288, 0.0
      %3290 = vst.msk [vmem:[#allocation2 + $0x8] sm:$0xff] %vm3288, 0.0
      %3291 = vst.msk [vmem:[#allocation2 + $0x10] sm:$0xff] %vm3288, 0.0
      %3292 = vst.msk [vmem:[#allocation3] sm:$0xff] %vm3288, 0.0
      %3293 = vst.msk [vmem:[#allocation3 + $0x8] sm:$0xff] %vm3288, 0.0
      %3294 = vst.msk [vmem:[#allocation3 + $0x10] sm:$0xff] %vm3288, 0.0
      %3295 = vst.msk [vmem:[#allocation2 + $0x160] sm:$0xff] %vm3288, 0.0
      %3296 = vst.msk [vmem:[#allocation2 + $0x168] sm:$0xff] %vm3288, 0.0
      %3297 = vst.msk [vmem:[#allocation2 + $0x170] sm:$0xff] %vm3288, 0.0
      %3298 = vst.msk [vmem:[#allocation2 + $0x178] sm:$0xff] %vm3288, 0.0
      %3299 = vst.msk [vmem:[#allocation2 + $0x180] sm:$0xff] %vm3288, 0.0
      %3300 = vst.msk [vmem:[#allocation3 + $0x160] sm:$0xff] %vm3288, 0.0
      %3301 = vst.msk [vmem:[#allocation3 + $0x168] sm:$0xff] %vm3288, 0.0
      %3302 = vst.msk [vmem:[#allocation3 + $0x170] sm:$0xff] %vm3288, 0.0
      %3303 = vst.msk [vmem:[#allocation3 + $0x178] sm:$0xff] %vm3288, 0.0
      %3304 = vst.msk [vmem:[#allocation3 + $0x180] sm:$0xff] %vm3288, 0.0
      %v3305 = vld [vmem:[%s327] sm:$0xff]
      %v3306 = vld [vmem:[%s327 + $0x8] sm:$0xff]
      %v3307 = vld [vmem:[%s327 + $0x10] sm:$0xff]
      %v3308 = vld [vmem:[%s327 + $0x18] sm:$0xff]
      %v3309 = vld [vmem:[%s327 + $0x20] sm:$0xff]
      %v3310 = vld [vmem:[%s327 + $0x28] sm:$0xff]
      %v3311 = vld [vmem:[%s327 + $0x30] sm:$0xff]
      %v3312 = vld [vmem:[%s327 + $0x38] sm:$0xff]
      %v3313 = vld [vmem:[%s327 + $0x40] sm:$0xff]
      %v3314 = vld [vmem:[%s327 + $0x48] sm:$0xff]
      %v3315 = vld [vmem:[%s327 + $0x50] sm:$0xff]
      %v3316 = vld [vmem:[%s327 + $0x58] sm:$0xff]
      %v3317 = vld [vmem:[%s327 + $0x60] sm:$0xff]
      %v3318 = vld [vmem:[%s327 + $0x68] sm:$0xff]
      %v3319 = vld [vmem:[%s327 + $0x70] sm:$0xff]
      %v3320 = vld [vmem:[%s327 + $0x78] sm:$0xff]
      %v3321 = vld [vmem:[%s327 + $0x80] sm:$0xff]
      %v3322 = vld [vmem:[%s327 + $0x88] sm:$0xff]
      %v3323 = vld [vmem:[%s327 + $0x90] sm:$0xff]
      %v3324 = vld [vmem:[%s327 + $0x98] sm:$0xff]
      %v3325 = vld [vmem:[%s327 + $0xa0] sm:$0xff]
      %v3326 = vld [vmem:[%s327 + $0xa8] sm:$0xff]
      %v3327 = vld [vmem:[%s327 + $0xb0] sm:$0xff]
      %v3328 = vld [vmem:[%s327 + $0xb8] sm:$0xff]
      %v3329 = vld [vmem:[%s327 + $0xc0] sm:$0xff]
      %v3330 = vld [vmem:[%s327 + $0xc8] sm:$0xff]
      %v3331 = vld [vmem:[%s327 + $0xd0] sm:$0xff]
      %v3332 = vld [vmem:[%s327 + $0xd8] sm:$0xff]
      %v3333 = vld [vmem:[%s327 + $0xe0] sm:$0xff]
      %v3334 = vld [vmem:[%s327 + $0xe8] sm:$0xff]
      %v3335 = vld [vmem:[%s327 + $0xf0] sm:$0xff]
      %v3336 = vld [vmem:[%s327 + $0xf8] sm:$0xff]
      %v3337 = vld [vmem:[%s327 + $0x100] sm:$0xff]
      %v3338 = vld [vmem:[%s327 + $0x108] sm:$0xff]
      %v3339 = vld [vmem:[%s327 + $0x110] sm:$0xff]
      %v3340 = vld [vmem:[%s327 + $0x118] sm:$0xff]
      %v3341 = vld [vmem:[%s327 + $0x120] sm:$0xff]
      %v3342 = vld [vmem:[%s327 + $0x128] sm:$0xff]
      %v3343 = vld [vmem:[%s327 + $0x130] sm:$0xff]
      %v3344 = vld [vmem:[%s327 + $0x138] sm:$0xff]
      %v3345 = vld [vmem:[%s327 + $0x140] sm:$0xff]
      %vm3346 = vcmask 31744
      %3347 = vst.msk [vmem:[#allocation2 + $0x18] sm:$0xff] %vm3346, %v3305
      %3348 = vst.msk [vmem:[#allocation2 + $0x20] sm:$0xff] %vm3346, %v3306
      %3349 = vst.msk [vmem:[#allocation2 + $0x28] sm:$0xff] %vm3346, %v3307
      %3350 = vst.msk [vmem:[#allocation2 + $0x30] sm:$0xff] %vm3346, %v3308
      %3351 = vst.msk [vmem:[#allocation2 + $0x38] sm:$0xff] %vm3346, %v3309
      %3352 = vst.msk [vmem:[#allocation2 + $0x40] sm:$0xff] %vm3346, %v3310
      %3353 = vst.msk [vmem:[#allocation2 + $0x48] sm:$0xff] %vm3346, %v3311
      %3354 = vst.msk [vmem:[#allocation2 + $0x50] sm:$0xff] %vm3346, %v3312
      %3355 = vst.msk [vmem:[#allocation2 + $0x58] sm:$0xff] %vm3346, %v3313
      %3356 = vst.msk [vmem:[#allocation2 + $0x60] sm:$0xff] %vm3346, %v3314
      %3357 = vst.msk [vmem:[#allocation2 + $0x68] sm:$0xff] %vm3346, %v3315
      %3358 = vst.msk [vmem:[#allocation2 + $0x70] sm:$0xff] %vm3346, %v3316
      %3359 = vst.msk [vmem:[#allocation2 + $0x78] sm:$0xff] %vm3346, %v3317
      %3360 = vst.msk [vmem:[#allocation2 + $0x80] sm:$0xff] %vm3346, %v3318
      %3361 = vst.msk [vmem:[#allocation2 + $0x88] sm:$0xff] %vm3346, %v3319
      %3362 = vst.msk [vmem:[#allocation2 + $0x90] sm:$0xff] %vm3346, %v3320
      %3363 = vst.msk [vmem:[#allocation2 + $0x98] sm:$0xff] %vm3346, %v3321
      %3364 = vst.msk [vmem:[#allocation2 + $0xa0] sm:$0xff] %vm3346, %v3322
      %3365 = vst.msk [vmem:[#allocation2 + $0xa8] sm:$0xff] %vm3346, %v3323
      %3366 = vst.msk [vmem:[#allocation2 + $0xb0] sm:$0xff] %vm3346, %v3324
      %3367 = vst.msk [vmem:[#allocation2 + $0xb8] sm:$0xff] %vm3346, %v3325
      %3368 = vst.msk [vmem:[#allocation2 + $0xc0] sm:$0xff] %vm3346, %v3326
      %3369 = vst.msk [vmem:[#allocation2 + $0xc8] sm:$0xff] %vm3346, %v3327
      %3370 = vst.msk [vmem:[#allocation2 + $0xd0] sm:$0xff] %vm3346, %v3328
      %3371 = vst.msk [vmem:[#allocation2 + $0xd8] sm:$0xff] %vm3346, %v3329
      %3372 = vst.msk [vmem:[#allocation2 + $0xe0] sm:$0xff] %vm3346, %v3330
      %3373 = vst.msk [vmem:[#allocation2 + $0xe8] sm:$0xff] %vm3346, %v3331
      %3374 = vst.msk [vmem:[#allocation2 + $0xf0] sm:$0xff] %vm3346, %v3332
      %3375 = vst.msk [vmem:[#allocation2 + $0xf8] sm:$0xff] %vm3346, %v3333
      %3376 = vst.msk [vmem:[#allocation2 + $0x100] sm:$0xff] %vm3346, %v3334
      %3377 = vst.msk [vmem:[#allocation2 + $0x108] sm:$0xff] %vm3346, %v3335
      %3378 = vst.msk [vmem:[#allocation2 + $0x110] sm:$0xff] %vm3346, %v3336
      %3379 = vst.msk [vmem:[#allocation2 + $0x118] sm:$0xff] %vm3346, %v3337
      %3380 = vst.msk [vmem:[#allocation2 + $0x120] sm:$0xff] %vm3346, %v3338
      %3381 = vst.msk [vmem:[#allocation2 + $0x128] sm:$0xff] %vm3346, %v3339
      %3382 = vst.msk [vmem:[#allocation2 + $0x130] sm:$0xff] %vm3346, %v3340
      %3383 = vst.msk [vmem:[#allocation2 + $0x138] sm:$0xff] %vm3346, %v3341
      %3384 = vst.msk [vmem:[#allocation2 + $0x140] sm:$0xff] %vm3346, %v3342
      %3385 = vst.msk [vmem:[#allocation2 + $0x148] sm:$0xff] %vm3346, %v3343
      %3386 = vst.msk [vmem:[#allocation2 + $0x150] sm:$0xff] %vm3346, %v3344
      %3387 = vst.msk [vmem:[#allocation2 + $0x158] sm:$0xff] %vm3346, %v3345
      %v3388 = vld [vmem:[#allocation2 + $0x18] sm:$0xff]
      %v3389 = vld [vmem:[#allocation2 + $0x20] sm:$0xff]
      %v3390 = vld [vmem:[#allocation2 + $0x28] sm:$0xff]
      %v3391 = vld [vmem:[#allocation2 + $0x30] sm:$0xff]
      %v3392 = vld [vmem:[#allocation2 + $0x38] sm:$0xff]
      %v3393 = vld [vmem:[#allocation2 + $0x40] sm:$0xff]
      %v3394 = vld [vmem:[#allocation2 + $0x48] sm:$0xff]
      %v3395 = vld [vmem:[#allocation2 + $0x50] sm:$0xff]
      %v3396 = vld [vmem:[#allocation2 + $0x58] sm:$0xff]
      %v3397 = vld [vmem:[#allocation2 + $0x60] sm:$0xff]
      %v3398 = vld [vmem:[#allocation2 + $0x68] sm:$0xff]
      %v3399 = vld [vmem:[#allocation2 + $0x70] sm:$0xff]
      %v3400 = vld [vmem:[#allocation2 + $0x78] sm:$0xff]
      %v3401 = vld [vmem:[#allocation2 + $0x80] sm:$0xff]
      %v3402 = vld [vmem:[#allocation2 + $0x88] sm:$0xff]
      %v3403 = vld [vmem:[#allocation2 + $0x90] sm:$0xff]
      %v3404 = vld [vmem:[#allocation2 + $0x98] sm:$0xff]
      %v3405 = vld [vmem:[#allocation2 + $0xa0] sm:$0xff]
      %v3406 = vld [vmem:[#allocation2 + $0xa8] sm:$0xff]
      %v3407 = vld [vmem:[#allocation2 + $0xb0] sm:$0xff]
      %v3408 = vld [vmem:[#allocation2 + $0xb8] sm:$0xff]
      %v3409 = vld [vmem:[#allocation2 + $0xc0] sm:$0xff]
      %v3410 = vld [vmem:[#allocation2 + $0xc8] sm:$0xff]
      %v3411 = vld [vmem:[#allocation2 + $0xd0] sm:$0xff]
      %v3412 = vld [vmem:[#allocation2 + $0xd8] sm:$0xff]
      %v3413 = vld [vmem:[#allocation2 + $0xe0] sm:$0xff]
      %v3414 = vld [vmem:[#allocation2 + $0xe8] sm:$0xff]
      %v3415 = vld [vmem:[#allocation2 + $0xf0] sm:$0xff]
      %v3416 = vld [vmem:[#allocation2 + $0xf8] sm:$0xff]
      %v3417 = vld [vmem:[#allocation2 + $0x100] sm:$0xff]
      %v3418 = vld [vmem:[#allocation2 + $0x108] sm:$0xff]
      %v3419 = vld [vmem:[#allocation2 + $0x110] sm:$0xff]
      %v3420 = vld [vmem:[#allocation2 + $0x118] sm:$0xff]
      %v3421 = vld [vmem:[#allocation2 + $0x120] sm:$0xff]
      %v3422 = vld [vmem:[#allocation2 + $0x128] sm:$0xff]
      %v3423 = vld [vmem:[#allocation2 + $0x130] sm:$0xff]
      %v3424 = vld [vmem:[#allocation2 + $0x138] sm:$0xff]
      %v3425 = vld [vmem:[#allocation2 + $0x140] sm:$0xff]
      %v3426 = vld [vmem:[#allocation2 + $0x148] sm:$0xff]
      %v3427 = vld [vmem:[#allocation2 + $0x150] sm:$0xff]
      %v3428 = vld [vmem:[#allocation2 + $0x158] sm:$0xff]
      %v3429 = vpack.c.bf16 %v3389, %v3388
      %v3430 = vpack.c.bf16 %v3391, %v3390
      %v3431 = vpack.c.bf16 %v3393, %v3392
      %v3432 = vpack.c.bf16 %v3395, %v3394
      %v3433 = vpack.c.bf16 %v3397, %v3396
      %v3434 = vpack.c.bf16 %v3399, %v3398
      %v3435 = vpack.c.bf16 %v3401, %v3400
      %v3436 = vpack.c.bf16 %v3403, %v3402
      %v3437 = vpack.c.bf16 %v3405, %v3404
      %v3438 = vpack.c.bf16 %v3407, %v3406
      %v3439 = vpack.c.bf16 %v3409, %v3408
      %v3440 = vpack.c.bf16 %v3411, %v3410
      %v3441 = vpack.c.bf16 %v3413, %v3412
      %v3442 = vpack.c.bf16 %v3415, %v3414
      %v3443 = vpack.c.bf16 %v3417, %v3416
      %v3444 = vpack.c.bf16 %v3419, %v3418
      %v3445 = vpack.c.bf16 %v3421, %v3420
      %v3446 = vpack.c.bf16 %v3423, %v3422
      %v3447 = vpack.c.bf16 %v3425, %v3424
      %v3448 = vpack.c.bf16 %v3427, %v3426
      %v3449 = vpack.c.bf16 %v3428, %v3428
      %v3450 = vld [vmem:[%s1] sm:$0x3]
      %v3451 = vld [vmem:[#allocation2 + $0x19] sm:$0xff]
      %v3452 = vld [vmem:[#allocation2 + $0x21] sm:$0xff]
      %v3453 = vld [vmem:[#allocation2 + $0x29] sm:$0xff]
      %v3454 = vld [vmem:[#allocation2 + $0x31] sm:$0xff]
      %v3455 = vld [vmem:[#allocation2 + $0x39] sm:$0xff]
      %v3456 = vld [vmem:[#allocation2 + $0x41] sm:$0xff]
      %v3457 = vld [vmem:[#allocation2 + $0x49] sm:$0xff]
      %v3458 = vld [vmem:[#allocation2 + $0x51] sm:$0xff]
      %v3459 = vld [vmem:[#allocation2 + $0x59] sm:$0xff]
      %v3460 = vld [vmem:[#allocation2 + $0x61] sm:$0xff]
      %v3461 = vld [vmem:[#allocation2 + $0x69] sm:$0xff]
      %v3462 = vld [vmem:[#allocation2 + $0x71] sm:$0xff]
      %v3463 = vld [vmem:[#allocation2 + $0x79] sm:$0xff]
      %v3464 = vld [vmem:[#allocation2 + $0x81] sm:$0xff]
      %v3465 = vld [vmem:[#allocation2 + $0x89] sm:$0xff]
      %v3466 = vld [vmem:[#allocation2 + $0x91] sm:$0xff]
      %v3467 = vld [vmem:[#allocation2 + $0x99] sm:$0xff]
      %v3468 = vld [vmem:[#allocation2 + $0xa1] sm:$0xff]
      %v3469 = vld [vmem:[#allocation2 + $0xa9] sm:$0xff]
      %v3470 = vld [vmem:[#allocation2 + $0xb1] sm:$0xff]
      %v3471 = vld [vmem:[#allocation2 + $0xb9] sm:$0xff]
      %v3472 = vld [vmem:[#allocation2 + $0xc1] sm:$0xff]
      %v3473 = vld [vmem:[#allocation2 + $0xc9] sm:$0xff]
      %v3474 = vld [vmem:[#allocation2 + $0xd1] sm:$0xff]
      %v3475 = vld [vmem:[#allocation2 + $0xd9] sm:$0xff]
      %v3476 = vld [vmem:[#allocation2 + $0xe1] sm:$0xff]
      %v3477 = vld [vmem:[#allocation2 + $0xe9] sm:$0xff]
      %v3478 = vld [vmem:[#allocation2 + $0xf1] sm:$0xff]
      %v3479 = vld [vmem:[#allocation2 + $0xf9] sm:$0xff]
      %v3480 = vld [vmem:[#allocation2 + $0x101] sm:$0xff]
      %v3481 = vld [vmem:[#allocation2 + $0x109] sm:$0xff]
      %v3482 = vld [vmem:[#allocation2 + $0x111] sm:$0xff]
      %v3483 = vld [vmem:[#allocation2 + $0x119] sm:$0xff]
      %v3484 = vld [vmem:[#allocation2 + $0x121] sm:$0xff]
      %v3485 = vld [vmem:[#allocation2 + $0x129] sm:$0xff]
      %v3486 = vld [vmem:[#allocation2 + $0x131] sm:$0xff]
      %v3487 = vld [vmem:[#allocation2 + $0x139] sm:$0xff]
      %v3488 = vld [vmem:[#allocation2 + $0x141] sm:$0xff]
      %v3489 = vld [vmem:[#allocation2 + $0x149] sm:$0xff]
      %v3490 = vld [vmem:[#allocation2 + $0x151] sm:$0xff]
      %v3491 = vld [vmem:[#allocation2 + $0x159] sm:$0xff]
      %v3492 = vpack.c.bf16 %v3452, %v3451
      %v3493 = vpack.c.bf16 %v3454, %v3453
      %v3494 = vpack.c.bf16 %v3456, %v3455
      %v3495 = vpack.c.bf16 %v3458, %v3457
      %v3496 = vpack.c.bf16 %v3460, %v3459
      %v3497 = vpack.c.bf16 %v3462, %v3461
      %v3498 = vpack.c.bf16 %v3464, %v3463
      %v3499 = vpack.c.bf16 %v3466, %v3465
      %v3500 = vpack.c.bf16 %v3468, %v3467
      %v3501 = vpack.c.bf16 %v3470, %v3469
      %v3502 = vpack.c.bf16 %v3472, %v3471
      %v3503 = vpack.c.bf16 %v3474, %v3473
      %v3504 = vpack.c.bf16 %v3476, %v3475
      %v3505 = vpack.c.bf16 %v3478, %v3477
      %v3506 = vpack.c.bf16 %v3480, %v3479
      %v3507 = vpack.c.bf16 %v3482, %v3481
      %v3508 = vpack.c.bf16 %v3484, %v3483
      %v3509 = vpack.c.bf16 %v3486, %v3485
      %v3510 = vpack.c.bf16 %v3488, %v3487
      %v3511 = vpack.c.bf16 %v3490, %v3489
      %v3512 = vpack.c.bf16 %v3491, %v3491
      %s3513 = scalar_lea.vmem %s1, 2
      %v3514 = vld [vmem:[%s3513] sm:$0x3]
      %v3516 = vsel %vm3346, %v3492, 0
      %v3519 = vsel %vm3346, %v3493, 0
      %v3522 = vsel %vm3346, %v3494, 0
      %v3525 = vsel %vm3346, %v3495, 0
      %v3528 = vsel %vm3346, %v3496, 0
      %v3531 = vsel %vm3346, %v3497, 0
      %v3534 = vsel %vm3346, %v3498, 0
      %v3537 = vsel %vm3346, %v3499, 0
      %v3540 = vsel %vm3346, %v3500, 0
      %v3543 = vsel %vm3346, %v3501, 0
      %v3546 = vsel %vm3346, %v3502, 0
      %v3549 = vsel %vm3346, %v3503, 0
      %v3552 = vsel %vm3346, %v3504, 0
      %v3555 = vsel %vm3346, %v3505, 0
      %v3558 = vsel %vm3346, %v3506, 0
      %v3561 = vsel %vm3346, %v3507, 0
      %v3564 = vsel %vm3346, %v3508, 0
      %v3567 = vsel %vm3346, %v3509, 0
      %v3570 = vsel %vm3346, %v3510, 0
      %v3573 = vsel %vm3346, %v3511, 0
      %v3576 = vsel %vm3346, %v3512, 0
      %vm3578 = vcmask 1041408
      %v3580 = vsel %vm3578, %v3514, 0
      %3582 = vmatpush.bf16.msra.mxu0 0
      %3583 = vmatpush.bf16.msra.mxu0 0
      %3584 = vmatpush.bf16.msra.mxu0 0
      %3585 = vmatpush.bf16.msra.mxu0 0
      %3586 = vmatpush.bf16.msra.mxu0 0
      %3587 = vmatpush.bf16.msra.mxu0 0
      %3588 = vmatpush.bf16.msra.mxu0 0
      %3589 = vmatpush.bf16.msra.mxu0 %v3580
      %3590 = vmatmul.bf16.gmra.mxu0 %v3516
      %v3591 = vpop.f32.mrf.mxu0
      %v3592 = vadd.f32 0.0, %v3591
      %v3593 = vpop.f32.mrf.mxu0
      %v3594 = vadd.f32 0.0, %v3593
      %3595 = vmatmul.bf16.gmra.mxu0 %v3519
      %v3596 = vpop.f32.mrf.mxu0
      %v3597 = vadd.f32 0.0, %v3596
      %v3598 = vpop.f32.mrf.mxu0
      %v3599 = vadd.f32 0.0, %v3598
      %3600 = vmatmul.bf16.gmra.mxu0 %v3522
      %v3601 = vpop.f32.mrf.mxu0
      %v3602 = vadd.f32 0.0, %v3601
      %v3603 = vpop.f32.mrf.mxu0
      %v3604 = vadd.f32 0.0, %v3603
      %3605 = vmatmul.bf16.gmra.mxu0 %v3525
      %v3606 = vpop.f32.mrf.mxu0
      %v3607 = vadd.f32 0.0, %v3606
      %v3608 = vpop.f32.mrf.mxu0
      %v3609 = vadd.f32 0.0, %v3608
      %3610 = vmatmul.bf16.gmra.mxu0 %v3528
      %v3611 = vpop.f32.mrf.mxu0
      %v3612 = vadd.f32 0.0, %v3611
      %v3613 = vpop.f32.mrf.mxu0
      %v3614 = vadd.f32 0.0, %v3613
      %3615 = vmatmul.bf16.gmra.mxu0 %v3531
      %v3616 = vpop.f32.mrf.mxu0
      %v3617 = vadd.f32 0.0, %v3616
      %v3618 = vpop.f32.mrf.mxu0
      %v3619 = vadd.f32 0.0, %v3618
      %3620 = vmatmul.bf16.gmra.mxu0 %v3534
      %v3621 = vpop.f32.mrf.mxu0
      %v3622 = vadd.f32 0.0, %v3621
      %v3623 = vpop.f32.mrf.mxu0
      %v3624 = vadd.f32 0.0, %v3623
      %3625 = vmatmul.bf16.gmra.mxu0 %v3537
      %v3626 = vpop.f32.mrf.mxu0
      %v3627 = vadd.f32 0.0, %v3626
      %v3628 = vpop.f32.mrf.mxu0
      %v3629 = vadd.f32 0.0, %v3628
      %3630 = vmatmul.bf16.gmra.mxu0 %v3540
      %v3631 = vpop.f32.mrf.mxu0
      %v3632 = vadd.f32 0.0, %v3631
      %v3633 = vpop.f32.mrf.mxu0
      %v3634 = vadd.f32 0.0, %v3633
      %3635 = vmatmul.bf16.gmra.mxu0 %v3543
      %v3636 = vpop.f32.mrf.mxu0
      %v3637 = vadd.f32 0.0, %v3636
      %v3638 = vpop.f32.mrf.mxu0
      %v3639 = vadd.f32 0.0, %v3638
      %3640 = vmatmul.bf16.gmra.mxu0 %v3546
      %v3641 = vpop.f32.mrf.mxu0
      %v3642 = vadd.f32 0.0, %v3641
      %v3643 = vpop.f32.mrf.mxu0
      %v3644 = vadd.f32 0.0, %v3643
      %3645 = vmatmul.bf16.gmra.mxu0 %v3549
      %v3646 = vpop.f32.mrf.mxu0
      %v3647 = vadd.f32 0.0, %v3646
      %v3648 = vpop.f32.mrf.mxu0
      %v3649 = vadd.f32 0.0, %v3648
      %3650 = vmatmul.bf16.gmra.mxu0 %v3552
      %v3651 = vpop.f32.mrf.mxu0
      %v3652 = vadd.f32 0.0, %v3651
      %v3653 = vpop.f32.mrf.mxu0
      %v3654 = vadd.f32 0.0, %v3653
      %3655 = vmatmul.bf16.gmra.mxu0 %v3555
      %v3656 = vpop.f32.mrf.mxu0
      %v3657 = vadd.f32 0.0, %v3656
      %v3658 = vpop.f32.mrf.mxu0
      %v3659 = vadd.f32 0.0, %v3658
      %3660 = vmatmul.bf16.gmra.mxu0 %v3558
      %v3661 = vpop.f32.mrf.mxu0
      %v3662 = vadd.f32 0.0, %v3661
      %v3663 = vpop.f32.mrf.mxu0
      %v3664 = vadd.f32 0.0, %v3663
      %3665 = vmatmul.bf16.gmra.mxu0 %v3561
      %v3666 = vpop.f32.mrf.mxu0
      %v3667 = vadd.f32 0.0, %v3666
      %v3668 = vpop.f32.mrf.mxu0
      %v3669 = vadd.f32 0.0, %v3668
      %3670 = vmatmul.bf16.gmra.mxu0 %v3564
      %v3671 = vpop.f32.mrf.mxu0
      %v3672 = vadd.f32 0.0, %v3671
      %v3673 = vpop.f32.mrf.mxu0
      %v3674 = vadd.f32 0.0, %v3673
      %3675 = vmatmul.bf16.gmra.mxu0 %v3567
      %v3676 = vpop.f32.mrf.mxu0
      %v3677 = vadd.f32 0.0, %v3676
      %v3678 = vpop.f32.mrf.mxu0
      %v3679 = vadd.f32 0.0, %v3678
      %3680 = vmatmul.bf16.gmra.mxu0 %v3570
      %v3681 = vpop.f32.mrf.mxu0
      %v3682 = vadd.f32 0.0, %v3681
      %v3683 = vpop.f32.mrf.mxu0
      %v3684 = vadd.f32 0.0, %v3683
      %3685 = vmatmul.bf16.gmra.mxu0 %v3573
      %v3686 = vpop.f32.mrf.mxu0
      %v3687 = vadd.f32 0.0, %v3686
      %v3688 = vpop.f32.mrf.mxu0
      %v3689 = vadd.f32 0.0, %v3688
      %3690 = vmatmul.bf16.gmra.mxu0 %v3576
      %v3691 = vpop.f32.mrf.mxu0
      %v3692 = vadd.f32 0.0, %v3691
      %v3693 = vpop.f32.mrf.mxu0
      %3694 = vdwg.mxu0
      %v3696 = vsel %vm3346, %v3429, 0
      %v3699 = vsel %vm3346, %v3430, 0
      %v3702 = vsel %vm3346, %v3431, 0
      %v3705 = vsel %vm3346, %v3432, 0
      %v3708 = vsel %vm3346, %v3433, 0
      %v3711 = vsel %vm3346, %v3434, 0
      %v3714 = vsel %vm3346, %v3435, 0
      %v3717 = vsel %vm3346, %v3436, 0
      %v3720 = vsel %vm3346, %v3437, 0
      %v3723 = vsel %vm3346, %v3438, 0
      %v3726 = vsel %vm3346, %v3439, 0
      %v3729 = vsel %vm3346, %v3440, 0
      %v3732 = vsel %vm3346, %v3441, 0
      %v3735 = vsel %vm3346, %v3442, 0
      %v3738 = vsel %vm3346, %v3443, 0
      %v3741 = vsel %vm3346, %v3444, 0
      %v3744 = vsel %vm3346, %v3445, 0
      %v3747 = vsel %vm3346, %v3446, 0
      %v3750 = vsel %vm3346, %v3447, 0
      %v3753 = vsel %vm3346, %v3448, 0
      %v3756 = vsel %vm3346, %v3449, 0
      %v3759 = vsel %vm3578, %v3450, 0
      %3761 = vmatpush.bf16.msra.mxu0 0
      %3762 = vmatpush.bf16.msra.mxu0 0
      %3763 = vmatpush.bf16.msra.mxu0 0
      %3764 = vmatpush.bf16.msra.mxu0 0
      %3765 = vmatpush.bf16.msra.mxu0 0
      %3766 = vmatpush.bf16.msra.mxu0 0
      %3767 = vmatpush.bf16.msra.mxu0 0
      %3768 = vmatpush.bf16.msra.mxu0 %v3759
      %3769 = vmatmul.bf16.gmra.mxu0 %v3696
      %v3770 = vpop.f32.mrf.mxu0
      %v3771 = vadd.f32 %v3592, %v3770
      %v3772 = vpop.f32.mrf.mxu0
      %v3773 = vadd.f32 %v3594, %v3772
      %3774 = vmatmul.bf16.gmra.mxu0 %v3699
      %v3775 = vpop.f32.mrf.mxu0
      %v3776 = vadd.f32 %v3597, %v3775
      %v3777 = vpop.f32.mrf.mxu0
      %v3778 = vadd.f32 %v3599, %v3777
      %3779 = vmatmul.bf16.gmra.mxu0 %v3702
      %v3780 = vpop.f32.mrf.mxu0
      %v3781 = vadd.f32 %v3602, %v3780
      %v3782 = vpop.f32.mrf.mxu0
      %v3783 = vadd.f32 %v3604, %v3782
      %3784 = vmatmul.bf16.gmra.mxu0 %v3705
      %v3785 = vpop.f32.mrf.mxu0
      %v3786 = vadd.f32 %v3607, %v3785
      %v3787 = vpop.f32.mrf.mxu0
      %v3788 = vadd.f32 %v3609, %v3787
      %3789 = vmatmul.bf16.gmra.mxu0 %v3708
      %v3790 = vpop.f32.mrf.mxu0
      %v3791 = vadd.f32 %v3612, %v3790
      %v3792 = vpop.f32.mrf.mxu0
      %v3793 = vadd.f32 %v3614, %v3792
      %3794 = vmatmul.bf16.gmra.mxu0 %v3711
      %v3795 = vpop.f32.mrf.mxu0
      %v3796 = vadd.f32 %v3617, %v3795
      %v3797 = vpop.f32.mrf.mxu0
      %v3798 = vadd.f32 %v3619, %v3797
      %3799 = vmatmul.bf16.gmra.mxu0 %v3714
      %v3800 = vpop.f32.mrf.mxu0
      %v3801 = vadd.f32 %v3622, %v3800
      %v3802 = vpop.f32.mrf.mxu0
      %v3803 = vadd.f32 %v3624, %v3802
      %3804 = vmatmul.bf16.gmra.mxu0 %v3717
      %v3805 = vpop.f32.mrf.mxu0
      %v3806 = vadd.f32 %v3627, %v3805
      %v3807 = vpop.f32.mrf.mxu0
      %v3808 = vadd.f32 %v3629, %v3807
      %3809 = vmatmul.bf16.gmra.mxu0 %v3720
      %v3810 = vpop.f32.mrf.mxu0
      %v3811 = vadd.f32 %v3632, %v3810
      %v3812 = vpop.f32.mrf.mxu0
      %v3813 = vadd.f32 %v3634, %v3812
      %3814 = vmatmul.bf16.gmra.mxu0 %v3723
      %v3815 = vpop.f32.mrf.mxu0
      %v3816 = vadd.f32 %v3637, %v3815
      %v3817 = vpop.f32.mrf.mxu0
      %v3818 = vadd.f32 %v3639, %v3817
      %3819 = vmatmul.bf16.gmra.mxu0 %v3726
      %v3820 = vpop.f32.mrf.mxu0
      %v3821 = vadd.f32 %v3642, %v3820
      %v3822 = vpop.f32.mrf.mxu0
      %v3823 = vadd.f32 %v3644, %v3822
      %3824 = vmatmul.bf16.gmra.mxu0 %v3729
      %v3825 = vpop.f32.mrf.mxu0
      %v3826 = vadd.f32 %v3647, %v3825
      %v3827 = vpop.f32.mrf.mxu0
      %v3828 = vadd.f32 %v3649, %v3827
      %3829 = vmatmul.bf16.gmra.mxu0 %v3732
      %v3830 = vpop.f32.mrf.mxu0
      %v3831 = vadd.f32 %v3652, %v3830
      %v3832 = vpop.f32.mrf.mxu0
      %v3833 = vadd.f32 %v3654, %v3832
      %3834 = vmatmul.bf16.gmra.mxu0 %v3735
      %v3835 = vpop.f32.mrf.mxu0
      %v3836 = vadd.f32 %v3657, %v3835
      %v3837 = vpop.f32.mrf.mxu0
      %v3838 = vadd.f32 %v3659, %v3837
      %3839 = vmatmul.bf16.gmra.mxu0 %v3738
      %v3840 = vpop.f32.mrf.mxu0
      %v3841 = vadd.f32 %v3662, %v3840
      %v3842 = vpop.f32.mrf.mxu0
      %v3843 = vadd.f32 %v3664, %v3842
      %3844 = vmatmul.bf16.gmra.mxu0 %v3741
      %v3845 = vpop.f32.mrf.mxu0
      %v3846 = vadd.f32 %v3667, %v3845
      %v3847 = vpop.f32.mrf.mxu0
      %v3848 = vadd.f32 %v3669, %v3847
      %3849 = vmatmul.bf16.gmra.mxu0 %v3744
      %v3850 = vpop.f32.mrf.mxu0
      %v3851 = vadd.f32 %v3672, %v3850
      %v3852 = vpop.f32.mrf.mxu0
      %v3853 = vadd.f32 %v3674, %v3852
      %3854 = vmatmul.bf16.gmra.mxu0 %v3747
      %v3855 = vpop.f32.mrf.mxu0
      %v3856 = vadd.f32 %v3677, %v3855
      %v3857 = vpop.f32.mrf.mxu0
      %v3858 = vadd.f32 %v3679, %v3857
      %3859 = vmatmul.bf16.gmra.mxu0 %v3750
      %v3860 = vpop.f32.mrf.mxu0
      %v3861 = vadd.f32 %v3682, %v3860
      %v3862 = vpop.f32.mrf.mxu0
      %v3863 = vadd.f32 %v3684, %v3862
      %3864 = vmatmul.bf16.gmra.mxu0 %v3753
      %v3865 = vpop.f32.mrf.mxu0
      %v3866 = vadd.f32 %v3687, %v3865
      %v3867 = vpop.f32.mrf.mxu0
      %v3868 = vadd.f32 %v3689, %v3867
      %3869 = vmatmul.bf16.gmra.mxu0 %v3756
      %v3870 = vpop.f32.mrf.mxu0
      %v3871 = vadd.f32 %v3692, %v3870
      %v3872 = vpop.f32.mrf.mxu0
      %3873 = vdwg.mxu0
      %v3874 = vld [vmem:[#allocation2 + $0x1a] sm:$0xff]
      %v3875 = vld [vmem:[#allocation2 + $0x22] sm:$0xff]
      %v3876 = vld [vmem:[#allocation2 + $0x2a] sm:$0xff]
      %v3877 = vld [vmem:[#allocation2 + $0x32] sm:$0xff]
      %v3878 = vld [vmem:[#allocation2 + $0x3a] sm:$0xff]
      %v3879 = vld [vmem:[#allocation2 + $0x42] sm:$0xff]
      %v3880 = vld [vmem:[#allocation2 + $0x4a] sm:$0xff]
      %v3881 = vld [vmem:[#allocation2 + $0x52] sm:$0xff]
      %v3882 = vld [vmem:[#allocation2 + $0x5a] sm:$0xff]
      %v3883 = vld [vmem:[#allocation2 + $0x62] sm:$0xff]
      %v3884 = vld [vmem:[#allocation2 + $0x6a] sm:$0xff]
      %v3885 = vld [vmem:[#allocation2 + $0x72] sm:$0xff]
      %v3886 = vld [vmem:[#allocation2 + $0x7a] sm:$0xff]
      %v3887 = vld [vmem:[#allocation2 + $0x82] sm:$0xff]
      %v3888 = vld [vmem:[#allocation2 + $0x8a] sm:$0xff]
      %v3889 = vld [vmem:[#allocation2 + $0x92] sm:$0xff]
      %v3890 = vld [vmem:[#allocation2 + $0x9a] sm:$0xff]
      %v3891 = vld [vmem:[#allocation2 + $0xa2] sm:$0xff]
      %v3892 = vld [vmem:[#allocation2 + $0xaa] sm:$0xff]
      %v3893 = vld [vmem:[#allocation2 + $0xb2] sm:$0xff]
      %v3894 = vld [vmem:[#allocation2 + $0xba] sm:$0xff]
      %v3895 = vld [vmem:[#allocation2 + $0xc2] sm:$0xff]
      %v3896 = vld [vmem:[#allocation2 + $0xca] sm:$0xff]
      %v3897 = vld [vmem:[#allocation2 + $0xd2] sm:$0xff]
      %v3898 = vld [vmem:[#allocation2 + $0xda] sm:$0xff]
      %v3899 = vld [vmem:[#allocation2 + $0xe2] sm:$0xff]
      %v3900 = vld [vmem:[#allocation2 + $0xea] sm:$0xff]
      %v3901 = vld [vmem:[#allocation2 + $0xf2] sm:$0xff]
      %v3902 = vld [vmem:[#allocation2 + $0xfa] sm:$0xff]
      %v3903 = vld [vmem:[#allocation2 + $0x102] sm:$0xff]
      %v3904 = vld [vmem:[#allocation2 + $0x10a] sm:$0xff]
      %v3905 = vld [vmem:[#allocation2 + $0x112] sm:$0xff]
      %v3906 = vld [vmem:[#allocation2 + $0x11a] sm:$0xff]
      %v3907 = vld [vmem:[#allocation2 + $0x122] sm:$0xff]
      %v3908 = vld [vmem:[#allocation2 + $0x12a] sm:$0xff]
      %v3909 = vld [vmem:[#allocation2 + $0x132] sm:$0xff]
      %v3910 = vld [vmem:[#allocation2 + $0x13a] sm:$0xff]
      %v3911 = vld [vmem:[#allocation2 + $0x142] sm:$0xff]
      %v3912 = vld [vmem:[#allocation2 + $0x14a] sm:$0xff]
      %v3913 = vld [vmem:[#allocation2 + $0x152] sm:$0xff]
      %v3914 = vld [vmem:[#allocation2 + $0x15a] sm:$0xff]
      %v3915 = vpack.c.bf16 %v3875, %v3874
      %v3916 = vpack.c.bf16 %v3877, %v3876
      %v3917 = vpack.c.bf16 %v3879, %v3878
      %v3918 = vpack.c.bf16 %v3881, %v3880
      %v3919 = vpack.c.bf16 %v3883, %v3882
      %v3920 = vpack.c.bf16 %v3885, %v3884
      %v3921 = vpack.c.bf16 %v3887, %v3886
      %v3922 = vpack.c.bf16 %v3889, %v3888
      %v3923 = vpack.c.bf16 %v3891, %v3890
      %v3924 = vpack.c.bf16 %v3893, %v3892
      %v3925 = vpack.c.bf16 %v3895, %v3894
      %v3926 = vpack.c.bf16 %v3897, %v3896
      %v3927 = vpack.c.bf16 %v3899, %v3898
      %v3928 = vpack.c.bf16 %v3901, %v3900
      %v3929 = vpack.c.bf16 %v3903, %v3902
      %v3930 = vpack.c.bf16 %v3905, %v3904
      %v3931 = vpack.c.bf16 %v3907, %v3906
      %v3932 = vpack.c.bf16 %v3909, %v3908
      %v3933 = vpack.c.bf16 %v3911, %v3910
      %v3934 = vpack.c.bf16 %v3913, %v3912
      %v3935 = vpack.c.bf16 %v3914, %v3914
      %s3936 = scalar_lea.vmem %s1, 4
      %v3937 = vld [vmem:[%s3936] sm:$0x3]
      %v3939 = vsel %vm3346, %v3915, 0
      %v3942 = vsel %vm3346, %v3916, 0
      %v3945 = vsel %vm3346, %v3917, 0
      %v3948 = vsel %vm3346, %v3918, 0
      %v3951 = vsel %vm3346, %v3919, 0
      %v3954 = vsel %vm3346, %v3920, 0
      %v3957 = vsel %vm3346, %v3921, 0
      %v3960 = vsel %vm3346, %v3922, 0
      %v3963 = vsel %vm3346, %v3923, 0
      %v3966 = vsel %vm3346, %v3924, 0
      %v3969 = vsel %vm3346, %v3925, 0
      %v3972 = vsel %vm3346, %v3926, 0
      %v3975 = vsel %vm3346, %v3927, 0
      %v3978 = vsel %vm3346, %v3928, 0
      %v3981 = vsel %vm3346, %v3929, 0
      %v3984 = vsel %vm3346, %v3930, 0
      %v3987 = vsel %vm3346, %v3931, 0
      %v3990 = vsel %vm3346, %v3932, 0
      %v3993 = vsel %vm3346, %v3933, 0
      %v3996 = vsel %vm3346, %v3934, 0
      %v3999 = vsel %vm3346, %v3935, 0
      %v4002 = vsel %vm3578, %v3937, 0
      %4004 = vmatpush.bf16.msra.mxu0 0
      %4005 = vmatpush.bf16.msra.mxu0 0
      %4006 = vmatpush.bf16.msra.mxu0 0
      %4007 = vmatpush.bf16.msra.mxu0 0
      %4008 = vmatpush.bf16.msra.mxu0 0
      %4009 = vmatpush.bf16.msra.mxu0 0
      %4010 = vmatpush.bf16.msra.mxu0 0
      %4011 = vmatpush.bf16.msra.mxu0 %v4002
      %4012 = vmatmul.bf16.gmra.mxu0 %v3939
      %v4013 = vpop.f32.mrf.mxu0
      %v4014 = vadd.f32 0.0, %v4013
      %v4015 = vpop.f32.mrf.mxu0
      %v4016 = vadd.f32 0.0, %v4015
      %4017 = vmatmul.bf16.gmra.mxu0 %v3942
      %v4018 = vpop.f32.mrf.mxu0
      %v4019 = vadd.f32 0.0, %v4018
      %v4020 = vpop.f32.mrf.mxu0
      %v4021 = vadd.f32 0.0, %v4020
      %4022 = vmatmul.bf16.gmra.mxu0 %v3945
      %v4023 = vpop.f32.mrf.mxu0
      %v4024 = vadd.f32 0.0, %v4023
      %v4025 = vpop.f32.mrf.mxu0
      %v4026 = vadd.f32 0.0, %v4025
      %4027 = vmatmul.bf16.gmra.mxu0 %v3948
      %v4028 = vpop.f32.mrf.mxu0
      %v4029 = vadd.f32 0.0, %v4028
      %v4030 = vpop.f32.mrf.mxu0
      %v4031 = vadd.f32 0.0, %v4030
      %4032 = vmatmul.bf16.gmra.mxu0 %v3951
      %v4033 = vpop.f32.mrf.mxu0
      %v4034 = vadd.f32 0.0, %v4033
      %v4035 = vpop.f32.mrf.mxu0
      %v4036 = vadd.f32 0.0, %v4035
      %4037 = vmatmul.bf16.gmra.mxu0 %v3954
      %v4038 = vpop.f32.mrf.mxu0
      %v4039 = vadd.f32 0.0, %v4038
      %v4040 = vpop.f32.mrf.mxu0
      %v4041 = vadd.f32 0.0, %v4040
      %4042 = vmatmul.bf16.gmra.mxu0 %v3957
      %v4043 = vpop.f32.mrf.mxu0
      %v4044 = vadd.f32 0.0, %v4043
      %v4045 = vpop.f32.mrf.mxu0
      %v4046 = vadd.f32 0.0, %v4045
      %4047 = vmatmul.bf16.gmra.mxu0 %v3960
      %v4048 = vpop.f32.mrf.mxu0
      %v4049 = vadd.f32 0.0, %v4048
      %v4050 = vpop.f32.mrf.mxu0
      %v4051 = vadd.f32 0.0, %v4050
      %4052 = vmatmul.bf16.gmra.mxu0 %v3963
      %v4053 = vpop.f32.mrf.mxu0
      %v4054 = vadd.f32 0.0, %v4053
      %v4055 = vpop.f32.mrf.mxu0
      %v4056 = vadd.f32 0.0, %v4055
      %4057 = vmatmul.bf16.gmra.mxu0 %v3966
      %v4058 = vpop.f32.mrf.mxu0
      %v4059 = vadd.f32 0.0, %v4058
      %v4060 = vpop.f32.mrf.mxu0
      %v4061 = vadd.f32 0.0, %v4060
      %4062 = vmatmul.bf16.gmra.mxu0 %v3969
      %v4063 = vpop.f32.mrf.mxu0
      %v4064 = vadd.f32 0.0, %v4063
      %v4065 = vpop.f32.mrf.mxu0
      %v4066 = vadd.f32 0.0, %v4065
      %4067 = vmatmul.bf16.gmra.mxu0 %v3972
      %v4068 = vpop.f32.mrf.mxu0
      %v4069 = vadd.f32 0.0, %v4068
      %v4070 = vpop.f32.mrf.mxu0
      %v4071 = vadd.f32 0.0, %v4070
      %4072 = vmatmul.bf16.gmra.mxu0 %v3975
      %v4073 = vpop.f32.mrf.mxu0
      %v4074 = vadd.f32 0.0, %v4073
      %v4075 = vpop.f32.mrf.mxu0
      %v4076 = vadd.f32 0.0, %v4075
      %4077 = vmatmul.bf16.gmra.mxu0 %v3978
      %v4078 = vpop.f32.mrf.mxu0
      %v4079 = vadd.f32 0.0, %v4078
      %v4080 = vpop.f32.mrf.mxu0
      %v4081 = vadd.f32 0.0, %v4080
      %4082 = vmatmul.bf16.gmra.mxu0 %v3981
      %v4083 = vpop.f32.mrf.mxu0
      %v4084 = vadd.f32 0.0, %v4083
      %v4085 = vpop.f32.mrf.mxu0
      %v4086 = vadd.f32 0.0, %v4085
      %4087 = vmatmul.bf16.gmra.mxu0 %v3984
      %v4088 = vpop.f32.mrf.mxu0
      %v4089 = vadd.f32 0.0, %v4088
      %v4090 = vpop.f32.mrf.mxu0
      %v4091 = vadd.f32 0.0, %v4090
      %4092 = vmatmul.bf16.gmra.mxu0 %v3987
      %v4093 = vpop.f32.mrf.mxu0
      %v4094 = vadd.f32 0.0, %v4093
      %v4095 = vpop.f32.mrf.mxu0
      %v4096 = vadd.f32 0.0, %v4095
      %4097 = vmatmul.bf16.gmra.mxu0 %v3990
      %v4098 = vpop.f32.mrf.mxu0
      %v4099 = vadd.f32 0.0, %v4098
      %v4100 = vpop.f32.mrf.mxu0
      %v4101 = vadd.f32 0.0, %v4100
      %4102 = vmatmul.bf16.gmra.mxu0 %v3993
      %v4103 = vpop.f32.mrf.mxu0
      %v4104 = vadd.f32 0.0, %v4103
      %v4105 = vpop.f32.mrf.mxu0
      %v4106 = vadd.f32 0.0, %v4105
      %4107 = vmatmul.bf16.gmra.mxu0 %v3996
      %v4108 = vpop.f32.mrf.mxu0
      %v4109 = vadd.f32 0.0, %v4108
      %v4110 = vpop.f32.mrf.mxu0
      %v4111 = vadd.f32 0.0, %v4110
      %4112 = vmatmul.bf16.gmra.mxu0 %v3999
      %v4113 = vpop.f32.mrf.mxu0
      %v4114 = vadd.f32 0.0, %v4113
      %v4115 = vpop.f32.mrf.mxu0
      %4116 = vdwg.mxu0
      %v4117 = vadd.f32 %v3771, %v4014
      %v4118 = vadd.f32 %v3773, %v4016
      %v4119 = vadd.f32 %v3776, %v4019
      %v4120 = vadd.f32 %v3778, %v4021
      %v4121 = vadd.f32 %v3781, %v4024
      %v4122 = vadd.f32 %v3783, %v4026
      %v4123 = vadd.f32 %v3786, %v4029
      %v4124 = vadd.f32 %v3788, %v4031
      %v4125 = vadd.f32 %v3791, %v4034
      %v4126 = vadd.f32 %v3793, %v4036
      %v4127 = vadd.f32 %v3796, %v4039
      %v4128 = vadd.f32 %v3798, %v4041
      %v4129 = vadd.f32 %v3801, %v4044
      %v4130 = vadd.f32 %v3803, %v4046
      %v4131 = vadd.f32 %v3806, %v4049
      %v4132 = vadd.f32 %v3808, %v4051
      %v4133 = vadd.f32 %v3811, %v4054
      %v4134 = vadd.f32 %v3813, %v4056
      %v4135 = vadd.f32 %v3816, %v4059
      %v4136 = vadd.f32 %v3818, %v4061
      %v4137 = vadd.f32 %v3821, %v4064
      %v4138 = vadd.f32 %v3823, %v4066
      %v4139 = vadd.f32 %v3826, %v4069
      %v4140 = vadd.f32 %v3828, %v4071
      %v4141 = vadd.f32 %v3831, %v4074
      %v4142 = vadd.f32 %v3833, %v4076
      %v4143 = vadd.f32 %v3836, %v4079
      %v4144 = vadd.f32 %v3838, %v4081
      %v4145 = vadd.f32 %v3841, %v4084
      %v4146 = vadd.f32 %v3843, %v4086
      %v4147 = vadd.f32 %v3846, %v4089
      %v4148 = vadd.f32 %v3848, %v4091
      %v4149 = vadd.f32 %v3851, %v4094
      %v4150 = vadd.f32 %v3853, %v4096
      %v4151 = vadd.f32 %v3856, %v4099
      %v4152 = vadd.f32 %v3858, %v4101
      %v4153 = vadd.f32 %v3861, %v4104
      %v4154 = vadd.f32 %v3863, %v4106
      %v4155 = vadd.f32 %v3866, %v4109
      %v4156 = vadd.f32 %v3868, %v4111
      %v4157 = vadd.f32 %v3871, %v4114
      %v4158 = vld [vmem:[#allocation2 + $0x2a] sm:$0xff]
      %v4159 = vld [vmem:[#allocation2 + $0x32] sm:$0xff]
      %v4160 = vld [vmem:[#allocation2 + $0x3a] sm:$0xff]
      %v4161 = vld [vmem:[#allocation2 + $0x42] sm:$0xff]
      %v4162 = vld [vmem:[#allocation2 + $0x4a] sm:$0xff]
      %v4163 = vld [vmem:[#allocation2 + $0x52] sm:$0xff]
      %v4164 = vld [vmem:[#allocation2 + $0x5a] sm:$0xff]
      %v4165 = vld [vmem:[#allocation2 + $0x62] sm:$0xff]
      %v4166 = vld [vmem:[#allocation2 + $0x6a] sm:$0xff]
      %v4167 = vld [vmem:[#allocation2 + $0x72] sm:$0xff]
      %v4168 = vld [vmem:[#allocation2 + $0x7a] sm:$0xff]
      %v4169 = vld [vmem:[#allocation2 + $0x82] sm:$0xff]
      %v4170 = vld [vmem:[#allocation2 + $0x8a] sm:$0xff]
      %v4171 = vld [vmem:[#allocation2 + $0x92] sm:$0xff]
      %v4172 = vld [vmem:[#allocation2 + $0x9a] sm:$0xff]
      %v4173 = vld [vmem:[#allocation2 + $0xa2] sm:$0xff]
      %v4174 = vld [vmem:[#allocation2 + $0xaa] sm:$0xff]
      %v4175 = vld [vmem:[#allocation2 + $0xb2] sm:$0xff]
      %v4176 = vld [vmem:[#allocation2 + $0xba] sm:$0xff]
      %v4177 = vld [vmem:[#allocation2 + $0xc2] sm:$0xff]
      %v4178 = vld [vmem:[#allocation2 + $0xca] sm:$0xff]
      %v4179 = vld [vmem:[#allocation2 + $0xd2] sm:$0xff]
      %v4180 = vld [vmem:[#allocation2 + $0xda] sm:$0xff]
      %v4181 = vld [vmem:[#allocation2 + $0xe2] sm:$0xff]
      %v4182 = vld [vmem:[#allocation2 + $0xea] sm:$0xff]
      %v4183 = vld [vmem:[#allocation2 + $0xf2] sm:$0xff]
      %v4184 = vld [vmem:[#allocation2 + $0xfa] sm:$0xff]
      %v4185 = vld [vmem:[#allocation2 + $0x102] sm:$0xff]
      %v4186 = vld [vmem:[#allocation2 + $0x10a] sm:$0xff]
      %v4187 = vld [vmem:[#allocation2 + $0x112] sm:$0xff]
      %v4188 = vld [vmem:[#allocation2 + $0x11a] sm:$0xff]
      %v4189 = vld [vmem:[#allocation2 + $0x122] sm:$0xff]
      %v4190 = vld [vmem:[#allocation2 + $0x12a] sm:$0xff]
      %v4191 = vld [vmem:[#allocation2 + $0x132] sm:$0xff]
      %v4192 = vld [vmem:[#allocation2 + $0x13a] sm:$0xff]
      %v4193 = vld [vmem:[#allocation2 + $0x142] sm:$0xff]
      %v4194 = vld [vmem:[#allocation2 + $0x14a] sm:$0xff]
      %v4195 = vld [vmem:[#allocation2 + $0x152] sm:$0xff]
      %v4196 = vld [vmem:[#allocation2 + $0x15a] sm:$0xff]
      %v4197 = vld [vmem:[#allocation2 + $0x162] sm:$0xff]
      %v4198 = vld [vmem:[#allocation2 + $0x16a] sm:$0xff]
      %v4199 = vpack.c.bf16 %v4159, %v4158
      %v4200 = vpack.c.bf16 %v4161, %v4160
      %v4201 = vpack.c.bf16 %v4163, %v4162
      %v4202 = vpack.c.bf16 %v4165, %v4164
      %v4203 = vpack.c.bf16 %v4167, %v4166
      %v4204 = vpack.c.bf16 %v4169, %v4168
      %v4205 = vpack.c.bf16 %v4171, %v4170
      %v4206 = vpack.c.bf16 %v4173, %v4172
      %v4207 = vpack.c.bf16 %v4175, %v4174
      %v4208 = vpack.c.bf16 %v4177, %v4176
      %v4209 = vpack.c.bf16 %v4179, %v4178
      %v4210 = vpack.c.bf16 %v4181, %v4180
      %v4211 = vpack.c.bf16 %v4183, %v4182
      %v4212 = vpack.c.bf16 %v4185, %v4184
      %v4213 = vpack.c.bf16 %v4187, %v4186
      %v4214 = vpack.c.bf16 %v4189, %v4188
      %v4215 = vpack.c.bf16 %v4191, %v4190
      %v4216 = vpack.c.bf16 %v4193, %v4192
      %v4217 = vpack.c.bf16 %v4195, %v4194
      %v4218 = vpack.c.bf16 %v4197, %v4196
      %v4219 = vpack.c.bf16 %v4198, %v4198
      %s4220 = scalar_lea.vmem %s1, 6
      %v4221 = vld [vmem:[%s4220] sm:$0x3]
      %v4223 = vsel %vm3346, %v4199, 0
      %v4226 = vsel %vm3346, %v4200, 0
      %v4229 = vsel %vm3346, %v4201, 0
      %v4232 = vsel %vm3346, %v4202, 0
      %v4235 = vsel %vm3346, %v4203, 0
      %v4238 = vsel %vm3346, %v4204, 0
      %v4241 = vsel %vm3346, %v4205, 0
      %v4244 = vsel %vm3346, %v4206, 0
      %v4247 = vsel %vm3346, %v4207, 0
      %v4250 = vsel %vm3346, %v4208, 0
      %v4253 = vsel %vm3346, %v4209, 0
      %v4256 = vsel %vm3346, %v4210, 0
      %v4259 = vsel %vm3346, %v4211, 0
      %v4262 = vsel %vm3346, %v4212, 0
      %v4265 = vsel %vm3346, %v4213, 0
      %v4268 = vsel %vm3346, %v4214, 0
      %v4271 = vsel %vm3346, %v4215, 0
      %v4274 = vsel %vm3346, %v4216, 0
      %v4277 = vsel %vm3346, %v4217, 0
      %v4280 = vsel %vm3346, %v4218, 0
      %v4283 = vsel %vm3346, %v4219, 0
      %v4286 = vsel %vm3578, %v4221, 0
      %4288 = vmatpush.bf16.msra.mxu0 0
      %4289 = vmatpush.bf16.msra.mxu0 0
      %4290 = vmatpush.bf16.msra.mxu0 0
      %4291 = vmatpush.bf16.msra.mxu0 0
      %4292 = vmatpush.bf16.msra.mxu0 0
      %4293 = vmatpush.bf16.msra.mxu0 0
      %4294 = vmatpush.bf16.msra.mxu0 0
      %4295 = vmatpush.bf16.msra.mxu0 %v4286
      %4296 = vmatmul.bf16.gmra.mxu0 %v4223
      %v4297 = vpop.f32.mrf.mxu0
      %v4298 = vadd.f32 0.0, %v4297
      %v4299 = vpop.f32.mrf.mxu0
      %v4300 = vadd.f32 0.0, %v4299
      %4301 = vmatmul.bf16.gmra.mxu0 %v4226
      %v4302 = vpop.f32.mrf.mxu0
      %v4303 = vadd.f32 0.0, %v4302
      %v4304 = vpop.f32.mrf.mxu0
      %v4305 = vadd.f32 0.0, %v4304
      %4306 = vmatmul.bf16.gmra.mxu0 %v4229
      %v4307 = vpop.f32.mrf.mxu0
      %v4308 = vadd.f32 0.0, %v4307
      %v4309 = vpop.f32.mrf.mxu0
      %v4310 = vadd.f32 0.0, %v4309
      %4311 = vmatmul.bf16.gmra.mxu0 %v4232
      %v4312 = vpop.f32.mrf.mxu0
      %v4313 = vadd.f32 0.0, %v4312
      %v4314 = vpop.f32.mrf.mxu0
      %v4315 = vadd.f32 0.0, %v4314
      %4316 = vmatmul.bf16.gmra.mxu0 %v4235
      %v4317 = vpop.f32.mrf.mxu0
      %v4318 = vadd.f32 0.0, %v4317
      %v4319 = vpop.f32.mrf.mxu0
      %v4320 = vadd.f32 0.0, %v4319
      %4321 = vmatmul.bf16.gmra.mxu0 %v4238
      %v4322 = vpop.f32.mrf.mxu0
      %v4323 = vadd.f32 0.0, %v4322
      %v4324 = vpop.f32.mrf.mxu0
      %v4325 = vadd.f32 0.0, %v4324
      %4326 = vmatmul.bf16.gmra.mxu0 %v4241
      %v4327 = vpop.f32.mrf.mxu0
      %v4328 = vadd.f32 0.0, %v4327
      %v4329 = vpop.f32.mrf.mxu0
      %v4330 = vadd.f32 0.0, %v4329
      %4331 = vmatmul.bf16.gmra.mxu0 %v4244
      %v4332 = vpop.f32.mrf.mxu0
      %v4333 = vadd.f32 0.0, %v4332
      %v4334 = vpop.f32.mrf.mxu0
      %v4335 = vadd.f32 0.0, %v4334
      %4336 = vmatmul.bf16.gmra.mxu0 %v4247
      %v4337 = vpop.f32.mrf.mxu0
      %v4338 = vadd.f32 0.0, %v4337
      %v4339 = vpop.f32.mrf.mxu0
      %v4340 = vadd.f32 0.0, %v4339
      %4341 = vmatmul.bf16.gmra.mxu0 %v4250
      %v4342 = vpop.f32.mrf.mxu0
      %v4343 = vadd.f32 0.0, %v4342
      %v4344 = vpop.f32.mrf.mxu0
      %v4345 = vadd.f32 0.0, %v4344
      %4346 = vmatmul.bf16.gmra.mxu0 %v4253
      %v4347 = vpop.f32.mrf.mxu0
      %v4348 = vadd.f32 0.0, %v4347
      %v4349 = vpop.f32.mrf.mxu0
      %v4350 = vadd.f32 0.0, %v4349
      %4351 = vmatmul.bf16.gmra.mxu0 %v4256
      %v4352 = vpop.f32.mrf.mxu0
      %v4353 = vadd.f32 0.0, %v4352
      %v4354 = vpop.f32.mrf.mxu0
      %v4355 = vadd.f32 0.0, %v4354
      %4356 = vmatmul.bf16.gmra.mxu0 %v4259
      %v4357 = vpop.f32.mrf.mxu0
      %v4358 = vadd.f32 0.0, %v4357
      %v4359 = vpop.f32.mrf.mxu0
      %v4360 = vadd.f32 0.0, %v4359
      %4361 = vmatmul.bf16.gmra.mxu0 %v4262
      %v4362 = vpop.f32.mrf.mxu0
      %v4363 = vadd.f32 0.0, %v4362
      %v4364 = vpop.f32.mrf.mxu0
      %v4365 = vadd.f32 0.0, %v4364
      %4366 = vmatmul.bf16.gmra.mxu0 %v4265
      %v4367 = vpop.f32.mrf.mxu0
      %v4368 = vadd.f32 0.0, %v4367
      %v4369 = vpop.f32.mrf.mxu0
      %v4370 = vadd.f32 0.0, %v4369
      %4371 = vmatmul.bf16.gmra.mxu0 %v4268
      %v4372 = vpop.f32.mrf.mxu0
      %v4373 = vadd.f32 0.0, %v4372
      %v4374 = vpop.f32.mrf.mxu0
      %v4375 = vadd.f32 0.0, %v4374
      %4376 = vmatmul.bf16.gmra.mxu0 %v4271
      %v4377 = vpop.f32.mrf.mxu0
      %v4378 = vadd.f32 0.0, %v4377
      %v4379 = vpop.f32.mrf.mxu0
      %v4380 = vadd.f32 0.0, %v4379
      %4381 = vmatmul.bf16.gmra.mxu0 %v4274
      %v4382 = vpop.f32.mrf.mxu0
      %v4383 = vadd.f32 0.0, %v4382
      %v4384 = vpop.f32.mrf.mxu0
      %v4385 = vadd.f32 0.0, %v4384
      %4386 = vmatmul.bf16.gmra.mxu0 %v4277
      %v4387 = vpop.f32.mrf.mxu0
      %v4388 = vadd.f32 0.0, %v4387
      %v4389 = vpop.f32.mrf.mxu0
      %v4390 = vadd.f32 0.0, %v4389
      %4391 = vmatmul.bf16.gmra.mxu0 %v4280
      %v4392 = vpop.f32.mrf.mxu0
      %v4393 = vadd.f32 0.0, %v4392
      %v4394 = vpop.f32.mrf.mxu0
      %v4395 = vadd.f32 0.0, %v4394
      %4396 = vmatmul.bf16.gmra.mxu0 %v4283
      %v4397 = vpop.f32.mrf.mxu0
      %v4398 = vadd.f32 0.0, %v4397
      %v4399 = vpop.f32.mrf.mxu0
      %4400 = vdwg.mxu0
      %v4401 = vadd.f32 %v4117, %v4298
      %v4402 = vadd.f32 %v4118, %v4300
      %v4403 = vadd.f32 %v4119, %v4303
      %v4404 = vadd.f32 %v4120, %v4305
      %v4405 = vadd.f32 %v4121, %v4308
      %v4406 = vadd.f32 %v4122, %v4310
      %v4407 = vadd.f32 %v4123, %v4313
      %v4408 = vadd.f32 %v4124, %v4315
      %v4409 = vadd.f32 %v4125, %v4318
      %v4410 = vadd.f32 %v4126, %v4320
      %v4411 = vadd.f32 %v4127, %v4323
      %v4412 = vadd.f32 %v4128, %v4325
      %v4413 = vadd.f32 %v4129, %v4328
      %v4414 = vadd.f32 %v4130, %v4330
      %v4415 = vadd.f32 %v4131, %v4333
      %v4416 = vadd.f32 %v4132, %v4335
      %v4417 = vadd.f32 %v4133, %v4338
      %v4418 = vadd.f32 %v4134, %v4340
      %v4419 = vadd.f32 %v4135, %v4343
      %v4420 = vadd.f32 %v4136, %v4345
      %v4421 = vadd.f32 %v4137, %v4348
      %v4422 = vadd.f32 %v4138, %v4350
      %v4423 = vadd.f32 %v4139, %v4353
      %v4424 = vadd.f32 %v4140, %v4355
      %v4425 = vadd.f32 %v4141, %v4358
      %v4426 = vadd.f32 %v4142, %v4360
      %v4427 = vadd.f32 %v4143, %v4363
      %v4428 = vadd.f32 %v4144, %v4365
      %v4429 = vadd.f32 %v4145, %v4368
      %v4430 = vadd.f32 %v4146, %v4370
      %v4431 = vadd.f32 %v4147, %v4373
      %v4432 = vadd.f32 %v4148, %v4375
      %v4433 = vadd.f32 %v4149, %v4378
      %v4434 = vadd.f32 %v4150, %v4380
      %v4435 = vadd.f32 %v4151, %v4383
      %v4436 = vadd.f32 %v4152, %v4385
      %v4437 = vadd.f32 %v4153, %v4388
      %v4438 = vadd.f32 %v4154, %v4390
      %v4439 = vadd.f32 %v4155, %v4393
      %v4440 = vadd.f32 %v4156, %v4395
      %v4441 = vadd.f32 %v4157, %v4398
      %v4442 = vld [vmem:[#allocation2 + $0x2b] sm:$0xff]
      %v4443 = vld [vmem:[#allocation2 + $0x33] sm:$0xff]
      %v4444 = vld [vmem:[#allocation2 + $0x3b] sm:$0xff]
      %v4445 = vld [vmem:[#allocation2 + $0x43] sm:$0xff]
      %v4446 = vld [vmem:[#allocation2 + $0x4b] sm:$0xff]
      %v4447 = vld [vmem:[#allocation2 + $0x53] sm:$0xff]
      %v4448 = vld [vmem:[#allocation2 + $0x5b] sm:$0xff]
      %v4449 = vld [vmem:[#allocation2 + $0x63] sm:$0xff]
      %v4450 = vld [vmem:[#allocation2 + $0x6b] sm:$0xff]
      %v4451 = vld [vmem:[#allocation2 + $0x73] sm:$0xff]
      %v4452 = vld [vmem:[#allocation2 + $0x7b] sm:$0xff]
      %v4453 = vld [vmem:[#allocation2 + $0x83] sm:$0xff]
      %v4454 = vld [vmem:[#allocation2 + $0x8b] sm:$0xff]
      %v4455 = vld [vmem:[#allocation2 + $0x93] sm:$0xff]
      %v4456 = vld [vmem:[#allocation2 + $0x9b] sm:$0xff]
      %v4457 = vld [vmem:[#allocation2 + $0xa3] sm:$0xff]
      %v4458 = vld [vmem:[#allocation2 + $0xab] sm:$0xff]
      %v4459 = vld [vmem:[#allocation2 + $0xb3] sm:$0xff]
      %v4460 = vld [vmem:[#allocation2 + $0xbb] sm:$0xff]
      %v4461 = vld [vmem:[#allocation2 + $0xc3] sm:$0xff]
      %v4462 = vld [vmem:[#allocation2 + $0xcb] sm:$0xff]
      %v4463 = vld [vmem:[#allocation2 + $0xd3] sm:$0xff]
      %v4464 = vld [vmem:[#allocation2 + $0xdb] sm:$0xff]
      %v4465 = vld [vmem:[#allocation2 + $0xe3] sm:$0xff]
      %v4466 = vld [vmem:[#allocation2 + $0xeb] sm:$0xff]
      %v4467 = vld [vmem:[#allocation2 + $0xf3] sm:$0xff]
      %v4468 = vld [vmem:[#allocation2 + $0xfb] sm:$0xff]
      %v4469 = vld [vmem:[#allocation2 + $0x103] sm:$0xff]
      %v4470 = vld [vmem:[#allocation2 + $0x10b] sm:$0xff]
      %v4471 = vld [vmem:[#allocation2 + $0x113] sm:$0xff]
      %v4472 = vld [vmem:[#allocation2 + $0x11b] sm:$0xff]
      %v4473 = vld [vmem:[#allocation2 + $0x123] sm:$0xff]
      %v4474 = vld [vmem:[#allocation2 + $0x12b] sm:$0xff]
      %v4475 = vld [vmem:[#allocation2 + $0x133] sm:$0xff]
      %v4476 = vld [vmem:[#allocation2 + $0x13b] sm:$0xff]
      %v4477 = vld [vmem:[#allocation2 + $0x143] sm:$0xff]
      %v4478 = vld [vmem:[#allocation2 + $0x14b] sm:$0xff]
      %v4479 = vld [vmem:[#allocation2 + $0x153] sm:$0xff]
      %v4480 = vld [vmem:[#allocation2 + $0x15b] sm:$0xff]
      %v4481 = vld [vmem:[#allocation2 + $0x163] sm:$0xff]
      %v4482 = vld [vmem:[#allocation2 + $0x16b] sm:$0xff]
      %v4483 = vpack.c.bf16 %v4443, %v4442
      %v4484 = vpack.c.bf16 %v4445, %v4444
      %v4485 = vpack.c.bf16 %v4447, %v4446
      %v4486 = vpack.c.bf16 %v4449, %v4448
      %v4487 = vpack.c.bf16 %v4451, %v4450
      %v4488 = vpack.c.bf16 %v4453, %v4452
      %v4489 = vpack.c.bf16 %v4455, %v4454
      %v4490 = vpack.c.bf16 %v4457, %v4456
      %v4491 = vpack.c.bf16 %v4459, %v4458
      %v4492 = vpack.c.bf16 %v4461, %v4460
      %v4493 = vpack.c.bf16 %v4463, %v4462
      %v4494 = vpack.c.bf16 %v4465, %v4464
      %v4495 = vpack.c.bf16 %v4467, %v4466
      %v4496 = vpack.c.bf16 %v4469, %v4468
      %v4497 = vpack.c.bf16 %v4471, %v4470
      %v4498 = vpack.c.bf16 %v4473, %v4472
      %v4499 = vpack.c.bf16 %v4475, %v4474
      %v4500 = vpack.c.bf16 %v4477, %v4476
      %v4501 = vpack.c.bf16 %v4479, %v4478
      %v4502 = vpack.c.bf16 %v4481, %v4480
      %v4503 = vpack.c.bf16 %v4482, %v4482
      %s4504 = scalar_lea.vmem %s1, 8
      %v4505 = vld [vmem:[%s4504] sm:$0x3]
      %v4507 = vsel %vm3346, %v4483, 0
      %v4510 = vsel %vm3346, %v4484, 0
      %v4513 = vsel %vm3346, %v4485, 0
      %v4516 = vsel %vm3346, %v4486, 0
      %v4519 = vsel %vm3346, %v4487, 0
      %v4522 = vsel %vm3346, %v4488, 0
      %v4525 = vsel %vm3346, %v4489, 0
      %v4528 = vsel %vm3346, %v4490, 0
      %v4531 = vsel %vm3346, %v4491, 0
      %v4534 = vsel %vm3346, %v4492, 0
      %v4537 = vsel %vm3346, %v4493, 0
      %v4540 = vsel %vm3346, %v4494, 0
      %v4543 = vsel %vm3346, %v4495, 0
      %v4546 = vsel %vm3346, %v4496, 0
      %v4549 = vsel %vm3346, %v4497, 0
      %v4552 = vsel %vm3346, %v4498, 0
      %v4555 = vsel %vm3346, %v4499, 0
      %v4558 = vsel %vm3346, %v4500, 0
      %v4561 = vsel %vm3346, %v4501, 0
      %v4564 = vsel %vm3346, %v4502, 0
      %v4567 = vsel %vm3346, %v4503, 0
      %v4570 = vsel %vm3578, %v4505, 0
      %4572 = vmatpush.bf16.msra.mxu0 0
      %4573 = vmatpush.bf16.msra.mxu0 0
      %4574 = vmatpush.bf16.msra.mxu0 0
      %4575 = vmatpush.bf16.msra.mxu0 0
      %4576 = vmatpush.bf16.msra.mxu0 0
      %4577 = vmatpush.bf16.msra.mxu0 0
      %4578 = vmatpush.bf16.msra.mxu0 0
      %4579 = vmatpush.bf16.msra.mxu0 %v4570
      %4580 = vmatmul.bf16.gmra.mxu0 %v4507
      %v4581 = vpop.f32.mrf.mxu0
      %v4582 = vadd.f32 0.0, %v4581
      %v4583 = vpop.f32.mrf.mxu0
      %v4584 = vadd.f32 0.0, %v4583
      %4585 = vmatmul.bf16.gmra.mxu0 %v4510
      %v4586 = vpop.f32.mrf.mxu0
      %v4587 = vadd.f32 0.0, %v4586
      %v4588 = vpop.f32.mrf.mxu0
      %v4589 = vadd.f32 0.0, %v4588
      %4590 = vmatmul.bf16.gmra.mxu0 %v4513
      %v4591 = vpop.f32.mrf.mxu0
      %v4592 = vadd.f32 0.0, %v4591
      %v4593 = vpop.f32.mrf.mxu0
      %v4594 = vadd.f32 0.0, %v4593
      %4595 = vmatmul.bf16.gmra.mxu0 %v4516
      %v4596 = vpop.f32.mrf.mxu0
      %v4597 = vadd.f32 0.0, %v4596
      %v4598 = vpop.f32.mrf.mxu0
      %v4599 = vadd.f32 0.0, %v4598
      %4600 = vmatmul.bf16.gmra.mxu0 %v4519
      %v4601 = vpop.f32.mrf.mxu0
      %v4602 = vadd.f32 0.0, %v4601
      %v4603 = vpop.f32.mrf.mxu0
      %v4604 = vadd.f32 0.0, %v4603
      %4605 = vmatmul.bf16.gmra.mxu0 %v4522
      %v4606 = vpop.f32.mrf.mxu0
      %v4607 = vadd.f32 0.0, %v4606
      %v4608 = vpop.f32.mrf.mxu0
      %v4609 = vadd.f32 0.0, %v4608
      %4610 = vmatmul.bf16.gmra.mxu0 %v4525
      %v4611 = vpop.f32.mrf.mxu0
      %v4612 = vadd.f32 0.0, %v4611
      %v4613 = vpop.f32.mrf.mxu0
      %v4614 = vadd.f32 0.0, %v4613
      %4615 = vmatmul.bf16.gmra.mxu0 %v4528
      %v4616 = vpop.f32.mrf.mxu0
      %v4617 = vadd.f32 0.0, %v4616
      %v4618 = vpop.f32.mrf.mxu0
      %v4619 = vadd.f32 0.0, %v4618
      %4620 = vmatmul.bf16.gmra.mxu0 %v4531
      %v4621 = vpop.f32.mrf.mxu0
      %v4622 = vadd.f32 0.0, %v4621
      %v4623 = vpop.f32.mrf.mxu0
      %v4624 = vadd.f32 0.0, %v4623
      %4625 = vmatmul.bf16.gmra.mxu0 %v4534
      %v4626 = vpop.f32.mrf.mxu0
      %v4627 = vadd.f32 0.0, %v4626
      %v4628 = vpop.f32.mrf.mxu0
      %v4629 = vadd.f32 0.0, %v4628
      %4630 = vmatmul.bf16.gmra.mxu0 %v4537
      %v4631 = vpop.f32.mrf.mxu0
      %v4632 = vadd.f32 0.0, %v4631
      %v4633 = vpop.f32.mrf.mxu0
      %v4634 = vadd.f32 0.0, %v4633
      %4635 = vmatmul.bf16.gmra.mxu0 %v4540
      %v4636 = vpop.f32.mrf.mxu0
      %v4637 = vadd.f32 0.0, %v4636
      %v4638 = vpop.f32.mrf.mxu0
      %v4639 = vadd.f32 0.0, %v4638
      %4640 = vmatmul.bf16.gmra.mxu0 %v4543
      %v4641 = vpop.f32.mrf.mxu0
      %v4642 = vadd.f32 0.0, %v4641
      %v4643 = vpop.f32.mrf.mxu0
      %v4644 = vadd.f32 0.0, %v4643
      %4645 = vmatmul.bf16.gmra.mxu0 %v4546
      %v4646 = vpop.f32.mrf.mxu0
      %v4647 = vadd.f32 0.0, %v4646
      %v4648 = vpop.f32.mrf.mxu0
      %v4649 = vadd.f32 0.0, %v4648
      %4650 = vmatmul.bf16.gmra.mxu0 %v4549
      %v4651 = vpop.f32.mrf.mxu0
      %v4652 = vadd.f32 0.0, %v4651
      %v4653 = vpop.f32.mrf.mxu0
      %v4654 = vadd.f32 0.0, %v4653
      %4655 = vmatmul.bf16.gmra.mxu0 %v4552
      %v4656 = vpop.f32.mrf.mxu0
      %v4657 = vadd.f32 0.0, %v4656
      %v4658 = vpop.f32.mrf.mxu0
      %v4659 = vadd.f32 0.0, %v4658
      %4660 = vmatmul.bf16.gmra.mxu0 %v4555
      %v4661 = vpop.f32.mrf.mxu0
      %v4662 = vadd.f32 0.0, %v4661
      %v4663 = vpop.f32.mrf.mxu0
      %v4664 = vadd.f32 0.0, %v4663
      %4665 = vmatmul.bf16.gmra.mxu0 %v4558
      %v4666 = vpop.f32.mrf.mxu0
      %v4667 = vadd.f32 0.0, %v4666
      %v4668 = vpop.f32.mrf.mxu0
      %v4669 = vadd.f32 0.0, %v4668
      %4670 = vmatmul.bf16.gmra.mxu0 %v4561
      %v4671 = vpop.f32.mrf.mxu0
      %v4672 = vadd.f32 0.0, %v4671
      %v4673 = vpop.f32.mrf.mxu0
      %v4674 = vadd.f32 0.0, %v4673
      %4675 = vmatmul.bf16.gmra.mxu0 %v4564
      %v4676 = vpop.f32.mrf.mxu0
      %v4677 = vadd.f32 0.0, %v4676
      %v4678 = vpop.f32.mrf.mxu0
      %v4679 = vadd.f32 0.0, %v4678
      %4680 = vmatmul.bf16.gmra.mxu0 %v4567
      %v4681 = vpop.f32.mrf.mxu0
      %v4682 = vadd.f32 0.0, %v4681
      %v4683 = vpop.f32.mrf.mxu0
      %4684 = vdwg.mxu0
      %v4685 = vadd.f32 %v4401, %v4582
      %v4686 = vadd.f32 %v4402, %v4584
      %v4687 = vadd.f32 %v4403, %v4587
      %v4688 = vadd.f32 %v4404, %v4589
      %v4689 = vadd.f32 %v4405, %v4592
      %v4690 = vadd.f32 %v4406, %v4594
      %v4691 = vadd.f32 %v4407, %v4597
      %v4692 = vadd.f32 %v4408, %v4599
      %v4693 = vadd.f32 %v4409, %v4602
      %v4694 = vadd.f32 %v4410, %v4604
      %v4695 = vadd.f32 %v4411, %v4607
      %v4696 = vadd.f32 %v4412, %v4609
      %v4697 = vadd.f32 %v4413, %v4612
      %v4698 = vadd.f32 %v4414, %v4614
      %v4699 = vadd.f32 %v4415, %v4617
      %v4700 = vadd.f32 %v4416, %v4619
      %v4701 = vadd.f32 %v4417, %v4622
      %v4702 = vadd.f32 %v4418, %v4624
      %v4703 = vadd.f32 %v4419, %v4627
      %v4704 = vadd.f32 %v4420, %v4629
      %v4705 = vadd.f32 %v4421, %v4632
      %v4706 = vadd.f32 %v4422, %v4634
      %v4707 = vadd.f32 %v4423, %v4637
      %v4708 = vadd.f32 %v4424, %v4639
      %v4709 = vadd.f32 %v4425, %v4642
      %v4710 = vadd.f32 %v4426, %v4644
      %v4711 = vadd.f32 %v4427, %v4647
      %v4712 = vadd.f32 %v4428, %v4649
      %v4713 = vadd.f32 %v4429, %v4652
      %v4714 = vadd.f32 %v4430, %v4654
      %v4715 = vadd.f32 %v4431, %v4657
      %v4716 = vadd.f32 %v4432, %v4659
      %v4717 = vadd.f32 %v4433, %v4662
      %v4718 = vadd.f32 %v4434, %v4664
      %v4719 = vadd.f32 %v4435, %v4667
      %v4720 = vadd.f32 %v4436, %v4669
      %v4721 = vadd.f32 %v4437, %v4672
      %v4722 = vadd.f32 %v4438, %v4674
      %v4723 = vadd.f32 %v4439, %v4677
      %v4724 = vadd.f32 %v4440, %v4679
      %v4725 = vadd.f32 %v4441, %v4682
      %v4726 = vld [vmem:[#allocation2 + $0x2c] sm:$0xff]
      %v4727 = vld [vmem:[#allocation2 + $0x34] sm:$0xff]
      %v4728 = vld [vmem:[#allocation2 + $0x3c] sm:$0xff]
      %v4729 = vld [vmem:[#allocation2 + $0x44] sm:$0xff]
      %v4730 = vld [vmem:[#allocation2 + $0x4c] sm:$0xff]
      %v4731 = vld [vmem:[#allocation2 + $0x54] sm:$0xff]
      %v4732 = vld [vmem:[#allocation2 + $0x5c] sm:$0xff]
      %v4733 = vld [vmem:[#allocation2 + $0x64] sm:$0xff]
      %v4734 = vld [vmem:[#allocation2 + $0x6c] sm:$0xff]
      %v4735 = vld [vmem:[#allocation2 + $0x74] sm:$0xff]
      %v4736 = vld [vmem:[#allocation2 + $0x7c] sm:$0xff]
      %v4737 = vld [vmem:[#allocation2 + $0x84] sm:$0xff]
      %v4738 = vld [vmem:[#allocation2 + $0x8c] sm:$0xff]
      %v4739 = vld [vmem:[#allocation2 + $0x94] sm:$0xff]
      %v4740 = vld [vmem:[#allocation2 + $0x9c] sm:$0xff]
      %v4741 = vld [vmem:[#allocation2 + $0xa4] sm:$0xff]
      %v4742 = vld [vmem:[#allocation2 + $0xac] sm:$0xff]
      %v4743 = vld [vmem:[#allocation2 + $0xb4] sm:$0xff]
      %v4744 = vld [vmem:[#allocation2 + $0xbc] sm:$0xff]
      %v4745 = vld [vmem:[#allocation2 + $0xc4] sm:$0xff]
      %v4746 = vld [vmem:[#allocation2 + $0xcc] sm:$0xff]
      %v4747 = vld [vmem:[#allocation2 + $0xd4] sm:$0xff]
      %v4748 = vld [vmem:[#allocation2 + $0xdc] sm:$0xff]
      %v4749 = vld [vmem:[#allocation2 + $0xe4] sm:$0xff]
      %v4750 = vld [vmem:[#allocation2 + $0xec] sm:$0xff]
      %v4751 = vld [vmem:[#allocation2 + $0xf4] sm:$0xff]
      %v4752 = vld [vmem:[#allocation2 + $0xfc] sm:$0xff]
      %v4753 = vld [vmem:[#allocation2 + $0x104] sm:$0xff]
      %v4754 = vld [vmem:[#allocation2 + $0x10c] sm:$0xff]
      %v4755 = vld [vmem:[#allocation2 + $0x114] sm:$0xff]
      %v4756 = vld [vmem:[#allocation2 + $0x11c] sm:$0xff]
      %v4757 = vld [vmem:[#allocation2 + $0x124] sm:$0xff]
      %v4758 = vld [vmem:[#allocation2 + $0x12c] sm:$0xff]
      %v4759 = vld [vmem:[#allocation2 + $0x134] sm:$0xff]
      %v4760 = vld [vmem:[#allocation2 + $0x13c] sm:$0xff]
      %v4761 = vld [vmem:[#allocation2 + $0x144] sm:$0xff]
      %v4762 = vld [vmem:[#allocation2 + $0x14c] sm:$0xff]
      %v4763 = vld [vmem:[#allocation2 + $0x154] sm:$0xff]
      %v4764 = vld [vmem:[#allocation2 + $0x15c] sm:$0xff]
      %v4765 = vld [vmem:[#allocation2 + $0x164] sm:$0xff]
      %v4766 = vld [vmem:[#allocation2 + $0x16c] sm:$0xff]
      %v4767 = vpack.c.bf16 %v4727, %v4726
      %v4768 = vpack.c.bf16 %v4729, %v4728
      %v4769 = vpack.c.bf16 %v4731, %v4730
      %v4770 = vpack.c.bf16 %v4733, %v4732
      %v4771 = vpack.c.bf16 %v4735, %v4734
      %v4772 = vpack.c.bf16 %v4737, %v4736
      %v4773 = vpack.c.bf16 %v4739, %v4738
      %v4774 = vpack.c.bf16 %v4741, %v4740
      %v4775 = vpack.c.bf16 %v4743, %v4742
      %v4776 = vpack.c.bf16 %v4745, %v4744
      %v4777 = vpack.c.bf16 %v4747, %v4746
      %v4778 = vpack.c.bf16 %v4749, %v4748
      %v4779 = vpack.c.bf16 %v4751, %v4750
      %v4780 = vpack.c.bf16 %v4753, %v4752
      %v4781 = vpack.c.bf16 %v4755, %v4754
      %v4782 = vpack.c.bf16 %v4757, %v4756
      %v4783 = vpack.c.bf16 %v4759, %v4758
      %v4784 = vpack.c.bf16 %v4761, %v4760
      %v4785 = vpack.c.bf16 %v4763, %v4762
      %v4786 = vpack.c.bf16 %v4765, %v4764
      %v4787 = vpack.c.bf16 %v4766, %v4766
      %s4788 = scalar_lea.vmem %s1, 10
      %v4789 = vld [vmem:[%s4788] sm:$0x3]
      %v4791 = vsel %vm3346, %v4767, 0
      %v4794 = vsel %vm3346, %v4768, 0
      %v4797 = vsel %vm3346, %v4769, 0
      %v4800 = vsel %vm3346, %v4770, 0
      %v4803 = vsel %vm3346, %v4771, 0
      %v4806 = vsel %vm3346, %v4772, 0
      %v4809 = vsel %vm3346, %v4773, 0
      %v4812 = vsel %vm3346, %v4774, 0
      %v4815 = vsel %vm3346, %v4775, 0
      %v4818 = vsel %vm3346, %v4776, 0
      %v4821 = vsel %vm3346, %v4777, 0
      %v4824 = vsel %vm3346, %v4778, 0
      %v4827 = vsel %vm3346, %v4779, 0
      %v4830 = vsel %vm3346, %v4780, 0
      %v4833 = vsel %vm3346, %v4781, 0
      %v4836 = vsel %vm3346, %v4782, 0
      %v4839 = vsel %vm3346, %v4783, 0
      %v4842 = vsel %vm3346, %v4784, 0
      %v4845 = vsel %vm3346, %v4785, 0
      %v4848 = vsel %vm3346, %v4786, 0
      %v4851 = vsel %vm3346, %v4787, 0
      %v4854 = vsel %vm3578, %v4789, 0
      %4856 = vmatpush.bf16.msra.mxu0 0
      %4857 = vmatpush.bf16.msra.mxu0 0
      %4858 = vmatpush.bf16.msra.mxu0 0
      %4859 = vmatpush.bf16.msra.mxu0 0
      %4860 = vmatpush.bf16.msra.mxu0 0
      %4861 = vmatpush.bf16.msra.mxu0 0
      %4862 = vmatpush.bf16.msra.mxu0 0
      %4863 = vmatpush.bf16.msra.mxu0 %v4854
      %4864 = vmatmul.bf16.gmra.mxu0 %v4791
      %v4865 = vpop.f32.mrf.mxu0
      %v4866 = vadd.f32 0.0, %v4865
      %v4867 = vpop.f32.mrf.mxu0
      %v4868 = vadd.f32 0.0, %v4867
      %4869 = vmatmul.bf16.gmra.mxu0 %v4794
      %v4870 = vpop.f32.mrf.mxu0
      %v4871 = vadd.f32 0.0, %v4870
      %v4872 = vpop.f32.mrf.mxu0
      %v4873 = vadd.f32 0.0, %v4872
      %4874 = vmatmul.bf16.gmra.mxu0 %v4797
      %v4875 = vpop.f32.mrf.mxu0
      %v4876 = vadd.f32 0.0, %v4875
      %v4877 = vpop.f32.mrf.mxu0
      %v4878 = vadd.f32 0.0, %v4877
      %4879 = vmatmul.bf16.gmra.mxu0 %v4800
      %v4880 = vpop.f32.mrf.mxu0
      %v4881 = vadd.f32 0.0, %v4880
      %v4882 = vpop.f32.mrf.mxu0
      %v4883 = vadd.f32 0.0, %v4882
      %4884 = vmatmul.bf16.gmra.mxu0 %v4803
      %v4885 = vpop.f32.mrf.mxu0
      %v4886 = vadd.f32 0.0, %v4885
      %v4887 = vpop.f32.mrf.mxu0
      %v4888 = vadd.f32 0.0, %v4887
      %4889 = vmatmul.bf16.gmra.mxu0 %v4806
      %v4890 = vpop.f32.mrf.mxu0
      %v4891 = vadd.f32 0.0, %v4890
      %v4892 = vpop.f32.mrf.mxu0
      %v4893 = vadd.f32 0.0, %v4892
      %4894 = vmatmul.bf16.gmra.mxu0 %v4809
      %v4895 = vpop.f32.mrf.mxu0
      %v4896 = vadd.f32 0.0, %v4895
      %v4897 = vpop.f32.mrf.mxu0
      %v4898 = vadd.f32 0.0, %v4897
      %4899 = vmatmul.bf16.gmra.mxu0 %v4812
      %v4900 = vpop.f32.mrf.mxu0
      %v4901 = vadd.f32 0.0, %v4900
      %v4902 = vpop.f32.mrf.mxu0
      %v4903 = vadd.f32 0.0, %v4902
      %4904 = vmatmul.bf16.gmra.mxu0 %v4815
      %v4905 = vpop.f32.mrf.mxu0
      %v4906 = vadd.f32 0.0, %v4905
      %v4907 = vpop.f32.mrf.mxu0
      %v4908 = vadd.f32 0.0, %v4907
      %4909 = vmatmul.bf16.gmra.mxu0 %v4818
      %v4910 = vpop.f32.mrf.mxu0
      %v4911 = vadd.f32 0.0, %v4910
      %v4912 = vpop.f32.mrf.mxu0
      %v4913 = vadd.f32 0.0, %v4912
      %4914 = vmatmul.bf16.gmra.mxu0 %v4821
      %v4915 = vpop.f32.mrf.mxu0
      %v4916 = vadd.f32 0.0, %v4915
      %v4917 = vpop.f32.mrf.mxu0
      %v4918 = vadd.f32 0.0, %v4917
      %4919 = vmatmul.bf16.gmra.mxu0 %v4824
      %v4920 = vpop.f32.mrf.mxu0
      %v4921 = vadd.f32 0.0, %v4920
      %v4922 = vpop.f32.mrf.mxu0
      %v4923 = vadd.f32 0.0, %v4922
      %4924 = vmatmul.bf16.gmra.mxu0 %v4827
      %v4925 = vpop.f32.mrf.mxu0
      %v4926 = vadd.f32 0.0, %v4925
      %v4927 = vpop.f32.mrf.mxu0
      %v4928 = vadd.f32 0.0, %v4927
      %4929 = vmatmul.bf16.gmra.mxu0 %v4830
      %v4930 = vpop.f32.mrf.mxu0
      %v4931 = vadd.f32 0.0, %v4930
      %v4932 = vpop.f32.mrf.mxu0
      %v4933 = vadd.f32 0.0, %v4932
      %4934 = vmatmul.bf16.gmra.mxu0 %v4833
      %v4935 = vpop.f32.mrf.mxu0
      %v4936 = vadd.f32 0.0, %v4935
      %v4937 = vpop.f32.mrf.mxu0
      %v4938 = vadd.f32 0.0, %v4937
      %4939 = vmatmul.bf16.gmra.mxu0 %v4836
      %v4940 = vpop.f32.mrf.mxu0
      %v4941 = vadd.f32 0.0, %v4940
      %v4942 = vpop.f32.mrf.mxu0
      %v4943 = vadd.f32 0.0, %v4942
      %4944 = vmatmul.bf16.gmra.mxu0 %v4839
      %v4945 = vpop.f32.mrf.mxu0
      %v4946 = vadd.f32 0.0, %v4945
      %v4947 = vpop.f32.mrf.mxu0
      %v4948 = vadd.f32 0.0, %v4947
      %4949 = vmatmul.bf16.gmra.mxu0 %v4842
      %v4950 = vpop.f32.mrf.mxu0
      %v4951 = vadd.f32 0.0, %v4950
      %v4952 = vpop.f32.mrf.mxu0
      %v4953 = vadd.f32 0.0, %v4952
      %4954 = vmatmul.bf16.gmra.mxu0 %v4845
      %v4955 = vpop.f32.mrf.mxu0
      %v4956 = vadd.f32 0.0, %v4955
      %v4957 = vpop.f32.mrf.mxu0
      %v4958 = vadd.f32 0.0, %v4957
      %4959 = vmatmul.bf16.gmra.mxu0 %v4848
      %v4960 = vpop.f32.mrf.mxu0
      %v4961 = vadd.f32 0.0, %v4960
      %v4962 = vpop.f32.mrf.mxu0
      %v4963 = vadd.f32 0.0, %v4962
      %4964 = vmatmul.bf16.gmra.mxu0 %v4851
      %v4965 = vpop.f32.mrf.mxu0
      %v4966 = vadd.f32 0.0, %v4965
      %v4967 = vpop.f32.mrf.mxu0
      %4968 = vdwg.mxu0
      %v4969 = vadd.f32 %v4685, %v4866
      %v4970 = vadd.f32 %v4686, %v4868
      %v4971 = vadd.f32 %v4687, %v4871
      %v4972 = vadd.f32 %v4688, %v4873
      %v4973 = vadd.f32 %v4689, %v4876
      %v4974 = vadd.f32 %v4690, %v4878
      %v4975 = vadd.f32 %v4691, %v4881
      %v4976 = vadd.f32 %v4692, %v4883
      %v4977 = vadd.f32 %v4693, %v4886
      %v4978 = vadd.f32 %v4694, %v4888
      %v4979 = vadd.f32 %v4695, %v4891
      %v4980 = vadd.f32 %v4696, %v4893
      %v4981 = vadd.f32 %v4697, %v4896
      %v4982 = vadd.f32 %v4698, %v4898
      %v4983 = vadd.f32 %v4699, %v4901
      %v4984 = vadd.f32 %v4700, %v4903
      %v4985 = vadd.f32 %v4701, %v4906
      %v4986 = vadd.f32 %v4702, %v4908
      %v4987 = vadd.f32 %v4703, %v4911
      %v4988 = vadd.f32 %v4704, %v4913
      %v4989 = vadd.f32 %v4705, %v4916
      %v4990 = vadd.f32 %v4706, %v4918
      %v4991 = vadd.f32 %v4707, %v4921
      %v4992 = vadd.f32 %v4708, %v4923
      %v4993 = vadd.f32 %v4709, %v4926
      %v4994 = vadd.f32 %v4710, %v4928
      %v4995 = vadd.f32 %v4711, %v4931
      %v4996 = vadd.f32 %v4712, %v4933
      %v4997 = vadd.f32 %v4713, %v4936
      %v4998 = vadd.f32 %v4714, %v4938
      %v4999 = vadd.f32 %v4715, %v4941
      %v5000 = vadd.f32 %v4716, %v4943
      %v5001 = vadd.f32 %v4717, %v4946
      %v5002 = vadd.f32 %v4718, %v4948
      %v5003 = vadd.f32 %v4719, %v4951
      %v5004 = vadd.f32 %v4720, %v4953
      %v5005 = vadd.f32 %v4721, %v4956
      %v5006 = vadd.f32 %v4722, %v4958
      %v5007 = vadd.f32 %v4723, %v4961
      %v5008 = vadd.f32 %v4724, %v4963
      %v5009 = vadd.f32 %v4725, %v4966
      %v5010 = vld [vmem:[#allocation2 + $0x3c] sm:$0xff]
      %v5011 = vld [vmem:[#allocation2 + $0x44] sm:$0xff]
      %v5012 = vld [vmem:[#allocation2 + $0x4c] sm:$0xff]
      %v5013 = vld [vmem:[#allocation2 + $0x54] sm:$0xff]
      %v5014 = vld [vmem:[#allocation2 + $0x5c] sm:$0xff]
      %v5015 = vld [vmem:[#allocation2 + $0x64] sm:$0xff]
      %v5016 = vld [vmem:[#allocation2 + $0x6c] sm:$0xff]
      %v5017 = vld [vmem:[#allocation2 + $0x74] sm:$0xff]
      %v5018 = vld [vmem:[#allocation2 + $0x7c] sm:$0xff]
      %v5019 = vld [vmem:[#allocation2 + $0x84] sm:$0xff]
      %v5020 = vld [vmem:[#allocation2 + $0x8c] sm:$0xff]
      %v5021 = vld [vmem:[#allocation2 + $0x94] sm:$0xff]
      %v5022 = vld [vmem:[#allocation2 + $0x9c] sm:$0xff]
      %v5023 = vld [vmem:[#allocation2 + $0xa4] sm:$0xff]
      %v5024 = vld [vmem:[#allocation2 + $0xac] sm:$0xff]
      %v5025 = vld [vmem:[#allocation2 + $0xb4] sm:$0xff]
      %v5026 = vld [vmem:[#allocation2 + $0xbc] sm:$0xff]
      %v5027 = vld [vmem:[#allocation2 + $0xc4] sm:$0xff]
      %v5028 = vld [vmem:[#allocation2 + $0xcc] sm:$0xff]
      %v5029 = vld [vmem:[#allocation2 + $0xd4] sm:$0xff]
      %v5030 = vld [vmem:[#allocation2 + $0xdc] sm:$0xff]
      %v5031 = vld [vmem:[#allocation2 + $0xe4] sm:$0xff]
      %v5032 = vld [vmem:[#allocation2 + $0xec] sm:$0xff]
      %v5033 = vld [vmem:[#allocation2 + $0xf4] sm:$0xff]
      %v5034 = vld [vmem:[#allocation2 + $0xfc] sm:$0xff]
      %v5035 = vld [vmem:[#allocation2 + $0x104] sm:$0xff]
      %v5036 = vld [vmem:[#allocation2 + $0x10c] sm:$0xff]
      %v5037 = vld [vmem:[#allocation2 + $0x114] sm:$0xff]
      %v5038 = vld [vmem:[#allocation2 + $0x11c] sm:$0xff]
      %v5039 = vld [vmem:[#allocation2 + $0x124] sm:$0xff]
      %v5040 = vld [vmem:[#allocation2 + $0x12c] sm:$0xff]
      %v5041 = vld [vmem:[#allocation2 + $0x134] sm:$0xff]
      %v5042 = vld [vmem:[#allocation2 + $0x13c] sm:$0xff]
      %v5043 = vld [vmem:[#allocation2 + $0x144] sm:$0xff]
      %v5044 = vld [vmem:[#allocation2 + $0x14c] sm:$0xff]
      %v5045 = vld [vmem:[#allocation2 + $0x154] sm:$0xff]
      %v5046 = vld [vmem:[#allocation2 + $0x15c] sm:$0xff]
      %v5047 = vld [vmem:[#allocation2 + $0x164] sm:$0xff]
      %v5048 = vld [vmem:[#allocation2 + $0x16c] sm:$0xff]
      %v5049 = vld [vmem:[#allocation2 + $0x174] sm:$0xff]
      %v5050 = vld [vmem:[#allocation2 + $0x17c] sm:$0xff]
      %v5051 = vpack.c.bf16 %v5011, %v5010
      %v5052 = vpack.c.bf16 %v5013, %v5012
      %v5053 = vpack.c.bf16 %v5015, %v5014
      %v5054 = vpack.c.bf16 %v5017, %v5016
      %v5055 = vpack.c.bf16 %v5019, %v5018
      %v5056 = vpack.c.bf16 %v5021, %v5020
      %v5057 = vpack.c.bf16 %v5023, %v5022
      %v5058 = vpack.c.bf16 %v5025, %v5024
      %v5059 = vpack.c.bf16 %v5027, %v5026
      %v5060 = vpack.c.bf16 %v5029, %v5028
      %v5061 = vpack.c.bf16 %v5031, %v5030
      %v5062 = vpack.c.bf16 %v5033, %v5032
      %v5063 = vpack.c.bf16 %v5035, %v5034
      %v5064 = vpack.c.bf16 %v5037, %v5036
      %v5065 = vpack.c.bf16 %v5039, %v5038
      %v5066 = vpack.c.bf16 %v5041, %v5040
      %v5067 = vpack.c.bf16 %v5043, %v5042
      %v5068 = vpack.c.bf16 %v5045, %v5044
      %v5069 = vpack.c.bf16 %v5047, %v5046
      %v5070 = vpack.c.bf16 %v5049, %v5048
      %v5071 = vpack.c.bf16 %v5050, %v5050
      %s5072 = scalar_lea.vmem %s1, 12
      %v5073 = vld [vmem:[%s5072] sm:$0x3]
      %v5075 = vsel %vm3346, %v5051, 0
      %v5078 = vsel %vm3346, %v5052, 0
      %v5081 = vsel %vm3346, %v5053, 0
      %v5084 = vsel %vm3346, %v5054, 0
      %v5087 = vsel %vm3346, %v5055, 0
      %v5090 = vsel %vm3346, %v5056, 0
      %v5093 = vsel %vm3346, %v5057, 0
      %v5096 = vsel %vm3346, %v5058, 0
      %v5099 = vsel %vm3346, %v5059, 0
      %v5102 = vsel %vm3346, %v5060, 0
      %v5105 = vsel %vm3346, %v5061, 0
      %v5108 = vsel %vm3346, %v5062, 0
      %v5111 = vsel %vm3346, %v5063, 0
      %v5114 = vsel %vm3346, %v5064, 0
      %v5117 = vsel %vm3346, %v5065, 0
      %v5120 = vsel %vm3346, %v5066, 0
      %v5123 = vsel %vm3346, %v5067, 0
      %v5126 = vsel %vm3346, %v5068, 0
      %v5129 = vsel %vm3346, %v5069, 0
      %v5132 = vsel %vm3346, %v5070, 0
      %v5135 = vsel %vm3346, %v5071, 0
      %v5138 = vsel %vm3578, %v5073, 0
      %5140 = vmatpush.bf16.msra.mxu0 0
      %5141 = vmatpush.bf16.msra.mxu0 0
      %5142 = vmatpush.bf16.msra.mxu0 0
      %5143 = vmatpush.bf16.msra.mxu0 0
      %5144 = vmatpush.bf16.msra.mxu0 0
      %5145 = vmatpush.bf16.msra.mxu0 0
      %5146 = vmatpush.bf16.msra.mxu0 0
      %5147 = vmatpush.bf16.msra.mxu0 %v5138
      %5148 = vmatmul.bf16.gmra.mxu0 %v5075
      %v5149 = vpop.f32.mrf.mxu0
      %v5150 = vadd.f32 0.0, %v5149
      %v5151 = vpop.f32.mrf.mxu0
      %v5152 = vadd.f32 0.0, %v5151
      %5153 = vmatmul.bf16.gmra.mxu0 %v5078
      %v5154 = vpop.f32.mrf.mxu0
      %v5155 = vadd.f32 0.0, %v5154
      %v5156 = vpop.f32.mrf.mxu0
      %v5157 = vadd.f32 0.0, %v5156
      %5158 = vmatmul.bf16.gmra.mxu0 %v5081
      %v5159 = vpop.f32.mrf.mxu0
      %v5160 = vadd.f32 0.0, %v5159
      %v5161 = vpop.f32.mrf.mxu0
      %v5162 = vadd.f32 0.0, %v5161
      %5163 = vmatmul.bf16.gmra.mxu0 %v5084
      %v5164 = vpop.f32.mrf.mxu0
      %v5165 = vadd.f32 0.0, %v5164
      %v5166 = vpop.f32.mrf.mxu0
      %v5167 = vadd.f32 0.0, %v5166
      %5168 = vmatmul.bf16.gmra.mxu0 %v5087
      %v5169 = vpop.f32.mrf.mxu0
      %v5170 = vadd.f32 0.0, %v5169
      %v5171 = vpop.f32.mrf.mxu0
      %v5172 = vadd.f32 0.0, %v5171
      %5173 = vmatmul.bf16.gmra.mxu0 %v5090
      %v5174 = vpop.f32.mrf.mxu0
      %v5175 = vadd.f32 0.0, %v5174
      %v5176 = vpop.f32.mrf.mxu0
      %v5177 = vadd.f32 0.0, %v5176
      %5178 = vmatmul.bf16.gmra.mxu0 %v5093
      %v5179 = vpop.f32.mrf.mxu0
      %v5180 = vadd.f32 0.0, %v5179
      %v5181 = vpop.f32.mrf.mxu0
      %v5182 = vadd.f32 0.0, %v5181
      %5183 = vmatmul.bf16.gmra.mxu0 %v5096
      %v5184 = vpop.f32.mrf.mxu0
      %v5185 = vadd.f32 0.0, %v5184
      %v5186 = vpop.f32.mrf.mxu0
      %v5187 = vadd.f32 0.0, %v5186
      %5188 = vmatmul.bf16.gmra.mxu0 %v5099
      %v5189 = vpop.f32.mrf.mxu0
      %v5190 = vadd.f32 0.0, %v5189
      %v5191 = vpop.f32.mrf.mxu0
      %v5192 = vadd.f32 0.0, %v5191
      %5193 = vmatmul.bf16.gmra.mxu0 %v5102
      %v5194 = vpop.f32.mrf.mxu0
      %v5195 = vadd.f32 0.0, %v5194
      %v5196 = vpop.f32.mrf.mxu0
      %v5197 = vadd.f32 0.0, %v5196
      %5198 = vmatmul.bf16.gmra.mxu0 %v5105
      %v5199 = vpop.f32.mrf.mxu0
      %v5200 = vadd.f32 0.0, %v5199
      %v5201 = vpop.f32.mrf.mxu0
      %v5202 = vadd.f32 0.0, %v5201
      %5203 = vmatmul.bf16.gmra.mxu0 %v5108
      %v5204 = vpop.f32.mrf.mxu0
      %v5205 = vadd.f32 0.0, %v5204
      %v5206 = vpop.f32.mrf.mxu0
      %v5207 = vadd.f32 0.0, %v5206
      %5208 = vmatmul.bf16.gmra.mxu0 %v5111
      %v5209 = vpop.f32.mrf.mxu0
      %v5210 = vadd.f32 0.0, %v5209
      %v5211 = vpop.f32.mrf.mxu0
      %v5212 = vadd.f32 0.0, %v5211
      %5213 = vmatmul.bf16.gmra.mxu0 %v5114
      %v5214 = vpop.f32.mrf.mxu0
      %v5215 = vadd.f32 0.0, %v5214
      %v5216 = vpop.f32.mrf.mxu0
      %v5217 = vadd.f32 0.0, %v5216
      %5218 = vmatmul.bf16.gmra.mxu0 %v5117
      %v5219 = vpop.f32.mrf.mxu0
      %v5220 = vadd.f32 0.0, %v5219
      %v5221 = vpop.f32.mrf.mxu0
      %v5222 = vadd.f32 0.0, %v5221
      %5223 = vmatmul.bf16.gmra.mxu0 %v5120
      %v5224 = vpop.f32.mrf.mxu0
      %v5225 = vadd.f32 0.0, %v5224
      %v5226 = vpop.f32.mrf.mxu0
      %v5227 = vadd.f32 0.0, %v5226
      %5228 = vmatmul.bf16.gmra.mxu0 %v5123
      %v5229 = vpop.f32.mrf.mxu0
      %v5230 = vadd.f32 0.0, %v5229
      %v5231 = vpop.f32.mrf.mxu0
      %v5232 = vadd.f32 0.0, %v5231
      %5233 = vmatmul.bf16.gmra.mxu0 %v5126
      %v5234 = vpop.f32.mrf.mxu0
      %v5235 = vadd.f32 0.0, %v5234
      %v5236 = vpop.f32.mrf.mxu0
      %v5237 = vadd.f32 0.0, %v5236
      %5238 = vmatmul.bf16.gmra.mxu0 %v5129
      %v5239 = vpop.f32.mrf.mxu0
      %v5240 = vadd.f32 0.0, %v5239
      %v5241 = vpop.f32.mrf.mxu0
      %v5242 = vadd.f32 0.0, %v5241
      %5243 = vmatmul.bf16.gmra.mxu0 %v5132
      %v5244 = vpop.f32.mrf.mxu0
      %v5245 = vadd.f32 0.0, %v5244
      %v5246 = vpop.f32.mrf.mxu0
      %v5247 = vadd.f32 0.0, %v5246
      %5248 = vmatmul.bf16.gmra.mxu0 %v5135
      %v5249 = vpop.f32.mrf.mxu0
      %v5250 = vadd.f32 0.0, %v5249
      %v5251 = vpop.f32.mrf.mxu0
      %5252 = vdwg.mxu0
      %v5253 = vadd.f32 %v4969, %v5150
      %v5254 = vadd.f32 %v4970, %v5152
      %v5255 = vadd.f32 %v4971, %v5155
      %v5256 = vadd.f32 %v4972, %v5157
      %v5257 = vadd.f32 %v4973, %v5160
      %v5258 = vadd.f32 %v4974, %v5162
      %v5259 = vadd.f32 %v4975, %v5165
      %v5260 = vadd.f32 %v4976, %v5167
      %v5261 = vadd.f32 %v4977, %v5170
      %v5262 = vadd.f32 %v4978, %v5172
      %v5263 = vadd.f32 %v4979, %v5175
      %v5264 = vadd.f32 %v4980, %v5177
      %v5265 = vadd.f32 %v4981, %v5180
      %v5266 = vadd.f32 %v4982, %v5182
      %v5267 = vadd.f32 %v4983, %v5185
      %v5268 = vadd.f32 %v4984, %v5187
      %v5269 = vadd.f32 %v4985, %v5190
      %v5270 = vadd.f32 %v4986, %v5192
      %v5271 = vadd.f32 %v4987, %v5195
      %v5272 = vadd.f32 %v4988, %v5197
      %v5273 = vadd.f32 %v4989, %v5200
      %v5274 = vadd.f32 %v4990, %v5202
      %v5275 = vadd.f32 %v4991, %v5205
      %v5276 = vadd.f32 %v4992, %v5207
      %v5277 = vadd.f32 %v4993, %v5210
      %v5278 = vadd.f32 %v4994, %v5212
      %v5279 = vadd.f32 %v4995, %v5215
      %v5280 = vadd.f32 %v4996, %v5217
      %v5281 = vadd.f32 %v4997, %v5220
      %v5282 = vadd.f32 %v4998, %v5222
      %v5283 = vadd.f32 %v4999, %v5225
      %v5284 = vadd.f32 %v5000, %v5227
      %v5285 = vadd.f32 %v5001, %v5230
      %v5286 = vadd.f32 %v5002, %v5232
      %v5287 = vadd.f32 %v5003, %v5235
      %v5288 = vadd.f32 %v5004, %v5237
      %v5289 = vadd.f32 %v5005, %v5240
      %v5290 = vadd.f32 %v5006, %v5242
      %v5291 = vadd.f32 %v5007, %v5245
      %v5292 = vadd.f32 %v5008, %v5247
      %v5293 = vadd.f32 %v5009, %v5250
      %v5294 = vld [vmem:[#allocation2 + $0x3d] sm:$0xff]
      %v5295 = vld [vmem:[#allocation2 + $0x45] sm:$0xff]
      %v5296 = vld [vmem:[#allocation2 + $0x4d] sm:$0xff]
      %v5297 = vld [vmem:[#allocation2 + $0x55] sm:$0xff]
      %v5298 = vld [vmem:[#allocation2 + $0x5d] sm:$0xff]
      %v5299 = vld [vmem:[#allocation2 + $0x65] sm:$0xff]
      %v5300 = vld [vmem:[#allocation2 + $0x6d] sm:$0xff]
      %v5301 = vld [vmem:[#allocation2 + $0x75] sm:$0xff]
      %v5302 = vld [vmem:[#allocation2 + $0x7d] sm:$0xff]
      %v5303 = vld [vmem:[#allocation2 + $0x85] sm:$0xff]
      %v5304 = vld [vmem:[#allocation2 + $0x8d] sm:$0xff]
      %v5305 = vld [vmem:[#allocation2 + $0x95] sm:$0xff]
      %v5306 = vld [vmem:[#allocation2 + $0x9d] sm:$0xff]
      %v5307 = vld [vmem:[#allocation2 + $0xa5] sm:$0xff]
      %v5308 = vld [vmem:[#allocation2 + $0xad] sm:$0xff]
      %v5309 = vld [vmem:[#allocation2 + $0xb5] sm:$0xff]
      %v5310 = vld [vmem:[#allocation2 + $0xbd] sm:$0xff]
      %v5311 = vld [vmem:[#allocation2 + $0xc5] sm:$0xff]
      %v5312 = vld [vmem:[#allocation2 + $0xcd] sm:$0xff]
      %v5313 = vld [vmem:[#allocation2 + $0xd5] sm:$0xff]
      %v5314 = vld [vmem:[#allocation2 + $0xdd] sm:$0xff]
      %v5315 = vld [vmem:[#allocation2 + $0xe5] sm:$0xff]
      %v5316 = vld [vmem:[#allocation2 + $0xed] sm:$0xff]
      %v5317 = vld [vmem:[#allocation2 + $0xf5] sm:$0xff]
      %v5318 = vld [vmem:[#allocation2 + $0xfd] sm:$0xff]
      %v5319 = vld [vmem:[#allocation2 + $0x105] sm:$0xff]
      %v5320 = vld [vmem:[#allocation2 + $0x10d] sm:$0xff]
      %v5321 = vld [vmem:[#allocation2 + $0x115] sm:$0xff]
      %v5322 = vld [vmem:[#allocation2 + $0x11d] sm:$0xff]
      %v5323 = vld [vmem:[#allocation2 + $0x125] sm:$0xff]
      %v5324 = vld [vmem:[#allocation2 + $0x12d] sm:$0xff]
      %v5325 = vld [vmem:[#allocation2 + $0x135] sm:$0xff]
      %v5326 = vld [vmem:[#allocation2 + $0x13d] sm:$0xff]
      %v5327 = vld [vmem:[#allocation2 + $0x145] sm:$0xff]
      %v5328 = vld [vmem:[#allocation2 + $0x14d] sm:$0xff]
      %v5329 = vld [vmem:[#allocation2 + $0x155] sm:$0xff]
      %v5330 = vld [vmem:[#allocation2 + $0x15d] sm:$0xff]
      %v5331 = vld [vmem:[#allocation2 + $0x165] sm:$0xff]
      %v5332 = vld [vmem:[#allocation2 + $0x16d] sm:$0xff]
      %v5333 = vld [vmem:[#allocation2 + $0x175] sm:$0xff]
      %v5334 = vld [vmem:[#allocation2 + $0x17d] sm:$0xff]
      %v5335 = vpack.c.bf16 %v5295, %v5294
      %v5336 = vpack.c.bf16 %v5297, %v5296
      %v5337 = vpack.c.bf16 %v5299, %v5298
      %v5338 = vpack.c.bf16 %v5301, %v5300
      %v5339 = vpack.c.bf16 %v5303, %v5302
      %v5340 = vpack.c.bf16 %v5305, %v5304
      %v5341 = vpack.c.bf16 %v5307, %v5306
      %v5342 = vpack.c.bf16 %v5309, %v5308
      %v5343 = vpack.c.bf16 %v5311, %v5310
      %v5344 = vpack.c.bf16 %v5313, %v5312
      %v5345 = vpack.c.bf16 %v5315, %v5314
      %v5346 = vpack.c.bf16 %v5317, %v5316
      %v5347 = vpack.c.bf16 %v5319, %v5318
      %v5348 = vpack.c.bf16 %v5321, %v5320
      %v5349 = vpack.c.bf16 %v5323, %v5322
      %v5350 = vpack.c.bf16 %v5325, %v5324
      %v5351 = vpack.c.bf16 %v5327, %v5326
      %v5352 = vpack.c.bf16 %v5329, %v5328
      %v5353 = vpack.c.bf16 %v5331, %v5330
      %v5354 = vpack.c.bf16 %v5333, %v5332
      %v5355 = vpack.c.bf16 %v5334, %v5334
      %s5356 = scalar_lea.vmem %s1, 14
      %v5357 = vld [vmem:[%s5356] sm:$0x3]
      %v5359 = vsel %vm3346, %v5335, 0
      %v5362 = vsel %vm3346, %v5336, 0
      %v5365 = vsel %vm3346, %v5337, 0
      %v5368 = vsel %vm3346, %v5338, 0
      %v5371 = vsel %vm3346, %v5339, 0
      %v5374 = vsel %vm3346, %v5340, 0
      %v5377 = vsel %vm3346, %v5341, 0
      %v5380 = vsel %vm3346, %v5342, 0
      %v5383 = vsel %vm3346, %v5343, 0
      %v5386 = vsel %vm3346, %v5344, 0
      %v5389 = vsel %vm3346, %v5345, 0
      %v5392 = vsel %vm3346, %v5346, 0
      %v5395 = vsel %vm3346, %v5347, 0
      %v5398 = vsel %vm3346, %v5348, 0
      %v5401 = vsel %vm3346, %v5349, 0
      %v5404 = vsel %vm3346, %v5350, 0
      %v5407 = vsel %vm3346, %v5351, 0
      %v5410 = vsel %vm3346, %v5352, 0
      %v5413 = vsel %vm3346, %v5353, 0
      %v5416 = vsel %vm3346, %v5354, 0
      %v5419 = vsel %vm3346, %v5355, 0
      %v5422 = vsel %vm3578, %v5357, 0
      %5424 = vmatpush.bf16.msra.mxu0 0
      %5425 = vmatpush.bf16.msra.mxu0 0
      %5426 = vmatpush.bf16.msra.mxu0 0
      %5427 = vmatpush.bf16.msra.mxu0 0
      %5428 = vmatpush.bf16.msra.mxu0 0
      %5429 = vmatpush.bf16.msra.mxu0 0
      %5430 = vmatpush.bf16.msra.mxu0 0
      %5431 = vmatpush.bf16.msra.mxu0 %v5422
      %5432 = vmatmul.bf16.gmra.mxu0 %v5359
      %v5433 = vpop.f32.mrf.mxu0
      %v5434 = vadd.f32 0.0, %v5433
      %v5435 = vpop.f32.mrf.mxu0
      %v5436 = vadd.f32 0.0, %v5435
      %5437 = vmatmul.bf16.gmra.mxu0 %v5362
      %v5438 = vpop.f32.mrf.mxu0
      %v5439 = vadd.f32 0.0, %v5438
      %v5440 = vpop.f32.mrf.mxu0
      %v5441 = vadd.f32 0.0, %v5440
      %5442 = vmatmul.bf16.gmra.mxu0 %v5365
      %v5443 = vpop.f32.mrf.mxu0
      %v5444 = vadd.f32 0.0, %v5443
      %v5445 = vpop.f32.mrf.mxu0
      %v5446 = vadd.f32 0.0, %v5445
      %5447 = vmatmul.bf16.gmra.mxu0 %v5368
      %v5448 = vpop.f32.mrf.mxu0
      %v5449 = vadd.f32 0.0, %v5448
      %v5450 = vpop.f32.mrf.mxu0
      %v5451 = vadd.f32 0.0, %v5450
      %5452 = vmatmul.bf16.gmra.mxu0 %v5371
      %v5453 = vpop.f32.mrf.mxu0
      %v5454 = vadd.f32 0.0, %v5453
      %v5455 = vpop.f32.mrf.mxu0
      %v5456 = vadd.f32 0.0, %v5455
      %5457 = vmatmul.bf16.gmra.mxu0 %v5374
      %v5458 = vpop.f32.mrf.mxu0
      %v5459 = vadd.f32 0.0, %v5458
      %v5460 = vpop.f32.mrf.mxu0
      %v5461 = vadd.f32 0.0, %v5460
      %5462 = vmatmul.bf16.gmra.mxu0 %v5377
      %v5463 = vpop.f32.mrf.mxu0
      %v5464 = vadd.f32 0.0, %v5463
      %v5465 = vpop.f32.mrf.mxu0
      %v5466 = vadd.f32 0.0, %v5465
      %5467 = vmatmul.bf16.gmra.mxu0 %v5380
      %v5468 = vpop.f32.mrf.mxu0
      %v5469 = vadd.f32 0.0, %v5468
      %v5470 = vpop.f32.mrf.mxu0
      %v5471 = vadd.f32 0.0, %v5470
      %5472 = vmatmul.bf16.gmra.mxu0 %v5383
      %v5473 = vpop.f32.mrf.mxu0
      %v5474 = vadd.f32 0.0, %v5473
      %v5475 = vpop.f32.mrf.mxu0
      %v5476 = vadd.f32 0.0, %v5475
      %5477 = vmatmul.bf16.gmra.mxu0 %v5386
      %v5478 = vpop.f32.mrf.mxu0
      %v5479 = vadd.f32 0.0, %v5478
      %v5480 = vpop.f32.mrf.mxu0
      %v5481 = vadd.f32 0.0, %v5480
      %5482 = vmatmul.bf16.gmra.mxu0 %v5389
      %v5483 = vpop.f32.mrf.mxu0
      %v5484 = vadd.f32 0.0, %v5483
      %v5485 = vpop.f32.mrf.mxu0
      %v5486 = vadd.f32 0.0, %v5485
      %5487 = vmatmul.bf16.gmra.mxu0 %v5392
      %v5488 = vpop.f32.mrf.mxu0
      %v5489 = vadd.f32 0.0, %v5488
      %v5490 = vpop.f32.mrf.mxu0
      %v5491 = vadd.f32 0.0, %v5490
      %5492 = vmatmul.bf16.gmra.mxu0 %v5395
      %v5493 = vpop.f32.mrf.mxu0
      %v5494 = vadd.f32 0.0, %v5493
      %v5495 = vpop.f32.mrf.mxu0
      %v5496 = vadd.f32 0.0, %v5495
      %5497 = vmatmul.bf16.gmra.mxu0 %v5398
      %v5498 = vpop.f32.mrf.mxu0
      %v5499 = vadd.f32 0.0, %v5498
      %v5500 = vpop.f32.mrf.mxu0
      %v5501 = vadd.f32 0.0, %v5500
      %5502 = vmatmul.bf16.gmra.mxu0 %v5401
      %v5503 = vpop.f32.mrf.mxu0
      %v5504 = vadd.f32 0.0, %v5503
      %v5505 = vpop.f32.mrf.mxu0
      %v5506 = vadd.f32 0.0, %v5505
      %5507 = vmatmul.bf16.gmra.mxu0 %v5404
      %v5508 = vpop.f32.mrf.mxu0
      %v5509 = vadd.f32 0.0, %v5508
      %v5510 = vpop.f32.mrf.mxu0
      %v5511 = vadd.f32 0.0, %v5510
      %5512 = vmatmul.bf16.gmra.mxu0 %v5407
      %v5513 = vpop.f32.mrf.mxu0
      %v5514 = vadd.f32 0.0, %v5513
      %v5515 = vpop.f32.mrf.mxu0
      %v5516 = vadd.f32 0.0, %v5515
      %5517 = vmatmul.bf16.gmra.mxu0 %v5410
      %v5518 = vpop.f32.mrf.mxu0
      %v5519 = vadd.f32 0.0, %v5518
      %v5520 = vpop.f32.mrf.mxu0
      %v5521 = vadd.f32 0.0, %v5520
      %5522 = vmatmul.bf16.gmra.mxu0 %v5413
      %v5523 = vpop.f32.mrf.mxu0
      %v5524 = vadd.f32 0.0, %v5523
      %v5525 = vpop.f32.mrf.mxu0
      %v5526 = vadd.f32 0.0, %v5525
      %5527 = vmatmul.bf16.gmra.mxu0 %v5416
      %v5528 = vpop.f32.mrf.mxu0
      %v5529 = vadd.f32 0.0, %v5528
      %v5530 = vpop.f32.mrf.mxu0
      %v5531 = vadd.f32 0.0, %v5530
      %5532 = vmatmul.bf16.gmra.mxu0 %v5419
      %v5533 = vpop.f32.mrf.mxu0
      %v5534 = vadd.f32 0.0, %v5533
      %v5535 = vpop.f32.mrf.mxu0
      %5536 = vdwg.mxu0
      %v5537 = vadd.f32 %v5253, %v5434
      %v5538 = vadd.f32 %v5254, %v5436
      %v5539 = vadd.f32 %v5255, %v5439
      %v5540 = vadd.f32 %v5256, %v5441
      %v5541 = vadd.f32 %v5257, %v5444
      %v5542 = vadd.f32 %v5258, %v5446
      %v5543 = vadd.f32 %v5259, %v5449
      %v5544 = vadd.f32 %v5260, %v5451
      %v5545 = vadd.f32 %v5261, %v5454
      %v5546 = vadd.f32 %v5262, %v5456
      %v5547 = vadd.f32 %v5263, %v5459
      %v5548 = vadd.f32 %v5264, %v5461
      %v5549 = vadd.f32 %v5265, %v5464
      %v5550 = vadd.f32 %v5266, %v5466
      %v5551 = vadd.f32 %v5267, %v5469
      %v5552 = vadd.f32 %v5268, %v5471
      %v5553 = vadd.f32 %v5269, %v5474
      %v5554 = vadd.f32 %v5270, %v5476
      %v5555 = vadd.f32 %v5271, %v5479
      %v5556 = vadd.f32 %v5272, %v5481
      %v5557 = vadd.f32 %v5273, %v5484
      %v5558 = vadd.f32 %v5274, %v5486
      %v5559 = vadd.f32 %v5275, %v5489
      %v5560 = vadd.f32 %v5276, %v5491
      %v5561 = vadd.f32 %v5277, %v5494
      %v5562 = vadd.f32 %v5278, %v5496
      %v5563 = vadd.f32 %v5279, %v5499
      %v5564 = vadd.f32 %v5280, %v5501
      %v5565 = vadd.f32 %v5281, %v5504
      %v5566 = vadd.f32 %v5282, %v5506
      %v5567 = vadd.f32 %v5283, %v5509
      %v5568 = vadd.f32 %v5284, %v5511
      %v5569 = vadd.f32 %v5285, %v5514
      %v5570 = vadd.f32 %v5286, %v5516
      %v5571 = vadd.f32 %v5287, %v5519
      %v5572 = vadd.f32 %v5288, %v5521
      %v5573 = vadd.f32 %v5289, %v5524
      %v5574 = vadd.f32 %v5290, %v5526
      %v5575 = vadd.f32 %v5291, %v5529
      %v5576 = vadd.f32 %v5292, %v5531
      %v5577 = vadd.f32 %v5293, %v5534
      %v5578 = vld [vmem:[#allocation2 + $0x3e] sm:$0xff]
      %v5579 = vld [vmem:[#allocation2 + $0x46] sm:$0xff]
      %v5580 = vld [vmem:[#allocation2 + $0x4e] sm:$0xff]
      %v5581 = vld [vmem:[#allocation2 + $0x56] sm:$0xff]
      %v5582 = vld [vmem:[#allocation2 + $0x5e] sm:$0xff]
      %v5583 = vld [vmem:[#allocation2 + $0x66] sm:$0xff]
      %v5584 = vld [vmem:[#allocation2 + $0x6e] sm:$0xff]
      %v5585 = vld [vmem:[#allocation2 + $0x76] sm:$0xff]
      %v5586 = vld [vmem:[#allocation2 + $0x7e] sm:$0xff]
      %v5587 = vld [vmem:[#allocation2 + $0x86] sm:$0xff]
      %v5588 = vld [vmem:[#allocation2 + $0x8e] sm:$0xff]
      %v5589 = vld [vmem:[#allocation2 + $0x96] sm:$0xff]
      %v5590 = vld [vmem:[#allocation2 + $0x9e] sm:$0xff]
      %v5591 = vld [vmem:[#allocation2 + $0xa6] sm:$0xff]
      %v5592 = vld [vmem:[#allocation2 + $0xae] sm:$0xff]
      %v5593 = vld [vmem:[#allocation2 + $0xb6] sm:$0xff]
      %v5594 = vld [vmem:[#allocation2 + $0xbe] sm:$0xff]
      %v5595 = vld [vmem:[#allocation2 + $0xc6] sm:$0xff]
      %v5596 = vld [vmem:[#allocation2 + $0xce] sm:$0xff]
      %v5597 = vld [vmem:[#allocation2 + $0xd6] sm:$0xff]
      %v5598 = vld [vmem:[#allocation2 + $0xde] sm:$0xff]
      %v5599 = vld [vmem:[#allocation2 + $0xe6] sm:$0xff]
      %v5600 = vld [vmem:[#allocation2 + $0xee] sm:$0xff]
      %v5601 = vld [vmem:[#allocation2 + $0xf6] sm:$0xff]
      %v5602 = vld [vmem:[#allocation2 + $0xfe] sm:$0xff]
      %v5603 = vld [vmem:[#allocation2 + $0x106] sm:$0xff]
      %v5604 = vld [vmem:[#allocation2 + $0x10e] sm:$0xff]
      %v5605 = vld [vmem:[#allocation2 + $0x116] sm:$0xff]
      %v5606 = vld [vmem:[#allocation2 + $0x11e] sm:$0xff]
      %v5607 = vld [vmem:[#allocation2 + $0x126] sm:$0xff]
      %v5608 = vld [vmem:[#allocation2 + $0x12e] sm:$0xff]
      %v5609 = vld [vmem:[#allocation2 + $0x136] sm:$0xff]
      %v5610 = vld [vmem:[#allocation2 + $0x13e] sm:$0xff]
      %v5611 = vld [vmem:[#allocation2 + $0x146] sm:$0xff]
      %v5612 = vld [vmem:[#allocation2 + $0x14e] sm:$0xff]
      %v5613 = vld [vmem:[#allocation2 + $0x156] sm:$0xff]
      %v5614 = vld [vmem:[#allocation2 + $0x15e] sm:$0xff]
      %v5615 = vld [vmem:[#allocation2 + $0x166] sm:$0xff]
      %v5616 = vld [vmem:[#allocation2 + $0x16e] sm:$0xff]
      %v5617 = vld [vmem:[#allocation2 + $0x176] sm:$0xff]
      %v5618 = vld [vmem:[#allocation2 + $0x17e] sm:$0xff]
      %v5619 = vpack.c.bf16 %v5579, %v5578
      %v5620 = vpack.c.bf16 %v5581, %v5580
      %v5621 = vpack.c.bf16 %v5583, %v5582
      %v5622 = vpack.c.bf16 %v5585, %v5584
      %v5623 = vpack.c.bf16 %v5587, %v5586
      %v5624 = vpack.c.bf16 %v5589, %v5588
      %v5625 = vpack.c.bf16 %v5591, %v5590
      %v5626 = vpack.c.bf16 %v5593, %v5592
      %v5627 = vpack.c.bf16 %v5595, %v5594
      %v5628 = vpack.c.bf16 %v5597, %v5596
      %v5629 = vpack.c.bf16 %v5599, %v5598
      %v5630 = vpack.c.bf16 %v5601, %v5600
      %v5631 = vpack.c.bf16 %v5603, %v5602
      %v5632 = vpack.c.bf16 %v5605, %v5604
      %v5633 = vpack.c.bf16 %v5607, %v5606
      %v5634 = vpack.c.bf16 %v5609, %v5608
      %v5635 = vpack.c.bf16 %v5611, %v5610
      %v5636 = vpack.c.bf16 %v5613, %v5612
      %v5637 = vpack.c.bf16 %v5615, %v5614
      %v5638 = vpack.c.bf16 %v5617, %v5616
      %v5639 = vpack.c.bf16 %v5618, %v5618
      %s5640 = scalar_lea.vmem %s1, 16
      %v5641 = vld [vmem:[%s5640] sm:$0x3]
      %v5643 = vsel %vm3346, %v5619, 0
      %v5646 = vsel %vm3346, %v5620, 0
      %v5649 = vsel %vm3346, %v5621, 0
      %v5652 = vsel %vm3346, %v5622, 0
      %v5655 = vsel %vm3346, %v5623, 0
      %v5658 = vsel %vm3346, %v5624, 0
      %v5661 = vsel %vm3346, %v5625, 0
      %v5664 = vsel %vm3346, %v5626, 0
      %v5667 = vsel %vm3346, %v5627, 0
      %v5670 = vsel %vm3346, %v5628, 0
      %v5673 = vsel %vm3346, %v5629, 0
      %v5676 = vsel %vm3346, %v5630, 0
      %v5679 = vsel %vm3346, %v5631, 0
      %v5682 = vsel %vm3346, %v5632, 0
      %v5685 = vsel %vm3346, %v5633, 0
      %v5688 = vsel %vm3346, %v5634, 0
      %v5691 = vsel %vm3346, %v5635, 0
      %v5694 = vsel %vm3346, %v5636, 0
      %v5697 = vsel %vm3346, %v5637, 0
      %v5700 = vsel %vm3346, %v5638, 0
      %v5703 = vsel %vm3346, %v5639, 0
      %v5706 = vsel %vm3578, %v5641, 0
      %5708 = vmatpush.bf16.msra.mxu0 0
      %5709 = vmatpush.bf16.msra.mxu0 0
      %5710 = vmatpush.bf16.msra.mxu0 0
      %5711 = vmatpush.bf16.msra.mxu0 0
      %5712 = vmatpush.bf16.msra.mxu0 0
      %5713 = vmatpush.bf16.msra.mxu0 0
      %5714 = vmatpush.bf16.msra.mxu0 0
      %5715 = vmatpush.bf16.msra.mxu0 %v5706
      %5716 = vmatmul.bf16.gmra.mxu0 %v5643
      %v5717 = vpop.f32.mrf.mxu0
      %v5718 = vadd.f32 0.0, %v5717
      %v5719 = vpop.f32.mrf.mxu0
      %v5720 = vadd.f32 0.0, %v5719
      %5721 = vmatmul.bf16.gmra.mxu0 %v5646
      %v5722 = vpop.f32.mrf.mxu0
      %v5723 = vadd.f32 0.0, %v5722
      %v5724 = vpop.f32.mrf.mxu0
      %v5725 = vadd.f32 0.0, %v5724
      %5726 = vmatmul.bf16.gmra.mxu0 %v5649
      %v5727 = vpop.f32.mrf.mxu0
      %v5728 = vadd.f32 0.0, %v5727
      %v5729 = vpop.f32.mrf.mxu0
      %v5730 = vadd.f32 0.0, %v5729
      %5731 = vmatmul.bf16.gmra.mxu0 %v5652
      %v5732 = vpop.f32.mrf.mxu0
      %v5733 = vadd.f32 0.0, %v5732
      %v5734 = vpop.f32.mrf.mxu0
      %v5735 = vadd.f32 0.0, %v5734
      %5736 = vmatmul.bf16.gmra.mxu0 %v5655
      %v5737 = vpop.f32.mrf.mxu0
      %v5738 = vadd.f32 0.0, %v5737
      %v5739 = vpop.f32.mrf.mxu0
      %v5740 = vadd.f32 0.0, %v5739
      %5741 = vmatmul.bf16.gmra.mxu0 %v5658
      %v5742 = vpop.f32.mrf.mxu0
      %v5743 = vadd.f32 0.0, %v5742
      %v5744 = vpop.f32.mrf.mxu0
      %v5745 = vadd.f32 0.0, %v5744
      %5746 = vmatmul.bf16.gmra.mxu0 %v5661
      %v5747 = vpop.f32.mrf.mxu0
      %v5748 = vadd.f32 0.0, %v5747
      %v5749 = vpop.f32.mrf.mxu0
      %v5750 = vadd.f32 0.0, %v5749
      %5751 = vmatmul.bf16.gmra.mxu0 %v5664
      %v5752 = vpop.f32.mrf.mxu0
      %v5753 = vadd.f32 0.0, %v5752
      %v5754 = vpop.f32.mrf.mxu0
      %v5755 = vadd.f32 0.0, %v5754
      %5756 = vmatmul.bf16.gmra.mxu0 %v5667
      %v5757 = vpop.f32.mrf.mxu0
      %v5758 = vadd.f32 0.0, %v5757
      %v5759 = vpop.f32.mrf.mxu0
      %v5760 = vadd.f32 0.0, %v5759
      %5761 = vmatmul.bf16.gmra.mxu0 %v5670
      %v5762 = vpop.f32.mrf.mxu0
      %v5763 = vadd.f32 0.0, %v5762
      %v5764 = vpop.f32.mrf.mxu0
      %v5765 = vadd.f32 0.0, %v5764
      %5766 = vmatmul.bf16.gmra.mxu0 %v5673
      %v5767 = vpop.f32.mrf.mxu0
      %v5768 = vadd.f32 0.0, %v5767
      %v5769 = vpop.f32.mrf.mxu0
      %v5770 = vadd.f32 0.0, %v5769
      %5771 = vmatmul.bf16.gmra.mxu0 %v5676
      %v5772 = vpop.f32.mrf.mxu0
      %v5773 = vadd.f32 0.0, %v5772
      %v5774 = vpop.f32.mrf.mxu0
      %v5775 = vadd.f32 0.0, %v5774
      %5776 = vmatmul.bf16.gmra.mxu0 %v5679
      %v5777 = vpop.f32.mrf.mxu0
      %v5778 = vadd.f32 0.0, %v5777
      %v5779 = vpop.f32.mrf.mxu0
      %v5780 = vadd.f32 0.0, %v5779
      %5781 = vmatmul.bf16.gmra.mxu0 %v5682
      %v5782 = vpop.f32.mrf.mxu0
      %v5783 = vadd.f32 0.0, %v5782
      %v5784 = vpop.f32.mrf.mxu0
      %v5785 = vadd.f32 0.0, %v5784
      %5786 = vmatmul.bf16.gmra.mxu0 %v5685
      %v5787 = vpop.f32.mrf.mxu0
      %v5788 = vadd.f32 0.0, %v5787
      %v5789 = vpop.f32.mrf.mxu0
      %v5790 = vadd.f32 0.0, %v5789
      %5791 = vmatmul.bf16.gmra.mxu0 %v5688
      %v5792 = vpop.f32.mrf.mxu0
      %v5793 = vadd.f32 0.0, %v5792
      %v5794 = vpop.f32.mrf.mxu0
      %v5795 = vadd.f32 0.0, %v5794
      %5796 = vmatmul.bf16.gmra.mxu0 %v5691
      %v5797 = vpop.f32.mrf.mxu0
      %v5798 = vadd.f32 0.0, %v5797
      %v5799 = vpop.f32.mrf.mxu0
      %v5800 = vadd.f32 0.0, %v5799
      %5801 = vmatmul.bf16.gmra.mxu0 %v5694
      %v5802 = vpop.f32.mrf.mxu0
      %v5803 = vadd.f32 0.0, %v5802
      %v5804 = vpop.f32.mrf.mxu0
      %v5805 = vadd.f32 0.0, %v5804
      %5806 = vmatmul.bf16.gmra.mxu0 %v5697
      %v5807 = vpop.f32.mrf.mxu0
      %v5808 = vadd.f32 0.0, %v5807
      %v5809 = vpop.f32.mrf.mxu0
      %v5810 = vadd.f32 0.0, %v5809
      %5811 = vmatmul.bf16.gmra.mxu0 %v5700
      %v5812 = vpop.f32.mrf.mxu0
      %v5813 = vadd.f32 0.0, %v5812
      %v5814 = vpop.f32.mrf.mxu0
      %v5815 = vadd.f32 0.0, %v5814
      %5816 = vmatmul.bf16.gmra.mxu0 %v5703
      %v5817 = vpop.f32.mrf.mxu0
      %v5818 = vadd.f32 0.0, %v5817
      %v5819 = vpop.f32.mrf.mxu0
      %5820 = vdwg.mxu0
      %v5821 = vadd.f32 %v5537, %v5718
      %v5822 = vadd.f32 %v5538, %v5720
      %v5823 = vadd.f32 %v5539, %v5723
      %v5824 = vadd.f32 %v5540, %v5725
      %v5825 = vadd.f32 %v5541, %v5728
      %v5826 = vadd.f32 %v5542, %v5730
      %v5827 = vadd.f32 %v5543, %v5733
      %v5828 = vadd.f32 %v5544, %v5735
      %v5829 = vadd.f32 %v5545, %v5738
      %v5830 = vadd.f32 %v5546, %v5740
      %v5831 = vadd.f32 %v5547, %v5743
      %v5832 = vadd.f32 %v5548, %v5745
      %v5833 = vadd.f32 %v5549, %v5748
      %v5834 = vadd.f32 %v5550, %v5750
      %v5835 = vadd.f32 %v5551, %v5753
      %v5836 = vadd.f32 %v5552, %v5755
      %v5837 = vadd.f32 %v5553, %v5758
      %v5838 = vadd.f32 %v5554, %v5760
      %v5839 = vadd.f32 %v5555, %v5763
      %v5840 = vadd.f32 %v5556, %v5765
      %v5841 = vadd.f32 %v5557, %v5768
      %v5842 = vadd.f32 %v5558, %v5770
      %v5843 = vadd.f32 %v5559, %v5773
      %v5844 = vadd.f32 %v5560, %v5775
      %v5845 = vadd.f32 %v5561, %v5778
      %v5846 = vadd.f32 %v5562, %v5780
      %v5847 = vadd.f32 %v5563, %v5783
      %v5848 = vadd.f32 %v5564, %v5785
      %v5849 = vadd.f32 %v5565, %v5788
      %v5850 = vadd.f32 %v5566, %v5790
      %v5851 = vadd.f32 %v5567, %v5793
      %v5852 = vadd.f32 %v5568, %v5795
      %v5853 = vadd.f32 %v5569, %v5798
      %v5854 = vadd.f32 %v5570, %v5800
      %v5855 = vadd.f32 %v5571, %v5803
      %v5856 = vadd.f32 %v5572, %v5805
      %v5857 = vadd.f32 %v5573, %v5808
      %v5858 = vadd.f32 %v5574, %v5810
      %v5859 = vadd.f32 %v5575, %v5813
      %v5860 = vadd.f32 %v5576, %v5815
      %v5861 = vadd.f32 %v5577, %v5818
      %v5862 = vld [vmem:[%s2] sm:$0x1]
      %v5864 = vperm.slane %v5862, 0
      %v5866 = vadd.f32 %v5821, %v5864
      %v5867 = vadd.f32 %v5822, %v5864
      %v5868 = vadd.f32 %v5823, %v5864
      %v5869 = vadd.f32 %v5824, %v5864
      %v5870 = vadd.f32 %v5825, %v5864
      %v5871 = vadd.f32 %v5826, %v5864
      %v5872 = vadd.f32 %v5827, %v5864
      %v5873 = vadd.f32 %v5828, %v5864
      %v5874 = vadd.f32 %v5829, %v5864
      %v5875 = vadd.f32 %v5830, %v5864
      %v5876 = vadd.f32 %v5831, %v5864
      %v5877 = vadd.f32 %v5832, %v5864
      %v5878 = vadd.f32 %v5833, %v5864
      %v5879 = vadd.f32 %v5834, %v5864
      %v5880 = vadd.f32 %v5835, %v5864
      %v5881 = vadd.f32 %v5836, %v5864
      %v5882 = vadd.f32 %v5837, %v5864
      %v5883 = vadd.f32 %v5838, %v5864
      %v5884 = vadd.f32 %v5839, %v5864
      %v5885 = vadd.f32 %v5840, %v5864
      %v5886 = vadd.f32 %v5841, %v5864
      %v5887 = vadd.f32 %v5842, %v5864
      %v5888 = vadd.f32 %v5843, %v5864
      %v5889 = vadd.f32 %v5844, %v5864
      %v5890 = vadd.f32 %v5845, %v5864
      %v5891 = vadd.f32 %v5846, %v5864
      %v5892 = vadd.f32 %v5847, %v5864
      %v5893 = vadd.f32 %v5848, %v5864
      %v5894 = vadd.f32 %v5849, %v5864
      %v5895 = vadd.f32 %v5850, %v5864
      %v5896 = vadd.f32 %v5851, %v5864
      %v5897 = vadd.f32 %v5852, %v5864
      %v5898 = vadd.f32 %v5853, %v5864
      %v5899 = vadd.f32 %v5854, %v5864
      %v5900 = vadd.f32 %v5855, %v5864
      %v5901 = vadd.f32 %v5856, %v5864
      %v5902 = vadd.f32 %v5857, %v5864
      %v5903 = vadd.f32 %v5858, %v5864
      %v5904 = vadd.f32 %v5859, %v5864
      %v5905 = vadd.f32 %v5860, %v5864
      %v5906 = vadd.f32 %v5861, %v5864
      %v5907 = vmax.f32 %v5866, 0.0
      %v5908 = vmax.f32 %v5867, 0.0
      %v5909 = vmax.f32 %v5868, 0.0
      %v5910 = vmax.f32 %v5869, 0.0
      %v5911 = vmax.f32 %v5870, 0.0
      %v5912 = vmax.f32 %v5871, 0.0
      %v5913 = vmax.f32 %v5872, 0.0
      %v5914 = vmax.f32 %v5873, 0.0
      %v5915 = vmax.f32 %v5874, 0.0
      %v5916 = vmax.f32 %v5875, 0.0
      %v5917 = vmax.f32 %v5876, 0.0
      %v5918 = vmax.f32 %v5877, 0.0
      %v5919 = vmax.f32 %v5878, 0.0
      %v5920 = vmax.f32 %v5879, 0.0
      %v5921 = vmax.f32 %v5880, 0.0
      %v5922 = vmax.f32 %v5881, 0.0
      %v5923 = vmax.f32 %v5882, 0.0
      %v5924 = vmax.f32 %v5883, 0.0
      %v5925 = vmax.f32 %v5884, 0.0
      %v5926 = vmax.f32 %v5885, 0.0
      %v5927 = vmax.f32 %v5886, 0.0
      %v5928 = vmax.f32 %v5887, 0.0
      %v5929 = vmax.f32 %v5888, 0.0
      %v5930 = vmax.f32 %v5889, 0.0
      %v5931 = vmax.f32 %v5890, 0.0
      %v5932 = vmax.f32 %v5891, 0.0
      %v5933 = vmax.f32 %v5892, 0.0
      %v5934 = vmax.f32 %v5893, 0.0
      %v5935 = vmax.f32 %v5894, 0.0
      %v5936 = vmax.f32 %v5895, 0.0
      %v5937 = vmax.f32 %v5896, 0.0
      %v5938 = vmax.f32 %v5897, 0.0
      %v5939 = vmax.f32 %v5898, 0.0
      %v5940 = vmax.f32 %v5899, 0.0
      %v5941 = vmax.f32 %v5900, 0.0
      %v5942 = vmax.f32 %v5901, 0.0
      %v5943 = vmax.f32 %v5902, 0.0
      %v5944 = vmax.f32 %v5903, 0.0
      %v5945 = vmax.f32 %v5904, 0.0
      %v5946 = vmax.f32 %v5905, 0.0
      %v5947 = vmax.f32 %v5906, 0.0
      %v5948 = vsel %vm3247, 1, 0
      %v5949 = vsel %vm3248, 1, 0
      %v5950 = vsel %vm3249, 1, 0
      %v5951 = vsel %vm3250, 1, 0
      %v5952 = vsel %vm3251, 1, 0
      %v5953 = vsel %vm3252, 1, 0
      %v5954 = vsel %vm3253, 1, 0
      %v5955 = vsel %vm3254, 1, 0
      %v5956 = vsel %vm3255, 1, 0
      %v5957 = vsel %vm3256, 1, 0
      %v5958 = vsel %vm3257, 1, 0
      %v5959 = vsel %vm3258, 1, 0
      %v5960 = vsel %vm3259, 1, 0
      %v5961 = vsel %vm3260, 1, 0
      %v5962 = vsel %vm3261, 1, 0
      %v5963 = vsel %vm3262, 1, 0
      %v5964 = vsel %vm3263, 1, 0
      %v5965 = vsel %vm3264, 1, 0
      %v5966 = vsel %vm3265, 1, 0
      %v5967 = vsel %vm3266, 1, 0
      %v5968 = vsel %vm3267, 1, 0
      %v5969 = vsel %vm3268, 1, 0
      %v5970 = vsel %vm3269, 1, 0
      %v5971 = vsel %vm3270, 1, 0
      %v5972 = vsel %vm3271, 1, 0
      %v5973 = vsel %vm3272, 1, 0
      %v5974 = vsel %vm3273, 1, 0
      %v5975 = vsel %vm3274, 1, 0
      %v5976 = vsel %vm3275, 1, 0
      %v5977 = vsel %vm3276, 1, 0
      %v5978 = vsel %vm3277, 1, 0
      %v5979 = vsel %vm3278, 1, 0
      %v5980 = vsel %vm3279, 1, 0
      %v5981 = vsel %vm3280, 1, 0
      %v5982 = vsel %vm3281, 1, 0
      %v5983 = vsel %vm3282, 1, 0
      %v5984 = vsel %vm3283, 1, 0
      %v5985 = vsel %vm3284, 1, 0
      %v5986 = vsel %vm3285, 1, 0
      %v5987 = vsel %vm3286, 1, 0
      %v5988 = vsel %vm3287, 1, 0
      %vm5989 = vcmp.eq.s32.totalorder %v5948, 1
      %vm5990 = vcmp.eq.s32.totalorder %v5949, 1
      %vm5991 = vcmp.eq.s32.totalorder %v5950, 1
      %vm5992 = vcmp.eq.s32.totalorder %v5951, 1
      %vm5993 = vcmp.eq.s32.totalorder %v5952, 1
      %vm5994 = vcmp.eq.s32.totalorder %v5953, 1
      %vm5995 = vcmp.eq.s32.totalorder %v5954, 1
      %vm5996 = vcmp.eq.s32.totalorder %v5955, 1
      %vm5997 = vcmp.eq.s32.totalorder %v5956, 1
      %vm5998 = vcmp.eq.s32.totalorder %v5957, 1
      %vm5999 = vcmp.eq.s32.totalorder %v5958, 1
      %vm6000 = vcmp.eq.s32.totalorder %v5959, 1
      %vm6001 = vcmp.eq.s32.totalorder %v5960, 1
      %vm6002 = vcmp.eq.s32.totalorder %v5961, 1
      %vm6003 = vcmp.eq.s32.totalorder %v5962, 1
      %vm6004 = vcmp.eq.s32.totalorder %v5963, 1
      %vm6005 = vcmp.eq.s32.totalorder %v5964, 1
      %vm6006 = vcmp.eq.s32.totalorder %v5965, 1
      %vm6007 = vcmp.eq.s32.totalorder %v5966, 1
      %vm6008 = vcmp.eq.s32.totalorder %v5967, 1
      %vm6009 = vcmp.eq.s32.totalorder %v5968, 1
      %vm6010 = vcmp.eq.s32.totalorder %v5969, 1
      %vm6011 = vcmp.eq.s32.totalorder %v5970, 1
      %vm6012 = vcmp.eq.s32.totalorder %v5971, 1
      %vm6013 = vcmp.eq.s32.totalorder %v5972, 1
      %vm6014 = vcmp.eq.s32.totalorder %v5973, 1
      %vm6015 = vcmp.eq.s32.totalorder %v5974, 1
      %vm6016 = vcmp.eq.s32.totalorder %v5975, 1
      %vm6017 = vcmp.eq.s32.totalorder %v5976, 1
      %vm6018 = vcmp.eq.s32.totalorder %v5977, 1
      %vm6019 = vcmp.eq.s32.totalorder %v5978, 1
      %vm6020 = vcmp.eq.s32.totalorder %v5979, 1
      %vm6021 = vcmp.eq.s32.totalorder %v5980, 1
      %vm6022 = vcmp.eq.s32.totalorder %v5981, 1
      %vm6023 = vcmp.eq.s32.totalorder %v5982, 1
      %vm6024 = vcmp.eq.s32.totalorder %v5983, 1
      %vm6025 = vcmp.eq.s32.totalorder %v5984, 1
      %vm6026 = vcmp.eq.s32.totalorder %v5985, 1
      %vm6027 = vcmp.eq.s32.totalorder %v5986, 1
      %vm6028 = vcmp.eq.s32.totalorder %v5987, 1
      %vm6029 = vcmp.eq.s32.totalorder %v5988, 1
      %v6030 = vsel %vm5989, %v5907, 0.0
      %v6031 = vsel %vm5990, %v5908, 0.0
      %v6032 = vsel %vm5991, %v5909, 0.0
      %v6033 = vsel %vm5992, %v5910, 0.0
      %v6034 = vsel %vm5993, %v5911, 0.0
      %v6035 = vsel %vm5994, %v5912, 0.0
      %v6036 = vsel %vm5995, %v5913, 0.0
      %v6037 = vsel %vm5996, %v5914, 0.0
      %v6038 = vsel %vm5997, %v5915, 0.0
      %v6039 = vsel %vm5998, %v5916, 0.0
      %v6040 = vsel %vm5999, %v5917, 0.0
      %v6041 = vsel %vm6000, %v5918, 0.0
      %v6042 = vsel %vm6001, %v5919, 0.0
      %v6043 = vsel %vm6002, %v5920, 0.0
      %v6044 = vsel %vm6003, %v5921, 0.0
      %v6045 = vsel %vm6004, %v5922, 0.0
      %v6046 = vsel %vm6005, %v5923, 0.0
      %v6047 = vsel %vm6006, %v5924, 0.0
      %v6048 = vsel %vm6007, %v5925, 0.0
      %v6049 = vsel %vm6008, %v5926, 0.0
      %v6050 = vsel %vm6009, %v5927, 0.0
      %v6051 = vsel %vm6010, %v5928, 0.0
      %v6052 = vsel %vm6011, %v5929, 0.0
      %v6053 = vsel %vm6012, %v5930, 0.0
      %v6054 = vsel %vm6013, %v5931, 0.0
      %v6055 = vsel %vm6014, %v5932, 0.0
      %v6056 = vsel %vm6015, %v5933, 0.0
      %v6057 = vsel %vm6016, %v5934, 0.0
      %v6058 = vsel %vm6017, %v5935, 0.0
      %v6059 = vsel %vm6018, %v5936, 0.0
      %v6060 = vsel %vm6019, %v5937, 0.0
      %v6061 = vsel %vm6020, %v5938, 0.0
      %v6062 = vsel %vm6021, %v5939, 0.0
      %v6063 = vsel %vm6022, %v5940, 0.0
      %v6064 = vsel %vm6023, %v5941, 0.0
      %v6065 = vsel %vm6024, %v5942, 0.0
      %v6066 = vsel %vm6025, %v5943, 0.0
      %v6067 = vsel %vm6026, %v5944, 0.0
      %v6068 = vsel %vm6027, %v5945, 0.0
      %v6069 = vsel %vm6028, %v5946, 0.0
      %v6070 = vsel %vm6029, %v5947, 0.0
      %vm6071 = vcmask 261120
      %6072 = vst.msk [vmem:[#allocation3 + $0x18] sm:$0xff] %vm6071, %v6030
      %6073 = vst.msk [vmem:[#allocation3 + $0x20] sm:$0xff] %vm6071, %v6031
      %6074 = vst.msk [vmem:[#allocation3 + $0x28] sm:$0xff] %vm6071, %v6032
      %6075 = vst.msk [vmem:[#allocation3 + $0x30] sm:$0xff] %vm6071, %v6033
      %6076 = vst.msk [vmem:[#allocation3 + $0x38] sm:$0xff] %vm6071, %v6034
      %6077 = vst.msk [vmem:[#allocation3 + $0x40] sm:$0xff] %vm6071, %v6035
      %6078 = vst.msk [vmem:[#allocation3 + $0x48] sm:$0xff] %vm6071, %v6036
      %6079 = vst.msk [vmem:[#allocation3 + $0x50] sm:$0xff] %vm6071, %v6037
      %6080 = vst.msk [vmem:[#allocation3 + $0x58] sm:$0xff] %vm6071, %v6038
      %6081 = vst.msk [vmem:[#allocation3 + $0x60] sm:$0xff] %vm6071, %v6039
      %6082 = vst.msk [vmem:[#allocation3 + $0x68] sm:$0xff] %vm6071, %v6040
      %6083 = vst.msk [vmem:[#allocation3 + $0x70] sm:$0xff] %vm6071, %v6041
      %6084 = vst.msk [vmem:[#allocation3 + $0x78] sm:$0xff] %vm6071, %v6042
      %6085 = vst.msk [vmem:[#allocation3 + $0x80] sm:$0xff] %vm6071, %v6043
      %6086 = vst.msk [vmem:[#allocation3 + $0x88] sm:$0xff] %vm6071, %v6044
      %6087 = vst.msk [vmem:[#allocation3 + $0x90] sm:$0xff] %vm6071, %v6045
      %6088 = vst.msk [vmem:[#allocation3 + $0x98] sm:$0xff] %vm6071, %v6046
      %6089 = vst.msk [vmem:[#allocation3 + $0xa0] sm:$0xff] %vm6071, %v6047
      %6090 = vst.msk [vmem:[#allocation3 + $0xa8] sm:$0xff] %vm6071, %v6048
      %6091 = vst.msk [vmem:[#allocation3 + $0xb0] sm:$0xff] %vm6071, %v6049
      %6092 = vst.msk [vmem:[#allocation3 + $0xb8] sm:$0xff] %vm6071, %v6050
      %6093 = vst.msk [vmem:[#allocation3 + $0xc0] sm:$0xff] %vm6071, %v6051
      %6094 = vst.msk [vmem:[#allocation3 + $0xc8] sm:$0xff] %vm6071, %v6052
      %6095 = vst.msk [vmem:[#allocation3 + $0xd0] sm:$0xff] %vm6071, %v6053
      %6096 = vst.msk [vmem:[#allocation3 + $0xd8] sm:$0xff] %vm6071, %v6054
      %6097 = vst.msk [vmem:[#allocation3 + $0xe0] sm:$0xff] %vm6071, %v6055
      %6098 = vst.msk [vmem:[#allocation3 + $0xe8] sm:$0xff] %vm6071, %v6056
      %6099 = vst.msk [vmem:[#allocation3 + $0xf0] sm:$0xff] %vm6071, %v6057
      %6100 = vst.msk [vmem:[#allocation3 + $0xf8] sm:$0xff] %vm6071, %v6058
      %6101 = vst.msk [vmem:[#allocation3 + $0x100] sm:$0xff] %vm6071, %v6059
      %6102 = vst.msk [vmem:[#allocation3 + $0x108] sm:$0xff] %vm6071, %v6060
      %6103 = vst.msk [vmem:[#allocation3 + $0x110] sm:$0xff] %vm6071, %v6061
      %6104 = vst.msk [vmem:[#allocation3 + $0x118] sm:$0xff] %vm6071, %v6062
      %6105 = vst.msk [vmem:[#allocation3 + $0x120] sm:$0xff] %vm6071, %v6063
      %6106 = vst.msk [vmem:[#allocation3 + $0x128] sm:$0xff] %vm6071, %v6064
      %6107 = vst.msk [vmem:[#allocation3 + $0x130] sm:$0xff] %vm6071, %v6065
      %6108 = vst.msk [vmem:[#allocation3 + $0x138] sm:$0xff] %vm6071, %v6066
      %6109 = vst.msk [vmem:[#allocation3 + $0x140] sm:$0xff] %vm6071, %v6067
      %6110 = vst.msk [vmem:[#allocation3 + $0x148] sm:$0xff] %vm6071, %v6068
      %6111 = vst.msk [vmem:[#allocation3 + $0x150] sm:$0xff] %vm6071, %v6069
      %6112 = vst.msk [vmem:[#allocation3 + $0x158] sm:$0xff] %vm6071, %v6070
      %v6113 = vld [vmem:[#allocation3 + $0x5] sm:$0xff]
      %v6114 = vld [vmem:[#allocation3 + $0xd] sm:$0xff]
      %v6115 = vld [vmem:[#allocation3 + $0x15] sm:$0xff]
      %v6116 = vld [vmem:[#allocation3 + $0x1d] sm:$0xff]
      %v6117 = vld [vmem:[#allocation3 + $0x25] sm:$0xff]
      %v6118 = vld [vmem:[#allocation3 + $0x2d] sm:$0xff]
      %v6119 = vld [vmem:[#allocation3 + $0x35] sm:$0xff]
      %v6120 = vld [vmem:[#allocation3 + $0x3d] sm:$0xff]
      %v6121 = vld [vmem:[#allocation3 + $0x45] sm:$0xff]
      %v6122 = vld [vmem:[#allocation3 + $0x4d] sm:$0xff]
      %v6123 = vld [vmem:[#allocation3 + $0x55] sm:$0xff]
      %v6124 = vld [vmem:[#allocation3 + $0x5d] sm:$0xff]
      %v6125 = vld [vmem:[#allocation3 + $0x65] sm:$0xff]
      %v6126 = vld [vmem:[#allocation3 + $0x6d] sm:$0xff]
      %v6127 = vld [vmem:[#allocation3 + $0x75] sm:$0xff]
      %v6128 = vld [vmem:[#allocation3 + $0x7d] sm:$0xff]
      %v6129 = vld [vmem:[#allocation3 + $0x85] sm:$0xff]
      %v6130 = vld [vmem:[#allocation3 + $0x8d] sm:$0xff]
      %v6131 = vld [vmem:[#allocation3 + $0x95] sm:$0xff]
      %v6132 = vld [vmem:[#allocation3 + $0x9d] sm:$0xff]
      %v6133 = vld [vmem:[#allocation3 + $0xa5] sm:$0xff]
      %v6134 = vld [vmem:[#allocation3 + $0xad] sm:$0xff]
      %v6135 = vld [vmem:[#allocation3 + $0xb5] sm:$0xff]
      %v6136 = vld [vmem:[#allocation3 + $0xbd] sm:$0xff]
      %v6137 = vld [vmem:[#allocation3 + $0xc5] sm:$0xff]
      %v6138 = vld [vmem:[#allocation3 + $0xcd] sm:$0xff]
      %v6139 = vld [vmem:[#allocation3 + $0xd5] sm:$0xff]
      %v6140 = vld [vmem:[#allocation3 + $0xdd] sm:$0xff]
      %v6141 = vld [vmem:[#allocation3 + $0xe5] sm:$0xff]
      %v6142 = vld [vmem:[#allocation3 + $0xed] sm:$0xff]
      %v6143 = vld [vmem:[#allocation3 + $0xf5] sm:$0xff]
      %v6144 = vld [vmem:[#allocation3 + $0xfd] sm:$0xff]
      %v6145 = vld [vmem:[#allocation3 + $0x105] sm:$0xff]
      %v6146 = vld [vmem:[#allocation3 + $0x10d] sm:$0xff]
      %v6147 = vld [vmem:[#allocation3 + $0x115] sm:$0xff]
      %v6148 = vld [vmem:[#allocation3 + $0x11d] sm:$0xff]
      %v6149 = vld [vmem:[#allocation3 + $0x125] sm:$0xff]
      %v6150 = vld [vmem:[#allocation3 + $0x12d] sm:$0xff]
      %v6151 = vld [vmem:[#allocation3 + $0x135] sm:$0xff]
      %v6152 = vld [vmem:[#allocation3 + $0x13d] sm:$0xff]
      %v6153 = vld [vmem:[#allocation3 + $0x145] sm:$0xff]
      %v6154 = vpack.c.bf16 %v6114, %v6113
      %v6155 = vpack.c.bf16 %v6116, %v6115
      %v6156 = vpack.c.bf16 %v6118, %v6117
      %v6157 = vpack.c.bf16 %v6120, %v6119
      %v6158 = vpack.c.bf16 %v6122, %v6121
      %v6159 = vpack.c.bf16 %v6124, %v6123
      %v6160 = vpack.c.bf16 %v6126, %v6125
      %v6161 = vpack.c.bf16 %v6128, %v6127
      %v6162 = vpack.c.bf16 %v6130, %v6129
      %v6163 = vpack.c.bf16 %v6132, %v6131
      %v6164 = vpack.c.bf16 %v6134, %v6133
      %v6165 = vpack.c.bf16 %v6136, %v6135
      %v6166 = vpack.c.bf16 %v6138, %v6137
      %v6167 = vpack.c.bf16 %v6140, %v6139
      %v6168 = vpack.c.bf16 %v6142, %v6141
      %v6169 = vpack.c.bf16 %v6144, %v6143
      %v6170 = vpack.c.bf16 %v6146, %v6145
      %v6171 = vpack.c.bf16 %v6148, %v6147
      %v6172 = vpack.c.bf16 %v6150, %v6149
      %v6173 = vpack.c.bf16 %v6152, %v6151
      %v6174 = vpack.c.bf16 %v6153, %v6153
      %v6175 = vld [vmem:[%s3] sm:$0xf]
      %v6176 = vld [vmem:[%s3 + $0x4] sm:$0xf]
      %v6177 = vld [vmem:[%s3 + $0x8] sm:$0xf]
      %v6178 = vld [vmem:[%s3 + $0xc] sm:$0xf]
      %v6179 = vld [vmem:[#allocation3 + $0x6] sm:$0xff]
      %v6180 = vld [vmem:[#allocation3 + $0xe] sm:$0xff]
      %v6181 = vld [vmem:[#allocation3 + $0x16] sm:$0xff]
      %v6182 = vld [vmem:[#allocation3 + $0x1e] sm:$0xff]
      %v6183 = vld [vmem:[#allocation3 + $0x26] sm:$0xff]
      %v6184 = vld [vmem:[#allocation3 + $0x2e] sm:$0xff]
      %v6185 = vld [vmem:[#allocation3 + $0x36] sm:$0xff]
      %v6186 = vld [vmem:[#allocation3 + $0x3e] sm:$0xff]
      %v6187 = vld [vmem:[#allocation3 + $0x46] sm:$0xff]
      %v6188 = vld [vmem:[#allocation3 + $0x4e] sm:$0xff]
      %v6189 = vld [vmem:[#allocation3 + $0x56] sm:$0xff]
      %v6190 = vld [vmem:[#allocation3 + $0x5e] sm:$0xff]
      %v6191 = vld [vmem:[#allocation3 + $0x66] sm:$0xff]
      %v6192 = vld [vmem:[#allocation3 + $0x6e] sm:$0xff]
      %v6193 = vld [vmem:[#allocation3 + $0x76] sm:$0xff]
      %v6194 = vld [vmem:[#allocation3 + $0x7e] sm:$0xff]
      %v6195 = vld [vmem:[#allocation3 + $0x86] sm:$0xff]
      %v6196 = vld [vmem:[#allocation3 + $0x8e] sm:$0xff]
      %v6197 = vld [vmem:[#allocation3 + $0x96] sm:$0xff]
      %v6198 = vld [vmem:[#allocation3 + $0x9e] sm:$0xff]
      %v6199 = vld [vmem:[#allocation3 + $0xa6] sm:$0xff]
      %v6200 = vld [vmem:[#allocation3 + $0xae] sm:$0xff]
      %v6201 = vld [vmem:[#allocation3 + $0xb6] sm:$0xff]
      %v6202 = vld [vmem:[#allocation3 + $0xbe] sm:$0xff]
      %v6203 = vld [vmem:[#allocation3 + $0xc6] sm:$0xff]
      %v6204 = vld [vmem:[#allocation3 + $0xce] sm:$0xff]
      %v6205 = vld [vmem:[#allocation3 + $0xd6] sm:$0xff]
      %v6206 = vld [vmem:[#allocation3 + $0xde] sm:$0xff]
      %v6207 = vld [vmem:[#allocation3 + $0xe6] sm:$0xff]
      %v6208 = vld [vmem:[#allocation3 + $0xee] sm:$0xff]
      %v6209 = vld [vmem:[#allocation3 + $0xf6] sm:$0xff]
      %v6210 = vld [vmem:[#allocation3 + $0xfe] sm:$0xff]
      %v6211 = vld [vmem:[#allocation3 + $0x106] sm:$0xff]
      %v6212 = vld [vmem:[#allocation3 + $0x10e] sm:$0xff]
      %v6213 = vld [vmem:[#allocation3 + $0x116] sm:$0xff]
      %v6214 = vld [vmem:[#allocation3 + $0x11e] sm:$0xff]
      %v6215 = vld [vmem:[#allocation3 + $0x126] sm:$0xff]
      %v6216 = vld [vmem:[#allocation3 + $0x12e] sm:$0xff]
      %v6217 = vld [vmem:[#allocation3 + $0x136] sm:$0xff]
      %v6218 = vld [vmem:[#allocation3 + $0x13e] sm:$0xff]
      %v6219 = vld [vmem:[#allocation3 + $0x146] sm:$0xff]
      %v6220 = vpack.c.bf16 %v6180, %v6179
      %v6221 = vpack.c.bf16 %v6182, %v6181
      %v6222 = vpack.c.bf16 %v6184, %v6183
      %v6223 = vpack.c.bf16 %v6186, %v6185
      %v6224 = vpack.c.bf16 %v6188, %v6187
      %v6225 = vpack.c.bf16 %v6190, %v6189
      %v6226 = vpack.c.bf16 %v6192, %v6191
      %v6227 = vpack.c.bf16 %v6194, %v6193
      %v6228 = vpack.c.bf16 %v6196, %v6195
      %v6229 = vpack.c.bf16 %v6198, %v6197
      %v6230 = vpack.c.bf16 %v6200, %v6199
      %v6231 = vpack.c.bf16 %v6202, %v6201
      %v6232 = vpack.c.bf16 %v6204, %v6203
      %v6233 = vpack.c.bf16 %v6206, %v6205
      %v6234 = vpack.c.bf16 %v6208, %v6207
      %v6235 = vpack.c.bf16 %v6210, %v6209
      %v6236 = vpack.c.bf16 %v6212, %v6211
      %v6237 = vpack.c.bf16 %v6214, %v6213
      %v6238 = vpack.c.bf16 %v6216, %v6215
      %v6239 = vpack.c.bf16 %v6218, %v6217
      %v6240 = vpack.c.bf16 %v6219, %v6219
      %s6241 = scalar_lea.vmem %s3, 16
      %v6242 = vld [vmem:[%s6241] sm:$0xf]
      %v6243 = vld [vmem:[%s6241 + $0x4] sm:$0xf]
      %v6244 = vld [vmem:[%s6241 + $0x8] sm:$0xf]
      %v6245 = vld [vmem:[%s6241 + $0xc] sm:$0xf]
      %v6250 = vunpack.c.l.b16 %v6242
      %v6251 = vunpack.c.l.b16 %v6243
      %v6252 = vunpack.c.l.b16 %v6244
      %v6253 = vunpack.c.l.b16 %v6245
      %v6254 = vpack.c.b16 %v6251, %v6250
      %v6255 = vpack.c.b16 %v6253, %v6252
      %v6259 = vsel %vm6071, %v6220, 0
      %v6262 = vsel %vm6071, %v6221, 0
      %v6265 = vsel %vm6071, %v6222, 0
      %v6268 = vsel %vm6071, %v6223, 0
      %v6271 = vsel %vm6071, %v6224, 0
      %v6274 = vsel %vm6071, %v6225, 0
      %v6277 = vsel %vm6071, %v6226, 0
      %v6280 = vsel %vm6071, %v6227, 0
      %v6283 = vsel %vm6071, %v6228, 0
      %v6286 = vsel %vm6071, %v6229, 0
      %v6289 = vsel %vm6071, %v6230, 0
      %v6292 = vsel %vm6071, %v6231, 0
      %v6295 = vsel %vm6071, %v6232, 0
      %v6298 = vsel %vm6071, %v6233, 0
      %v6301 = vsel %vm6071, %v6234, 0
      %v6304 = vsel %vm6071, %v6235, 0
      %v6307 = vsel %vm6071, %v6236, 0
      %v6310 = vsel %vm6071, %v6237, 0
      %v6313 = vsel %vm6071, %v6238, 0
      %v6316 = vsel %vm6071, %v6239, 0
      %v6319 = vsel %vm6071, %v6240, 0
      %6321 = vmatpush.bf16.msra.mxu0 0
      %6322 = vmatpush.bf16.msra.mxu0 0
      %6323 = vmatpush.bf16.msra.mxu0 0
      %6324 = vmatpush.bf16.msra.mxu0 0
      %6325 = vmatpush.bf16.msra.mxu0 0
      %6326 = vmatpush.bf16.msra.mxu0 0
      %6327 = vmatpush.bf16.msra.mxu0 %v6255
      %6328 = vmatpush.bf16.msra.mxu0 %v6254
      %6329 = vmatmul.bf16.gmra.mxu0 %v6259
      %v6330 = vpop.f32.mrf.mxu0
      %v6331 = vadd.f32 0.0, %v6330
      %v6332 = vpop.f32.mrf.mxu0
      %v6333 = vadd.f32 0.0, %v6332
      %6334 = vmatmul.bf16.gmra.mxu0 %v6262
      %v6335 = vpop.f32.mrf.mxu0
      %v6336 = vadd.f32 0.0, %v6335
      %v6337 = vpop.f32.mrf.mxu0
      %v6338 = vadd.f32 0.0, %v6337
      %6339 = vmatmul.bf16.gmra.mxu0 %v6265
      %v6340 = vpop.f32.mrf.mxu0
      %v6341 = vadd.f32 0.0, %v6340
      %v6342 = vpop.f32.mrf.mxu0
      %v6343 = vadd.f32 0.0, %v6342
      %6344 = vmatmul.bf16.gmra.mxu0 %v6268
      %v6345 = vpop.f32.mrf.mxu0
      %v6346 = vadd.f32 0.0, %v6345
      %v6347 = vpop.f32.mrf.mxu0
      %v6348 = vadd.f32 0.0, %v6347
      %6349 = vmatmul.bf16.gmra.mxu0 %v6271
      %v6350 = vpop.f32.mrf.mxu0
      %v6351 = vadd.f32 0.0, %v6350
      %v6352 = vpop.f32.mrf.mxu0
      %v6353 = vadd.f32 0.0, %v6352
      %6354 = vmatmul.bf16.gmra.mxu0 %v6274
      %v6355 = vpop.f32.mrf.mxu0
      %v6356 = vadd.f32 0.0, %v6355
      %v6357 = vpop.f32.mrf.mxu0
      %v6358 = vadd.f32 0.0, %v6357
      %6359 = vmatmul.bf16.gmra.mxu0 %v6277
      %v6360 = vpop.f32.mrf.mxu0
      %v6361 = vadd.f32 0.0, %v6360
      %v6362 = vpop.f32.mrf.mxu0
      %v6363 = vadd.f32 0.0, %v6362
      %6364 = vmatmul.bf16.gmra.mxu0 %v6280
      %v6365 = vpop.f32.mrf.mxu0
      %v6366 = vadd.f32 0.0, %v6365
      %v6367 = vpop.f32.mrf.mxu0
      %v6368 = vadd.f32 0.0, %v6367
      %6369 = vmatmul.bf16.gmra.mxu0 %v6283
      %v6370 = vpop.f32.mrf.mxu0
      %v6371 = vadd.f32 0.0, %v6370
      %v6372 = vpop.f32.mrf.mxu0
      %v6373 = vadd.f32 0.0, %v6372
      %6374 = vmatmul.bf16.gmra.mxu0 %v6286
      %v6375 = vpop.f32.mrf.mxu0
      %v6376 = vadd.f32 0.0, %v6375
      %v6377 = vpop.f32.mrf.mxu0
      %v6378 = vadd.f32 0.0, %v6377
      %6379 = vmatmul.bf16.gmra.mxu0 %v6289
      %v6380 = vpop.f32.mrf.mxu0
      %v6381 = vadd.f32 0.0, %v6380
      %v6382 = vpop.f32.mrf.mxu0
      %v6383 = vadd.f32 0.0, %v6382
      %6384 = vmatmul.bf16.gmra.mxu0 %v6292
      %v6385 = vpop.f32.mrf.mxu0
      %v6386 = vadd.f32 0.0, %v6385
      %v6387 = vpop.f32.mrf.mxu0
      %v6388 = vadd.f32 0.0, %v6387
      %6389 = vmatmul.bf16.gmra.mxu0 %v6295
      %v6390 = vpop.f32.mrf.mxu0
      %v6391 = vadd.f32 0.0, %v6390
      %v6392 = vpop.f32.mrf.mxu0
      %v6393 = vadd.f32 0.0, %v6392
      %6394 = vmatmul.bf16.gmra.mxu0 %v6298
      %v6395 = vpop.f32.mrf.mxu0
      %v6396 = vadd.f32 0.0, %v6395
      %v6397 = vpop.f32.mrf.mxu0
      %v6398 = vadd.f32 0.0, %v6397
      %6399 = vmatmul.bf16.gmra.mxu0 %v6301
      %v6400 = vpop.f32.mrf.mxu0
      %v6401 = vadd.f32 0.0, %v6400
      %v6402 = vpop.f32.mrf.mxu0
      %v6403 = vadd.f32 0.0, %v6402
      %6404 = vmatmul.bf16.gmra.mxu0 %v6304
      %v6405 = vpop.f32.mrf.mxu0
      %v6406 = vadd.f32 0.0, %v6405
      %v6407 = vpop.f32.mrf.mxu0
      %v6408 = vadd.f32 0.0, %v6407
      %6409 = vmatmul.bf16.gmra.mxu0 %v6307
      %v6410 = vpop.f32.mrf.mxu0
      %v6411 = vadd.f32 0.0, %v6410
      %v6412 = vpop.f32.mrf.mxu0
      %v6413 = vadd.f32 0.0, %v6412
      %6414 = vmatmul.bf16.gmra.mxu0 %v6310
      %v6415 = vpop.f32.mrf.mxu0
      %v6416 = vadd.f32 0.0, %v6415
      %v6417 = vpop.f32.mrf.mxu0
      %v6418 = vadd.f32 0.0, %v6417
      %6419 = vmatmul.bf16.gmra.mxu0 %v6313
      %v6420 = vpop.f32.mrf.mxu0
      %v6421 = vadd.f32 0.0, %v6420
      %v6422 = vpop.f32.mrf.mxu0
      %v6423 = vadd.f32 0.0, %v6422
      %6424 = vmatmul.bf16.gmra.mxu0 %v6316
      %v6425 = vpop.f32.mrf.mxu0
      %v6426 = vadd.f32 0.0, %v6425
      %v6427 = vpop.f32.mrf.mxu0
      %v6428 = vadd.f32 0.0, %v6427
      %6429 = vmatmul.bf16.gmra.mxu0 %v6319
      %v6430 = vpop.f32.mrf.mxu0
      %v6431 = vadd.f32 0.0, %v6430
      %v6432 = vpop.f32.mrf.mxu0
      %6433 = vdwg.mxu0
      %v6438 = vunpack.c.l.b16 %v6175
      %v6439 = vunpack.c.l.b16 %v6176
      %v6440 = vunpack.c.l.b16 %v6177
      %v6441 = vunpack.c.l.b16 %v6178
      %v6442 = vpack.c.b16 %v6439, %v6438
      %v6443 = vpack.c.b16 %v6441, %v6440
      %v6447 = vsel %vm6071, %v6154, 0
      %v6450 = vsel %vm6071, %v6155, 0
      %v6453 = vsel %vm6071, %v6156, 0
      %v6456 = vsel %vm6071, %v6157, 0
      %v6459 = vsel %vm6071, %v6158, 0
      %v6462 = vsel %vm6071, %v6159, 0
      %v6465 = vsel %vm6071, %v6160, 0
      %v6468 = vsel %vm6071, %v6161, 0
      %v6471 = vsel %vm6071, %v6162, 0
      %v6474 = vsel %vm6071, %v6163, 0
      %v6477 = vsel %vm6071, %v6164, 0
      %v6480 = vsel %vm6071, %v6165, 0
      %v6483 = vsel %vm6071, %v6166, 0
      %v6486 = vsel %vm6071, %v6167, 0
      %v6489 = vsel %vm6071, %v6168, 0
      %v6492 = vsel %vm6071, %v6169, 0
      %v6495 = vsel %vm6071, %v6170, 0
      %v6498 = vsel %vm6071, %v6171, 0
      %v6501 = vsel %vm6071, %v6172, 0
      %v6504 = vsel %vm6071, %v6173, 0
      %v6507 = vsel %vm6071, %v6174, 0
      %6509 = vmatpush.bf16.msra.mxu0 0
      %6510 = vmatpush.bf16.msra.mxu0 0
      %6511 = vmatpush.bf16.msra.mxu0 0
      %6512 = vmatpush.bf16.msra.mxu0 0
      %6513 = vmatpush.bf16.msra.mxu0 0
      %6514 = vmatpush.bf16.msra.mxu0 0
      %6515 = vmatpush.bf16.msra.mxu0 %v6443
      %6516 = vmatpush.bf16.msra.mxu0 %v6442
      %6517 = vmatmul.bf16.gmra.mxu0 %v6447
      %v6518 = vpop.f32.mrf.mxu0
      %v6519 = vadd.f32 %v6331, %v6518
      %v6520 = vpop.f32.mrf.mxu0
      %v6521 = vadd.f32 %v6333, %v6520
      %6522 = vmatmul.bf16.gmra.mxu0 %v6450
      %v6523 = vpop.f32.mrf.mxu0
      %v6524 = vadd.f32 %v6336, %v6523
      %v6525 = vpop.f32.mrf.mxu0
      %v6526 = vadd.f32 %v6338, %v6525
      %6527 = vmatmul.bf16.gmra.mxu0 %v6453
      %v6528 = vpop.f32.mrf.mxu0
      %v6529 = vadd.f32 %v6341, %v6528
      %v6530 = vpop.f32.mrf.mxu0
      %v6531 = vadd.f32 %v6343, %v6530
      %6532 = vmatmul.bf16.gmra.mxu0 %v6456
      %v6533 = vpop.f32.mrf.mxu0
      %v6534 = vadd.f32 %v6346, %v6533
      %v6535 = vpop.f32.mrf.mxu0
      %v6536 = vadd.f32 %v6348, %v6535
      %6537 = vmatmul.bf16.gmra.mxu0 %v6459
      %v6538 = vpop.f32.mrf.mxu0
      %v6539 = vadd.f32 %v6351, %v6538
      %v6540 = vpop.f32.mrf.mxu0
      %v6541 = vadd.f32 %v6353, %v6540
      %6542 = vmatmul.bf16.gmra.mxu0 %v6462
      %v6543 = vpop.f32.mrf.mxu0
      %v6544 = vadd.f32 %v6356, %v6543
      %v6545 = vpop.f32.mrf.mxu0
      %v6546 = vadd.f32 %v6358, %v6545
      %6547 = vmatmul.bf16.gmra.mxu0 %v6465
      %v6548 = vpop.f32.mrf.mxu0
      %v6549 = vadd.f32 %v6361, %v6548
      %v6550 = vpop.f32.mrf.mxu0
      %v6551 = vadd.f32 %v6363, %v6550
      %6552 = vmatmul.bf16.gmra.mxu0 %v6468
      %v6553 = vpop.f32.mrf.mxu0
      %v6554 = vadd.f32 %v6366, %v6553
      %v6555 = vpop.f32.mrf.mxu0
      %v6556 = vadd.f32 %v6368, %v6555
      %6557 = vmatmul.bf16.gmra.mxu0 %v6471
      %v6558 = vpop.f32.mrf.mxu0
      %v6559 = vadd.f32 %v6371, %v6558
      %v6560 = vpop.f32.mrf.mxu0
      %v6561 = vadd.f32 %v6373, %v6560
      %6562 = vmatmul.bf16.gmra.mxu0 %v6474
      %v6563 = vpop.f32.mrf.mxu0
      %v6564 = vadd.f32 %v6376, %v6563
      %v6565 = vpop.f32.mrf.mxu0
      %v6566 = vadd.f32 %v6378, %v6565
      %6567 = vmatmul.bf16.gmra.mxu0 %v6477
      %v6568 = vpop.f32.mrf.mxu0
      %v6569 = vadd.f32 %v6381, %v6568
      %v6570 = vpop.f32.mrf.mxu0
      %v6571 = vadd.f32 %v6383, %v6570
      %6572 = vmatmul.bf16.gmra.mxu0 %v6480
      %v6573 = vpop.f32.mrf.mxu0
      %v6574 = vadd.f32 %v6386, %v6573
      %v6575 = vpop.f32.mrf.mxu0
      %v6576 = vadd.f32 %v6388, %v6575
      %6577 = vmatmul.bf16.gmra.mxu0 %v6483
      %v6578 = vpop.f32.mrf.mxu0
      %v6579 = vadd.f32 %v6391, %v6578
      %v6580 = vpop.f32.mrf.mxu0
      %v6581 = vadd.f32 %v6393, %v6580
      %6582 = vmatmul.bf16.gmra.mxu0 %v6486
      %v6583 = vpop.f32.mrf.mxu0
      %v6584 = vadd.f32 %v6396, %v6583
      %v6585 = vpop.f32.mrf.mxu0
      %v6586 = vadd.f32 %v6398, %v6585
      %6587 = vmatmul.bf16.gmra.mxu0 %v6489
      %v6588 = vpop.f32.mrf.mxu0
      %v6589 = vadd.f32 %v6401, %v6588
      %v6590 = vpop.f32.mrf.mxu0
      %v6591 = vadd.f32 %v6403, %v6590
      %6592 = vmatmul.bf16.gmra.mxu0 %v6492
      %v6593 = vpop.f32.mrf.mxu0
      %v6594 = vadd.f32 %v6406, %v6593
      %v6595 = vpop.f32.mrf.mxu0
      %v6596 = vadd.f32 %v6408, %v6595
      %6597 = vmatmul.bf16.gmra.mxu0 %v6495
      %v6598 = vpop.f32.mrf.mxu0
      %v6599 = vadd.f32 %v6411, %v6598
      %v6600 = vpop.f32.mrf.mxu0
      %v6601 = vadd.f32 %v6413, %v6600
      %6602 = vmatmul.bf16.gmra.mxu0 %v6498
      %v6603 = vpop.f32.mrf.mxu0
      %v6604 = vadd.f32 %v6416, %v6603
      %v6605 = vpop.f32.mrf.mxu0
      %v6606 = vadd.f32 %v6418, %v6605
      %6607 = vmatmul.bf16.gmra.mxu0 %v6501
      %v6608 = vpop.f32.mrf.mxu0
      %v6609 = vadd.f32 %v6421, %v6608
      %v6610 = vpop.f32.mrf.mxu0
      %v6611 = vadd.f32 %v6423, %v6610
      %6612 = vmatmul.bf16.gmra.mxu0 %v6504
      %v6613 = vpop.f32.mrf.mxu0
      %v6614 = vadd.f32 %v6426, %v6613
      %v6615 = vpop.f32.mrf.mxu0
      %v6616 = vadd.f32 %v6428, %v6615
      %6617 = vmatmul.bf16.gmra.mxu0 %v6507
      %v6618 = vpop.f32.mrf.mxu0
      %v6619 = vadd.f32 %v6431, %v6618
      %v6620 = vpop.f32.mrf.mxu0
      %6621 = vdwg.mxu0
      %v6622 = vld [vmem:[#allocation3 + $0x7] sm:$0xff]
      %v6623 = vld [vmem:[#allocation3 + $0xf] sm:$0xff]
      %v6624 = vld [vmem:[#allocation3 + $0x17] sm:$0xff]
      %v6625 = vld [vmem:[#allocation3 + $0x1f] sm:$0xff]
      %v6626 = vld [vmem:[#allocation3 + $0x27] sm:$0xff]
      %v6627 = vld [vmem:[#allocation3 + $0x2f] sm:$0xff]
      %v6628 = vld [vmem:[#allocation3 + $0x37] sm:$0xff]
      %v6629 = vld [vmem:[#allocation3 + $0x3f] sm:$0xff]
      %v6630 = vld [vmem:[#allocation3 + $0x47] sm:$0xff]
      %v6631 = vld [vmem:[#allocation3 + $0x4f] sm:$0xff]
      %v6632 = vld [vmem:[#allocation3 + $0x57] sm:$0xff]
      %v6633 = vld [vmem:[#allocation3 + $0x5f] sm:$0xff]
      %v6634 = vld [vmem:[#allocation3 + $0x67] sm:$0xff]
      %v6635 = vld [vmem:[#allocation3 + $0x6f] sm:$0xff]
      %v6636 = vld [vmem:[#allocation3 + $0x77] sm:$0xff]
      %v6637 = vld [vmem:[#allocation3 + $0x7f] sm:$0xff]
      %v6638 = vld [vmem:[#allocation3 + $0x87] sm:$0xff]
      %v6639 = vld [vmem:[#allocation3 + $0x8f] sm:$0xff]
      %v6640 = vld [vmem:[#allocation3 + $0x97] sm:$0xff]
      %v6641 = vld [vmem:[#allocation3 + $0x9f] sm:$0xff]
      %v6642 = vld [vmem:[#allocation3 + $0xa7] sm:$0xff]
      %v6643 = vld [vmem:[#allocation3 + $0xaf] sm:$0xff]
      %v6644 = vld [vmem:[#allocation3 + $0xb7] sm:$0xff]
      %v6645 = vld [vmem:[#allocation3 + $0xbf] sm:$0xff]
      %v6646 = vld [vmem:[#allocation3 + $0xc7] sm:$0xff]
      %v6647 = vld [vmem:[#allocation3 + $0xcf] sm:$0xff]
      %v6648 = vld [vmem:[#allocation3 + $0xd7] sm:$0xff]
      %v6649 = vld [vmem:[#allocation3 + $0xdf] sm:$0xff]
      %v6650 = vld [vmem:[#allocation3 + $0xe7] sm:$0xff]
      %v6651 = vld [vmem:[#allocation3 + $0xef] sm:$0xff]
      %v6652 = vld [vmem:[#allocation3 + $0xf7] sm:$0xff]
      %v6653 = vld [vmem:[#allocation3 + $0xff] sm:$0xff]
      %v6654 = vld [vmem:[#allocation3 + $0x107] sm:$0xff]
      %v6655 = vld [vmem:[#allocation3 + $0x10f] sm:$0xff]
      %v6656 = vld [vmem:[#allocation3 + $0x117] sm:$0xff]
      %v6657 = vld [vmem:[#allocation3 + $0x11f] sm:$0xff]
      %v6658 = vld [vmem:[#allocation3 + $0x127] sm:$0xff]
      %v6659 = vld [vmem:[#allocation3 + $0x12f] sm:$0xff]
      %v6660 = vld [vmem:[#allocation3 + $0x137] sm:$0xff]
      %v6661 = vld [vmem:[#allocation3 + $0x13f] sm:$0xff]
      %v6662 = vld [vmem:[#allocation3 + $0x147] sm:$0xff]
      %v6663 = vpack.c.bf16 %v6623, %v6622
      %v6664 = vpack.c.bf16 %v6625, %v6624
      %v6665 = vpack.c.bf16 %v6627, %v6626
      %v6666 = vpack.c.bf16 %v6629, %v6628
      %v6667 = vpack.c.bf16 %v6631, %v6630
      %v6668 = vpack.c.bf16 %v6633, %v6632
      %v6669 = vpack.c.bf16 %v6635, %v6634
      %v6670 = vpack.c.bf16 %v6637, %v6636
      %v6671 = vpack.c.bf16 %v6639, %v6638
      %v6672 = vpack.c.bf16 %v6641, %v6640
      %v6673 = vpack.c.bf16 %v6643, %v6642
      %v6674 = vpack.c.bf16 %v6645, %v6644
      %v6675 = vpack.c.bf16 %v6647, %v6646
      %v6676 = vpack.c.bf16 %v6649, %v6648
      %v6677 = vpack.c.bf16 %v6651, %v6650
      %v6678 = vpack.c.bf16 %v6653, %v6652
      %v6679 = vpack.c.bf16 %v6655, %v6654
      %v6680 = vpack.c.bf16 %v6657, %v6656
      %v6681 = vpack.c.bf16 %v6659, %v6658
      %v6682 = vpack.c.bf16 %v6661, %v6660
      %v6683 = vpack.c.bf16 %v6662, %v6662
      %s6684 = scalar_lea.vmem %s3, 32
      %v6685 = vld [vmem:[%s6684] sm:$0xf]
      %v6686 = vld [vmem:[%s6684 + $0x4] sm:$0xf]
      %v6687 = vld [vmem:[%s6684 + $0x8] sm:$0xf]
      %v6688 = vld [vmem:[%s6684 + $0xc] sm:$0xf]
      %v6693 = vunpack.c.l.b16 %v6685
      %v6694 = vunpack.c.l.b16 %v6686
      %v6695 = vunpack.c.l.b16 %v6687
      %v6696 = vunpack.c.l.b16 %v6688
      %v6697 = vpack.c.b16 %v6694, %v6693
      %v6698 = vpack.c.b16 %v6696, %v6695
      %v6702 = vsel %vm6071, %v6663, 0
      %v6705 = vsel %vm6071, %v6664, 0
      %v6708 = vsel %vm6071, %v6665, 0
      %v6711 = vsel %vm6071, %v6666, 0
      %v6714 = vsel %vm6071, %v6667, 0
      %v6717 = vsel %vm6071, %v6668, 0
      %v6720 = vsel %vm6071, %v6669, 0
      %v6723 = vsel %vm6071, %v6670, 0
      %v6726 = vsel %vm6071, %v6671, 0
      %v6729 = vsel %vm6071, %v6672, 0
      %v6732 = vsel %vm6071, %v6673, 0
      %v6735 = vsel %vm6071, %v6674, 0
      %v6738 = vsel %vm6071, %v6675, 0
      %v6741 = vsel %vm6071, %v6676, 0
      %v6744 = vsel %vm6071, %v6677, 0
      %v6747 = vsel %vm6071, %v6678, 0
      %v6750 = vsel %vm6071, %v6679, 0
      %v6753 = vsel %vm6071, %v6680, 0
      %v6756 = vsel %vm6071, %v6681, 0
      %v6759 = vsel %vm6071, %v6682, 0
      %v6762 = vsel %vm6071, %v6683, 0
      %6764 = vmatpush.bf16.msra.mxu0 0
      %6765 = vmatpush.bf16.msra.mxu0 0
      %6766 = vmatpush.bf16.msra.mxu0 0
      %6767 = vmatpush.bf16.msra.mxu0 0
      %6768 = vmatpush.bf16.msra.mxu0 0
      %6769 = vmatpush.bf16.msra.mxu0 0
      %6770 = vmatpush.bf16.msra.mxu0 %v6698
      %6771 = vmatpush.bf16.msra.mxu0 %v6697
      %6772 = vmatmul.bf16.gmra.mxu0 %v6702
      %v6773 = vpop.f32.mrf.mxu0
      %v6774 = vadd.f32 0.0, %v6773
      %v6775 = vpop.f32.mrf.mxu0
      %v6776 = vadd.f32 0.0, %v6775
      %6777 = vmatmul.bf16.gmra.mxu0 %v6705
      %v6778 = vpop.f32.mrf.mxu0
      %v6779 = vadd.f32 0.0, %v6778
      %v6780 = vpop.f32.mrf.mxu0
      %v6781 = vadd.f32 0.0, %v6780
      %6782 = vmatmul.bf16.gmra.mxu0 %v6708
      %v6783 = vpop.f32.mrf.mxu0
      %v6784 = vadd.f32 0.0, %v6783
      %v6785 = vpop.f32.mrf.mxu0
      %v6786 = vadd.f32 0.0, %v6785
      %6787 = vmatmul.bf16.gmra.mxu0 %v6711
      %v6788 = vpop.f32.mrf.mxu0
      %v6789 = vadd.f32 0.0, %v6788
      %v6790 = vpop.f32.mrf.mxu0
      %v6791 = vadd.f32 0.0, %v6790
      %6792 = vmatmul.bf16.gmra.mxu0 %v6714
      %v6793 = vpop.f32.mrf.mxu0
      %v6794 = vadd.f32 0.0, %v6793
      %v6795 = vpop.f32.mrf.mxu0
      %v6796 = vadd.f32 0.0, %v6795
      %6797 = vmatmul.bf16.gmra.mxu0 %v6717
      %v6798 = vpop.f32.mrf.mxu0
      %v6799 = vadd.f32 0.0, %v6798
      %v6800 = vpop.f32.mrf.mxu0
      %v6801 = vadd.f32 0.0, %v6800
      %6802 = vmatmul.bf16.gmra.mxu0 %v6720
      %v6803 = vpop.f32.mrf.mxu0
      %v6804 = vadd.f32 0.0, %v6803
      %v6805 = vpop.f32.mrf.mxu0
      %v6806 = vadd.f32 0.0, %v6805
      %6807 = vmatmul.bf16.gmra.mxu0 %v6723
      %v6808 = vpop.f32.mrf.mxu0
      %v6809 = vadd.f32 0.0, %v6808
      %v6810 = vpop.f32.mrf.mxu0
      %v6811 = vadd.f32 0.0, %v6810
      %6812 = vmatmul.bf16.gmra.mxu0 %v6726
      %v6813 = vpop.f32.mrf.mxu0
      %v6814 = vadd.f32 0.0, %v6813
      %v6815 = vpop.f32.mrf.mxu0
      %v6816 = vadd.f32 0.0, %v6815
      %6817 = vmatmul.bf16.gmra.mxu0 %v6729
      %v6818 = vpop.f32.mrf.mxu0
      %v6819 = vadd.f32 0.0, %v6818
      %v6820 = vpop.f32.mrf.mxu0
      %v6821 = vadd.f32 0.0, %v6820
      %6822 = vmatmul.bf16.gmra.mxu0 %v6732
      %v6823 = vpop.f32.mrf.mxu0
      %v6824 = vadd.f32 0.0, %v6823
      %v6825 = vpop.f32.mrf.mxu0
      %v6826 = vadd.f32 0.0, %v6825
      %6827 = vmatmul.bf16.gmra.mxu0 %v6735
      %v6828 = vpop.f32.mrf.mxu0
      %v6829 = vadd.f32 0.0, %v6828
      %v6830 = vpop.f32.mrf.mxu0
      %v6831 = vadd.f32 0.0, %v6830
      %6832 = vmatmul.bf16.gmra.mxu0 %v6738
      %v6833 = vpop.f32.mrf.mxu0
      %v6834 = vadd.f32 0.0, %v6833
      %v6835 = vpop.f32.mrf.mxu0
      %v6836 = vadd.f32 0.0, %v6835
      %6837 = vmatmul.bf16.gmra.mxu0 %v6741
      %v6838 = vpop.f32.mrf.mxu0
      %v6839 = vadd.f32 0.0, %v6838
      %v6840 = vpop.f32.mrf.mxu0
      %v6841 = vadd.f32 0.0, %v6840
      %6842 = vmatmul.bf16.gmra.mxu0 %v6744
      %v6843 = vpop.f32.mrf.mxu0
      %v6844 = vadd.f32 0.0, %v6843
      %v6845 = vpop.f32.mrf.mxu0
      %v6846 = vadd.f32 0.0, %v6845
      %6847 = vmatmul.bf16.gmra.mxu0 %v6747
      %v6848 = vpop.f32.mrf.mxu0
      %v6849 = vadd.f32 0.0, %v6848
      %v6850 = vpop.f32.mrf.mxu0
      %v6851 = vadd.f32 0.0, %v6850
      %6852 = vmatmul.bf16.gmra.mxu0 %v6750
      %v6853 = vpop.f32.mrf.mxu0
      %v6854 = vadd.f32 0.0, %v6853
      %v6855 = vpop.f32.mrf.mxu0
      %v6856 = vadd.f32 0.0, %v6855
      %6857 = vmatmul.bf16.gmra.mxu0 %v6753
      %v6858 = vpop.f32.mrf.mxu0
      %v6859 = vadd.f32 0.0, %v6858
      %v6860 = vpop.f32.mrf.mxu0
      %v6861 = vadd.f32 0.0, %v6860
      %6862 = vmatmul.bf16.gmra.mxu0 %v6756
      %v6863 = vpop.f32.mrf.mxu0
      %v6864 = vadd.f32 0.0, %v6863
      %v6865 = vpop.f32.mrf.mxu0
      %v6866 = vadd.f32 0.0, %v6865
      %6867 = vmatmul.bf16.gmra.mxu0 %v6759
      %v6868 = vpop.f32.mrf.mxu0
      %v6869 = vadd.f32 0.0, %v6868
      %v6870 = vpop.f32.mrf.mxu0
      %v6871 = vadd.f32 0.0, %v6870
      %6872 = vmatmul.bf16.gmra.mxu0 %v6762
      %v6873 = vpop.f32.mrf.mxu0
      %v6874 = vadd.f32 0.0, %v6873
      %v6875 = vpop.f32.mrf.mxu0
      %6876 = vdwg.mxu0
      %v6877 = vadd.f32 %v6519, %v6774
      %v6878 = vadd.f32 %v6521, %v6776
      %v6879 = vadd.f32 %v6524, %v6779
      %v6880 = vadd.f32 %v6526, %v6781
      %v6881 = vadd.f32 %v6529, %v6784
      %v6882 = vadd.f32 %v6531, %v6786
      %v6883 = vadd.f32 %v6534, %v6789
      %v6884 = vadd.f32 %v6536, %v6791
      %v6885 = vadd.f32 %v6539, %v6794
      %v6886 = vadd.f32 %v6541, %v6796
      %v6887 = vadd.f32 %v6544, %v6799
      %v6888 = vadd.f32 %v6546, %v6801
      %v6889 = vadd.f32 %v6549, %v6804
      %v6890 = vadd.f32 %v6551, %v6806
      %v6891 = vadd.f32 %v6554, %v6809
      %v6892 = vadd.f32 %v6556, %v6811
      %v6893 = vadd.f32 %v6559, %v6814
      %v6894 = vadd.f32 %v6561, %v6816
      %v6895 = vadd.f32 %v6564, %v6819
      %v6896 = vadd.f32 %v6566, %v6821
      %v6897 = vadd.f32 %v6569, %v6824
      %v6898 = vadd.f32 %v6571, %v6826
      %v6899 = vadd.f32 %v6574, %v6829
      %v6900 = vadd.f32 %v6576, %v6831
      %v6901 = vadd.f32 %v6579, %v6834
      %v6902 = vadd.f32 %v6581, %v6836
      %v6903 = vadd.f32 %v6584, %v6839
      %v6904 = vadd.f32 %v6586, %v6841
      %v6905 = vadd.f32 %v6589, %v6844
      %v6906 = vadd.f32 %v6591, %v6846
      %v6907 = vadd.f32 %v6594, %v6849
      %v6908 = vadd.f32 %v6596, %v6851
      %v6909 = vadd.f32 %v6599, %v6854
      %v6910 = vadd.f32 %v6601, %v6856
      %v6911 = vadd.f32 %v6604, %v6859
      %v6912 = vadd.f32 %v6606, %v6861
      %v6913 = vadd.f32 %v6609, %v6864
      %v6914 = vadd.f32 %v6611, %v6866
      %v6915 = vadd.f32 %v6614, %v6869
      %v6916 = vadd.f32 %v6616, %v6871
      %v6917 = vadd.f32 %v6619, %v6874
      %v6918 = vld [vmem:[#allocation3 + $0x17] sm:$0xff]
      %v6919 = vld [vmem:[#allocation3 + $0x1f] sm:$0xff]
      %v6920 = vld [vmem:[#allocation3 + $0x27] sm:$0xff]
      %v6921 = vld [vmem:[#allocation3 + $0x2f] sm:$0xff]
      %v6922 = vld [vmem:[#allocation3 + $0x37] sm:$0xff]
      %v6923 = vld [vmem:[#allocation3 + $0x3f] sm:$0xff]
      %v6924 = vld [vmem:[#allocation3 + $0x47] sm:$0xff]
      %v6925 = vld [vmem:[#allocation3 + $0x4f] sm:$0xff]
      %v6926 = vld [vmem:[#allocation3 + $0x57] sm:$0xff]
      %v6927 = vld [vmem:[#allocation3 + $0x5f] sm:$0xff]
      %v6928 = vld [vmem:[#allocation3 + $0x67] sm:$0xff]
      %v6929 = vld [vmem:[#allocation3 + $0x6f] sm:$0xff]
      %v6930 = vld [vmem:[#allocation3 + $0x77] sm:$0xff]
      %v6931 = vld [vmem:[#allocation3 + $0x7f] sm:$0xff]
      %v6932 = vld [vmem:[#allocation3 + $0x87] sm:$0xff]
      %v6933 = vld [vmem:[#allocation3 + $0x8f] sm:$0xff]
      %v6934 = vld [vmem:[#allocation3 + $0x97] sm:$0xff]
      %v6935 = vld [vmem:[#allocation3 + $0x9f] sm:$0xff]
      %v6936 = vld [vmem:[#allocation3 + $0xa7] sm:$0xff]
      %v6937 = vld [vmem:[#allocation3 + $0xaf] sm:$0xff]
      %v6938 = vld [vmem:[#allocation3 + $0xb7] sm:$0xff]
      %v6939 = vld [vmem:[#allocation3 + $0xbf] sm:$0xff]
      %v6940 = vld [vmem:[#allocation3 + $0xc7] sm:$0xff]
      %v6941 = vld [vmem:[#allocation3 + $0xcf] sm:$0xff]
      %v6942 = vld [vmem:[#allocation3 + $0xd7] sm:$0xff]
      %v6943 = vld [vmem:[#allocation3 + $0xdf] sm:$0xff]
      %v6944 = vld [vmem:[#allocation3 + $0xe7] sm:$0xff]
      %v6945 = vld [vmem:[#allocation3 + $0xef] sm:$0xff]
      %v6946 = vld [vmem:[#allocation3 + $0xf7] sm:$0xff]
      %v6947 = vld [vmem:[#allocation3 + $0xff] sm:$0xff]
      %v6948 = vld [vmem:[#allocation3 + $0x107] sm:$0xff]
      %v6949 = vld [vmem:[#allocation3 + $0x10f] sm:$0xff]
      %v6950 = vld [vmem:[#allocation3 + $0x117] sm:$0xff]
      %v6951 = vld [vmem:[#allocation3 + $0x11f] sm:$0xff]
      %v6952 = vld [vmem:[#allocation3 + $0x127] sm:$0xff]
      %v6953 = vld [vmem:[#allocation3 + $0x12f] sm:$0xff]
      %v6954 = vld [vmem:[#allocation3 + $0x137] sm:$0xff]
      %v6955 = vld [vmem:[#allocation3 + $0x13f] sm:$0xff]
      %v6956 = vld [vmem:[#allocation3 + $0x147] sm:$0xff]
      %v6957 = vld [vmem:[#allocation3 + $0x14f] sm:$0xff]
      %v6958 = vld [vmem:[#allocation3 + $0x157] sm:$0xff]
      %v6959 = vpack.c.bf16 %v6919, %v6918
      %v6960 = vpack.c.bf16 %v6921, %v6920
      %v6961 = vpack.c.bf16 %v6923, %v6922
      %v6962 = vpack.c.bf16 %v6925, %v6924
      %v6963 = vpack.c.bf16 %v6927, %v6926
      %v6964 = vpack.c.bf16 %v6929, %v6928
      %v6965 = vpack.c.bf16 %v6931, %v6930
      %v6966 = vpack.c.bf16 %v6933, %v6932
      %v6967 = vpack.c.bf16 %v6935, %v6934
      %v6968 = vpack.c.bf16 %v6937, %v6936
      %v6969 = vpack.c.bf16 %v6939, %v6938
      %v6970 = vpack.c.bf16 %v6941, %v6940
      %v6971 = vpack.c.bf16 %v6943, %v6942
      %v6972 = vpack.c.bf16 %v6945, %v6944
      %v6973 = vpack.c.bf16 %v6947, %v6946
      %v6974 = vpack.c.bf16 %v6949, %v6948
      %v6975 = vpack.c.bf16 %v6951, %v6950
      %v6976 = vpack.c.bf16 %v6953, %v6952
      %v6977 = vpack.c.bf16 %v6955, %v6954
      %v6978 = vpack.c.bf16 %v6957, %v6956
      %v6979 = vpack.c.bf16 %v6958, %v6958
      %s6980 = scalar_lea.vmem %s3, 48
      %v6981 = vld [vmem:[%s6980] sm:$0xf]
      %v6982 = vld [vmem:[%s6980 + $0x4] sm:$0xf]
      %v6983 = vld [vmem:[%s6980 + $0x8] sm:$0xf]
      %v6984 = vld [vmem:[%s6980 + $0xc] sm:$0xf]
      %v6989 = vunpack.c.l.b16 %v6981
      %v6990 = vunpack.c.l.b16 %v6982
      %v6991 = vunpack.c.l.b16 %v6983
      %v6992 = vunpack.c.l.b16 %v6984
      %v6993 = vpack.c.b16 %v6990, %v6989
      %v6994 = vpack.c.b16 %v6992, %v6991
      %v6998 = vsel %vm6071, %v6959, 0
      %v7001 = vsel %vm6071, %v6960, 0
      %v7004 = vsel %vm6071, %v6961, 0
      %v7007 = vsel %vm6071, %v6962, 0
      %v7010 = vsel %vm6071, %v6963, 0
      %v7013 = vsel %vm6071, %v6964, 0
      %v7016 = vsel %vm6071, %v6965, 0
      %v7019 = vsel %vm6071, %v6966, 0
      %v7022 = vsel %vm6071, %v6967, 0
      %v7025 = vsel %vm6071, %v6968, 0
      %v7028 = vsel %vm6071, %v6969, 0
      %v7031 = vsel %vm6071, %v6970, 0
      %v7034 = vsel %vm6071, %v6971, 0
      %v7037 = vsel %vm6071, %v6972, 0
      %v7040 = vsel %vm6071, %v6973, 0
      %v7043 = vsel %vm6071, %v6974, 0
      %v7046 = vsel %vm6071, %v6975, 0
      %v7049 = vsel %vm6071, %v6976, 0
      %v7052 = vsel %vm6071, %v6977, 0
      %v7055 = vsel %vm6071, %v6978, 0
      %v7058 = vsel %vm6071, %v6979, 0
      %7060 = vmatpush.bf16.msra.mxu0 0
      %7061 = vmatpush.bf16.msra.mxu0 0
      %7062 = vmatpush.bf16.msra.mxu0 0
      %7063 = vmatpush.bf16.msra.mxu0 0
      %7064 = vmatpush.bf16.msra.mxu0 0
      %7065 = vmatpush.bf16.msra.mxu0 0
      %7066 = vmatpush.bf16.msra.mxu0 %v6994
      %7067 = vmatpush.bf16.msra.mxu0 %v6993
      %7068 = vmatmul.bf16.gmra.mxu0 %v6998
      %v7069 = vpop.f32.mrf.mxu0
      %v7070 = vadd.f32 0.0, %v7069
      %v7071 = vpop.f32.mrf.mxu0
      %v7072 = vadd.f32 0.0, %v7071
      %7073 = vmatmul.bf16.gmra.mxu0 %v7001
      %v7074 = vpop.f32.mrf.mxu0
      %v7075 = vadd.f32 0.0, %v7074
      %v7076 = vpop.f32.mrf.mxu0
      %v7077 = vadd.f32 0.0, %v7076
      %7078 = vmatmul.bf16.gmra.mxu0 %v7004
      %v7079 = vpop.f32.mrf.mxu0
      %v7080 = vadd.f32 0.0, %v7079
      %v7081 = vpop.f32.mrf.mxu0
      %v7082 = vadd.f32 0.0, %v7081
      %7083 = vmatmul.bf16.gmra.mxu0 %v7007
      %v7084 = vpop.f32.mrf.mxu0
      %v7085 = vadd.f32 0.0, %v7084
      %v7086 = vpop.f32.mrf.mxu0
      %v7087 = vadd.f32 0.0, %v7086
      %7088 = vmatmul.bf16.gmra.mxu0 %v7010
      %v7089 = vpop.f32.mrf.mxu0
      %v7090 = vadd.f32 0.0, %v7089
      %v7091 = vpop.f32.mrf.mxu0
      %v7092 = vadd.f32 0.0, %v7091
      %7093 = vmatmul.bf16.gmra.mxu0 %v7013
      %v7094 = vpop.f32.mrf.mxu0
      %v7095 = vadd.f32 0.0, %v7094
      %v7096 = vpop.f32.mrf.mxu0
      %v7097 = vadd.f32 0.0, %v7096
      %7098 = vmatmul.bf16.gmra.mxu0 %v7016
      %v7099 = vpop.f32.mrf.mxu0
      %v7100 = vadd.f32 0.0, %v7099
      %v7101 = vpop.f32.mrf.mxu0
      %v7102 = vadd.f32 0.0, %v7101
      %7103 = vmatmul.bf16.gmra.mxu0 %v7019
      %v7104 = vpop.f32.mrf.mxu0
      %v7105 = vadd.f32 0.0, %v7104
      %v7106 = vpop.f32.mrf.mxu0
      %v7107 = vadd.f32 0.0, %v7106
      %7108 = vmatmul.bf16.gmra.mxu0 %v7022
      %v7109 = vpop.f32.mrf.mxu0
      %v7110 = vadd.f32 0.0, %v7109
      %v7111 = vpop.f32.mrf.mxu0
      %v7112 = vadd.f32 0.0, %v7111
      %7113 = vmatmul.bf16.gmra.mxu0 %v7025
      %v7114 = vpop.f32.mrf.mxu0
      %v7115 = vadd.f32 0.0, %v7114
      %v7116 = vpop.f32.mrf.mxu0
      %v7117 = vadd.f32 0.0, %v7116
      %7118 = vmatmul.bf16.gmra.mxu0 %v7028
      %v7119 = vpop.f32.mrf.mxu0
      %v7120 = vadd.f32 0.0, %v7119
      %v7121 = vpop.f32.mrf.mxu0
      %v7122 = vadd.f32 0.0, %v7121
      %7123 = vmatmul.bf16.gmra.mxu0 %v7031
      %v7124 = vpop.f32.mrf.mxu0
      %v7125 = vadd.f32 0.0, %v7124
      %v7126 = vpop.f32.mrf.mxu0
      %v7127 = vadd.f32 0.0, %v7126
      %7128 = vmatmul.bf16.gmra.mxu0 %v7034
      %v7129 = vpop.f32.mrf.mxu0
      %v7130 = vadd.f32 0.0, %v7129
      %v7131 = vpop.f32.mrf.mxu0
      %v7132 = vadd.f32 0.0, %v7131
      %7133 = vmatmul.bf16.gmra.mxu0 %v7037
      %v7134 = vpop.f32.mrf.mxu0
      %v7135 = vadd.f32 0.0, %v7134
      %v7136 = vpop.f32.mrf.mxu0
      %v7137 = vadd.f32 0.0, %v7136
      %7138 = vmatmul.bf16.gmra.mxu0 %v7040
      %v7139 = vpop.f32.mrf.mxu0
      %v7140 = vadd.f32 0.0, %v7139
      %v7141 = vpop.f32.mrf.mxu0
      %v7142 = vadd.f32 0.0, %v7141
      %7143 = vmatmul.bf16.gmra.mxu0 %v7043
      %v7144 = vpop.f32.mrf.mxu0
      %v7145 = vadd.f32 0.0, %v7144
      %v7146 = vpop.f32.mrf.mxu0
      %v7147 = vadd.f32 0.0, %v7146
      %7148 = vmatmul.bf16.gmra.mxu0 %v7046
      %v7149 = vpop.f32.mrf.mxu0
      %v7150 = vadd.f32 0.0, %v7149
      %v7151 = vpop.f32.mrf.mxu0
      %v7152 = vadd.f32 0.0, %v7151
      %7153 = vmatmul.bf16.gmra.mxu0 %v7049
      %v7154 = vpop.f32.mrf.mxu0
      %v7155 = vadd.f32 0.0, %v7154
      %v7156 = vpop.f32.mrf.mxu0
      %v7157 = vadd.f32 0.0, %v7156
      %7158 = vmatmul.bf16.gmra.mxu0 %v7052
      %v7159 = vpop.f32.mrf.mxu0
      %v7160 = vadd.f32 0.0, %v7159
      %v7161 = vpop.f32.mrf.mxu0
      %v7162 = vadd.f32 0.0, %v7161
      %7163 = vmatmul.bf16.gmra.mxu0 %v7055
      %v7164 = vpop.f32.mrf.mxu0
      %v7165 = vadd.f32 0.0, %v7164
      %v7166 = vpop.f32.mrf.mxu0
      %v7167 = vadd.f32 0.0, %v7166
      %7168 = vmatmul.bf16.gmra.mxu0 %v7058
      %v7169 = vpop.f32.mrf.mxu0
      %v7170 = vadd.f32 0.0, %v7169
      %v7171 = vpop.f32.mrf.mxu0
      %7172 = vdwg.mxu0
      %v7173 = vadd.f32 %v6877, %v7070
      %v7174 = vadd.f32 %v6878, %v7072
      %v7175 = vadd.f32 %v6879, %v7075
      %v7176 = vadd.f32 %v6880, %v7077
      %v7177 = vadd.f32 %v6881, %v7080
      %v7178 = vadd.f32 %v6882, %v7082
      %v7179 = vadd.f32 %v6883, %v7085
      %v7180 = vadd.f32 %v6884, %v7087
      %v7181 = vadd.f32 %v6885, %v7090
      %v7182 = vadd.f32 %v6886, %v7092
      %v7183 = vadd.f32 %v6887, %v7095
      %v7184 = vadd.f32 %v6888, %v7097
      %v7185 = vadd.f32 %v6889, %v7100
      %v7186 = vadd.f32 %v6890, %v7102
      %v7187 = vadd.f32 %v6891, %v7105
      %v7188 = vadd.f32 %v6892, %v7107
      %v7189 = vadd.f32 %v6893, %v7110
      %v7190 = vadd.f32 %v6894, %v7112
      %v7191 = vadd.f32 %v6895, %v7115
      %v7192 = vadd.f32 %v6896, %v7117
      %v7193 = vadd.f32 %v6897, %v7120
      %v7194 = vadd.f32 %v6898, %v7122
      %v7195 = vadd.f32 %v6899, %v7125
      %v7196 = vadd.f32 %v6900, %v7127
      %v7197 = vadd.f32 %v6901, %v7130
      %v7198 = vadd.f32 %v6902, %v7132
      %v7199 = vadd.f32 %v6903, %v7135
      %v7200 = vadd.f32 %v6904, %v7137
      %v7201 = vadd.f32 %v6905, %v7140
      %v7202 = vadd.f32 %v6906, %v7142
      %v7203 = vadd.f32 %v6907, %v7145
      %v7204 = vadd.f32 %v6908, %v7147
      %v7205 = vadd.f32 %v6909, %v7150
      %v7206 = vadd.f32 %v6910, %v7152
      %v7207 = vadd.f32 %v6911, %v7155
      %v7208 = vadd.f32 %v6912, %v7157
      %v7209 = vadd.f32 %v6913, %v7160
      %v7210 = vadd.f32 %v6914, %v7162
      %v7211 = vadd.f32 %v6915, %v7165
      %v7212 = vadd.f32 %v6916, %v7167
      %v7213 = vadd.f32 %v6917, %v7170
      %v7214 = vld [vmem:[#allocation3 + $0x18] sm:$0xff]
      %v7215 = vld [vmem:[#allocation3 + $0x20] sm:$0xff]
      %v7216 = vld [vmem:[#allocation3 + $0x28] sm:$0xff]
      %v7217 = vld [vmem:[#allocation3 + $0x30] sm:$0xff]
      %v7218 = vld [vmem:[#allocation3 + $0x38] sm:$0xff]
      %v7219 = vld [vmem:[#allocation3 + $0x40] sm:$0xff]
      %v7220 = vld [vmem:[#allocation3 + $0x48] sm:$0xff]
      %v7221 = vld [vmem:[#allocation3 + $0x50] sm:$0xff]
      %v7222 = vld [vmem:[#allocation3 + $0x58] sm:$0xff]
      %v7223 = vld [vmem:[#allocation3 + $0x60] sm:$0xff]
      %v7224 = vld [vmem:[#allocation3 + $0x68] sm:$0xff]
      %v7225 = vld [vmem:[#allocation3 + $0x70] sm:$0xff]
      %v7226 = vld [vmem:[#allocation3 + $0x78] sm:$0xff]
      %v7227 = vld [vmem:[#allocation3 + $0x80] sm:$0xff]
      %v7228 = vld [vmem:[#allocation3 + $0x88] sm:$0xff]
      %v7229 = vld [vmem:[#allocation3 + $0x90] sm:$0xff]
      %v7230 = vld [vmem:[#allocation3 + $0x98] sm:$0xff]
      %v7231 = vld [vmem:[#allocation3 + $0xa0] sm:$0xff]
      %v7232 = vld [vmem:[#allocation3 + $0xa8] sm:$0xff]
      %v7233 = vld [vmem:[#allocation3 + $0xb0] sm:$0xff]
      %v7234 = vld [vmem:[#allocation3 + $0xb8] sm:$0xff]
      %v7235 = vld [vmem:[#allocation3 + $0xc0] sm:$0xff]
      %v7236 = vld [vmem:[#allocation3 + $0xc8] sm:$0xff]
      %v7237 = vld [vmem:[#allocation3 + $0xd0] sm:$0xff]
      %v7238 = vld [vmem:[#allocation3 + $0xd8] sm:$0xff]
      %v7239 = vld [vmem:[#allocation3 + $0xe0] sm:$0xff]
      %v7240 = vld [vmem:[#allocation3 + $0xe8] sm:$0xff]
      %v7241 = vld [vmem:[#allocation3 + $0xf0] sm:$0xff]
      %v7242 = vld [vmem:[#allocation3 + $0xf8] sm:$0xff]
      %v7243 = vld [vmem:[#allocation3 + $0x100] sm:$0xff]
      %v7244 = vld [vmem:[#allocation3 + $0x108] sm:$0xff]
      %v7245 = vld [vmem:[#allocation3 + $0x110] sm:$0xff]
      %v7246 = vld [vmem:[#allocation3 + $0x118] sm:$0xff]
      %v7247 = vld [vmem:[#allocation3 + $0x120] sm:$0xff]
      %v7248 = vld [vmem:[#allocation3 + $0x128] sm:$0xff]
      %v7249 = vld [vmem:[#allocation3 + $0x130] sm:$0xff]
      %v7250 = vld [vmem:[#allocation3 + $0x138] sm:$0xff]
      %v7251 = vld [vmem:[#allocation3 + $0x140] sm:$0xff]
      %v7252 = vld [vmem:[#allocation3 + $0x148] sm:$0xff]
      %v7253 = vld [vmem:[#allocation3 + $0x150] sm:$0xff]
      %v7254 = vld [vmem:[#allocation3 + $0x158] sm:$0xff]
      %v7255 = vpack.c.bf16 %v7215, %v7214
      %v7256 = vpack.c.bf16 %v7217, %v7216
      %v7257 = vpack.c.bf16 %v7219, %v7218
      %v7258 = vpack.c.bf16 %v7221, %v7220
      %v7259 = vpack.c.bf16 %v7223, %v7222
      %v7260 = vpack.c.bf16 %v7225, %v7224
      %v7261 = vpack.c.bf16 %v7227, %v7226
      %v7262 = vpack.c.bf16 %v7229, %v7228
      %v7263 = vpack.c.bf16 %v7231, %v7230
      %v7264 = vpack.c.bf16 %v7233, %v7232
      %v7265 = vpack.c.bf16 %v7235, %v7234
      %v7266 = vpack.c.bf16 %v7237, %v7236
      %v7267 = vpack.c.bf16 %v7239, %v7238
      %v7268 = vpack.c.bf16 %v7241, %v7240
      %v7269 = vpack.c.bf16 %v7243, %v7242
      %v7270 = vpack.c.bf16 %v7245, %v7244
      %v7271 = vpack.c.bf16 %v7247, %v7246
      %v7272 = vpack.c.bf16 %v7249, %v7248
      %v7273 = vpack.c.bf16 %v7251, %v7250
      %v7274 = vpack.c.bf16 %v7253, %v7252
      %v7275 = vpack.c.bf16 %v7254, %v7254
      %s7276 = scalar_lea.vmem %s3, 64
      %v7277 = vld [vmem:[%s7276] sm:$0xf]
      %v7278 = vld [vmem:[%s7276 + $0x4] sm:$0xf]
      %v7279 = vld [vmem:[%s7276 + $0x8] sm:$0xf]
      %v7280 = vld [vmem:[%s7276 + $0xc] sm:$0xf]
      %v7285 = vunpack.c.l.b16 %v7277
      %v7286 = vunpack.c.l.b16 %v7278
      %v7287 = vunpack.c.l.b16 %v7279
      %v7288 = vunpack.c.l.b16 %v7280
      %v7289 = vpack.c.b16 %v7286, %v7285
      %v7290 = vpack.c.b16 %v7288, %v7287
      %v7294 = vsel %vm6071, %v7255, 0
      %v7297 = vsel %vm6071, %v7256, 0
      %v7300 = vsel %vm6071, %v7257, 0
      %v7303 = vsel %vm6071, %v7258, 0
      %v7306 = vsel %vm6071, %v7259, 0
      %v7309 = vsel %vm6071, %v7260, 0
      %v7312 = vsel %vm6071, %v7261, 0
      %v7315 = vsel %vm6071, %v7262, 0
      %v7318 = vsel %vm6071, %v7263, 0
      %v7321 = vsel %vm6071, %v7264, 0
      %v7324 = vsel %vm6071, %v7265, 0
      %v7327 = vsel %vm6071, %v7266, 0
      %v7330 = vsel %vm6071, %v7267, 0
      %v7333 = vsel %vm6071, %v7268, 0
      %v7336 = vsel %vm6071, %v7269, 0
      %v7339 = vsel %vm6071, %v7270, 0
      %v7342 = vsel %vm6071, %v7271, 0
      %v7345 = vsel %vm6071, %v7272, 0
      %v7348 = vsel %vm6071, %v7273, 0
      %v7351 = vsel %vm6071, %v7274, 0
      %v7354 = vsel %vm6071, %v7275, 0
      %7356 = vmatpush.bf16.msra.mxu0 0
      %7357 = vmatpush.bf16.msra.mxu0 0
      %7358 = vmatpush.bf16.msra.mxu0 0
      %7359 = vmatpush.bf16.msra.mxu0 0
      %7360 = vmatpush.bf16.msra.mxu0 0
      %7361 = vmatpush.bf16.msra.mxu0 0
      %7362 = vmatpush.bf16.msra.mxu0 %v7290
      %7363 = vmatpush.bf16.msra.mxu0 %v7289
      %7364 = vmatmul.bf16.gmra.mxu0 %v7294
      %v7365 = vpop.f32.mrf.mxu0
      %v7366 = vadd.f32 0.0, %v7365
      %v7367 = vpop.f32.mrf.mxu0
      %v7368 = vadd.f32 0.0, %v7367
      %7369 = vmatmul.bf16.gmra.mxu0 %v7297
      %v7370 = vpop.f32.mrf.mxu0
      %v7371 = vadd.f32 0.0, %v7370
      %v7372 = vpop.f32.mrf.mxu0
      %v7373 = vadd.f32 0.0, %v7372
      %7374 = vmatmul.bf16.gmra.mxu0 %v7300
      %v7375 = vpop.f32.mrf.mxu0
      %v7376 = vadd.f32 0.0, %v7375
      %v7377 = vpop.f32.mrf.mxu0
      %v7378 = vadd.f32 0.0, %v7377
      %7379 = vmatmul.bf16.gmra.mxu0 %v7303
      %v7380 = vpop.f32.mrf.mxu0
      %v7381 = vadd.f32 0.0, %v7380
      %v7382 = vpop.f32.mrf.mxu0
      %v7383 = vadd.f32 0.0, %v7382
      %7384 = vmatmul.bf16.gmra.mxu0 %v7306
      %v7385 = vpop.f32.mrf.mxu0
      %v7386 = vadd.f32 0.0, %v7385
      %v7387 = vpop.f32.mrf.mxu0
      %v7388 = vadd.f32 0.0, %v7387
      %7389 = vmatmul.bf16.gmra.mxu0 %v7309
      %v7390 = vpop.f32.mrf.mxu0
      %v7391 = vadd.f32 0.0, %v7390
      %v7392 = vpop.f32.mrf.mxu0
      %v7393 = vadd.f32 0.0, %v7392
      %7394 = vmatmul.bf16.gmra.mxu0 %v7312
      %v7395 = vpop.f32.mrf.mxu0
      %v7396 = vadd.f32 0.0, %v7395
      %v7397 = vpop.f32.mrf.mxu0
      %v7398 = vadd.f32 0.0, %v7397
      %7399 = vmatmul.bf16.gmra.mxu0 %v7315
      %v7400 = vpop.f32.mrf.mxu0
      %v7401 = vadd.f32 0.0, %v7400
      %v7402 = vpop.f32.mrf.mxu0
      %v7403 = vadd.f32 0.0, %v7402
      %7404 = vmatmul.bf16.gmra.mxu0 %v7318
      %v7405 = vpop.f32.mrf.mxu0
      %v7406 = vadd.f32 0.0, %v7405
      %v7407 = vpop.f32.mrf.mxu0
      %v7408 = vadd.f32 0.0, %v7407
      %7409 = vmatmul.bf16.gmra.mxu0 %v7321
      %v7410 = vpop.f32.mrf.mxu0
      %v7411 = vadd.f32 0.0, %v7410
      %v7412 = vpop.f32.mrf.mxu0
      %v7413 = vadd.f32 0.0, %v7412
      %7414 = vmatmul.bf16.gmra.mxu0 %v7324
      %v7415 = vpop.f32.mrf.mxu0
      %v7416 = vadd.f32 0.0, %v7415
      %v7417 = vpop.f32.mrf.mxu0
      %v7418 = vadd.f32 0.0, %v7417
      %7419 = vmatmul.bf16.gmra.mxu0 %v7327
      %v7420 = vpop.f32.mrf.mxu0
      %v7421 = vadd.f32 0.0, %v7420
      %v7422 = vpop.f32.mrf.mxu0
      %v7423 = vadd.f32 0.0, %v7422
      %7424 = vmatmul.bf16.gmra.mxu0 %v7330
      %v7425 = vpop.f32.mrf.mxu0
      %v7426 = vadd.f32 0.0, %v7425
      %v7427 = vpop.f32.mrf.mxu0
      %v7428 = vadd.f32 0.0, %v7427
      %7429 = vmatmul.bf16.gmra.mxu0 %v7333
      %v7430 = vpop.f32.mrf.mxu0
      %v7431 = vadd.f32 0.0, %v7430
      %v7432 = vpop.f32.mrf.mxu0
      %v7433 = vadd.f32 0.0, %v7432
      %7434 = vmatmul.bf16.gmra.mxu0 %v7336
      %v7435 = vpop.f32.mrf.mxu0
      %v7436 = vadd.f32 0.0, %v7435
      %v7437 = vpop.f32.mrf.mxu0
      %v7438 = vadd.f32 0.0, %v7437
      %7439 = vmatmul.bf16.gmra.mxu0 %v7339
      %v7440 = vpop.f32.mrf.mxu0
      %v7441 = vadd.f32 0.0, %v7440
      %v7442 = vpop.f32.mrf.mxu0
      %v7443 = vadd.f32 0.0, %v7442
      %7444 = vmatmul.bf16.gmra.mxu0 %v7342
      %v7445 = vpop.f32.mrf.mxu0
      %v7446 = vadd.f32 0.0, %v7445
      %v7447 = vpop.f32.mrf.mxu0
      %v7448 = vadd.f32 0.0, %v7447
      %7449 = vmatmul.bf16.gmra.mxu0 %v7345
      %v7450 = vpop.f32.mrf.mxu0
      %v7451 = vadd.f32 0.0, %v7450
      %v7452 = vpop.f32.mrf.mxu0
      %v7453 = vadd.f32 0.0, %v7452
      %7454 = vmatmul.bf16.gmra.mxu0 %v7348
      %v7455 = vpop.f32.mrf.mxu0
      %v7456 = vadd.f32 0.0, %v7455
      %v7457 = vpop.f32.mrf.mxu0
      %v7458 = vadd.f32 0.0, %v7457
      %7459 = vmatmul.bf16.gmra.mxu0 %v7351
      %v7460 = vpop.f32.mrf.mxu0
      %v7461 = vadd.f32 0.0, %v7460
      %v7462 = vpop.f32.mrf.mxu0
      %v7463 = vadd.f32 0.0, %v7462
      %7464 = vmatmul.bf16.gmra.mxu0 %v7354
      %v7465 = vpop.f32.mrf.mxu0
      %v7466 = vadd.f32 0.0, %v7465
      %v7467 = vpop.f32.mrf.mxu0
      %7468 = vdwg.mxu0
      %v7469 = vadd.f32 %v7173, %v7366
      %v7470 = vadd.f32 %v7174, %v7368
      %v7471 = vadd.f32 %v7175, %v7371
      %v7472 = vadd.f32 %v7176, %v7373
      %v7473 = vadd.f32 %v7177, %v7376
      %v7474 = vadd.f32 %v7178, %v7378
      %v7475 = vadd.f32 %v7179, %v7381
      %v7476 = vadd.f32 %v7180, %v7383
      %v7477 = vadd.f32 %v7181, %v7386
      %v7478 = vadd.f32 %v7182, %v7388
      %v7479 = vadd.f32 %v7183, %v7391
      %v7480 = vadd.f32 %v7184, %v7393
      %v7481 = vadd.f32 %v7185, %v7396
      %v7482 = vadd.f32 %v7186, %v7398
      %v7483 = vadd.f32 %v7187, %v7401
      %v7484 = vadd.f32 %v7188, %v7403
      %v7485 = vadd.f32 %v7189, %v7406
      %v7486 = vadd.f32 %v7190, %v7408
      %v7487 = vadd.f32 %v7191, %v7411
      %v7488 = vadd.f32 %v7192, %v7413
      %v7489 = vadd.f32 %v7193, %v7416
      %v7490 = vadd.f32 %v7194, %v7418
      %v7491 = vadd.f32 %v7195, %v7421
      %v7492 = vadd.f32 %v7196, %v7423
      %v7493 = vadd.f32 %v7197, %v7426
      %v7494 = vadd.f32 %v7198, %v7428
      %v7495 = vadd.f32 %v7199, %v7431
      %v7496 = vadd.f32 %v7200, %v7433
      %v7497 = vadd.f32 %v7201, %v7436
      %v7498 = vadd.f32 %v7202, %v7438
      %v7499 = vadd.f32 %v7203, %v7441
      %v7500 = vadd.f32 %v7204, %v7443
      %v7501 = vadd.f32 %v7205, %v7446
      %v7502 = vadd.f32 %v7206, %v7448
      %v7503 = vadd.f32 %v7207, %v7451
      %v7504 = vadd.f32 %v7208, %v7453
      %v7505 = vadd.f32 %v7209, %v7456
      %v7506 = vadd.f32 %v7210, %v7458
      %v7507 = vadd.f32 %v7211, %v7461
      %v7508 = vadd.f32 %v7212, %v7463
      %v7509 = vadd.f32 %v7213, %v7466
      %v7510 = vld [vmem:[#allocation3 + $0x19] sm:$0xff]
      %v7511 = vld [vmem:[#allocation3 + $0x21] sm:$0xff]
      %v7512 = vld [vmem:[#allocation3 + $0x29] sm:$0xff]
      %v7513 = vld [vmem:[#allocation3 + $0x31] sm:$0xff]
      %v7514 = vld [vmem:[#allocation3 + $0x39] sm:$0xff]
      %v7515 = vld [vmem:[#allocation3 + $0x41] sm:$0xff]
      %v7516 = vld [vmem:[#allocation3 + $0x49] sm:$0xff]
      %v7517 = vld [vmem:[#allocation3 + $0x51] sm:$0xff]
      %v7518 = vld [vmem:[#allocation3 + $0x59] sm:$0xff]
      %v7519 = vld [vmem:[#allocation3 + $0x61] sm:$0xff]
      %v7520 = vld [vmem:[#allocation3 + $0x69] sm:$0xff]
      %v7521 = vld [vmem:[#allocation3 + $0x71] sm:$0xff]
      %v7522 = vld [vmem:[#allocation3 + $0x79] sm:$0xff]
      %v7523 = vld [vmem:[#allocation3 + $0x81] sm:$0xff]
      %v7524 = vld [vmem:[#allocation3 + $0x89] sm:$0xff]
      %v7525 = vld [vmem:[#allocation3 + $0x91] sm:$0xff]
      %v7526 = vld [vmem:[#allocation3 + $0x99] sm:$0xff]
      %v7527 = vld [vmem:[#allocation3 + $0xa1] sm:$0xff]
      %v7528 = vld [vmem:[#allocation3 + $0xa9] sm:$0xff]
      %v7529 = vld [vmem:[#allocation3 + $0xb1] sm:$0xff]
      %v7530 = vld [vmem:[#allocation3 + $0xb9] sm:$0xff]
      %v7531 = vld [vmem:[#allocation3 + $0xc1] sm:$0xff]
      %v7532 = vld [vmem:[#allocation3 + $0xc9] sm:$0xff]
      %v7533 = vld [vmem:[#allocation3 + $0xd1] sm:$0xff]
      %v7534 = vld [vmem:[#allocation3 + $0xd9] sm:$0xff]
      %v7535 = vld [vmem:[#allocation3 + $0xe1] sm:$0xff]
      %v7536 = vld [vmem:[#allocation3 + $0xe9] sm:$0xff]
      %v7537 = vld [vmem:[#allocation3 + $0xf1] sm:$0xff]
      %v7538 = vld [vmem:[#allocation3 + $0xf9] sm:$0xff]
      %v7539 = vld [vmem:[#allocation3 + $0x101] sm:$0xff]
      %v7540 = vld [vmem:[#allocation3 + $0x109] sm:$0xff]
      %v7541 = vld [vmem:[#allocation3 + $0x111] sm:$0xff]
      %v7542 = vld [vmem:[#allocation3 + $0x119] sm:$0xff]
      %v7543 = vld [vmem:[#allocation3 + $0x121] sm:$0xff]
      %v7544 = vld [vmem:[#allocation3 + $0x129] sm:$0xff]
      %v7545 = vld [vmem:[#allocation3 + $0x131] sm:$0xff]
      %v7546 = vld [vmem:[#allocation3 + $0x139] sm:$0xff]
      %v7547 = vld [vmem:[#allocation3 + $0x141] sm:$0xff]
      %v7548 = vld [vmem:[#allocation3 + $0x149] sm:$0xff]
      %v7549 = vld [vmem:[#allocation3 + $0x151] sm:$0xff]
      %v7550 = vld [vmem:[#allocation3 + $0x159] sm:$0xff]
      %v7551 = vpack.c.bf16 %v7511, %v7510
      %v7552 = vpack.c.bf16 %v7513, %v7512
      %v7553 = vpack.c.bf16 %v7515, %v7514
      %v7554 = vpack.c.bf16 %v7517, %v7516
      %v7555 = vpack.c.bf16 %v7519, %v7518
      %v7556 = vpack.c.bf16 %v7521, %v7520
      %v7557 = vpack.c.bf16 %v7523, %v7522
      %v7558 = vpack.c.bf16 %v7525, %v7524
      %v7559 = vpack.c.bf16 %v7527, %v7526
      %v7560 = vpack.c.bf16 %v7529, %v7528
      %v7561 = vpack.c.bf16 %v7531, %v7530
      %v7562 = vpack.c.bf16 %v7533, %v7532
      %v7563 = vpack.c.bf16 %v7535, %v7534
      %v7564 = vpack.c.bf16 %v7537, %v7536
      %v7565 = vpack.c.bf16 %v7539, %v7538
      %v7566 = vpack.c.bf16 %v7541, %v7540
      %v7567 = vpack.c.bf16 %v7543, %v7542
      %v7568 = vpack.c.bf16 %v7545, %v7544
      %v7569 = vpack.c.bf16 %v7547, %v7546
      %v7570 = vpack.c.bf16 %v7549, %v7548
      %v7571 = vpack.c.bf16 %v7550, %v7550
      %s7572 = scalar_lea.vmem %s3, 80
      %v7573 = vld [vmem:[%s7572] sm:$0xf]
      %v7574 = vld [vmem:[%s7572 + $0x4] sm:$0xf]
      %v7575 = vld [vmem:[%s7572 + $0x8] sm:$0xf]
      %v7576 = vld [vmem:[%s7572 + $0xc] sm:$0xf]
      %v7581 = vunpack.c.l.b16 %v7573
      %v7582 = vunpack.c.l.b16 %v7574
      %v7583 = vunpack.c.l.b16 %v7575
      %v7584 = vunpack.c.l.b16 %v7576
      %v7585 = vpack.c.b16 %v7582, %v7581
      %v7586 = vpack.c.b16 %v7584, %v7583
      %v7590 = vsel %vm6071, %v7551, 0
      %v7593 = vsel %vm6071, %v7552, 0
      %v7596 = vsel %vm6071, %v7553, 0
      %v7599 = vsel %vm6071, %v7554, 0
      %v7602 = vsel %vm6071, %v7555, 0
      %v7605 = vsel %vm6071, %v7556, 0
      %v7608 = vsel %vm6071, %v7557, 0
      %v7611 = vsel %vm6071, %v7558, 0
      %v7614 = vsel %vm6071, %v7559, 0
      %v7617 = vsel %vm6071, %v7560, 0
      %v7620 = vsel %vm6071, %v7561, 0
      %v7623 = vsel %vm6071, %v7562, 0
      %v7626 = vsel %vm6071, %v7563, 0
      %v7629 = vsel %vm6071, %v7564, 0
      %v7632 = vsel %vm6071, %v7565, 0
      %v7635 = vsel %vm6071, %v7566, 0
      %v7638 = vsel %vm6071, %v7567, 0
      %v7641 = vsel %vm6071, %v7568, 0
      %v7644 = vsel %vm6071, %v7569, 0
      %v7647 = vsel %vm6071, %v7570, 0
      %v7650 = vsel %vm6071, %v7571, 0
      %7652 = vmatpush.bf16.msra.mxu0 0
      %7653 = vmatpush.bf16.msra.mxu0 0
      %7654 = vmatpush.bf16.msra.mxu0 0
      %7655 = vmatpush.bf16.msra.mxu0 0
      %7656 = vmatpush.bf16.msra.mxu0 0
      %7657 = vmatpush.bf16.msra.mxu0 0
      %7658 = vmatpush.bf16.msra.mxu0 %v7586
      %7659 = vmatpush.bf16.msra.mxu0 %v7585
      %7660 = vmatmul.bf16.gmra.mxu0 %v7590
      %v7661 = vpop.f32.mrf.mxu0
      %v7662 = vadd.f32 0.0, %v7661
      %v7663 = vpop.f32.mrf.mxu0
      %v7664 = vadd.f32 0.0, %v7663
      %7665 = vmatmul.bf16.gmra.mxu0 %v7593
      %v7666 = vpop.f32.mrf.mxu0
      %v7667 = vadd.f32 0.0, %v7666
      %v7668 = vpop.f32.mrf.mxu0
      %v7669 = vadd.f32 0.0, %v7668
      %7670 = vmatmul.bf16.gmra.mxu0 %v7596
      %v7671 = vpop.f32.mrf.mxu0
      %v7672 = vadd.f32 0.0, %v7671
      %v7673 = vpop.f32.mrf.mxu0
      %v7674 = vadd.f32 0.0, %v7673
      %7675 = vmatmul.bf16.gmra.mxu0 %v7599
      %v7676 = vpop.f32.mrf.mxu0
      %v7677 = vadd.f32 0.0, %v7676
      %v7678 = vpop.f32.mrf.mxu0
      %v7679 = vadd.f32 0.0, %v7678
      %7680 = vmatmul.bf16.gmra.mxu0 %v7602
      %v7681 = vpop.f32.mrf.mxu0
      %v7682 = vadd.f32 0.0, %v7681
      %v7683 = vpop.f32.mrf.mxu0
      %v7684 = vadd.f32 0.0, %v7683
      %7685 = vmatmul.bf16.gmra.mxu0 %v7605
      %v7686 = vpop.f32.mrf.mxu0
      %v7687 = vadd.f32 0.0, %v7686
      %v7688 = vpop.f32.mrf.mxu0
      %v7689 = vadd.f32 0.0, %v7688
      %7690 = vmatmul.bf16.gmra.mxu0 %v7608
      %v7691 = vpop.f32.mrf.mxu0
      %v7692 = vadd.f32 0.0, %v7691
      %v7693 = vpop.f32.mrf.mxu0
      %v7694 = vadd.f32 0.0, %v7693
      %7695 = vmatmul.bf16.gmra.mxu0 %v7611
      %v7696 = vpop.f32.mrf.mxu0
      %v7697 = vadd.f32 0.0, %v7696
      %v7698 = vpop.f32.mrf.mxu0
      %v7699 = vadd.f32 0.0, %v7698
      %7700 = vmatmul.bf16.gmra.mxu0 %v7614
      %v7701 = vpop.f32.mrf.mxu0
      %v7702 = vadd.f32 0.0, %v7701
      %v7703 = vpop.f32.mrf.mxu0
      %v7704 = vadd.f32 0.0, %v7703
      %7705 = vmatmul.bf16.gmra.mxu0 %v7617
      %v7706 = vpop.f32.mrf.mxu0
      %v7707 = vadd.f32 0.0, %v7706
      %v7708 = vpop.f32.mrf.mxu0
      %v7709 = vadd.f32 0.0, %v7708
      %7710 = vmatmul.bf16.gmra.mxu0 %v7620
      %v7711 = vpop.f32.mrf.mxu0
      %v7712 = vadd.f32 0.0, %v7711
      %v7713 = vpop.f32.mrf.mxu0
      %v7714 = vadd.f32 0.0, %v7713
      %7715 = vmatmul.bf16.gmra.mxu0 %v7623
      %v7716 = vpop.f32.mrf.mxu0
      %v7717 = vadd.f32 0.0, %v7716
      %v7718 = vpop.f32.mrf.mxu0
      %v7719 = vadd.f32 0.0, %v7718
      %7720 = vmatmul.bf16.gmra.mxu0 %v7626
      %v7721 = vpop.f32.mrf.mxu0
      %v7722 = vadd.f32 0.0, %v7721
      %v7723 = vpop.f32.mrf.mxu0
      %v7724 = vadd.f32 0.0, %v7723
      %7725 = vmatmul.bf16.gmra.mxu0 %v7629
      %v7726 = vpop.f32.mrf.mxu0
      %v7727 = vadd.f32 0.0, %v7726
      %v7728 = vpop.f32.mrf.mxu0
      %v7729 = vadd.f32 0.0, %v7728
      %7730 = vmatmul.bf16.gmra.mxu0 %v7632
      %v7731 = vpop.f32.mrf.mxu0
      %v7732 = vadd.f32 0.0, %v7731
      %v7733 = vpop.f32.mrf.mxu0
      %v7734 = vadd.f32 0.0, %v7733
      %7735 = vmatmul.bf16.gmra.mxu0 %v7635
      %v7736 = vpop.f32.mrf.mxu0
      %v7737 = vadd.f32 0.0, %v7736
      %v7738 = vpop.f32.mrf.mxu0
      %v7739 = vadd.f32 0.0, %v7738
      %7740 = vmatmul.bf16.gmra.mxu0 %v7638
      %v7741 = vpop.f32.mrf.mxu0
      %v7742 = vadd.f32 0.0, %v7741
      %v7743 = vpop.f32.mrf.mxu0
      %v7744 = vadd.f32 0.0, %v7743
      %7745 = vmatmul.bf16.gmra.mxu0 %v7641
      %v7746 = vpop.f32.mrf.mxu0
      %v7747 = vadd.f32 0.0, %v7746
      %v7748 = vpop.f32.mrf.mxu0
      %v7749 = vadd.f32 0.0, %v7748
      %7750 = vmatmul.bf16.gmra.mxu0 %v7644
      %v7751 = vpop.f32.mrf.mxu0
      %v7752 = vadd.f32 0.0, %v7751
      %v7753 = vpop.f32.mrf.mxu0
      %v7754 = vadd.f32 0.0, %v7753
      %7755 = vmatmul.bf16.gmra.mxu0 %v7647
      %v7756 = vpop.f32.mrf.mxu0
      %v7757 = vadd.f32 0.0, %v7756
      %v7758 = vpop.f32.mrf.mxu0
      %v7759 = vadd.f32 0.0, %v7758
      %7760 = vmatmul.bf16.gmra.mxu0 %v7650
      %v7761 = vpop.f32.mrf.mxu0
      %v7762 = vadd.f32 0.0, %v7761
      %v7763 = vpop.f32.mrf.mxu0
      %7764 = vdwg.mxu0
      %v7765 = vadd.f32 %v7469, %v7662
      %v7766 = vadd.f32 %v7470, %v7664
      %v7767 = vadd.f32 %v7471, %v7667
      %v7768 = vadd.f32 %v7472, %v7669
      %v7769 = vadd.f32 %v7473, %v7672
      %v7770 = vadd.f32 %v7474, %v7674
      %v7771 = vadd.f32 %v7475, %v7677
      %v7772 = vadd.f32 %v7476, %v7679
      %v7773 = vadd.f32 %v7477, %v7682
      %v7774 = vadd.f32 %v7478, %v7684
      %v7775 = vadd.f32 %v7479, %v7687
      %v7776 = vadd.f32 %v7480, %v7689
      %v7777 = vadd.f32 %v7481, %v7692
      %v7778 = vadd.f32 %v7482, %v7694
      %v7779 = vadd.f32 %v7483, %v7697
      %v7780 = vadd.f32 %v7484, %v7699
      %v7781 = vadd.f32 %v7485, %v7702
      %v7782 = vadd.f32 %v7486, %v7704
      %v7783 = vadd.f32 %v7487, %v7707
      %v7784 = vadd.f32 %v7488, %v7709
      %v7785 = vadd.f32 %v7489, %v7712
      %v7786 = vadd.f32 %v7490, %v7714
      %v7787 = vadd.f32 %v7491, %v7717
      %v7788 = vadd.f32 %v7492, %v7719
      %v7789 = vadd.f32 %v7493, %v7722
      %v7790 = vadd.f32 %v7494, %v7724
      %v7791 = vadd.f32 %v7495, %v7727
      %v7792 = vadd.f32 %v7496, %v7729
      %v7793 = vadd.f32 %v7497, %v7732
      %v7794 = vadd.f32 %v7498, %v7734
      %v7795 = vadd.f32 %v7499, %v7737
      %v7796 = vadd.f32 %v7500, %v7739
      %v7797 = vadd.f32 %v7501, %v7742
      %v7798 = vadd.f32 %v7502, %v7744
      %v7799 = vadd.f32 %v7503, %v7747
      %v7800 = vadd.f32 %v7504, %v7749
      %v7801 = vadd.f32 %v7505, %v7752
      %v7802 = vadd.f32 %v7506, %v7754
      %v7803 = vadd.f32 %v7507, %v7757
      %v7804 = vadd.f32 %v7508, %v7759
      %v7805 = vadd.f32 %v7509, %v7762
      %v7806 = vld [vmem:[#allocation3 + $0x29] sm:$0xff]
      %v7807 = vld [vmem:[#allocation3 + $0x31] sm:$0xff]
      %v7808 = vld [vmem:[#allocation3 + $0x39] sm:$0xff]
      %v7809 = vld [vmem:[#allocation3 + $0x41] sm:$0xff]
      %v7810 = vld [vmem:[#allocation3 + $0x49] sm:$0xff]
      %v7811 = vld [vmem:[#allocation3 + $0x51] sm:$0xff]
      %v7812 = vld [vmem:[#allocation3 + $0x59] sm:$0xff]
      %v7813 = vld [vmem:[#allocation3 + $0x61] sm:$0xff]
      %v7814 = vld [vmem:[#allocation3 + $0x69] sm:$0xff]
      %v7815 = vld [vmem:[#allocation3 + $0x71] sm:$0xff]
      %v7816 = vld [vmem:[#allocation3 + $0x79] sm:$0xff]
      %v7817 = vld [vmem:[#allocation3 + $0x81] sm:$0xff]
      %v7818 = vld [vmem:[#allocation3 + $0x89] sm:$0xff]
      %v7819 = vld [vmem:[#allocation3 + $0x91] sm:$0xff]
      %v7820 = vld [vmem:[#allocation3 + $0x99] sm:$0xff]
      %v7821 = vld [vmem:[#allocation3 + $0xa1] sm:$0xff]
      %v7822 = vld [vmem:[#allocation3 + $0xa9] sm:$0xff]
      %v7823 = vld [vmem:[#allocation3 + $0xb1] sm:$0xff]
      %v7824 = vld [vmem:[#allocation3 + $0xb9] sm:$0xff]
      %v7825 = vld [vmem:[#allocation3 + $0xc1] sm:$0xff]
      %v7826 = vld [vmem:[#allocation3 + $0xc9] sm:$0xff]
      %v7827 = vld [vmem:[#allocation3 + $0xd1] sm:$0xff]
      %v7828 = vld [vmem:[#allocation3 + $0xd9] sm:$0xff]
      %v7829 = vld [vmem:[#allocation3 + $0xe1] sm:$0xff]
      %v7830 = vld [vmem:[#allocation3 + $0xe9] sm:$0xff]
      %v7831 = vld [vmem:[#allocation3 + $0xf1] sm:$0xff]
      %v7832 = vld [vmem:[#allocation3 + $0xf9] sm:$0xff]
      %v7833 = vld [vmem:[#allocation3 + $0x101] sm:$0xff]
      %v7834 = vld [vmem:[#allocation3 + $0x109] sm:$0xff]
      %v7835 = vld [vmem:[#allocation3 + $0x111] sm:$0xff]
      %v7836 = vld [vmem:[#allocation3 + $0x119] sm:$0xff]
      %v7837 = vld [vmem:[#allocation3 + $0x121] sm:$0xff]
      %v7838 = vld [vmem:[#allocation3 + $0x129] sm:$0xff]
      %v7839 = vld [vmem:[#allocation3 + $0x131] sm:$0xff]
      %v7840 = vld [vmem:[#allocation3 + $0x139] sm:$0xff]
      %v7841 = vld [vmem:[#allocation3 + $0x141] sm:$0xff]
      %v7842 = vld [vmem:[#allocation3 + $0x149] sm:$0xff]
      %v7843 = vld [vmem:[#allocation3 + $0x151] sm:$0xff]
      %v7844 = vld [vmem:[#allocation3 + $0x159] sm:$0xff]
      %v7845 = vld [vmem:[#allocation3 + $0x161] sm:$0xff]
      %v7846 = vld [vmem:[#allocation3 + $0x169] sm:$0xff]
      %v7847 = vpack.c.bf16 %v7807, %v7806
      %v7848 = vpack.c.bf16 %v7809, %v7808
      %v7849 = vpack.c.bf16 %v7811, %v7810
      %v7850 = vpack.c.bf16 %v7813, %v7812
      %v7851 = vpack.c.bf16 %v7815, %v7814
      %v7852 = vpack.c.bf16 %v7817, %v7816
      %v7853 = vpack.c.bf16 %v7819, %v7818
      %v7854 = vpack.c.bf16 %v7821, %v7820
      %v7855 = vpack.c.bf16 %v7823, %v7822
      %v7856 = vpack.c.bf16 %v7825, %v7824
      %v7857 = vpack.c.bf16 %v7827, %v7826
      %v7858 = vpack.c.bf16 %v7829, %v7828
      %v7859 = vpack.c.bf16 %v7831, %v7830
      %v7860 = vpack.c.bf16 %v7833, %v7832
      %v7861 = vpack.c.bf16 %v7835, %v7834
      %v7862 = vpack.c.bf16 %v7837, %v7836
      %v7863 = vpack.c.bf16 %v7839, %v7838
      %v7864 = vpack.c.bf16 %v7841, %v7840
      %v7865 = vpack.c.bf16 %v7843, %v7842
      %v7866 = vpack.c.bf16 %v7845, %v7844
      %v7867 = vpack.c.bf16 %v7846, %v7846
      %s7868 = scalar_lea.vmem %s3, 96
      %v7869 = vld [vmem:[%s7868] sm:$0xf]
      %v7870 = vld [vmem:[%s7868 + $0x4] sm:$0xf]
      %v7871 = vld [vmem:[%s7868 + $0x8] sm:$0xf]
      %v7872 = vld [vmem:[%s7868 + $0xc] sm:$0xf]
      %v7877 = vunpack.c.l.b16 %v7869
      %v7878 = vunpack.c.l.b16 %v7870
      %v7879 = vunpack.c.l.b16 %v7871
      %v7880 = vunpack.c.l.b16 %v7872
      %v7881 = vpack.c.b16 %v7878, %v7877
      %v7882 = vpack.c.b16 %v7880, %v7879
      %v7886 = vsel %vm6071, %v7847, 0
      %v7889 = vsel %vm6071, %v7848, 0
      %v7892 = vsel %vm6071, %v7849, 0
      %v7895 = vsel %vm6071, %v7850, 0
      %v7898 = vsel %vm6071, %v7851, 0
      %v7901 = vsel %vm6071, %v7852, 0
      %v7904 = vsel %vm6071, %v7853, 0
      %v7907 = vsel %vm6071, %v7854, 0
      %v7910 = vsel %vm6071, %v7855, 0
      %v7913 = vsel %vm6071, %v7856, 0
      %v7916 = vsel %vm6071, %v7857, 0
      %v7919 = vsel %vm6071, %v7858, 0
      %v7922 = vsel %vm6071, %v7859, 0
      %v7925 = vsel %vm6071, %v7860, 0
      %v7928 = vsel %vm6071, %v7861, 0
      %v7931 = vsel %vm6071, %v7862, 0
      %v7934 = vsel %vm6071, %v7863, 0
      %v7937 = vsel %vm6071, %v7864, 0
      %v7940 = vsel %vm6071, %v7865, 0
      %v7943 = vsel %vm6071, %v7866, 0
      %v7946 = vsel %vm6071, %v7867, 0
      %7948 = vmatpush.bf16.msra.mxu0 0
      %7949 = vmatpush.bf16.msra.mxu0 0
      %7950 = vmatpush.bf16.msra.mxu0 0
      %7951 = vmatpush.bf16.msra.mxu0 0
      %7952 = vmatpush.bf16.msra.mxu0 0
      %7953 = vmatpush.bf16.msra.mxu0 0
      %7954 = vmatpush.bf16.msra.mxu0 %v7882
      %7955 = vmatpush.bf16.msra.mxu0 %v7881
      %7956 = vmatmul.bf16.gmra.mxu0 %v7886
      %v7957 = vpop.f32.mrf.mxu0
      %v7958 = vadd.f32 0.0, %v7957
      %v7959 = vpop.f32.mrf.mxu0
      %v7960 = vadd.f32 0.0, %v7959
      %7961 = vmatmul.bf16.gmra.mxu0 %v7889
      %v7962 = vpop.f32.mrf.mxu0
      %v7963 = vadd.f32 0.0, %v7962
      %v7964 = vpop.f32.mrf.mxu0
      %v7965 = vadd.f32 0.0, %v7964
      %7966 = vmatmul.bf16.gmra.mxu0 %v7892
      %v7967 = vpop.f32.mrf.mxu0
      %v7968 = vadd.f32 0.0, %v7967
      %v7969 = vpop.f32.mrf.mxu0
      %v7970 = vadd.f32 0.0, %v7969
      %7971 = vmatmul.bf16.gmra.mxu0 %v7895
      %v7972 = vpop.f32.mrf.mxu0
      %v7973 = vadd.f32 0.0, %v7972
      %v7974 = vpop.f32.mrf.mxu0
      %v7975 = vadd.f32 0.0, %v7974
      %7976 = vmatmul.bf16.gmra.mxu0 %v7898
      %v7977 = vpop.f32.mrf.mxu0
      %v7978 = vadd.f32 0.0, %v7977
      %v7979 = vpop.f32.mrf.mxu0
      %v7980 = vadd.f32 0.0, %v7979
      %7981 = vmatmul.bf16.gmra.mxu0 %v7901
      %v7982 = vpop.f32.mrf.mxu0
      %v7983 = vadd.f32 0.0, %v7982
      %v7984 = vpop.f32.mrf.mxu0
      %v7985 = vadd.f32 0.0, %v7984
      %7986 = vmatmul.bf16.gmra.mxu0 %v7904
      %v7987 = vpop.f32.mrf.mxu0
      %v7988 = vadd.f32 0.0, %v7987
      %v7989 = vpop.f32.mrf.mxu0
      %v7990 = vadd.f32 0.0, %v7989
      %7991 = vmatmul.bf16.gmra.mxu0 %v7907
      %v7992 = vpop.f32.mrf.mxu0
      %v7993 = vadd.f32 0.0, %v7992
      %v7994 = vpop.f32.mrf.mxu0
      %v7995 = vadd.f32 0.0, %v7994
      %7996 = vmatmul.bf16.gmra.mxu0 %v7910
      %v7997 = vpop.f32.mrf.mxu0
      %v7998 = vadd.f32 0.0, %v7997
      %v7999 = vpop.f32.mrf.mxu0
      %v8000 = vadd.f32 0.0, %v7999
      %8001 = vmatmul.bf16.gmra.mxu0 %v7913
      %v8002 = vpop.f32.mrf.mxu0
      %v8003 = vadd.f32 0.0, %v8002
      %v8004 = vpop.f32.mrf.mxu0
      %v8005 = vadd.f32 0.0, %v8004
      %8006 = vmatmul.bf16.gmra.mxu0 %v7916
      %v8007 = vpop.f32.mrf.mxu0
      %v8008 = vadd.f32 0.0, %v8007
      %v8009 = vpop.f32.mrf.mxu0
      %v8010 = vadd.f32 0.0, %v8009
      %8011 = vmatmul.bf16.gmra.mxu0 %v7919
      %v8012 = vpop.f32.mrf.mxu0
      %v8013 = vadd.f32 0.0, %v8012
      %v8014 = vpop.f32.mrf.mxu0
      %v8015 = vadd.f32 0.0, %v8014
      %8016 = vmatmul.bf16.gmra.mxu0 %v7922
      %v8017 = vpop.f32.mrf.mxu0
      %v8018 = vadd.f32 0.0, %v8017
      %v8019 = vpop.f32.mrf.mxu0
      %v8020 = vadd.f32 0.0, %v8019
      %8021 = vmatmul.bf16.gmra.mxu0 %v7925
      %v8022 = vpop.f32.mrf.mxu0
      %v8023 = vadd.f32 0.0, %v8022
      %v8024 = vpop.f32.mrf.mxu0
      %v8025 = vadd.f32 0.0, %v8024
      %8026 = vmatmul.bf16.gmra.mxu0 %v7928
      %v8027 = vpop.f32.mrf.mxu0
      %v8028 = vadd.f32 0.0, %v8027
      %v8029 = vpop.f32.mrf.mxu0
      %v8030 = vadd.f32 0.0, %v8029
      %8031 = vmatmul.bf16.gmra.mxu0 %v7931
      %v8032 = vpop.f32.mrf.mxu0
      %v8033 = vadd.f32 0.0, %v8032
      %v8034 = vpop.f32.mrf.mxu0
      %v8035 = vadd.f32 0.0, %v8034
      %8036 = vmatmul.bf16.gmra.mxu0 %v7934
      %v8037 = vpop.f32.mrf.mxu0
      %v8038 = vadd.f32 0.0, %v8037
      %v8039 = vpop.f32.mrf.mxu0
      %v8040 = vadd.f32 0.0, %v8039
      %8041 = vmatmul.bf16.gmra.mxu0 %v7937
      %v8042 = vpop.f32.mrf.mxu0
      %v8043 = vadd.f32 0.0, %v8042
      %v8044 = vpop.f32.mrf.mxu0
      %v8045 = vadd.f32 0.0, %v8044
      %8046 = vmatmul.bf16.gmra.mxu0 %v7940
      %v8047 = vpop.f32.mrf.mxu0
      %v8048 = vadd.f32 0.0, %v8047
      %v8049 = vpop.f32.mrf.mxu0
      %v8050 = vadd.f32 0.0, %v8049
      %8051 = vmatmul.bf16.gmra.mxu0 %v7943
      %v8052 = vpop.f32.mrf.mxu0
      %v8053 = vadd.f32 0.0, %v8052
      %v8054 = vpop.f32.mrf.mxu0
      %v8055 = vadd.f32 0.0, %v8054
      %8056 = vmatmul.bf16.gmra.mxu0 %v7946
      %v8057 = vpop.f32.mrf.mxu0
      %v8058 = vadd.f32 0.0, %v8057
      %v8059 = vpop.f32.mrf.mxu0
      %8060 = vdwg.mxu0
      %v8061 = vadd.f32 %v7765, %v7958
      %v8062 = vadd.f32 %v7766, %v7960
      %v8063 = vadd.f32 %v7767, %v7963
      %v8064 = vadd.f32 %v7768, %v7965
      %v8065 = vadd.f32 %v7769, %v7968
      %v8066 = vadd.f32 %v7770, %v7970
      %v8067 = vadd.f32 %v7771, %v7973
      %v8068 = vadd.f32 %v7772, %v7975
      %v8069 = vadd.f32 %v7773, %v7978
      %v8070 = vadd.f32 %v7774, %v7980
      %v8071 = vadd.f32 %v7775, %v7983
      %v8072 = vadd.f32 %v7776, %v7985
      %v8073 = vadd.f32 %v7777, %v7988
      %v8074 = vadd.f32 %v7778, %v7990
      %v8075 = vadd.f32 %v7779, %v7993
      %v8076 = vadd.f32 %v7780, %v7995
      %v8077 = vadd.f32 %v7781, %v7998
      %v8078 = vadd.f32 %v7782, %v8000
      %v8079 = vadd.f32 %v7783, %v8003
      %v8080 = vadd.f32 %v7784, %v8005
      %v8081 = vadd.f32 %v7785, %v8008
      %v8082 = vadd.f32 %v7786, %v8010
      %v8083 = vadd.f32 %v7787, %v8013
      %v8084 = vadd.f32 %v7788, %v8015
      %v8085 = vadd.f32 %v7789, %v8018
      %v8086 = vadd.f32 %v7790, %v8020
      %v8087 = vadd.f32 %v7791, %v8023
      %v8088 = vadd.f32 %v7792, %v8025
      %v8089 = vadd.f32 %v7793, %v8028
      %v8090 = vadd.f32 %v7794, %v8030
      %v8091 = vadd.f32 %v7795, %v8033
      %v8092 = vadd.f32 %v7796, %v8035
      %v8093 = vadd.f32 %v7797, %v8038
      %v8094 = vadd.f32 %v7798, %v8040
      %v8095 = vadd.f32 %v7799, %v8043
      %v8096 = vadd.f32 %v7800, %v8045
      %v8097 = vadd.f32 %v7801, %v8048
      %v8098 = vadd.f32 %v7802, %v8050
      %v8099 = vadd.f32 %v7803, %v8053
      %v8100 = vadd.f32 %v7804, %v8055
      %v8101 = vadd.f32 %v7805, %v8058
      %v8102 = vld [vmem:[#allocation3 + $0x2a] sm:$0xff]
      %v8103 = vld [vmem:[#allocation3 + $0x32] sm:$0xff]
      %v8104 = vld [vmem:[#allocation3 + $0x3a] sm:$0xff]
      %v8105 = vld [vmem:[#allocation3 + $0x42] sm:$0xff]
      %v8106 = vld [vmem:[#allocation3 + $0x4a] sm:$0xff]
      %v8107 = vld [vmem:[#allocation3 + $0x52] sm:$0xff]
      %v8108 = vld [vmem:[#allocation3 + $0x5a] sm:$0xff]
      %v8109 = vld [vmem:[#allocation3 + $0x62] sm:$0xff]
      %v8110 = vld [vmem:[#allocation3 + $0x6a] sm:$0xff]
      %v8111 = vld [vmem:[#allocation3 + $0x72] sm:$0xff]
      %v8112 = vld [vmem:[#allocation3 + $0x7a] sm:$0xff]
      %v8113 = vld [vmem:[#allocation3 + $0x82] sm:$0xff]
      %v8114 = vld [vmem:[#allocation3 + $0x8a] sm:$0xff]
      %v8115 = vld [vmem:[#allocation3 + $0x92] sm:$0xff]
      %v8116 = vld [vmem:[#allocation3 + $0x9a] sm:$0xff]
      %v8117 = vld [vmem:[#allocation3 + $0xa2] sm:$0xff]
      %v8118 = vld [vmem:[#allocation3 + $0xaa] sm:$0xff]
      %v8119 = vld [vmem:[#allocation3 + $0xb2] sm:$0xff]
      %v8120 = vld [vmem:[#allocation3 + $0xba] sm:$0xff]
      %v8121 = vld [vmem:[#allocation3 + $0xc2] sm:$0xff]
      %v8122 = vld [vmem:[#allocation3 + $0xca] sm:$0xff]
      %v8123 = vld [vmem:[#allocation3 + $0xd2] sm:$0xff]
      %v8124 = vld [vmem:[#allocation3 + $0xda] sm:$0xff]
      %v8125 = vld [vmem:[#allocation3 + $0xe2] sm:$0xff]
      %v8126 = vld [vmem:[#allocation3 + $0xea] sm:$0xff]
      %v8127 = vld [vmem:[#allocation3 + $0xf2] sm:$0xff]
      %v8128 = vld [vmem:[#allocation3 + $0xfa] sm:$0xff]
      %v8129 = vld [vmem:[#allocation3 + $0x102] sm:$0xff]
      %v8130 = vld [vmem:[#allocation3 + $0x10a] sm:$0xff]
      %v8131 = vld [vmem:[#allocation3 + $0x112] sm:$0xff]
      %v8132 = vld [vmem:[#allocation3 + $0x11a] sm:$0xff]
      %v8133 = vld [vmem:[#allocation3 + $0x122] sm:$0xff]
      %v8134 = vld [vmem:[#allocation3 + $0x12a] sm:$0xff]
      %v8135 = vld [vmem:[#allocation3 + $0x132] sm:$0xff]
      %v8136 = vld [vmem:[#allocation3 + $0x13a] sm:$0xff]
      %v8137 = vld [vmem:[#allocation3 + $0x142] sm:$0xff]
      %v8138 = vld [vmem:[#allocation3 + $0x14a] sm:$0xff]
      %v8139 = vld [vmem:[#allocation3 + $0x152] sm:$0xff]
      %v8140 = vld [vmem:[#allocation3 + $0x15a] sm:$0xff]
      %v8141 = vld [vmem:[#allocation3 + $0x162] sm:$0xff]
      %v8142 = vld [vmem:[#allocation3 + $0x16a] sm:$0xff]
      %v8143 = vpack.c.bf16 %v8103, %v8102
      %v8144 = vpack.c.bf16 %v8105, %v8104
      %v8145 = vpack.c.bf16 %v8107, %v8106
      %v8146 = vpack.c.bf16 %v8109, %v8108
      %v8147 = vpack.c.bf16 %v8111, %v8110
      %v8148 = vpack.c.bf16 %v8113, %v8112
      %v8149 = vpack.c.bf16 %v8115, %v8114
      %v8150 = vpack.c.bf16 %v8117, %v8116
      %v8151 = vpack.c.bf16 %v8119, %v8118
      %v8152 = vpack.c.bf16 %v8121, %v8120
      %v8153 = vpack.c.bf16 %v8123, %v8122
      %v8154 = vpack.c.bf16 %v8125, %v8124
      %v8155 = vpack.c.bf16 %v8127, %v8126
      %v8156 = vpack.c.bf16 %v8129, %v8128
      %v8157 = vpack.c.bf16 %v8131, %v8130
      %v8158 = vpack.c.bf16 %v8133, %v8132
      %v8159 = vpack.c.bf16 %v8135, %v8134
      %v8160 = vpack.c.bf16 %v8137, %v8136
      %v8161 = vpack.c.bf16 %v8139, %v8138
      %v8162 = vpack.c.bf16 %v8141, %v8140
      %v8163 = vpack.c.bf16 %v8142, %v8142
      %s8164 = scalar_lea.vmem %s3, 112
      %v8165 = vld [vmem:[%s8164] sm:$0xf]
      %v8166 = vld [vmem:[%s8164 + $0x4] sm:$0xf]
      %v8167 = vld [vmem:[%s8164 + $0x8] sm:$0xf]
      %v8168 = vld [vmem:[%s8164 + $0xc] sm:$0xf]
      %v8173 = vunpack.c.l.b16 %v8165
      %v8174 = vunpack.c.l.b16 %v8166
      %v8175 = vunpack.c.l.b16 %v8167
      %v8176 = vunpack.c.l.b16 %v8168
      %v8177 = vpack.c.b16 %v8174, %v8173
      %v8178 = vpack.c.b16 %v8176, %v8175
      %v8182 = vsel %vm6071, %v8143, 0
      %v8185 = vsel %vm6071, %v8144, 0
      %v8188 = vsel %vm6071, %v8145, 0
      %v8191 = vsel %vm6071, %v8146, 0
      %v8194 = vsel %vm6071, %v8147, 0
      %v8197 = vsel %vm6071, %v8148, 0
      %v8200 = vsel %vm6071, %v8149, 0
      %v8203 = vsel %vm6071, %v8150, 0
      %v8206 = vsel %vm6071, %v8151, 0
      %v8209 = vsel %vm6071, %v8152, 0
      %v8212 = vsel %vm6071, %v8153, 0
      %v8215 = vsel %vm6071, %v8154, 0
      %v8218 = vsel %vm6071, %v8155, 0
      %v8221 = vsel %vm6071, %v8156, 0
      %v8224 = vsel %vm6071, %v8157, 0
      %v8227 = vsel %vm6071, %v8158, 0
      %v8230 = vsel %vm6071, %v8159, 0
      %v8233 = vsel %vm6071, %v8160, 0
      %v8236 = vsel %vm6071, %v8161, 0
      %v8239 = vsel %vm6071, %v8162, 0
      %v8242 = vsel %vm6071, %v8163, 0
      %8244 = vmatpush.bf16.msra.mxu0 0
      %8245 = vmatpush.bf16.msra.mxu0 0
      %8246 = vmatpush.bf16.msra.mxu0 0
      %8247 = vmatpush.bf16.msra.mxu0 0
      %8248 = vmatpush.bf16.msra.mxu0 0
      %8249 = vmatpush.bf16.msra.mxu0 0
      %8250 = vmatpush.bf16.msra.mxu0 %v8178
      %8251 = vmatpush.bf16.msra.mxu0 %v8177
      %8252 = vmatmul.bf16.gmra.mxu0 %v8182
      %v8253 = vpop.f32.mrf.mxu0
      %v8254 = vadd.f32 0.0, %v8253
      %v8255 = vpop.f32.mrf.mxu0
      %v8256 = vadd.f32 0.0, %v8255
      %8257 = vmatmul.bf16.gmra.mxu0 %v8185
      %v8258 = vpop.f32.mrf.mxu0
      %v8259 = vadd.f32 0.0, %v8258
      %v8260 = vpop.f32.mrf.mxu0
      %v8261 = vadd.f32 0.0, %v8260
      %8262 = vmatmul.bf16.gmra.mxu0 %v8188
      %v8263 = vpop.f32.mrf.mxu0
      %v8264 = vadd.f32 0.0, %v8263
      %v8265 = vpop.f32.mrf.mxu0
      %v8266 = vadd.f32 0.0, %v8265
      %8267 = vmatmul.bf16.gmra.mxu0 %v8191
      %v8268 = vpop.f32.mrf.mxu0
      %v8269 = vadd.f32 0.0, %v8268
      %v8270 = vpop.f32.mrf.mxu0
      %v8271 = vadd.f32 0.0, %v8270
      %8272 = vmatmul.bf16.gmra.mxu0 %v8194
      %v8273 = vpop.f32.mrf.mxu0
      %v8274 = vadd.f32 0.0, %v8273
      %v8275 = vpop.f32.mrf.mxu0
      %v8276 = vadd.f32 0.0, %v8275
      %8277 = vmatmul.bf16.gmra.mxu0 %v8197
      %v8278 = vpop.f32.mrf.mxu0
      %v8279 = vadd.f32 0.0, %v8278
      %v8280 = vpop.f32.mrf.mxu0
      %v8281 = vadd.f32 0.0, %v8280
      %8282 = vmatmul.bf16.gmra.mxu0 %v8200
      %v8283 = vpop.f32.mrf.mxu0
      %v8284 = vadd.f32 0.0, %v8283
      %v8285 = vpop.f32.mrf.mxu0
      %v8286 = vadd.f32 0.0, %v8285
      %8287 = vmatmul.bf16.gmra.mxu0 %v8203
      %v8288 = vpop.f32.mrf.mxu0
      %v8289 = vadd.f32 0.0, %v8288
      %v8290 = vpop.f32.mrf.mxu0
      %v8291 = vadd.f32 0.0, %v8290
      %8292 = vmatmul.bf16.gmra.mxu0 %v8206
      %v8293 = vpop.f32.mrf.mxu0
      %v8294 = vadd.f32 0.0, %v8293
      %v8295 = vpop.f32.mrf.mxu0
      %v8296 = vadd.f32 0.0, %v8295
      %8297 = vmatmul.bf16.gmra.mxu0 %v8209
      %v8298 = vpop.f32.mrf.mxu0
      %v8299 = vadd.f32 0.0, %v8298
      %v8300 = vpop.f32.mrf.mxu0
      %v8301 = vadd.f32 0.0, %v8300
      %8302 = vmatmul.bf16.gmra.mxu0 %v8212
      %v8303 = vpop.f32.mrf.mxu0
      %v8304 = vadd.f32 0.0, %v8303
      %v8305 = vpop.f32.mrf.mxu0
      %v8306 = vadd.f32 0.0, %v8305
      %8307 = vmatmul.bf16.gmra.mxu0 %v8215
      %v8308 = vpop.f32.mrf.mxu0
      %v8309 = vadd.f32 0.0, %v8308
      %v8310 = vpop.f32.mrf.mxu0
      %v8311 = vadd.f32 0.0, %v8310
      %8312 = vmatmul.bf16.gmra.mxu0 %v8218
      %v8313 = vpop.f32.mrf.mxu0
      %v8314 = vadd.f32 0.0, %v8313
      %v8315 = vpop.f32.mrf.mxu0
      %v8316 = vadd.f32 0.0, %v8315
      %8317 = vmatmul.bf16.gmra.mxu0 %v8221
      %v8318 = vpop.f32.mrf.mxu0
      %v8319 = vadd.f32 0.0, %v8318
      %v8320 = vpop.f32.mrf.mxu0
      %v8321 = vadd.f32 0.0, %v8320
      %8322 = vmatmul.bf16.gmra.mxu0 %v8224
      %v8323 = vpop.f32.mrf.mxu0
      %v8324 = vadd.f32 0.0, %v8323
      %v8325 = vpop.f32.mrf.mxu0
      %v8326 = vadd.f32 0.0, %v8325
      %8327 = vmatmul.bf16.gmra.mxu0 %v8227
      %v8328 = vpop.f32.mrf.mxu0
      %v8329 = vadd.f32 0.0, %v8328
      %v8330 = vpop.f32.mrf.mxu0
      %v8331 = vadd.f32 0.0, %v8330
      %8332 = vmatmul.bf16.gmra.mxu0 %v8230
      %v8333 = vpop.f32.mrf.mxu0
      %v8334 = vadd.f32 0.0, %v8333
      %v8335 = vpop.f32.mrf.mxu0
      %v8336 = vadd.f32 0.0, %v8335
      %8337 = vmatmul.bf16.gmra.mxu0 %v8233
      %v8338 = vpop.f32.mrf.mxu0
      %v8339 = vadd.f32 0.0, %v8338
      %v8340 = vpop.f32.mrf.mxu0
      %v8341 = vadd.f32 0.0, %v8340
      %8342 = vmatmul.bf16.gmra.mxu0 %v8236
      %v8343 = vpop.f32.mrf.mxu0
      %v8344 = vadd.f32 0.0, %v8343
      %v8345 = vpop.f32.mrf.mxu0
      %v8346 = vadd.f32 0.0, %v8345
      %8347 = vmatmul.bf16.gmra.mxu0 %v8239
      %v8348 = vpop.f32.mrf.mxu0
      %v8349 = vadd.f32 0.0, %v8348
      %v8350 = vpop.f32.mrf.mxu0
      %v8351 = vadd.f32 0.0, %v8350
      %8352 = vmatmul.bf16.gmra.mxu0 %v8242
      %v8353 = vpop.f32.mrf.mxu0
      %v8354 = vadd.f32 0.0, %v8353
      %v8355 = vpop.f32.mrf.mxu0
      %8356 = vdwg.mxu0
      %v8357 = vadd.f32 %v8061, %v8254
      %v8358 = vadd.f32 %v8062, %v8256
      %v8359 = vadd.f32 %v8063, %v8259
      %v8360 = vadd.f32 %v8064, %v8261
      %v8361 = vadd.f32 %v8065, %v8264
      %v8362 = vadd.f32 %v8066, %v8266
      %v8363 = vadd.f32 %v8067, %v8269
      %v8364 = vadd.f32 %v8068, %v8271
      %v8365 = vadd.f32 %v8069, %v8274
      %v8366 = vadd.f32 %v8070, %v8276
      %v8367 = vadd.f32 %v8071, %v8279
      %v8368 = vadd.f32 %v8072, %v8281
      %v8369 = vadd.f32 %v8073, %v8284
      %v8370 = vadd.f32 %v8074, %v8286
      %v8371 = vadd.f32 %v8075, %v8289
      %v8372 = vadd.f32 %v8076, %v8291
      %v8373 = vadd.f32 %v8077, %v8294
      %v8374 = vadd.f32 %v8078, %v8296
      %v8375 = vadd.f32 %v8079, %v8299
      %v8376 = vadd.f32 %v8080, %v8301
      %v8377 = vadd.f32 %v8081, %v8304
      %v8378 = vadd.f32 %v8082, %v8306
      %v8379 = vadd.f32 %v8083, %v8309
      %v8380 = vadd.f32 %v8084, %v8311
      %v8381 = vadd.f32 %v8085, %v8314
      %v8382 = vadd.f32 %v8086, %v8316
      %v8383 = vadd.f32 %v8087, %v8319
      %v8384 = vadd.f32 %v8088, %v8321
      %v8385 = vadd.f32 %v8089, %v8324
      %v8386 = vadd.f32 %v8090, %v8326
      %v8387 = vadd.f32 %v8091, %v8329
      %v8388 = vadd.f32 %v8092, %v8331
      %v8389 = vadd.f32 %v8093, %v8334
      %v8390 = vadd.f32 %v8094, %v8336
      %v8391 = vadd.f32 %v8095, %v8339
      %v8392 = vadd.f32 %v8096, %v8341
      %v8393 = vadd.f32 %v8097, %v8344
      %v8394 = vadd.f32 %v8098, %v8346
      %v8395 = vadd.f32 %v8099, %v8349
      %v8396 = vadd.f32 %v8100, %v8351
      %v8397 = vadd.f32 %v8101, %v8354
      %v8398 = vld [vmem:[#allocation3 + $0x2b] sm:$0xff]
      %v8399 = vld [vmem:[#allocation3 + $0x33] sm:$0xff]
      %v8400 = vld [vmem:[#allocation3 + $0x3b] sm:$0xff]
      %v8401 = vld [vmem:[#allocation3 + $0x43] sm:$0xff]
      %v8402 = vld [vmem:[#allocation3 + $0x4b] sm:$0xff]
      %v8403 = vld [vmem:[#allocation3 + $0x53] sm:$0xff]
      %v8404 = vld [vmem:[#allocation3 + $0x5b] sm:$0xff]
      %v8405 = vld [vmem:[#allocation3 + $0x63] sm:$0xff]
      %v8406 = vld [vmem:[#allocation3 + $0x6b] sm:$0xff]
      %v8407 = vld [vmem:[#allocation3 + $0x73] sm:$0xff]
      %v8408 = vld [vmem:[#allocation3 + $0x7b] sm:$0xff]
      %v8409 = vld [vmem:[#allocation3 + $0x83] sm:$0xff]
      %v8410 = vld [vmem:[#allocation3 + $0x8b] sm:$0xff]
      %v8411 = vld [vmem:[#allocation3 + $0x93] sm:$0xff]
      %v8412 = vld [vmem:[#allocation3 + $0x9b] sm:$0xff]
      %v8413 = vld [vmem:[#allocation3 + $0xa3] sm:$0xff]
      %v8414 = vld [vmem:[#allocation3 + $0xab] sm:$0xff]
      %v8415 = vld [vmem:[#allocation3 + $0xb3] sm:$0xff]
      %v8416 = vld [vmem:[#allocation3 + $0xbb] sm:$0xff]
      %v8417 = vld [vmem:[#allocation3 + $0xc3] sm:$0xff]
      %v8418 = vld [vmem:[#allocation3 + $0xcb] sm:$0xff]
      %v8419 = vld [vmem:[#allocation3 + $0xd3] sm:$0xff]
      %v8420 = vld [vmem:[#allocation3 + $0xdb] sm:$0xff]
      %v8421 = vld [vmem:[#allocation3 + $0xe3] sm:$0xff]
      %v8422 = vld [vmem:[#allocation3 + $0xeb] sm:$0xff]
      %v8423 = vld [vmem:[#allocation3 + $0xf3] sm:$0xff]
      %v8424 = vld [vmem:[#allocation3 + $0xfb] sm:$0xff]
      %v8425 = vld [vmem:[#allocation3 + $0x103] sm:$0xff]
      %v8426 = vld [vmem:[#allocation3 + $0x10b] sm:$0xff]
      %v8427 = vld [vmem:[#allocation3 + $0x113] sm:$0xff]
      %v8428 = vld [vmem:[#allocation3 + $0x11b] sm:$0xff]
      %v8429 = vld [vmem:[#allocation3 + $0x123] sm:$0xff]
      %v8430 = vld [vmem:[#allocation3 + $0x12b] sm:$0xff]
      %v8431 = vld [vmem:[#allocation3 + $0x133] sm:$0xff]
      %v8432 = vld [vmem:[#allocation3 + $0x13b] sm:$0xff]
      %v8433 = vld [vmem:[#allocation3 + $0x143] sm:$0xff]
      %v8434 = vld [vmem:[#allocation3 + $0x14b] sm:$0xff]
      %v8435 = vld [vmem:[#allocation3 + $0x153] sm:$0xff]
      %v8436 = vld [vmem:[#allocation3 + $0x15b] sm:$0xff]
      %v8437 = vld [vmem:[#allocation3 + $0x163] sm:$0xff]
      %v8438 = vld [vmem:[#allocation3 + $0x16b] sm:$0xff]
      %v8439 = vpack.c.bf16 %v8399, %v8398
      %v8440 = vpack.c.bf16 %v8401, %v8400
      %v8441 = vpack.c.bf16 %v8403, %v8402
      %v8442 = vpack.c.bf16 %v8405, %v8404
      %v8443 = vpack.c.bf16 %v8407, %v8406
      %v8444 = vpack.c.bf16 %v8409, %v8408
      %v8445 = vpack.c.bf16 %v8411, %v8410
      %v8446 = vpack.c.bf16 %v8413, %v8412
      %v8447 = vpack.c.bf16 %v8415, %v8414
      %v8448 = vpack.c.bf16 %v8417, %v8416
      %v8449 = vpack.c.bf16 %v8419, %v8418
      %v8450 = vpack.c.bf16 %v8421, %v8420
      %v8451 = vpack.c.bf16 %v8423, %v8422
      %v8452 = vpack.c.bf16 %v8425, %v8424
      %v8453 = vpack.c.bf16 %v8427, %v8426
      %v8454 = vpack.c.bf16 %v8429, %v8428
      %v8455 = vpack.c.bf16 %v8431, %v8430
      %v8456 = vpack.c.bf16 %v8433, %v8432
      %v8457 = vpack.c.bf16 %v8435, %v8434
      %v8458 = vpack.c.bf16 %v8437, %v8436
      %v8459 = vpack.c.bf16 %v8438, %v8438
      %s8460 = scalar_lea.vmem %s3, 128
      %v8461 = vld [vmem:[%s8460] sm:$0xf]
      %v8462 = vld [vmem:[%s8460 + $0x4] sm:$0xf]
      %v8463 = vld [vmem:[%s8460 + $0x8] sm:$0xf]
      %v8464 = vld [vmem:[%s8460 + $0xc] sm:$0xf]
      %v8469 = vunpack.c.l.b16 %v8461
      %v8470 = vunpack.c.l.b16 %v8462
      %v8471 = vunpack.c.l.b16 %v8463
      %v8472 = vunpack.c.l.b16 %v8464
      %v8473 = vpack.c.b16 %v8470, %v8469
      %v8474 = vpack.c.b16 %v8472, %v8471
      %v8478 = vsel %vm6071, %v8439, 0
      %v8481 = vsel %vm6071, %v8440, 0
      %v8484 = vsel %vm6071, %v8441, 0
      %v8487 = vsel %vm6071, %v8442, 0
      %v8490 = vsel %vm6071, %v8443, 0
      %v8493 = vsel %vm6071, %v8444, 0
      %v8496 = vsel %vm6071, %v8445, 0
      %v8499 = vsel %vm6071, %v8446, 0
      %v8502 = vsel %vm6071, %v8447, 0
      %v8505 = vsel %vm6071, %v8448, 0
      %v8508 = vsel %vm6071, %v8449, 0
      %v8511 = vsel %vm6071, %v8450, 0
      %v8514 = vsel %vm6071, %v8451, 0
      %v8517 = vsel %vm6071, %v8452, 0
      %v8520 = vsel %vm6071, %v8453, 0
      %v8523 = vsel %vm6071, %v8454, 0
      %v8526 = vsel %vm6071, %v8455, 0
      %v8529 = vsel %vm6071, %v8456, 0
      %v8532 = vsel %vm6071, %v8457, 0
      %v8535 = vsel %vm6071, %v8458, 0
      %v8538 = vsel %vm6071, %v8459, 0
      %8540 = vmatpush.bf16.msra.mxu0 0
      %8541 = vmatpush.bf16.msra.mxu0 0
      %8542 = vmatpush.bf16.msra.mxu0 0
      %8543 = vmatpush.bf16.msra.mxu0 0
      %8544 = vmatpush.bf16.msra.mxu0 0
      %8545 = vmatpush.bf16.msra.mxu0 0
      %8546 = vmatpush.bf16.msra.mxu0 %v8474
      %8547 = vmatpush.bf16.msra.mxu0 %v8473
      %8548 = vmatmul.bf16.gmra.mxu0 %v8478
      %v8549 = vpop.f32.mrf.mxu0
      %v8550 = vadd.f32 0.0, %v8549
      %v8551 = vpop.f32.mrf.mxu0
      %v8552 = vadd.f32 0.0, %v8551
      %8553 = vmatmul.bf16.gmra.mxu0 %v8481
      %v8554 = vpop.f32.mrf.mxu0
      %v8555 = vadd.f32 0.0, %v8554
      %v8556 = vpop.f32.mrf.mxu0
      %v8557 = vadd.f32 0.0, %v8556
      %8558 = vmatmul.bf16.gmra.mxu0 %v8484
      %v8559 = vpop.f32.mrf.mxu0
      %v8560 = vadd.f32 0.0, %v8559
      %v8561 = vpop.f32.mrf.mxu0
      %v8562 = vadd.f32 0.0, %v8561
      %8563 = vmatmul.bf16.gmra.mxu0 %v8487
      %v8564 = vpop.f32.mrf.mxu0
      %v8565 = vadd.f32 0.0, %v8564
      %v8566 = vpop.f32.mrf.mxu0
      %v8567 = vadd.f32 0.0, %v8566
      %8568 = vmatmul.bf16.gmra.mxu0 %v8490
      %v8569 = vpop.f32.mrf.mxu0
      %v8570 = vadd.f32 0.0, %v8569
      %v8571 = vpop.f32.mrf.mxu0
      %v8572 = vadd.f32 0.0, %v8571
      %8573 = vmatmul.bf16.gmra.mxu0 %v8493
      %v8574 = vpop.f32.mrf.mxu0
      %v8575 = vadd.f32 0.0, %v8574
      %v8576 = vpop.f32.mrf.mxu0
      %v8577 = vadd.f32 0.0, %v8576
      %8578 = vmatmul.bf16.gmra.mxu0 %v8496
      %v8579 = vpop.f32.mrf.mxu0
      %v8580 = vadd.f32 0.0, %v8579
      %v8581 = vpop.f32.mrf.mxu0
      %v8582 = vadd.f32 0.0, %v8581
      %8583 = vmatmul.bf16.gmra.mxu0 %v8499
      %v8584 = vpop.f32.mrf.mxu0
      %v8585 = vadd.f32 0.0, %v8584
      %v8586 = vpop.f32.mrf.mxu0
      %v8587 = vadd.f32 0.0, %v8586
      %8588 = vmatmul.bf16.gmra.mxu0 %v8502
      %v8589 = vpop.f32.mrf.mxu0
      %v8590 = vadd.f32 0.0, %v8589
      %v8591 = vpop.f32.mrf.mxu0
      %v8592 = vadd.f32 0.0, %v8591
      %8593 = vmatmul.bf16.gmra.mxu0 %v8505
      %v8594 = vpop.f32.mrf.mxu0
      %v8595 = vadd.f32 0.0, %v8594
      %v8596 = vpop.f32.mrf.mxu0
      %v8597 = vadd.f32 0.0, %v8596
      %8598 = vmatmul.bf16.gmra.mxu0 %v8508
      %v8599 = vpop.f32.mrf.mxu0
      %v8600 = vadd.f32 0.0, %v8599
      %v8601 = vpop.f32.mrf.mxu0
      %v8602 = vadd.f32 0.0, %v8601
      %8603 = vmatmul.bf16.gmra.mxu0 %v8511
      %v8604 = vpop.f32.mrf.mxu0
      %v8605 = vadd.f32 0.0, %v8604
      %v8606 = vpop.f32.mrf.mxu0
      %v8607 = vadd.f32 0.0, %v8606
      %8608 = vmatmul.bf16.gmra.mxu0 %v8514
      %v8609 = vpop.f32.mrf.mxu0
      %v8610 = vadd.f32 0.0, %v8609
      %v8611 = vpop.f32.mrf.mxu0
      %v8612 = vadd.f32 0.0, %v8611
      %8613 = vmatmul.bf16.gmra.mxu0 %v8517
      %v8614 = vpop.f32.mrf.mxu0
      %v8615 = vadd.f32 0.0, %v8614
      %v8616 = vpop.f32.mrf.mxu0
      %v8617 = vadd.f32 0.0, %v8616
      %8618 = vmatmul.bf16.gmra.mxu0 %v8520
      %v8619 = vpop.f32.mrf.mxu0
      %v8620 = vadd.f32 0.0, %v8619
      %v8621 = vpop.f32.mrf.mxu0
      %v8622 = vadd.f32 0.0, %v8621
      %8623 = vmatmul.bf16.gmra.mxu0 %v8523
      %v8624 = vpop.f32.mrf.mxu0
      %v8625 = vadd.f32 0.0, %v8624
      %v8626 = vpop.f32.mrf.mxu0
      %v8627 = vadd.f32 0.0, %v8626
      %8628 = vmatmul.bf16.gmra.mxu0 %v8526
      %v8629 = vpop.f32.mrf.mxu0
      %v8630 = vadd.f32 0.0, %v8629
      %v8631 = vpop.f32.mrf.mxu0
      %v8632 = vadd.f32 0.0, %v8631
      %8633 = vmatmul.bf16.gmra.mxu0 %v8529
      %v8634 = vpop.f32.mrf.mxu0
      %v8635 = vadd.f32 0.0, %v8634
      %v8636 = vpop.f32.mrf.mxu0
      %v8637 = vadd.f32 0.0, %v8636
      %8638 = vmatmul.bf16.gmra.mxu0 %v8532
      %v8639 = vpop.f32.mrf.mxu0
      %v8640 = vadd.f32 0.0, %v8639
      %v8641 = vpop.f32.mrf.mxu0
      %v8642 = vadd.f32 0.0, %v8641
      %8643 = vmatmul.bf16.gmra.mxu0 %v8535
      %v8644 = vpop.f32.mrf.mxu0
      %v8645 = vadd.f32 0.0, %v8644
      %v8646 = vpop.f32.mrf.mxu0
      %v8647 = vadd.f32 0.0, %v8646
      %8648 = vmatmul.bf16.gmra.mxu0 %v8538
      %v8649 = vpop.f32.mrf.mxu0
      %v8650 = vadd.f32 0.0, %v8649
      %v8651 = vpop.f32.mrf.mxu0
      %8652 = vdwg.mxu0
      %v8653 = vadd.f32 %v8357, %v8550
      %v8654 = vadd.f32 %v8358, %v8552
      %v8655 = vadd.f32 %v8359, %v8555
      %v8656 = vadd.f32 %v8360, %v8557
      %v8657 = vadd.f32 %v8361, %v8560
      %v8658 = vadd.f32 %v8362, %v8562
      %v8659 = vadd.f32 %v8363, %v8565
      %v8660 = vadd.f32 %v8364, %v8567
      %v8661 = vadd.f32 %v8365, %v8570
      %v8662 = vadd.f32 %v8366, %v8572
      %v8663 = vadd.f32 %v8367, %v8575
      %v8664 = vadd.f32 %v8368, %v8577
      %v8665 = vadd.f32 %v8369, %v8580
      %v8666 = vadd.f32 %v8370, %v8582
      %v8667 = vadd.f32 %v8371, %v8585
      %v8668 = vadd.f32 %v8372, %v8587
      %v8669 = vadd.f32 %v8373, %v8590
      %v8670 = vadd.f32 %v8374, %v8592
      %v8671 = vadd.f32 %v8375, %v8595
      %v8672 = vadd.f32 %v8376, %v8597
      %v8673 = vadd.f32 %v8377, %v8600
      %v8674 = vadd.f32 %v8378, %v8602
      %v8675 = vadd.f32 %v8379, %v8605
      %v8676 = vadd.f32 %v8380, %v8607
      %v8677 = vadd.f32 %v8381, %v8610
      %v8678 = vadd.f32 %v8382, %v8612
      %v8679 = vadd.f32 %v8383, %v8615
      %v8680 = vadd.f32 %v8384, %v8617
      %v8681 = vadd.f32 %v8385, %v8620
      %v8682 = vadd.f32 %v8386, %v8622
      %v8683 = vadd.f32 %v8387, %v8625
      %v8684 = vadd.f32 %v8388, %v8627
      %v8685 = vadd.f32 %v8389, %v8630
      %v8686 = vadd.f32 %v8390, %v8632
      %v8687 = vadd.f32 %v8391, %v8635
      %v8688 = vadd.f32 %v8392, %v8637
      %v8689 = vadd.f32 %v8393, %v8640
      %v8690 = vadd.f32 %v8394, %v8642
      %v8691 = vadd.f32 %v8395, %v8645
      %v8692 = vadd.f32 %v8396, %v8647
      %v8693 = vadd.f32 %v8397, %v8650
      %v8694 = vld [vmem:[%s4] sm:$0x1]
      %v8696 = vperm.slane %v8694, 0
      %v8698 = vadd.f32 %v8653, %v8696
      %v8699 = vadd.f32 %v8654, %v8696
      %v8700 = vadd.f32 %v8655, %v8696
      %v8701 = vadd.f32 %v8656, %v8696
      %v8702 = vadd.f32 %v8657, %v8696
      %v8703 = vadd.f32 %v8658, %v8696
      %v8704 = vadd.f32 %v8659, %v8696
      %v8705 = vadd.f32 %v8660, %v8696
      %v8706 = vadd.f32 %v8661, %v8696
      %v8707 = vadd.f32 %v8662, %v8696
      %v8708 = vadd.f32 %v8663, %v8696
      %v8709 = vadd.f32 %v8664, %v8696
      %v8710 = vadd.f32 %v8665, %v8696
      %v8711 = vadd.f32 %v8666, %v8696
      %v8712 = vadd.f32 %v8667, %v8696
      %v8713 = vadd.f32 %v8668, %v8696
      %v8714 = vadd.f32 %v8669, %v8696
      %v8715 = vadd.f32 %v8670, %v8696
      %v8716 = vadd.f32 %v8671, %v8696
      %v8717 = vadd.f32 %v8672, %v8696
      %v8718 = vadd.f32 %v8673, %v8696
      %v8719 = vadd.f32 %v8674, %v8696
      %v8720 = vadd.f32 %v8675, %v8696
      %v8721 = vadd.f32 %v8676, %v8696
      %v8722 = vadd.f32 %v8677, %v8696
      %v8723 = vadd.f32 %v8678, %v8696
      %v8724 = vadd.f32 %v8679, %v8696
      %v8725 = vadd.f32 %v8680, %v8696
      %v8726 = vadd.f32 %v8681, %v8696
      %v8727 = vadd.f32 %v8682, %v8696
      %v8728 = vadd.f32 %v8683, %v8696
      %v8729 = vadd.f32 %v8684, %v8696
      %v8730 = vadd.f32 %v8685, %v8696
      %v8731 = vadd.f32 %v8686, %v8696
      %v8732 = vadd.f32 %v8687, %v8696
      %v8733 = vadd.f32 %v8688, %v8696
      %v8734 = vadd.f32 %v8689, %v8696
      %v8735 = vadd.f32 %v8690, %v8696
      %v8736 = vadd.f32 %v8691, %v8696
      %v8737 = vadd.f32 %v8692, %v8696
      %v8738 = vadd.f32 %v8693, %v8696
      %v8739 = vmax.f32 %v8698, 0.0
      %v8740 = vmax.f32 %v8699, 0.0
      %v8741 = vmax.f32 %v8700, 0.0
      %v8742 = vmax.f32 %v8701, 0.0
      %v8743 = vmax.f32 %v8702, 0.0
      %v8744 = vmax.f32 %v8703, 0.0
      %v8745 = vmax.f32 %v8704, 0.0
      %v8746 = vmax.f32 %v8705, 0.0
      %v8747 = vmax.f32 %v8706, 0.0
      %v8748 = vmax.f32 %v8707, 0.0
      %v8749 = vmax.f32 %v8708, 0.0
      %v8750 = vmax.f32 %v8709, 0.0
      %v8751 = vmax.f32 %v8710, 0.0
      %v8752 = vmax.f32 %v8711, 0.0
      %v8753 = vmax.f32 %v8712, 0.0
      %v8754 = vmax.f32 %v8713, 0.0
      %v8755 = vmax.f32 %v8714, 0.0
      %v8756 = vmax.f32 %v8715, 0.0
      %v8757 = vmax.f32 %v8716, 0.0
      %v8758 = vmax.f32 %v8717, 0.0
      %v8759 = vmax.f32 %v8718, 0.0
      %v8760 = vmax.f32 %v8719, 0.0
      %v8761 = vmax.f32 %v8720, 0.0
      %v8762 = vmax.f32 %v8721, 0.0
      %v8763 = vmax.f32 %v8722, 0.0
      %v8764 = vmax.f32 %v8723, 0.0
      %v8765 = vmax.f32 %v8724, 0.0
      %v8766 = vmax.f32 %v8725, 0.0
      %v8767 = vmax.f32 %v8726, 0.0
      %v8768 = vmax.f32 %v8727, 0.0
      %v8769 = vmax.f32 %v8728, 0.0
      %v8770 = vmax.f32 %v8729, 0.0
      %v8771 = vmax.f32 %v8730, 0.0
      %v8772 = vmax.f32 %v8731, 0.0
      %v8773 = vmax.f32 %v8732, 0.0
      %v8774 = vmax.f32 %v8733, 0.0
      %v8775 = vmax.f32 %v8734, 0.0
      %v8776 = vmax.f32 %v8735, 0.0
      %v8777 = vmax.f32 %v8736, 0.0
      %v8778 = vmax.f32 %v8737, 0.0
      %v8779 = vmax.f32 %v8738, 0.0
      %v8780 = vsel %vm5989, %v8739, 0.0
      %v8781 = vsel %vm5990, %v8740, 0.0
      %v8782 = vsel %vm5991, %v8741, 0.0
      %v8783 = vsel %vm5992, %v8742, 0.0
      %v8784 = vsel %vm5993, %v8743, 0.0
      %v8785 = vsel %vm5994, %v8744, 0.0
      %v8786 = vsel %vm5995, %v8745, 0.0
      %v8787 = vsel %vm5996, %v8746, 0.0
      %v8788 = vsel %vm5997, %v8747, 0.0
      %v8789 = vsel %vm5998, %v8748, 0.0
      %v8790 = vsel %vm5999, %v8749, 0.0
      %v8791 = vsel %vm6000, %v8750, 0.0
      %v8792 = vsel %vm6001, %v8751, 0.0
      %v8793 = vsel %vm6002, %v8752, 0.0
      %v8794 = vsel %vm6003, %v8753, 0.0
      %v8795 = vsel %vm6004, %v8754, 0.0
      %v8796 = vsel %vm6005, %v8755, 0.0
      %v8797 = vsel %vm6006, %v8756, 0.0
      %v8798 = vsel %vm6007, %v8757, 0.0
      %v8799 = vsel %vm6008, %v8758, 0.0
      %v8800 = vsel %vm6009, %v8759, 0.0
      %v8801 = vsel %vm6010, %v8760, 0.0
      %v8802 = vsel %vm6011, %v8761, 0.0
      %v8803 = vsel %vm6012, %v8762, 0.0
      %v8804 = vsel %vm6013, %v8763, 0.0
      %v8805 = vsel %vm6014, %v8764, 0.0
      %v8806 = vsel %vm6015, %v8765, 0.0
      %v8807 = vsel %vm6016, %v8766, 0.0
      %v8808 = vsel %vm6017, %v8767, 0.0
      %v8809 = vsel %vm6018, %v8768, 0.0
      %v8810 = vsel %vm6019, %v8769, 0.0
      %v8811 = vsel %vm6020, %v8770, 0.0
      %v8812 = vsel %vm6021, %v8771, 0.0
      %v8813 = vsel %vm6022, %v8772, 0.0
      %v8814 = vsel %vm6023, %v8773, 0.0
      %v8815 = vsel %vm6024, %v8774, 0.0
      %v8816 = vsel %vm6025, %v8775, 0.0
      %v8817 = vsel %vm6026, %v8776, 0.0
      %v8818 = vsel %vm6027, %v8777, 0.0
      %v8819 = vsel %vm6028, %v8778, 0.0
      %v8820 = vsel %vm6029, %v8779, 0.0
      %8821 = vst.msk [vmem:[#allocation2 + $0x18] sm:$0xff] %vm3288, %v8780
      %8822 = vst.msk [vmem:[#allocation2 + $0x20] sm:$0xff] %vm3288, %v8781
      %8823 = vst.msk [vmem:[#allocation2 + $0x28] sm:$0xff] %vm3288, %v8782
      %8824 = vst.msk [vmem:[#allocation2 + $0x30] sm:$0xff] %vm3288, %v8783
      %8825 = vst.msk [vmem:[#allocation2 + $0x38] sm:$0xff] %vm3288, %v8784
      %8826 = vst.msk [vmem:[#allocation2 + $0x40] sm:$0xff] %vm3288, %v8785
      %8827 = vst.msk [vmem:[#allocation2 + $0x48] sm:$0xff] %vm3288, %v8786
      %8828 = vst.msk [vmem:[#allocation2 + $0x50] sm:$0xff] %vm3288, %v8787
      %8829 = vst.msk [vmem:[#allocation2 + $0x58] sm:$0xff] %vm3288, %v8788
      %8830 = vst.msk [vmem:[#allocation2 + $0x60] sm:$0xff] %vm3288, %v8789
      %8831 = vst.msk [vmem:[#allocation2 + $0x68] sm:$0xff] %vm3288, %v8790
      %8832 = vst.msk [vmem:[#allocation2 + $0x70] sm:$0xff] %vm3288, %v8791
      %8833 = vst.msk [vmem:[#allocation2 + $0x78] sm:$0xff] %vm3288, %v8792
      %8834 = vst.msk [vmem:[#allocation2 + $0x80] sm:$0xff] %vm3288, %v8793
      %8835 = vst.msk [vmem:[#allocation2 + $0x88] sm:$0xff] %vm3288, %v8794
      %8836 = vst.msk [vmem:[#allocation2 + $0x90] sm:$0xff] %vm3288, %v8795
      %8837 = vst.msk [vmem:[#allocation2 + $0x98] sm:$0xff] %vm3288, %v8796
      %8838 = vst.msk [vmem:[#allocation2 + $0xa0] sm:$0xff] %vm3288, %v8797
      %8839 = vst.msk [vmem:[#allocation2 + $0xa8] sm:$0xff] %vm3288, %v8798
      %8840 = vst.msk [vmem:[#allocation2 + $0xb0] sm:$0xff] %vm3288, %v8799
      %8841 = vst.msk [vmem:[#allocation2 + $0xb8] sm:$0xff] %vm3288, %v8800
      %8842 = vst.msk [vmem:[#allocation2 + $0xc0] sm:$0xff] %vm3288, %v8801
      %8843 = vst.msk [vmem:[#allocation2 + $0xc8] sm:$0xff] %vm3288, %v8802
      %8844 = vst.msk [vmem:[#allocation2 + $0xd0] sm:$0xff] %vm3288, %v8803
      %8845 = vst.msk [vmem:[#allocation2 + $0xd8] sm:$0xff] %vm3288, %v8804
      %8846 = vst.msk [vmem:[#allocation2 + $0xe0] sm:$0xff] %vm3288, %v8805
      %8847 = vst.msk [vmem:[#allocation2 + $0xe8] sm:$0xff] %vm3288, %v8806
      %8848 = vst.msk [vmem:[#allocation2 + $0xf0] sm:$0xff] %vm3288, %v8807
      %8849 = vst.msk [vmem:[#allocation2 + $0xf8] sm:$0xff] %vm3288, %v8808
      %8850 = vst.msk [vmem:[#allocation2 + $0x100] sm:$0xff] %vm3288, %v8809
      %8851 = vst.msk [vmem:[#allocation2 + $0x108] sm:$0xff] %vm3288, %v8810
      %8852 = vst.msk [vmem:[#allocation2 + $0x110] sm:$0xff] %vm3288, %v8811
      %8853 = vst.msk [vmem:[#allocation2 + $0x118] sm:$0xff] %vm3288, %v8812
      %8854 = vst.msk [vmem:[#allocation2 + $0x120] sm:$0xff] %vm3288, %v8813
      %8855 = vst.msk [vmem:[#allocation2 + $0x128] sm:$0xff] %vm3288, %v8814
      %8856 = vst.msk [vmem:[#allocation2 + $0x130] sm:$0xff] %vm3288, %v8815
      %8857 = vst.msk [vmem:[#allocation2 + $0x138] sm:$0xff] %vm3288, %v8816
      %8858 = vst.msk [vmem:[#allocation2 + $0x140] sm:$0xff] %vm3288, %v8817
      %8859 = vst.msk [vmem:[#allocation2 + $0x148] sm:$0xff] %vm3288, %v8818
      %8860 = vst.msk [vmem:[#allocation2 + $0x150] sm:$0xff] %vm3288, %v8819
      %8861 = vst.msk [vmem:[#allocation2 + $0x158] sm:$0xff] %vm3288, %v8820
      %v8862 = vld [vmem:[#allocation2 + $0x5] sm:$0xff]
      %v8863 = vld [vmem:[#allocation2 + $0xd] sm:$0xff]
      %v8864 = vld [vmem:[#allocation2 + $0x15] sm:$0xff]
      %v8865 = vld [vmem:[#allocation2 + $0x1d] sm:$0xff]
      %v8866 = vld [vmem:[#allocation2 + $0x25] sm:$0xff]
      %v8867 = vld [vmem:[#allocation2 + $0x2d] sm:$0xff]
      %v8868 = vld [vmem:[#allocation2 + $0x35] sm:$0xff]
      %v8869 = vld [vmem:[#allocation2 + $0x3d] sm:$0xff]
      %v8870 = vld [vmem:[#allocation2 + $0x45] sm:$0xff]
      %v8871 = vld [vmem:[#allocation2 + $0x4d] sm:$0xff]
      %v8872 = vld [vmem:[#allocation2 + $0x55] sm:$0xff]
      %v8873 = vld [vmem:[#allocation2 + $0x5d] sm:$0xff]
      %v8874 = vld [vmem:[#allocation2 + $0x65] sm:$0xff]
      %v8875 = vld [vmem:[#allocation2 + $0x6d] sm:$0xff]
      %v8876 = vld [vmem:[#allocation2 + $0x75] sm:$0xff]
      %v8877 = vld [vmem:[#allocation2 + $0x7d] sm:$0xff]
      %v8878 = vld [vmem:[#allocation2 + $0x85] sm:$0xff]
      %v8879 = vld [vmem:[#allocation2 + $0x8d] sm:$0xff]
      %v8880 = vld [vmem:[#allocation2 + $0x95] sm:$0xff]
      %v8881 = vld [vmem:[#allocation2 + $0x9d] sm:$0xff]
      %v8882 = vld [vmem:[#allocation2 + $0xa5] sm:$0xff]
      %v8883 = vld [vmem:[#allocation2 + $0xad] sm:$0xff]
      %v8884 = vld [vmem:[#allocation2 + $0xb5] sm:$0xff]
      %v8885 = vld [vmem:[#allocation2 + $0xbd] sm:$0xff]
      %v8886 = vld [vmem:[#allocation2 + $0xc5] sm:$0xff]
      %v8887 = vld [vmem:[#allocation2 + $0xcd] sm:$0xff]
      %v8888 = vld [vmem:[#allocation2 + $0xd5] sm:$0xff]
      %v8889 = vld [vmem:[#allocation2 + $0xdd] sm:$0xff]
      %v8890 = vld [vmem:[#allocation2 + $0xe5] sm:$0xff]
      %v8891 = vld [vmem:[#allocation2 + $0xed] sm:$0xff]
      %v8892 = vld [vmem:[#allocation2 + $0xf5] sm:$0xff]
      %v8893 = vld [vmem:[#allocation2 + $0xfd] sm:$0xff]
      %v8894 = vld [vmem:[#allocation2 + $0x105] sm:$0xff]
      %v8895 = vld [vmem:[#allocation2 + $0x10d] sm:$0xff]
      %v8896 = vld [vmem:[#allocation2 + $0x115] sm:$0xff]
      %v8897 = vld [vmem:[#allocation2 + $0x11d] sm:$0xff]
      %v8898 = vld [vmem:[#allocation2 + $0x125] sm:$0xff]
      %v8899 = vld [vmem:[#allocation2 + $0x12d] sm:$0xff]
      %v8900 = vld [vmem:[#allocation2 + $0x135] sm:$0xff]
      %v8901 = vld [vmem:[#allocation2 + $0x13d] sm:$0xff]
      %v8902 = vld [vmem:[#allocation2 + $0x145] sm:$0xff]
      %v8903 = vpack.c.bf16 %v8863, %v8862
      %v8904 = vpack.c.bf16 %v8865, %v8864
      %v8905 = vpack.c.bf16 %v8867, %v8866
      %v8906 = vpack.c.bf16 %v8869, %v8868
      %v8907 = vpack.c.bf16 %v8871, %v8870
      %v8908 = vpack.c.bf16 %v8873, %v8872
      %v8909 = vpack.c.bf16 %v8875, %v8874
      %v8910 = vpack.c.bf16 %v8877, %v8876
      %v8911 = vpack.c.bf16 %v8879, %v8878
      %v8912 = vpack.c.bf16 %v8881, %v8880
      %v8913 = vpack.c.bf16 %v8883, %v8882
      %v8914 = vpack.c.bf16 %v8885, %v8884
      %v8915 = vpack.c.bf16 %v8887, %v8886
      %v8916 = vpack.c.bf16 %v8889, %v8888
      %v8917 = vpack.c.bf16 %v8891, %v8890
      %v8918 = vpack.c.bf16 %v8893, %v8892
      %v8919 = vpack.c.bf16 %v8895, %v8894
      %v8920 = vpack.c.bf16 %v8897, %v8896
      %v8921 = vpack.c.bf16 %v8899, %v8898
      %v8922 = vpack.c.bf16 %v8901, %v8900
      %v8923 = vpack.c.bf16 %v8902, %v8902
      %v8924 = vld [vmem:[%s5] sm:$0xf]
      %v8925 = vld [vmem:[%s5 + $0x4] sm:$0xf]
      %v8926 = vld [vmem:[%s5 + $0x8] sm:$0xf]
      %v8927 = vld [vmem:[%s5 + $0xc] sm:$0xf]
      %v8928 = vld [vmem:[%s5 + $0x10] sm:$0xf]
      %v8929 = vld [vmem:[%s5 + $0x14] sm:$0xf]
      %v8930 = vld [vmem:[%s5 + $0x18] sm:$0xf]
      %v8931 = vld [vmem:[%s5 + $0x1c] sm:$0xf]
      %v8932 = vld [vmem:[#allocation2 + $0x6] sm:$0xff]
      %v8933 = vld [vmem:[#allocation2 + $0xe] sm:$0xff]
      %v8934 = vld [vmem:[#allocation2 + $0x16] sm:$0xff]
      %v8935 = vld [vmem:[#allocation2 + $0x1e] sm:$0xff]
      %v8936 = vld [vmem:[#allocation2 + $0x26] sm:$0xff]
      %v8937 = vld [vmem:[#allocation2 + $0x2e] sm:$0xff]
      %v8938 = vld [vmem:[#allocation2 + $0x36] sm:$0xff]
      %v8939 = vld [vmem:[#allocation2 + $0x3e] sm:$0xff]
      %v8940 = vld [vmem:[#allocation2 + $0x46] sm:$0xff]
      %v8941 = vld [vmem:[#allocation2 + $0x4e] sm:$0xff]
      %v8942 = vld [vmem:[#allocation2 + $0x56] sm:$0xff]
      %v8943 = vld [vmem:[#allocation2 + $0x5e] sm:$0xff]
      %v8944 = vld [vmem:[#allocation2 + $0x66] sm:$0xff]
      %v8945 = vld [vmem:[#allocation2 + $0x6e] sm:$0xff]
      %v8946 = vld [vmem:[#allocation2 + $0x76] sm:$0xff]
      %v8947 = vld [vmem:[#allocation2 + $0x7e] sm:$0xff]
      %v8948 = vld [vmem:[#allocation2 + $0x86] sm:$0xff]
      %v8949 = vld [vmem:[#allocation2 + $0x8e] sm:$0xff]
      %v8950 = vld [vmem:[#allocation2 + $0x96] sm:$0xff]
      %v8951 = vld [vmem:[#allocation2 + $0x9e] sm:$0xff]
      %v8952 = vld [vmem:[#allocation2 + $0xa6] sm:$0xff]
      %v8953 = vld [vmem:[#allocation2 + $0xae] sm:$0xff]
      %v8954 = vld [vmem:[#allocation2 + $0xb6] sm:$0xff]
      %v8955 = vld [vmem:[#allocation2 + $0xbe] sm:$0xff]
      %v8956 = vld [vmem:[#allocation2 + $0xc6] sm:$0xff]
      %v8957 = vld [vmem:[#allocation2 + $0xce] sm:$0xff]
      %v8958 = vld [vmem:[#allocation2 + $0xd6] sm:$0xff]
      %v8959 = vld [vmem:[#allocation2 + $0xde] sm:$0xff]
      %v8960 = vld [vmem:[#allocation2 + $0xe6] sm:$0xff]
      %v8961 = vld [vmem:[#allocation2 + $0xee] sm:$0xff]
      %v8962 = vld [vmem:[#allocation2 + $0xf6] sm:$0xff]
      %v8963 = vld [vmem:[#allocation2 + $0xfe] sm:$0xff]
      %v8964 = vld [vmem:[#allocation2 + $0x106] sm:$0xff]
      %v8965 = vld [vmem:[#allocation2 + $0x10e] sm:$0xff]
      %v8966 = vld [vmem:[#allocation2 + $0x116] sm:$0xff]
      %v8967 = vld [vmem:[#allocation2 + $0x11e] sm:$0xff]
      %v8968 = vld [vmem:[#allocation2 + $0x126] sm:$0xff]
      %v8969 = vld [vmem:[#allocation2 + $0x12e] sm:$0xff]
      %v8970 = vld [vmem:[#allocation2 + $0x136] sm:$0xff]
      %v8971 = vld [vmem:[#allocation2 + $0x13e] sm:$0xff]
      %v8972 = vld [vmem:[#allocation2 + $0x146] sm:$0xff]
      %v8973 = vpack.c.bf16 %v8933, %v8932
      %v8974 = vpack.c.bf16 %v8935, %v8934
      %v8975 = vpack.c.bf16 %v8937, %v8936
      %v8976 = vpack.c.bf16 %v8939, %v8938
      %v8977 = vpack.c.bf16 %v8941, %v8940
      %v8978 = vpack.c.bf16 %v8943, %v8942
      %v8979 = vpack.c.bf16 %v8945, %v8944
      %v8980 = vpack.c.bf16 %v8947, %v8946
      %v8981 = vpack.c.bf16 %v8949, %v8948
      %v8982 = vpack.c.bf16 %v8951, %v8950
      %v8983 = vpack.c.bf16 %v8953, %v8952
      %v8984 = vpack.c.bf16 %v8955, %v8954
      %v8985 = vpack.c.bf16 %v8957, %v8956
      %v8986 = vpack.c.bf16 %v8959, %v8958
      %v8987 = vpack.c.bf16 %v8961, %v8960
      %v8988 = vpack.c.bf16 %v8963, %v8962
      %v8989 = vpack.c.bf16 %v8965, %v8964
      %v8990 = vpack.c.bf16 %v8967, %v8966
      %v8991 = vpack.c.bf16 %v8969, %v8968
      %v8992 = vpack.c.bf16 %v8971, %v8970
      %v8993 = vpack.c.bf16 %v8972, %v8972
      %s8994 = scalar_lea.vmem %s5, 32
      %v8995 = vld [vmem:[%s8994] sm:$0xf]
      %v8996 = vld [vmem:[%s8994 + $0x4] sm:$0xf]
      %v8997 = vld [vmem:[%s8994 + $0x8] sm:$0xf]
      %v8998 = vld [vmem:[%s8994 + $0xc] sm:$0xf]
      %v8999 = vld [vmem:[%s8994 + $0x10] sm:$0xf]
      %v9000 = vld [vmem:[%s8994 + $0x14] sm:$0xf]
      %v9001 = vld [vmem:[%s8994 + $0x18] sm:$0xf]
      %v9002 = vld [vmem:[%s8994 + $0x1c] sm:$0xf]
      %v9011 = vunpack.c.l.b16 %v8995
      %v9012 = vunpack.c.l.b16 %v8996
      %v9013 = vunpack.c.l.b16 %v8997
      %v9014 = vunpack.c.l.b16 %v8998
      %v9015 = vunpack.c.l.b16 %v8999
      %v9016 = vunpack.c.l.b16 %v9000
      %v9017 = vunpack.c.l.b16 %v9001
      %v9018 = vunpack.c.l.b16 %v9002
      %v9019 = vpack.c.b16 %v9012, %v9011
      %v9020 = vpack.c.b16 %v9014, %v9013
      %v9021 = vpack.c.b16 %v9016, %v9015
      %v9022 = vpack.c.b16 %v9018, %v9017
      %v9028 = vsel %vm3288, %v8973, 0
      %v9031 = vsel %vm3288, %v8974, 0
      %v9034 = vsel %vm3288, %v8975, 0
      %v9037 = vsel %vm3288, %v8976, 0
      %v9040 = vsel %vm3288, %v8977, 0
      %v9043 = vsel %vm3288, %v8978, 0
      %v9046 = vsel %vm3288, %v8979, 0
      %v9049 = vsel %vm3288, %v8980, 0
      %v9052 = vsel %vm3288, %v8981, 0
      %v9055 = vsel %vm3288, %v8982, 0
      %v9058 = vsel %vm3288, %v8983, 0
      %v9061 = vsel %vm3288, %v8984, 0
      %v9064 = vsel %vm3288, %v8985, 0
      %v9067 = vsel %vm3288, %v8986, 0
      %v9070 = vsel %vm3288, %v8987, 0
      %v9073 = vsel %vm3288, %v8988, 0
      %v9076 = vsel %vm3288, %v8989, 0
      %v9079 = vsel %vm3288, %v8990, 0
      %v9082 = vsel %vm3288, %v8991, 0
      %v9085 = vsel %vm3288, %v8992, 0
      %v9088 = vsel %vm3288, %v8993, 0
      %9090 = vmatpush.bf16.msra.mxu0 0
      %9091 = vmatpush.bf16.msra.mxu0 0
      %9092 = vmatpush.bf16.msra.mxu0 0
      %9093 = vmatpush.bf16.msra.mxu0 0
      %9094 = vmatpush.bf16.msra.mxu0 %v9022
      %9095 = vmatpush.bf16.msra.mxu0 %v9021
      %9096 = vmatpush.bf16.msra.mxu0 %v9020
      %9097 = vmatpush.bf16.msra.mxu0 %v9019
      %9098 = vmatmul.bf16.gmra.mxu0 %v9028
      %v9099 = vpop.f32.mrf.mxu0
      %v9100 = vadd.f32 0.0, %v9099
      %v9101 = vpop.f32.mrf.mxu0
      %v9102 = vadd.f32 0.0, %v9101
      %9103 = vmatmul.bf16.gmra.mxu0 %v9031
      %v9104 = vpop.f32.mrf.mxu0
      %v9105 = vadd.f32 0.0, %v9104
      %v9106 = vpop.f32.mrf.mxu0
      %v9107 = vadd.f32 0.0, %v9106
      %9108 = vmatmul.bf16.gmra.mxu0 %v9034
      %v9109 = vpop.f32.mrf.mxu0
      %v9110 = vadd.f32 0.0, %v9109
      %v9111 = vpop.f32.mrf.mxu0
      %v9112 = vadd.f32 0.0, %v9111
      %9113 = vmatmul.bf16.gmra.mxu0 %v9037
      %v9114 = vpop.f32.mrf.mxu0
      %v9115 = vadd.f32 0.0, %v9114
      %v9116 = vpop.f32.mrf.mxu0
      %v9117 = vadd.f32 0.0, %v9116
      %9118 = vmatmul.bf16.gmra.mxu0 %v9040
      %v9119 = vpop.f32.mrf.mxu0
      %v9120 = vadd.f32 0.0, %v9119
      %v9121 = vpop.f32.mrf.mxu0
      %v9122 = vadd.f32 0.0, %v9121
      %9123 = vmatmul.bf16.gmra.mxu0 %v9043
      %v9124 = vpop.f32.mrf.mxu0
      %v9125 = vadd.f32 0.0, %v9124
      %v9126 = vpop.f32.mrf.mxu0
      %v9127 = vadd.f32 0.0, %v9126
      %9128 = vmatmul.bf16.gmra.mxu0 %v9046
      %v9129 = vpop.f32.mrf.mxu0
      %v9130 = vadd.f32 0.0, %v9129
      %v9131 = vpop.f32.mrf.mxu0
      %v9132 = vadd.f32 0.0, %v9131
      %9133 = vmatmul.bf16.gmra.mxu0 %v9049
      %v9134 = vpop.f32.mrf.mxu0
      %v9135 = vadd.f32 0.0, %v9134
      %v9136 = vpop.f32.mrf.mxu0
      %v9137 = vadd.f32 0.0, %v9136
      %9138 = vmatmul.bf16.gmra.mxu0 %v9052
      %v9139 = vpop.f32.mrf.mxu0
      %v9140 = vadd.f32 0.0, %v9139
      %v9141 = vpop.f32.mrf.mxu0
      %v9142 = vadd.f32 0.0, %v9141
      %9143 = vmatmul.bf16.gmra.mxu0 %v9055
      %v9144 = vpop.f32.mrf.mxu0
      %v9145 = vadd.f32 0.0, %v9144
      %v9146 = vpop.f32.mrf.mxu0
      %v9147 = vadd.f32 0.0, %v9146
      %9148 = vmatmul.bf16.gmra.mxu0 %v9058
      %v9149 = vpop.f32.mrf.mxu0
      %v9150 = vadd.f32 0.0, %v9149
      %v9151 = vpop.f32.mrf.mxu0
      %v9152 = vadd.f32 0.0, %v9151
      %9153 = vmatmul.bf16.gmra.mxu0 %v9061
      %v9154 = vpop.f32.mrf.mxu0
      %v9155 = vadd.f32 0.0, %v9154
      %v9156 = vpop.f32.mrf.mxu0
      %v9157 = vadd.f32 0.0, %v9156
      %9158 = vmatmul.bf16.gmra.mxu0 %v9064
      %v9159 = vpop.f32.mrf.mxu0
      %v9160 = vadd.f32 0.0, %v9159
      %v9161 = vpop.f32.mrf.mxu0
      %v9162 = vadd.f32 0.0, %v9161
      %9163 = vmatmul.bf16.gmra.mxu0 %v9067
      %v9164 = vpop.f32.mrf.mxu0
      %v9165 = vadd.f32 0.0, %v9164
      %v9166 = vpop.f32.mrf.mxu0
      %v9167 = vadd.f32 0.0, %v9166
      %9168 = vmatmul.bf16.gmra.mxu0 %v9070
      %v9169 = vpop.f32.mrf.mxu0
      %v9170 = vadd.f32 0.0, %v9169
      %v9171 = vpop.f32.mrf.mxu0
      %v9172 = vadd.f32 0.0, %v9171
      %9173 = vmatmul.bf16.gmra.mxu0 %v9073
      %v9174 = vpop.f32.mrf.mxu0
      %v9175 = vadd.f32 0.0, %v9174
      %v9176 = vpop.f32.mrf.mxu0
      %v9177 = vadd.f32 0.0, %v9176
      %9178 = vmatmul.bf16.gmra.mxu0 %v9076
      %v9179 = vpop.f32.mrf.mxu0
      %v9180 = vadd.f32 0.0, %v9179
      %v9181 = vpop.f32.mrf.mxu0
      %v9182 = vadd.f32 0.0, %v9181
      %9183 = vmatmul.bf16.gmra.mxu0 %v9079
      %v9184 = vpop.f32.mrf.mxu0
      %v9185 = vadd.f32 0.0, %v9184
      %v9186 = vpop.f32.mrf.mxu0
      %v9187 = vadd.f32 0.0, %v9186
      %9188 = vmatmul.bf16.gmra.mxu0 %v9082
      %v9189 = vpop.f32.mrf.mxu0
      %v9190 = vadd.f32 0.0, %v9189
      %v9191 = vpop.f32.mrf.mxu0
      %v9192 = vadd.f32 0.0, %v9191
      %9193 = vmatmul.bf16.gmra.mxu0 %v9085
      %v9194 = vpop.f32.mrf.mxu0
      %v9195 = vadd.f32 0.0, %v9194
      %v9196 = vpop.f32.mrf.mxu0
      %v9197 = vadd.f32 0.0, %v9196
      %9198 = vmatmul.bf16.gmra.mxu0 %v9088
      %v9199 = vpop.f32.mrf.mxu0
      %v9200 = vadd.f32 0.0, %v9199
      %v9201 = vpop.f32.mrf.mxu0
      %9202 = vdwg.mxu0
      %v9211 = vunpack.c.l.b16 %v8924
      %v9212 = vunpack.c.l.b16 %v8925
      %v9213 = vunpack.c.l.b16 %v8926
      %v9214 = vunpack.c.l.b16 %v8927
      %v9215 = vunpack.c.l.b16 %v8928
      %v9216 = vunpack.c.l.b16 %v8929
      %v9217 = vunpack.c.l.b16 %v8930
      %v9218 = vunpack.c.l.b16 %v8931
      %v9219 = vpack.c.b16 %v9212, %v9211
      %v9220 = vpack.c.b16 %v9214, %v9213
      %v9221 = vpack.c.b16 %v9216, %v9215
      %v9222 = vpack.c.b16 %v9218, %v9217
      %v9228 = vsel %vm3288, %v8903, 0
      %v9231 = vsel %vm3288, %v8904, 0
      %v9234 = vsel %vm3288, %v8905, 0
      %v9237 = vsel %vm3288, %v8906, 0
      %v9240 = vsel %vm3288, %v8907, 0
      %v9243 = vsel %vm3288, %v8908, 0
      %v9246 = vsel %vm3288, %v8909, 0
      %v9249 = vsel %vm3288, %v8910, 0
      %v9252 = vsel %vm3288, %v8911, 0
      %v9255 = vsel %vm3288, %v8912, 0
      %v9258 = vsel %vm3288, %v8913, 0
      %v9261 = vsel %vm3288, %v8914, 0
      %v9264 = vsel %vm3288, %v8915, 0
      %v9267 = vsel %vm3288, %v8916, 0
      %v9270 = vsel %vm3288, %v8917, 0
      %v9273 = vsel %vm3288, %v8918, 0
      %v9276 = vsel %vm3288, %v8919, 0
      %v9279 = vsel %vm3288, %v8920, 0
      %v9282 = vsel %vm3288, %v8921, 0
      %v9285 = vsel %vm3288, %v8922, 0
      %v9288 = vsel %vm3288, %v8923, 0
      %9290 = vmatpush.bf16.msra.mxu0 0
      %9291 = vmatpush.bf16.msra.mxu0 0
      %9292 = vmatpush.bf16.msra.mxu0 0
      %9293 = vmatpush.bf16.msra.mxu0 0
      %9294 = vmatpush.bf16.msra.mxu0 %v9222
      %9295 = vmatpush.bf16.msra.mxu0 %v9221
      %9296 = vmatpush.bf16.msra.mxu0 %v9220
      %9297 = vmatpush.bf16.msra.mxu0 %v9219
      %9298 = vmatmul.bf16.gmra.mxu0 %v9228
      %v9299 = vpop.f32.mrf.mxu0
      %v9300 = vadd.f32 %v9100, %v9299
      %v9301 = vpop.f32.mrf.mxu0
      %v9302 = vadd.f32 %v9102, %v9301
      %9303 = vmatmul.bf16.gmra.mxu0 %v9231
      %v9304 = vpop.f32.mrf.mxu0
      %v9305 = vadd.f32 %v9105, %v9304
      %v9306 = vpop.f32.mrf.mxu0
      %v9307 = vadd.f32 %v9107, %v9306
      %9308 = vmatmul.bf16.gmra.mxu0 %v9234
      %v9309 = vpop.f32.mrf.mxu0
      %v9310 = vadd.f32 %v9110, %v9309
      %v9311 = vpop.f32.mrf.mxu0
      %v9312 = vadd.f32 %v9112, %v9311
      %9313 = vmatmul.bf16.gmra.mxu0 %v9237
      %v9314 = vpop.f32.mrf.mxu0
      %v9315 = vadd.f32 %v9115, %v9314
      %v9316 = vpop.f32.mrf.mxu0
      %v9317 = vadd.f32 %v9117, %v9316
      %9318 = vmatmul.bf16.gmra.mxu0 %v9240
      %v9319 = vpop.f32.mrf.mxu0
      %v9320 = vadd.f32 %v9120, %v9319
      %v9321 = vpop.f32.mrf.mxu0
      %v9322 = vadd.f32 %v9122, %v9321
      %9323 = vmatmul.bf16.gmra.mxu0 %v9243
      %v9324 = vpop.f32.mrf.mxu0
      %v9325 = vadd.f32 %v9125, %v9324
      %v9326 = vpop.f32.mrf.mxu0
      %v9327 = vadd.f32 %v9127, %v9326
      %9328 = vmatmul.bf16.gmra.mxu0 %v9246
      %v9329 = vpop.f32.mrf.mxu0
      %v9330 = vadd.f32 %v9130, %v9329
      %v9331 = vpop.f32.mrf.mxu0
      %v9332 = vadd.f32 %v9132, %v9331
      %9333 = vmatmul.bf16.gmra.mxu0 %v9249
      %v9334 = vpop.f32.mrf.mxu0
      %v9335 = vadd.f32 %v9135, %v9334
      %v9336 = vpop.f32.mrf.mxu0
      %v9337 = vadd.f32 %v9137, %v9336
      %9338 = vmatmul.bf16.gmra.mxu0 %v9252
      %v9339 = vpop.f32.mrf.mxu0
      %v9340 = vadd.f32 %v9140, %v9339
      %v9341 = vpop.f32.mrf.mxu0
      %v9342 = vadd.f32 %v9142, %v9341
      %9343 = vmatmul.bf16.gmra.mxu0 %v9255
      %v9344 = vpop.f32.mrf.mxu0
      %v9345 = vadd.f32 %v9145, %v9344
      %v9346 = vpop.f32.mrf.mxu0
      %v9347 = vadd.f32 %v9147, %v9346
      %9348 = vmatmul.bf16.gmra.mxu0 %v9258
      %v9349 = vpop.f32.mrf.mxu0
      %v9350 = vadd.f32 %v9150, %v9349
      %v9351 = vpop.f32.mrf.mxu0
      %v9352 = vadd.f32 %v9152, %v9351
      %9353 = vmatmul.bf16.gmra.mxu0 %v9261
      %v9354 = vpop.f32.mrf.mxu0
      %v9355 = vadd.f32 %v9155, %v9354
      %v9356 = vpop.f32.mrf.mxu0
      %v9357 = vadd.f32 %v9157, %v9356
      %9358 = vmatmul.bf16.gmra.mxu0 %v9264
      %v9359 = vpop.f32.mrf.mxu0
      %v9360 = vadd.f32 %v9160, %v9359
      %v9361 = vpop.f32.mrf.mxu0
      %v9362 = vadd.f32 %v9162, %v9361
      %9363 = vmatmul.bf16.gmra.mxu0 %v9267
      %v9364 = vpop.f32.mrf.mxu0
      %v9365 = vadd.f32 %v9165, %v9364
      %v9366 = vpop.f32.mrf.mxu0
      %v9367 = vadd.f32 %v9167, %v9366
      %9368 = vmatmul.bf16.gmra.mxu0 %v9270
      %v9369 = vpop.f32.mrf.mxu0
      %v9370 = vadd.f32 %v9170, %v9369
      %v9371 = vpop.f32.mrf.mxu0
      %v9372 = vadd.f32 %v9172, %v9371
      %9373 = vmatmul.bf16.gmra.mxu0 %v9273
      %v9374 = vpop.f32.mrf.mxu0
      %v9375 = vadd.f32 %v9175, %v9374
      %v9376 = vpop.f32.mrf.mxu0
      %v9377 = vadd.f32 %v9177, %v9376
      %9378 = vmatmul.bf16.gmra.mxu0 %v9276
      %v9379 = vpop.f32.mrf.mxu0
      %v9380 = vadd.f32 %v9180, %v9379
      %v9381 = vpop.f32.mrf.mxu0
      %v9382 = vadd.f32 %v9182, %v9381
      %9383 = vmatmul.bf16.gmra.mxu0 %v9279
      %v9384 = vpop.f32.mrf.mxu0
      %v9385 = vadd.f32 %v9185, %v9384
      %v9386 = vpop.f32.mrf.mxu0
      %v9387 = vadd.f32 %v9187, %v9386
      %9388 = vmatmul.bf16.gmra.mxu0 %v9282
      %v9389 = vpop.f32.mrf.mxu0
      %v9390 = vadd.f32 %v9190, %v9389
      %v9391 = vpop.f32.mrf.mxu0
      %v9392 = vadd.f32 %v9192, %v9391
      %9393 = vmatmul.bf16.gmra.mxu0 %v9285
      %v9394 = vpop.f32.mrf.mxu0
      %v9395 = vadd.f32 %v9195, %v9394
      %v9396 = vpop.f32.mrf.mxu0
      %v9397 = vadd.f32 %v9197, %v9396
      %9398 = vmatmul.bf16.gmra.mxu0 %v9288
      %v9399 = vpop.f32.mrf.mxu0
      %v9400 = vadd.f32 %v9200, %v9399
      %v9401 = vpop.f32.mrf.mxu0
      %9402 = vdwg.mxu0
      %v9403 = vld [vmem:[#allocation2 + $0x7] sm:$0xff]
      %v9404 = vld [vmem:[#allocation2 + $0xf] sm:$0xff]
      %v9405 = vld [vmem:[#allocation2 + $0x17] sm:$0xff]
      %v9406 = vld [vmem:[#allocation2 + $0x1f] sm:$0xff]
      %v9407 = vld [vmem:[#allocation2 + $0x27] sm:$0xff]
      %v9408 = vld [vmem:[#allocation2 + $0x2f] sm:$0xff]
      %v9409 = vld [vmem:[#allocation2 + $0x37] sm:$0xff]
      %v9410 = vld [vmem:[#allocation2 + $0x3f] sm:$0xff]
      %v9411 = vld [vmem:[#allocation2 + $0x47] sm:$0xff]
      %v9412 = vld [vmem:[#allocation2 + $0x4f] sm:$0xff]
      %v9413 = vld [vmem:[#allocation2 + $0x57] sm:$0xff]
      %v9414 = vld [vmem:[#allocation2 + $0x5f] sm:$0xff]
      %v9415 = vld [vmem:[#allocation2 + $0x67] sm:$0xff]
      %v9416 = vld [vmem:[#allocation2 + $0x6f] sm:$0xff]
      %v9417 = vld [vmem:[#allocation2 + $0x77] sm:$0xff]
      %v9418 = vld [vmem:[#allocation2 + $0x7f] sm:$0xff]
      %v9419 = vld [vmem:[#allocation2 + $0x87] sm:$0xff]
      %v9420 = vld [vmem:[#allocation2 + $0x8f] sm:$0xff]
      %v9421 = vld [vmem:[#allocation2 + $0x97] sm:$0xff]
      %v9422 = vld [vmem:[#allocation2 + $0x9f] sm:$0xff]
      %v9423 = vld [vmem:[#allocation2 + $0xa7] sm:$0xff]
      %v9424 = vld [vmem:[#allocation2 + $0xaf] sm:$0xff]
      %v9425 = vld [vmem:[#allocation2 + $0xb7] sm:$0xff]
      %v9426 = vld [vmem:[#allocation2 + $0xbf] sm:$0xff]
      %v9427 = vld [vmem:[#allocation2 + $0xc7] sm:$0xff]
      %v9428 = vld [vmem:[#allocation2 + $0xcf] sm:$0xff]
      %v9429 = vld [vmem:[#allocation2 + $0xd7] sm:$0xff]
      %v9430 = vld [vmem:[#allocation2 + $0xdf] sm:$0xff]
      %v9431 = vld [vmem:[#allocation2 + $0xe7] sm:$0xff]
      %v9432 = vld [vmem:[#allocation2 + $0xef] sm:$0xff]
      %v9433 = vld [vmem:[#allocation2 + $0xf7] sm:$0xff]
      %v9434 = vld [vmem:[#allocation2 + $0xff] sm:$0xff]
      %v9435 = vld [vmem:[#allocation2 + $0x107] sm:$0xff]
      %v9436 = vld [vmem:[#allocation2 + $0x10f] sm:$0xff]
      %v9437 = vld [vmem:[#allocation2 + $0x117] sm:$0xff]
      %v9438 = vld [vmem:[#allocation2 + $0x11f] sm:$0xff]
      %v9439 = vld [vmem:[#allocation2 + $0x127] sm:$0xff]
      %v9440 = vld [vmem:[#allocation2 + $0x12f] sm:$0xff]
      %v9441 = vld [vmem:[#allocation2 + $0x137] sm:$0xff]
      %v9442 = vld [vmem:[#allocation2 + $0x13f] sm:$0xff]
      %v9443 = vld [vmem:[#allocation2 + $0x147] sm:$0xff]
      %v9444 = vpack.c.bf16 %v9404, %v9403
      %v9445 = vpack.c.bf16 %v9406, %v9405
      %v9446 = vpack.c.bf16 %v9408, %v9407
      %v9447 = vpack.c.bf16 %v9410, %v9409
      %v9448 = vpack.c.bf16 %v9412, %v9411
      %v9449 = vpack.c.bf16 %v9414, %v9413
      %v9450 = vpack.c.bf16 %v9416, %v9415
      %v9451 = vpack.c.bf16 %v9418, %v9417
      %v9452 = vpack.c.bf16 %v9420, %v9419
      %v9453 = vpack.c.bf16 %v9422, %v9421
      %v9454 = vpack.c.bf16 %v9424, %v9423
      %v9455 = vpack.c.bf16 %v9426, %v9425
      %v9456 = vpack.c.bf16 %v9428, %v9427
      %v9457 = vpack.c.bf16 %v9430, %v9429
      %v9458 = vpack.c.bf16 %v9432, %v9431
      %v9459 = vpack.c.bf16 %v9434, %v9433
      %v9460 = vpack.c.bf16 %v9436, %v9435
      %v9461 = vpack.c.bf16 %v9438, %v9437
      %v9462 = vpack.c.bf16 %v9440, %v9439
      %v9463 = vpack.c.bf16 %v9442, %v9441
      %v9464 = vpack.c.bf16 %v9443, %v9443
      %s9465 = scalar_lea.vmem %s5, 64
      %v9466 = vld [vmem:[%s9465] sm:$0xf]
      %v9467 = vld [vmem:[%s9465 + $0x4] sm:$0xf]
      %v9468 = vld [vmem:[%s9465 + $0x8] sm:$0xf]
      %v9469 = vld [vmem:[%s9465 + $0xc] sm:$0xf]
      %v9470 = vld [vmem:[%s9465 + $0x10] sm:$0xf]
      %v9471 = vld [vmem:[%s9465 + $0x14] sm:$0xf]
      %v9472 = vld [vmem:[%s9465 + $0x18] sm:$0xf]
      %v9473 = vld [vmem:[%s9465 + $0x1c] sm:$0xf]
      %v9482 = vunpack.c.l.b16 %v9466
      %v9483 = vunpack.c.l.b16 %v9467
      %v9484 = vunpack.c.l.b16 %v9468
      %v9485 = vunpack.c.l.b16 %v9469
      %v9486 = vunpack.c.l.b16 %v9470
      %v9487 = vunpack.c.l.b16 %v9471
      %v9488 = vunpack.c.l.b16 %v9472
      %v9489 = vunpack.c.l.b16 %v9473
      %v9490 = vpack.c.b16 %v9483, %v9482
      %v9491 = vpack.c.b16 %v9485, %v9484
      %v9492 = vpack.c.b16 %v9487, %v9486
      %v9493 = vpack.c.b16 %v9489, %v9488
      %v9499 = vsel %vm3288, %v9444, 0
      %v9502 = vsel %vm3288, %v9445, 0
      %v9505 = vsel %vm3288, %v9446, 0
      %v9508 = vsel %vm3288, %v9447, 0
      %v9511 = vsel %vm3288, %v9448, 0
      %v9514 = vsel %vm3288, %v9449, 0
      %v9517 = vsel %vm3288, %v9450, 0
      %v9520 = vsel %vm3288, %v9451, 0
      %v9523 = vsel %vm3288, %v9452, 0
      %v9526 = vsel %vm3288, %v9453, 0
      %v9529 = vsel %vm3288, %v9454, 0
      %v9532 = vsel %vm3288, %v9455, 0
      %v9535 = vsel %vm3288, %v9456, 0
      %v9538 = vsel %vm3288, %v9457, 0
      %v9541 = vsel %vm3288, %v9458, 0
      %v9544 = vsel %vm3288, %v9459, 0
      %v9547 = vsel %vm3288, %v9460, 0
      %v9550 = vsel %vm3288, %v9461, 0
      %v9553 = vsel %vm3288, %v9462, 0
      %v9556 = vsel %vm3288, %v9463, 0
      %v9559 = vsel %vm3288, %v9464, 0
      %9561 = vmatpush.bf16.msra.mxu0 0
      %9562 = vmatpush.bf16.msra.mxu0 0
      %9563 = vmatpush.bf16.msra.mxu0 0
      %9564 = vmatpush.bf16.msra.mxu0 0
      %9565 = vmatpush.bf16.msra.mxu0 %v9493
      %9566 = vmatpush.bf16.msra.mxu0 %v9492
      %9567 = vmatpush.bf16.msra.mxu0 %v9491
      %9568 = vmatpush.bf16.msra.mxu0 %v9490
      %9569 = vmatmul.bf16.gmra.mxu0 %v9499
      %v9570 = vpop.f32.mrf.mxu0
      %v9571 = vadd.f32 0.0, %v9570
      %v9572 = vpop.f32.mrf.mxu0
      %v9573 = vadd.f32 0.0, %v9572
      %9574 = vmatmul.bf16.gmra.mxu0 %v9502
      %v9575 = vpop.f32.mrf.mxu0
      %v9576 = vadd.f32 0.0, %v9575
      %v9577 = vpop.f32.mrf.mxu0
      %v9578 = vadd.f32 0.0, %v9577
      %9579 = vmatmul.bf16.gmra.mxu0 %v9505
      %v9580 = vpop.f32.mrf.mxu0
      %v9581 = vadd.f32 0.0, %v9580
      %v9582 = vpop.f32.mrf.mxu0
      %v9583 = vadd.f32 0.0, %v9582
      %9584 = vmatmul.bf16.gmra.mxu0 %v9508
      %v9585 = vpop.f32.mrf.mxu0
      %v9586 = vadd.f32 0.0, %v9585
      %v9587 = vpop.f32.mrf.mxu0
      %v9588 = vadd.f32 0.0, %v9587
      %9589 = vmatmul.bf16.gmra.mxu0 %v9511
      %v9590 = vpop.f32.mrf.mxu0
      %v9591 = vadd.f32 0.0, %v9590
      %v9592 = vpop.f32.mrf.mxu0
      %v9593 = vadd.f32 0.0, %v9592
      %9594 = vmatmul.bf16.gmra.mxu0 %v9514
      %v9595 = vpop.f32.mrf.mxu0
      %v9596 = vadd.f32 0.0, %v9595
      %v9597 = vpop.f32.mrf.mxu0
      %v9598 = vadd.f32 0.0, %v9597
      %9599 = vmatmul.bf16.gmra.mxu0 %v9517
      %v9600 = vpop.f32.mrf.mxu0
      %v9601 = vadd.f32 0.0, %v9600
      %v9602 = vpop.f32.mrf.mxu0
      %v9603 = vadd.f32 0.0, %v9602
      %9604 = vmatmul.bf16.gmra.mxu0 %v9520
      %v9605 = vpop.f32.mrf.mxu0
      %v9606 = vadd.f32 0.0, %v9605
      %v9607 = vpop.f32.mrf.mxu0
      %v9608 = vadd.f32 0.0, %v9607
      %9609 = vmatmul.bf16.gmra.mxu0 %v9523
      %v9610 = vpop.f32.mrf.mxu0
      %v9611 = vadd.f32 0.0, %v9610
      %v9612 = vpop.f32.mrf.mxu0
      %v9613 = vadd.f32 0.0, %v9612
      %9614 = vmatmul.bf16.gmra.mxu0 %v9526
      %v9615 = vpop.f32.mrf.mxu0
      %v9616 = vadd.f32 0.0, %v9615
      %v9617 = vpop.f32.mrf.mxu0
      %v9618 = vadd.f32 0.0, %v9617
      %9619 = vmatmul.bf16.gmra.mxu0 %v9529
      %v9620 = vpop.f32.mrf.mxu0
      %v9621 = vadd.f32 0.0, %v9620
      %v9622 = vpop.f32.mrf.mxu0
      %v9623 = vadd.f32 0.0, %v9622
      %9624 = vmatmul.bf16.gmra.mxu0 %v9532
      %v9625 = vpop.f32.mrf.mxu0
      %v9626 = vadd.f32 0.0, %v9625
      %v9627 = vpop.f32.mrf.mxu0
      %v9628 = vadd.f32 0.0, %v9627
      %9629 = vmatmul.bf16.gmra.mxu0 %v9535
      %v9630 = vpop.f32.mrf.mxu0
      %v9631 = vadd.f32 0.0, %v9630
      %v9632 = vpop.f32.mrf.mxu0
      %v9633 = vadd.f32 0.0, %v9632
      %9634 = vmatmul.bf16.gmra.mxu0 %v9538
      %v9635 = vpop.f32.mrf.mxu0
      %v9636 = vadd.f32 0.0, %v9635
      %v9637 = vpop.f32.mrf.mxu0
      %v9638 = vadd.f32 0.0, %v9637
      %9639 = vmatmul.bf16.gmra.mxu0 %v9541
      %v9640 = vpop.f32.mrf.mxu0
      %v9641 = vadd.f32 0.0, %v9640
      %v9642 = vpop.f32.mrf.mxu0
      %v9643 = vadd.f32 0.0, %v9642
      %9644 = vmatmul.bf16.gmra.mxu0 %v9544
      %v9645 = vpop.f32.mrf.mxu0
      %v9646 = vadd.f32 0.0, %v9645
      %v9647 = vpop.f32.mrf.mxu0
      %v9648 = vadd.f32 0.0, %v9647
      %9649 = vmatmul.bf16.gmra.mxu0 %v9547
      %v9650 = vpop.f32.mrf.mxu0
      %v9651 = vadd.f32 0.0, %v9650
      %v9652 = vpop.f32.mrf.mxu0
      %v9653 = vadd.f32 0.0, %v9652
      %9654 = vmatmul.bf16.gmra.mxu0 %v9550
      %v9655 = vpop.f32.mrf.mxu0
      %v9656 = vadd.f32 0.0, %v9655
      %v9657 = vpop.f32.mrf.mxu0
      %v9658 = vadd.f32 0.0, %v9657
      %9659 = vmatmul.bf16.gmra.mxu0 %v9553
      %v9660 = vpop.f32.mrf.mxu0
      %v9661 = vadd.f32 0.0, %v9660
      %v9662 = vpop.f32.mrf.mxu0
      %v9663 = vadd.f32 0.0, %v9662
      %9664 = vmatmul.bf16.gmra.mxu0 %v9556
      %v9665 = vpop.f32.mrf.mxu0
      %v9666 = vadd.f32 0.0, %v9665
      %v9667 = vpop.f32.mrf.mxu0
      %v9668 = vadd.f32 0.0, %v9667
      %9669 = vmatmul.bf16.gmra.mxu0 %v9559
      %v9670 = vpop.f32.mrf.mxu0
      %v9671 = vadd.f32 0.0, %v9670
      %v9672 = vpop.f32.mrf.mxu0
      %9673 = vdwg.mxu0
      %v9674 = vadd.f32 %v9300, %v9571
      %v9675 = vadd.f32 %v9302, %v9573
      %v9676 = vadd.f32 %v9305, %v9576
      %v9677 = vadd.f32 %v9307, %v9578
      %v9678 = vadd.f32 %v9310, %v9581
      %v9679 = vadd.f32 %v9312, %v9583
      %v9680 = vadd.f32 %v9315, %v9586
      %v9681 = vadd.f32 %v9317, %v9588
      %v9682 = vadd.f32 %v9320, %v9591
      %v9683 = vadd.f32 %v9322, %v9593
      %v9684 = vadd.f32 %v9325, %v9596
      %v9685 = vadd.f32 %v9327, %v9598
      %v9686 = vadd.f32 %v9330, %v9601
      %v9687 = vadd.f32 %v9332, %v9603
      %v9688 = vadd.f32 %v9335, %v9606
      %v9689 = vadd.f32 %v9337, %v9608
      %v9690 = vadd.f32 %v9340, %v9611
      %v9691 = vadd.f32 %v9342, %v9613
      %v9692 = vadd.f32 %v9345, %v9616
      %v9693 = vadd.f32 %v9347, %v9618
      %v9694 = vadd.f32 %v9350, %v9621
      %v9695 = vadd.f32 %v9352, %v9623
      %v9696 = vadd.f32 %v9355, %v9626
      %v9697 = vadd.f32 %v9357, %v9628
      %v9698 = vadd.f32 %v9360, %v9631
      %v9699 = vadd.f32 %v9362, %v9633
      %v9700 = vadd.f32 %v9365, %v9636
      %v9701 = vadd.f32 %v9367, %v9638
      %v9702 = vadd.f32 %v9370, %v9641
      %v9703 = vadd.f32 %v9372, %v9643
      %v9704 = vadd.f32 %v9375, %v9646
      %v9705 = vadd.f32 %v9377, %v9648
      %v9706 = vadd.f32 %v9380, %v9651
      %v9707 = vadd.f32 %v9382, %v9653
      %v9708 = vadd.f32 %v9385, %v9656
      %v9709 = vadd.f32 %v9387, %v9658
      %v9710 = vadd.f32 %v9390, %v9661
      %v9711 = vadd.f32 %v9392, %v9663
      %v9712 = vadd.f32 %v9395, %v9666
      %v9713 = vadd.f32 %v9397, %v9668
      %v9714 = vadd.f32 %v9400, %v9671
      %v9715 = vld [vmem:[#allocation2 + $0x17] sm:$0xff]
      %v9716 = vld [vmem:[#allocation2 + $0x1f] sm:$0xff]
      %v9717 = vld [vmem:[#allocation2 + $0x27] sm:$0xff]
      %v9718 = vld [vmem:[#allocation2 + $0x2f] sm:$0xff]
      %v9719 = vld [vmem:[#allocation2 + $0x37] sm:$0xff]
      %v9720 = vld [vmem:[#allocation2 + $0x3f] sm:$0xff]
      %v9721 = vld [vmem:[#allocation2 + $0x47] sm:$0xff]
      %v9722 = vld [vmem:[#allocation2 + $0x4f] sm:$0xff]
      %v9723 = vld [vmem:[#allocation2 + $0x57] sm:$0xff]
      %v9724 = vld [vmem:[#allocation2 + $0x5f] sm:$0xff]
      %v9725 = vld [vmem:[#allocation2 + $0x67] sm:$0xff]
      %v9726 = vld [vmem:[#allocation2 + $0x6f] sm:$0xff]
      %v9727 = vld [vmem:[#allocation2 + $0x77] sm:$0xff]
      %v9728 = vld [vmem:[#allocation2 + $0x7f] sm:$0xff]
      %v9729 = vld [vmem:[#allocation2 + $0x87] sm:$0xff]
      %v9730 = vld [vmem:[#allocation2 + $0x8f] sm:$0xff]
      %v9731 = vld [vmem:[#allocation2 + $0x97] sm:$0xff]
      %v9732 = vld [vmem:[#allocation2 + $0x9f] sm:$0xff]
      %v9733 = vld [vmem:[#allocation2 + $0xa7] sm:$0xff]
      %v9734 = vld [vmem:[#allocation2 + $0xaf] sm:$0xff]
      %v9735 = vld [vmem:[#allocation2 + $0xb7] sm:$0xff]
      %v9736 = vld [vmem:[#allocation2 + $0xbf] sm:$0xff]
      %v9737 = vld [vmem:[#allocation2 + $0xc7] sm:$0xff]
      %v9738 = vld [vmem:[#allocation2 + $0xcf] sm:$0xff]
      %v9739 = vld [vmem:[#allocation2 + $0xd7] sm:$0xff]
      %v9740 = vld [vmem:[#allocation2 + $0xdf] sm:$0xff]
      %v9741 = vld [vmem:[#allocation2 + $0xe7] sm:$0xff]
      %v9742 = vld [vmem:[#allocation2 + $0xef] sm:$0xff]
      %v9743 = vld [vmem:[#allocation2 + $0xf7] sm:$0xff]
      %v9744 = vld [vmem:[#allocation2 + $0xff] sm:$0xff]
      %v9745 = vld [vmem:[#allocation2 + $0x107] sm:$0xff]
      %v9746 = vld [vmem:[#allocation2 + $0x10f] sm:$0xff]
      %v9747 = vld [vmem:[#allocation2 + $0x117] sm:$0xff]
      %v9748 = vld [vmem:[#allocation2 + $0x11f] sm:$0xff]
      %v9749 = vld [vmem:[#allocation2 + $0x127] sm:$0xff]
      %v9750 = vld [vmem:[#allocation2 + $0x12f] sm:$0xff]
      %v9751 = vld [vmem:[#allocation2 + $0x137] sm:$0xff]
      %v9752 = vld [vmem:[#allocation2 + $0x13f] sm:$0xff]
      %v9753 = vld [vmem:[#allocation2 + $0x147] sm:$0xff]
      %v9754 = vld [vmem:[#allocation2 + $0x14f] sm:$0xff]
      %v9755 = vld [vmem:[#allocation2 + $0x157] sm:$0xff]
      %v9756 = vpack.c.bf16 %v9716, %v9715
      %v9757 = vpack.c.bf16 %v9718, %v9717
      %v9758 = vpack.c.bf16 %v9720, %v9719
      %v9759 = vpack.c.bf16 %v9722, %v9721
      %v9760 = vpack.c.bf16 %v9724, %v9723
      %v9761 = vpack.c.bf16 %v9726, %v9725
      %v9762 = vpack.c.bf16 %v9728, %v9727
      %v9763 = vpack.c.bf16 %v9730, %v9729
      %v9764 = vpack.c.bf16 %v9732, %v9731
      %v9765 = vpack.c.bf16 %v9734, %v9733
      %v9766 = vpack.c.bf16 %v9736, %v9735
      %v9767 = vpack.c.bf16 %v9738, %v9737
      %v9768 = vpack.c.bf16 %v9740, %v9739
      %v9769 = vpack.c.bf16 %v9742, %v9741
      %v9770 = vpack.c.bf16 %v9744, %v9743
      %v9771 = vpack.c.bf16 %v9746, %v9745
      %v9772 = vpack.c.bf16 %v9748, %v9747
      %v9773 = vpack.c.bf16 %v9750, %v9749
      %v9774 = vpack.c.bf16 %v9752, %v9751
      %v9775 = vpack.c.bf16 %v9754, %v9753
      %v9776 = vpack.c.bf16 %v9755, %v9755
      %s9777 = scalar_lea.vmem %s5, 96
      %v9778 = vld [vmem:[%s9777] sm:$0xf]
      %v9779 = vld [vmem:[%s9777 + $0x4] sm:$0xf]
      %v9780 = vld [vmem:[%s9777 + $0x8] sm:$0xf]
      %v9781 = vld [vmem:[%s9777 + $0xc] sm:$0xf]
      %v9782 = vld [vmem:[%s9777 + $0x10] sm:$0xf]
      %v9783 = vld [vmem:[%s9777 + $0x14] sm:$0xf]
      %v9784 = vld [vmem:[%s9777 + $0x18] sm:$0xf]
      %v9785 = vld [vmem:[%s9777 + $0x1c] sm:$0xf]
      %v9794 = vunpack.c.l.b16 %v9778
      %v9795 = vunpack.c.l.b16 %v9779
      %v9796 = vunpack.c.l.b16 %v9780
      %v9797 = vunpack.c.l.b16 %v9781
      %v9798 = vunpack.c.l.b16 %v9782
      %v9799 = vunpack.c.l.b16 %v9783
      %v9800 = vunpack.c.l.b16 %v9784
      %v9801 = vunpack.c.l.b16 %v9785
      %v9802 = vpack.c.b16 %v9795, %v9794
      %v9803 = vpack.c.b16 %v9797, %v9796
      %v9804 = vpack.c.b16 %v9799, %v9798
      %v9805 = vpack.c.b16 %v9801, %v9800
      %v9811 = vsel %vm3288, %v9756, 0
      %v9814 = vsel %vm3288, %v9757, 0
      %v9817 = vsel %vm3288, %v9758, 0
      %v9820 = vsel %vm3288, %v9759, 0
      %v9823 = vsel %vm3288, %v9760, 0
      %v9826 = vsel %vm3288, %v9761, 0
      %v9829 = vsel %vm3288, %v9762, 0
      %v9832 = vsel %vm3288, %v9763, 0
      %v9835 = vsel %vm3288, %v9764, 0
      %v9838 = vsel %vm3288, %v9765, 0
      %v9841 = vsel %vm3288, %v9766, 0
      %v9844 = vsel %vm3288, %v9767, 0
      %v9847 = vsel %vm3288, %v9768, 0
      %v9850 = vsel %vm3288, %v9769, 0
      %v9853 = vsel %vm3288, %v9770, 0
      %v9856 = vsel %vm3288, %v9771, 0
      %v9859 = vsel %vm3288, %v9772, 0
      %v9862 = vsel %vm3288, %v9773, 0
      %v9865 = vsel %vm3288, %v9774, 0
      %v9868 = vsel %vm3288, %v9775, 0
      %v9871 = vsel %vm3288, %v9776, 0
      %9873 = vmatpush.bf16.msra.mxu0 0
      %9874 = vmatpush.bf16.msra.mxu0 0
      %9875 = vmatpush.bf16.msra.mxu0 0
      %9876 = vmatpush.bf16.msra.mxu0 0
      %9877 = vmatpush.bf16.msra.mxu0 %v9805
      %9878 = vmatpush.bf16.msra.mxu0 %v9804
      %9879 = vmatpush.bf16.msra.mxu0 %v9803
      %9880 = vmatpush.bf16.msra.mxu0 %v9802
      %9881 = vmatmul.bf16.gmra.mxu0 %v9811
      %v9882 = vpop.f32.mrf.mxu0
      %v9883 = vadd.f32 0.0, %v9882
      %v9884 = vpop.f32.mrf.mxu0
      %v9885 = vadd.f32 0.0, %v9884
      %9886 = vmatmul.bf16.gmra.mxu0 %v9814
      %v9887 = vpop.f32.mrf.mxu0
      %v9888 = vadd.f32 0.0, %v9887
      %v9889 = vpop.f32.mrf.mxu0
      %v9890 = vadd.f32 0.0, %v9889
      %9891 = vmatmul.bf16.gmra.mxu0 %v9817
      %v9892 = vpop.f32.mrf.mxu0
      %v9893 = vadd.f32 0.0, %v9892
      %v9894 = vpop.f32.mrf.mxu0
      %v9895 = vadd.f32 0.0, %v9894
      %9896 = vmatmul.bf16.gmra.mxu0 %v9820
      %v9897 = vpop.f32.mrf.mxu0
      %v9898 = vadd.f32 0.0, %v9897
      %v9899 = vpop.f32.mrf.mxu0
      %v9900 = vadd.f32 0.0, %v9899
      %9901 = vmatmul.bf16.gmra.mxu0 %v9823
      %v9902 = vpop.f32.mrf.mxu0
      %v9903 = vadd.f32 0.0, %v9902
      %v9904 = vpop.f32.mrf.mxu0
      %v9905 = vadd.f32 0.0, %v9904
      %9906 = vmatmul.bf16.gmra.mxu0 %v9826
      %v9907 = vpop.f32.mrf.mxu0
      %v9908 = vadd.f32 0.0, %v9907
      %v9909 = vpop.f32.mrf.mxu0
      %v9910 = vadd.f32 0.0, %v9909
      %9911 = vmatmul.bf16.gmra.mxu0 %v9829
      %v9912 = vpop.f32.mrf.mxu0
      %v9913 = vadd.f32 0.0, %v9912
      %v9914 = vpop.f32.mrf.mxu0
      %v9915 = vadd.f32 0.0, %v9914
      %9916 = vmatmul.bf16.gmra.mxu0 %v9832
      %v9917 = vpop.f32.mrf.mxu0
      %v9918 = vadd.f32 0.0, %v9917
      %v9919 = vpop.f32.mrf.mxu0
      %v9920 = vadd.f32 0.0, %v9919
      %9921 = vmatmul.bf16.gmra.mxu0 %v9835
      %v9922 = vpop.f32.mrf.mxu0
      %v9923 = vadd.f32 0.0, %v9922
      %v9924 = vpop.f32.mrf.mxu0
      %v9925 = vadd.f32 0.0, %v9924
      %9926 = vmatmul.bf16.gmra.mxu0 %v9838
      %v9927 = vpop.f32.mrf.mxu0
      %v9928 = vadd.f32 0.0, %v9927
      %v9929 = vpop.f32.mrf.mxu0
      %v9930 = vadd.f32 0.0, %v9929
      %9931 = vmatmul.bf16.gmra.mxu0 %v9841
      %v9932 = vpop.f32.mrf.mxu0
      %v9933 = vadd.f32 0.0, %v9932
      %v9934 = vpop.f32.mrf.mxu0
      %v9935 = vadd.f32 0.0, %v9934
      %9936 = vmatmul.bf16.gmra.mxu0 %v9844
      %v9937 = vpop.f32.mrf.mxu0
      %v9938 = vadd.f32 0.0, %v9937
      %v9939 = vpop.f32.mrf.mxu0
      %v9940 = vadd.f32 0.0, %v9939
      %9941 = vmatmul.bf16.gmra.mxu0 %v9847
      %v9942 = vpop.f32.mrf.mxu0
      %v9943 = vadd.f32 0.0, %v9942
      %v9944 = vpop.f32.mrf.mxu0
      %v9945 = vadd.f32 0.0, %v9944
      %9946 = vmatmul.bf16.gmra.mxu0 %v9850
      %v9947 = vpop.f32.mrf.mxu0
      %v9948 = vadd.f32 0.0, %v9947
      %v9949 = vpop.f32.mrf.mxu0
      %v9950 = vadd.f32 0.0, %v9949
      %9951 = vmatmul.bf16.gmra.mxu0 %v9853
      %v9952 = vpop.f32.mrf.mxu0
      %v9953 = vadd.f32 0.0, %v9952
      %v9954 = vpop.f32.mrf.mxu0
      %v9955 = vadd.f32 0.0, %v9954
      %9956 = vmatmul.bf16.gmra.mxu0 %v9856
      %v9957 = vpop.f32.mrf.mxu0
      %v9958 = vadd.f32 0.0, %v9957
      %v9959 = vpop.f32.mrf.mxu0
      %v9960 = vadd.f32 0.0, %v9959
      %9961 = vmatmul.bf16.gmra.mxu0 %v9859
      %v9962 = vpop.f32.mrf.mxu0
      %v9963 = vadd.f32 0.0, %v9962
      %v9964 = vpop.f32.mrf.mxu0
      %v9965 = vadd.f32 0.0, %v9964
      %9966 = vmatmul.bf16.gmra.mxu0 %v9862
      %v9967 = vpop.f32.mrf.mxu0
      %v9968 = vadd.f32 0.0, %v9967
      %v9969 = vpop.f32.mrf.mxu0
      %v9970 = vadd.f32 0.0, %v9969
      %9971 = vmatmul.bf16.gmra.mxu0 %v9865
      %v9972 = vpop.f32.mrf.mxu0
      %v9973 = vadd.f32 0.0, %v9972
      %v9974 = vpop.f32.mrf.mxu0
      %v9975 = vadd.f32 0.0, %v9974
      %9976 = vmatmul.bf16.gmra.mxu0 %v9868
      %v9977 = vpop.f32.mrf.mxu0
      %v9978 = vadd.f32 0.0, %v9977
      %v9979 = vpop.f32.mrf.mxu0
      %v9980 = vadd.f32 0.0, %v9979
      %9981 = vmatmul.bf16.gmra.mxu0 %v9871
      %v9982 = vpop.f32.mrf.mxu0
      %v9983 = vadd.f32 0.0, %v9982
      %v9984 = vpop.f32.mrf.mxu0
      %9985 = vdwg.mxu0
      %v9986 = vadd.f32 %v9674, %v9883
      %v9987 = vadd.f32 %v9675, %v9885
      %v9988 = vadd.f32 %v9676, %v9888
      %v9989 = vadd.f32 %v9677, %v9890
      %v9990 = vadd.f32 %v9678, %v9893
      %v9991 = vadd.f32 %v9679, %v9895
      %v9992 = vadd.f32 %v9680, %v9898
      %v9993 = vadd.f32 %v9681, %v9900
      %v9994 = vadd.f32 %v9682, %v9903
      %v9995 = vadd.f32 %v9683, %v9905
      %v9996 = vadd.f32 %v9684, %v9908
      %v9997 = vadd.f32 %v9685, %v9910
      %v9998 = vadd.f32 %v9686, %v9913
      %v9999 = vadd.f32 %v9687, %v9915
      %v10000 = vadd.f32 %v9688, %v9918
      %v10001 = vadd.f32 %v9689, %v9920
      %v10002 = vadd.f32 %v9690, %v9923
      %v10003 = vadd.f32 %v9691, %v9925
      %v10004 = vadd.f32 %v9692, %v9928
      %v10005 = vadd.f32 %v9693, %v9930
      %v10006 = vadd.f32 %v9694, %v9933
      %v10007 = vadd.f32 %v9695, %v9935
      %v10008 = vadd.f32 %v9696, %v9938
      %v10009 = vadd.f32 %v9697, %v9940
      %v10010 = vadd.f32 %v9698, %v9943
      %v10011 = vadd.f32 %v9699, %v9945
      %v10012 = vadd.f32 %v9700, %v9948
      %v10013 = vadd.f32 %v9701, %v9950
      %v10014 = vadd.f32 %v9702, %v9953
      %v10015 = vadd.f32 %v9703, %v9955
      %v10016 = vadd.f32 %v9704, %v9958
      %v10017 = vadd.f32 %v9705, %v9960
      %v10018 = vadd.f32 %v9706, %v9963
      %v10019 = vadd.f32 %v9707, %v9965
      %v10020 = vadd.f32 %v9708, %v9968
      %v10021 = vadd.f32 %v9709, %v9970
      %v10022 = vadd.f32 %v9710, %v9973
      %v10023 = vadd.f32 %v9711, %v9975
      %v10024 = vadd.f32 %v9712, %v9978
      %v10025 = vadd.f32 %v9713, %v9980
      %v10026 = vadd.f32 %v9714, %v9983
      %v10027 = vld [vmem:[#allocation2 + $0x18] sm:$0xff]
      %v10028 = vld [vmem:[#allocation2 + $0x20] sm:$0xff]
      %v10029 = vld [vmem:[#allocation2 + $0x28] sm:$0xff]
      %v10030 = vld [vmem:[#allocation2 + $0x30] sm:$0xff]
      %v10031 = vld [vmem:[#allocation2 + $0x38] sm:$0xff]
      %v10032 = vld [vmem:[#allocation2 + $0x40] sm:$0xff]
      %v10033 = vld [vmem:[#allocation2 + $0x48] sm:$0xff]
      %v10034 = vld [vmem:[#allocation2 + $0x50] sm:$0xff]
      %v10035 = vld [vmem:[#allocation2 + $0x58] sm:$0xff]
      %v10036 = vld [vmem:[#allocation2 + $0x60] sm:$0xff]
      %v10037 = vld [vmem:[#allocation2 + $0x68] sm:$0xff]
      %v10038 = vld [vmem:[#allocation2 + $0x70] sm:$0xff]
      %v10039 = vld [vmem:[#allocation2 + $0x78] sm:$0xff]
      %v10040 = vld [vmem:[#allocation2 + $0x80] sm:$0xff]
      %v10041 = vld [vmem:[#allocation2 + $0x88] sm:$0xff]
      %v10042 = vld [vmem:[#allocation2 + $0x90] sm:$0xff]
      %v10043 = vld [vmem:[#allocation2 + $0x98] sm:$0xff]
      %v10044 = vld [vmem:[#allocation2 + $0xa0] sm:$0xff]
      %v10045 = vld [vmem:[#allocation2 + $0xa8] sm:$0xff]
      %v10046 = vld [vmem:[#allocation2 + $0xb0] sm:$0xff]
      %v10047 = vld [vmem:[#allocation2 + $0xb8] sm:$0xff]
      %v10048 = vld [vmem:[#allocation2 + $0xc0] sm:$0xff]
      %v10049 = vld [vmem:[#allocation2 + $0xc8] sm:$0xff]
      %v10050 = vld [vmem:[#allocation2 + $0xd0] sm:$0xff]
      %v10051 = vld [vmem:[#allocation2 + $0xd8] sm:$0xff]
      %v10052 = vld [vmem:[#allocation2 + $0xe0] sm:$0xff]
      %v10053 = vld [vmem:[#allocation2 + $0xe8] sm:$0xff]
      %v10054 = vld [vmem:[#allocation2 + $0xf0] sm:$0xff]
      %v10055 = vld [vmem:[#allocation2 + $0xf8] sm:$0xff]
      %v10056 = vld [vmem:[#allocation2 + $0x100] sm:$0xff]
      %v10057 = vld [vmem:[#allocation2 + $0x108] sm:$0xff]
      %v10058 = vld [vmem:[#allocation2 + $0x110] sm:$0xff]
      %v10059 = vld [vmem:[#allocation2 + $0x118] sm:$0xff]
      %v10060 = vld [vmem:[#allocation2 + $0x120] sm:$0xff]
      %v10061 = vld [vmem:[#allocation2 + $0x128] sm:$0xff]
      %v10062 = vld [vmem:[#allocation2 + $0x130] sm:$0xff]
      %v10063 = vld [vmem:[#allocation2 + $0x138] sm:$0xff]
      %v10064 = vld [vmem:[#allocation2 + $0x140] sm:$0xff]
      %v10065 = vld [vmem:[#allocation2 + $0x148] sm:$0xff]
      %v10066 = vld [vmem:[#allocation2 + $0x150] sm:$0xff]
      %v10067 = vld [vmem:[#allocation2 + $0x158] sm:$0xff]
      %v10068 = vpack.c.bf16 %v10028, %v10027
      %v10069 = vpack.c.bf16 %v10030, %v10029
      %v10070 = vpack.c.bf16 %v10032, %v10031
      %v10071 = vpack.c.bf16 %v10034, %v10033
      %v10072 = vpack.c.bf16 %v10036, %v10035
      %v10073 = vpack.c.bf16 %v10038, %v10037
      %v10074 = vpack.c.bf16 %v10040, %v10039
      %v10075 = vpack.c.bf16 %v10042, %v10041
      %v10076 = vpack.c.bf16 %v10044, %v10043
      %v10077 = vpack.c.bf16 %v10046, %v10045
      %v10078 = vpack.c.bf16 %v10048, %v10047
      %v10079 = vpack.c.bf16 %v10050, %v10049
      %v10080 = vpack.c.bf16 %v10052, %v10051
      %v10081 = vpack.c.bf16 %v10054, %v10053
      %v10082 = vpack.c.bf16 %v10056, %v10055
      %v10083 = vpack.c.bf16 %v10058, %v10057
      %v10084 = vpack.c.bf16 %v10060, %v10059
      %v10085 = vpack.c.bf16 %v10062, %v10061
      %v10086 = vpack.c.bf16 %v10064, %v10063
      %v10087 = vpack.c.bf16 %v10066, %v10065
      %v10088 = vpack.c.bf16 %v10067, %v10067
      %s10089 = scalar_lea.vmem %s5, 128
      %v10090 = vld [vmem:[%s10089] sm:$0xf]
      %v10091 = vld [vmem:[%s10089 + $0x4] sm:$0xf]
      %v10092 = vld [vmem:[%s10089 + $0x8] sm:$0xf]
      %v10093 = vld [vmem:[%s10089 + $0xc] sm:$0xf]
      %v10094 = vld [vmem:[%s10089 + $0x10] sm:$0xf]
      %v10095 = vld [vmem:[%s10089 + $0x14] sm:$0xf]
      %v10096 = vld [vmem:[%s10089 + $0x18] sm:$0xf]
      %v10097 = vld [vmem:[%s10089 + $0x1c] sm:$0xf]
      %v10106 = vunpack.c.l.b16 %v10090
      %v10107 = vunpack.c.l.b16 %v10091
      %v10108 = vunpack.c.l.b16 %v10092
      %v10109 = vunpack.c.l.b16 %v10093
      %v10110 = vunpack.c.l.b16 %v10094
      %v10111 = vunpack.c.l.b16 %v10095
      %v10112 = vunpack.c.l.b16 %v10096
      %v10113 = vunpack.c.l.b16 %v10097
      %v10114 = vpack.c.b16 %v10107, %v10106
      %v10115 = vpack.c.b16 %v10109, %v10108
      %v10116 = vpack.c.b16 %v10111, %v10110
      %v10117 = vpack.c.b16 %v10113, %v10112
      %v10123 = vsel %vm3288, %v10068, 0
      %v10126 = vsel %vm3288, %v10069, 0
      %v10129 = vsel %vm3288, %v10070, 0
      %v10132 = vsel %vm3288, %v10071, 0
      %v10135 = vsel %vm3288, %v10072, 0
      %v10138 = vsel %vm3288, %v10073, 0
      %v10141 = vsel %vm3288, %v10074, 0
      %v10144 = vsel %vm3288, %v10075, 0
      %v10147 = vsel %vm3288, %v10076, 0
      %v10150 = vsel %vm3288, %v10077, 0
      %v10153 = vsel %vm3288, %v10078, 0
      %v10156 = vsel %vm3288, %v10079, 0
      %v10159 = vsel %vm3288, %v10080, 0
      %v10162 = vsel %vm3288, %v10081, 0
      %v10165 = vsel %vm3288, %v10082, 0
      %v10168 = vsel %vm3288, %v10083, 0
      %v10171 = vsel %vm3288, %v10084, 0
      %v10174 = vsel %vm3288, %v10085, 0
      %v10177 = vsel %vm3288, %v10086, 0
      %v10180 = vsel %vm3288, %v10087, 0
      %v10183 = vsel %vm3288, %v10088, 0
      %10185 = vmatpush.bf16.msra.mxu0 0
      %10186 = vmatpush.bf16.msra.mxu0 0
      %10187 = vmatpush.bf16.msra.mxu0 0
      %10188 = vmatpush.bf16.msra.mxu0 0
      %10189 = vmatpush.bf16.msra.mxu0 %v10117
      %10190 = vmatpush.bf16.msra.mxu0 %v10116
      %10191 = vmatpush.bf16.msra.mxu0 %v10115
      %10192 = vmatpush.bf16.msra.mxu0 %v10114
      %10193 = vmatmul.bf16.gmra.mxu0 %v10123
      %v10194 = vpop.f32.mrf.mxu0
      %v10195 = vadd.f32 0.0, %v10194
      %v10196 = vpop.f32.mrf.mxu0
      %v10197 = vadd.f32 0.0, %v10196
      %10198 = vmatmul.bf16.gmra.mxu0 %v10126
      %v10199 = vpop.f32.mrf.mxu0
      %v10200 = vadd.f32 0.0, %v10199
      %v10201 = vpop.f32.mrf.mxu0
      %v10202 = vadd.f32 0.0, %v10201
      %10203 = vmatmul.bf16.gmra.mxu0 %v10129
      %v10204 = vpop.f32.mrf.mxu0
      %v10205 = vadd.f32 0.0, %v10204
      %v10206 = vpop.f32.mrf.mxu0
      %v10207 = vadd.f32 0.0, %v10206
      %10208 = vmatmul.bf16.gmra.mxu0 %v10132
      %v10209 = vpop.f32.mrf.mxu0
      %v10210 = vadd.f32 0.0, %v10209
      %v10211 = vpop.f32.mrf.mxu0
      %v10212 = vadd.f32 0.0, %v10211
      %10213 = vmatmul.bf16.gmra.mxu0 %v10135
      %v10214 = vpop.f32.mrf.mxu0
      %v10215 = vadd.f32 0.0, %v10214
      %v10216 = vpop.f32.mrf.mxu0
      %v10217 = vadd.f32 0.0, %v10216
      %10218 = vmatmul.bf16.gmra.mxu0 %v10138
      %v10219 = vpop.f32.mrf.mxu0
      %v10220 = vadd.f32 0.0, %v10219
      %v10221 = vpop.f32.mrf.mxu0
      %v10222 = vadd.f32 0.0, %v10221
      %10223 = vmatmul.bf16.gmra.mxu0 %v10141
      %v10224 = vpop.f32.mrf.mxu0
      %v10225 = vadd.f32 0.0, %v10224
      %v10226 = vpop.f32.mrf.mxu0
      %v10227 = vadd.f32 0.0, %v10226
      %10228 = vmatmul.bf16.gmra.mxu0 %v10144
      %v10229 = vpop.f32.mrf.mxu0
      %v10230 = vadd.f32 0.0, %v10229
      %v10231 = vpop.f32.mrf.mxu0
      %v10232 = vadd.f32 0.0, %v10231
      %10233 = vmatmul.bf16.gmra.mxu0 %v10147
      %v10234 = vpop.f32.mrf.mxu0
      %v10235 = vadd.f32 0.0, %v10234
      %v10236 = vpop.f32.mrf.mxu0
      %v10237 = vadd.f32 0.0, %v10236
      %10238 = vmatmul.bf16.gmra.mxu0 %v10150
      %v10239 = vpop.f32.mrf.mxu0
      %v10240 = vadd.f32 0.0, %v10239
      %v10241 = vpop.f32.mrf.mxu0
      %v10242 = vadd.f32 0.0, %v10241
      %10243 = vmatmul.bf16.gmra.mxu0 %v10153
      %v10244 = vpop.f32.mrf.mxu0
      %v10245 = vadd.f32 0.0, %v10244
      %v10246 = vpop.f32.mrf.mxu0
      %v10247 = vadd.f32 0.0, %v10246
      %10248 = vmatmul.bf16.gmra.mxu0 %v10156
      %v10249 = vpop.f32.mrf.mxu0
      %v10250 = vadd.f32 0.0, %v10249
      %v10251 = vpop.f32.mrf.mxu0
      %v10252 = vadd.f32 0.0, %v10251
      %10253 = vmatmul.bf16.gmra.mxu0 %v10159
      %v10254 = vpop.f32.mrf.mxu0
      %v10255 = vadd.f32 0.0, %v10254
      %v10256 = vpop.f32.mrf.mxu0
      %v10257 = vadd.f32 0.0, %v10256
      %10258 = vmatmul.bf16.gmra.mxu0 %v10162
      %v10259 = vpop.f32.mrf.mxu0
      %v10260 = vadd.f32 0.0, %v10259
      %v10261 = vpop.f32.mrf.mxu0
      %v10262 = vadd.f32 0.0, %v10261
      %10263 = vmatmul.bf16.gmra.mxu0 %v10165
      %v10264 = vpop.f32.mrf.mxu0
      %v10265 = vadd.f32 0.0, %v10264
      %v10266 = vpop.f32.mrf.mxu0
      %v10267 = vadd.f32 0.0, %v10266
      %10268 = vmatmul.bf16.gmra.mxu0 %v10168
      %v10269 = vpop.f32.mrf.mxu0
      %v10270 = vadd.f32 0.0, %v10269
      %v10271 = vpop.f32.mrf.mxu0
      %v10272 = vadd.f32 0.0, %v10271
      %10273 = vmatmul.bf16.gmra.mxu0 %v10171
      %v10274 = vpop.f32.mrf.mxu0
      %v10275 = vadd.f32 0.0, %v10274
      %v10276 = vpop.f32.mrf.mxu0
      %v10277 = vadd.f32 0.0, %v10276
      %10278 = vmatmul.bf16.gmra.mxu0 %v10174
      %v10279 = vpop.f32.mrf.mxu0
      %v10280 = vadd.f32 0.0, %v10279
      %v10281 = vpop.f32.mrf.mxu0
      %v10282 = vadd.f32 0.0, %v10281
      %10283 = vmatmul.bf16.gmra.mxu0 %v10177
      %v10284 = vpop.f32.mrf.mxu0
      %v10285 = vadd.f32 0.0, %v10284
      %v10286 = vpop.f32.mrf.mxu0
      %v10287 = vadd.f32 0.0, %v10286
      %10288 = vmatmul.bf16.gmra.mxu0 %v10180
      %v10289 = vpop.f32.mrf.mxu0
      %v10290 = vadd.f32 0.0, %v10289
      %v10291 = vpop.f32.mrf.mxu0
      %v10292 = vadd.f32 0.0, %v10291
      %10293 = vmatmul.bf16.gmra.mxu0 %v10183
      %v10294 = vpop.f32.mrf.mxu0
      %v10295 = vadd.f32 0.0, %v10294
      %v10296 = vpop.f32.mrf.mxu0
      %10297 = vdwg.mxu0
      %v10298 = vadd.f32 %v9986, %v10195
      %v10299 = vadd.f32 %v9987, %v10197
      %v10300 = vadd.f32 %v9988, %v10200
      %v10301 = vadd.f32 %v9989, %v10202
      %v10302 = vadd.f32 %v9990, %v10205
      %v10303 = vadd.f32 %v9991, %v10207
      %v10304 = vadd.f32 %v9992, %v10210
      %v10305 = vadd.f32 %v9993, %v10212
      %v10306 = vadd.f32 %v9994, %v10215
      %v10307 = vadd.f32 %v9995, %v10217
      %v10308 = vadd.f32 %v9996, %v10220
      %v10309 = vadd.f32 %v9997, %v10222
      %v10310 = vadd.f32 %v9998, %v10225
      %v10311 = vadd.f32 %v9999, %v10227
      %v10312 = vadd.f32 %v10000, %v10230
      %v10313 = vadd.f32 %v10001, %v10232
      %v10314 = vadd.f32 %v10002, %v10235
      %v10315 = vadd.f32 %v10003, %v10237
      %v10316 = vadd.f32 %v10004, %v10240
      %v10317 = vadd.f32 %v10005, %v10242
      %v10318 = vadd.f32 %v10006, %v10245
      %v10319 = vadd.f32 %v10007, %v10247
      %v10320 = vadd.f32 %v10008, %v10250
      %v10321 = vadd.f32 %v10009, %v10252
      %v10322 = vadd.f32 %v10010, %v10255
      %v10323 = vadd.f32 %v10011, %v10257
      %v10324 = vadd.f32 %v10012, %v10260
      %v10325 = vadd.f32 %v10013, %v10262
      %v10326 = vadd.f32 %v10014, %v10265
      %v10327 = vadd.f32 %v10015, %v10267
      %v10328 = vadd.f32 %v10016, %v10270
      %v10329 = vadd.f32 %v10017, %v10272
      %v10330 = vadd.f32 %v10018, %v10275
      %v10331 = vadd.f32 %v10019, %v10277
      %v10332 = vadd.f32 %v10020, %v10280
      %v10333 = vadd.f32 %v10021, %v10282
      %v10334 = vadd.f32 %v10022, %v10285
      %v10335 = vadd.f32 %v10023, %v10287
      %v10336 = vadd.f32 %v10024, %v10290
      %v10337 = vadd.f32 %v10025, %v10292
      %v10338 = vadd.f32 %v10026, %v10295
      %v10339 = vld [vmem:[#allocation2 + $0x19] sm:$0xff]
      %v10340 = vld [vmem:[#allocation2 + $0x21] sm:$0xff]
      %v10341 = vld [vmem:[#allocation2 + $0x29] sm:$0xff]
      %v10342 = vld [vmem:[#allocation2 + $0x31] sm:$0xff]
      %v10343 = vld [vmem:[#allocation2 + $0x39] sm:$0xff]
      %v10344 = vld [vmem:[#allocation2 + $0x41] sm:$0xff]
      %v10345 = vld [vmem:[#allocation2 + $0x49] sm:$0xff]
      %v10346 = vld [vmem:[#allocation2 + $0x51] sm:$0xff]
      %v10347 = vld [vmem:[#allocation2 + $0x59] sm:$0xff]
      %v10348 = vld [vmem:[#allocation2 + $0x61] sm:$0xff]
      %v10349 = vld [vmem:[#allocation2 + $0x69] sm:$0xff]
      %v10350 = vld [vmem:[#allocation2 + $0x71] sm:$0xff]
      %v10351 = vld [vmem:[#allocation2 + $0x79] sm:$0xff]
      %v10352 = vld [vmem:[#allocation2 + $0x81] sm:$0xff]
      %v10353 = vld [vmem:[#allocation2 + $0x89] sm:$0xff]
      %v10354 = vld [vmem:[#allocation2 + $0x91] sm:$0xff]
      %v10355 = vld [vmem:[#allocation2 + $0x99] sm:$0xff]
      %v10356 = vld [vmem:[#allocation2 + $0xa1] sm:$0xff]
      %v10357 = vld [vmem:[#allocation2 + $0xa9] sm:$0xff]
      %v10358 = vld [vmem:[#allocation2 + $0xb1] sm:$0xff]
      %v10359 = vld [vmem:[#allocation2 + $0xb9] sm:$0xff]
      %v10360 = vld [vmem:[#allocation2 + $0xc1] sm:$0xff]
      %v10361 = vld [vmem:[#allocation2 + $0xc9] sm:$0xff]
      %v10362 = vld [vmem:[#allocation2 + $0xd1] sm:$0xff]
      %v10363 = vld [vmem:[#allocation2 + $0xd9] sm:$0xff]
      %v10364 = vld [vmem:[#allocation2 + $0xe1] sm:$0xff]
      %v10365 = vld [vmem:[#allocation2 + $0xe9] sm:$0xff]
      %v10366 = vld [vmem:[#allocation2 + $0xf1] sm:$0xff]
      %v10367 = vld [vmem:[#allocation2 + $0xf9] sm:$0xff]
      %v10368 = vld [vmem:[#allocation2 + $0x101] sm:$0xff]
      %v10369 = vld [vmem:[#allocation2 + $0x109] sm:$0xff]
      %v10370 = vld [vmem:[#allocation2 + $0x111] sm:$0xff]
      %v10371 = vld [vmem:[#allocation2 + $0x119] sm:$0xff]
      %v10372 = vld [vmem:[#allocation2 + $0x121] sm:$0xff]
      %v10373 = vld [vmem:[#allocation2 + $0x129] sm:$0xff]
      %v10374 = vld [vmem:[#allocation2 + $0x131] sm:$0xff]
      %v10375 = vld [vmem:[#allocation2 + $0x139] sm:$0xff]
      %v10376 = vld [vmem:[#allocation2 + $0x141] sm:$0xff]
      %v10377 = vld [vmem:[#allocation2 + $0x149] sm:$0xff]
      %v10378 = vld [vmem:[#allocation2 + $0x151] sm:$0xff]
      %v10379 = vld [vmem:[#allocation2 + $0x159] sm:$0xff]
      %v10380 = vpack.c.bf16 %v10340, %v10339
      %v10381 = vpack.c.bf16 %v10342, %v10341
      %v10382 = vpack.c.bf16 %v10344, %v10343
      %v10383 = vpack.c.bf16 %v10346, %v10345
      %v10384 = vpack.c.bf16 %v10348, %v10347
      %v10385 = vpack.c.bf16 %v10350, %v10349
      %v10386 = vpack.c.bf16 %v10352, %v10351
      %v10387 = vpack.c.bf16 %v10354, %v10353
      %v10388 = vpack.c.bf16 %v10356, %v10355
      %v10389 = vpack.c.bf16 %v10358, %v10357
      %v10390 = vpack.c.bf16 %v10360, %v10359
      %v10391 = vpack.c.bf16 %v10362, %v10361
      %v10392 = vpack.c.bf16 %v10364, %v10363
      %v10393 = vpack.c.bf16 %v10366, %v10365
      %v10394 = vpack.c.bf16 %v10368, %v10367
      %v10395 = vpack.c.bf16 %v10370, %v10369
      %v10396 = vpack.c.bf16 %v10372, %v10371
      %v10397 = vpack.c.bf16 %v10374, %v10373
      %v10398 = vpack.c.bf16 %v10376, %v10375
      %v10399 = vpack.c.bf16 %v10378, %v10377
      %v10400 = vpack.c.bf16 %v10379, %v10379
      %s10401 = scalar_lea.vmem %s5, 160
      %v10402 = vld [vmem:[%s10401] sm:$0xf]
      %v10403 = vld [vmem:[%s10401 + $0x4] sm:$0xf]
      %v10404 = vld [vmem:[%s10401 + $0x8] sm:$0xf]
      %v10405 = vld [vmem:[%s10401 + $0xc] sm:$0xf]
      %v10406 = vld [vmem:[%s10401 + $0x10] sm:$0xf]
      %v10407 = vld [vmem:[%s10401 + $0x14] sm:$0xf]
      %v10408 = vld [vmem:[%s10401 + $0x18] sm:$0xf]
      %v10409 = vld [vmem:[%s10401 + $0x1c] sm:$0xf]
      %v10418 = vunpack.c.l.b16 %v10402
      %v10419 = vunpack.c.l.b16 %v10403
      %v10420 = vunpack.c.l.b16 %v10404
      %v10421 = vunpack.c.l.b16 %v10405
      %v10422 = vunpack.c.l.b16 %v10406
      %v10423 = vunpack.c.l.b16 %v10407
      %v10424 = vunpack.c.l.b16 %v10408
      %v10425 = vunpack.c.l.b16 %v10409
      %v10426 = vpack.c.b16 %v10419, %v10418
      %v10427 = vpack.c.b16 %v10421, %v10420
      %v10428 = vpack.c.b16 %v10423, %v10422
      %v10429 = vpack.c.b16 %v10425, %v10424
      %v10435 = vsel %vm3288, %v10380, 0
      %v10438 = vsel %vm3288, %v10381, 0
      %v10441 = vsel %vm3288, %v10382, 0
      %v10444 = vsel %vm3288, %v10383, 0
      %v10447 = vsel %vm3288, %v10384, 0
      %v10450 = vsel %vm3288, %v10385, 0
      %v10453 = vsel %vm3288, %v10386, 0
      %v10456 = vsel %vm3288, %v10387, 0
      %v10459 = vsel %vm3288, %v10388, 0
      %v10462 = vsel %vm3288, %v10389, 0
      %v10465 = vsel %vm3288, %v10390, 0
      %v10468 = vsel %vm3288, %v10391, 0
      %v10471 = vsel %vm3288, %v10392, 0
      %v10474 = vsel %vm3288, %v10393, 0
      %v10477 = vsel %vm3288, %v10394, 0
      %v10480 = vsel %vm3288, %v10395, 0
      %v10483 = vsel %vm3288, %v10396, 0
      %v10486 = vsel %vm3288, %v10397, 0
      %v10489 = vsel %vm3288, %v10398, 0
      %v10492 = vsel %vm3288, %v10399, 0
      %v10495 = vsel %vm3288, %v10400, 0
      %10497 = vmatpush.bf16.msra.mxu0 0
      %10498 = vmatpush.bf16.msra.mxu0 0
      %10499 = vmatpush.bf16.msra.mxu0 0
      %10500 = vmatpush.bf16.msra.mxu0 0
      %10501 = vmatpush.bf16.msra.mxu0 %v10429
      %10502 = vmatpush.bf16.msra.mxu0 %v10428
      %10503 = vmatpush.bf16.msra.mxu0 %v10427
      %10504 = vmatpush.bf16.msra.mxu0 %v10426
      %10505 = vmatmul.bf16.gmra.mxu0 %v10435
      %v10506 = vpop.f32.mrf.mxu0
      %v10507 = vadd.f32 0.0, %v10506
      %v10508 = vpop.f32.mrf.mxu0
      %v10509 = vadd.f32 0.0, %v10508
      %10510 = vmatmul.bf16.gmra.mxu0 %v10438
      %v10511 = vpop.f32.mrf.mxu0
      %v10512 = vadd.f32 0.0, %v10511
      %v10513 = vpop.f32.mrf.mxu0
      %v10514 = vadd.f32 0.0, %v10513
      %10515 = vmatmul.bf16.gmra.mxu0 %v10441
      %v10516 = vpop.f32.mrf.mxu0
      %v10517 = vadd.f32 0.0, %v10516
      %v10518 = vpop.f32.mrf.mxu0
      %v10519 = vadd.f32 0.0, %v10518
      %10520 = vmatmul.bf16.gmra.mxu0 %v10444
      %v10521 = vpop.f32.mrf.mxu0
      %v10522 = vadd.f32 0.0, %v10521
      %v10523 = vpop.f32.mrf.mxu0
      %v10524 = vadd.f32 0.0, %v10523
      %10525 = vmatmul.bf16.gmra.mxu0 %v10447
      %v10526 = vpop.f32.mrf.mxu0
      %v10527 = vadd.f32 0.0, %v10526
      %v10528 = vpop.f32.mrf.mxu0
      %v10529 = vadd.f32 0.0, %v10528
      %10530 = vmatmul.bf16.gmra.mxu0 %v10450
      %v10531 = vpop.f32.mrf.mxu0
      %v10532 = vadd.f32 0.0, %v10531
      %v10533 = vpop.f32.mrf.mxu0
      %v10534 = vadd.f32 0.0, %v10533
      %10535 = vmatmul.bf16.gmra.mxu0 %v10453
      %v10536 = vpop.f32.mrf.mxu0
      %v10537 = vadd.f32 0.0, %v10536
      %v10538 = vpop.f32.mrf.mxu0
      %v10539 = vadd.f32 0.0, %v10538
      %10540 = vmatmul.bf16.gmra.mxu0 %v10456
      %v10541 = vpop.f32.mrf.mxu0
      %v10542 = vadd.f32 0.0, %v10541
      %v10543 = vpop.f32.mrf.mxu0
      %v10544 = vadd.f32 0.0, %v10543
      %10545 = vmatmul.bf16.gmra.mxu0 %v10459
      %v10546 = vpop.f32.mrf.mxu0
      %v10547 = vadd.f32 0.0, %v10546
      %v10548 = vpop.f32.mrf.mxu0
      %v10549 = vadd.f32 0.0, %v10548
      %10550 = vmatmul.bf16.gmra.mxu0 %v10462
      %v10551 = vpop.f32.mrf.mxu0
      %v10552 = vadd.f32 0.0, %v10551
      %v10553 = vpop.f32.mrf.mxu0
      %v10554 = vadd.f32 0.0, %v10553
      %10555 = vmatmul.bf16.gmra.mxu0 %v10465
      %v10556 = vpop.f32.mrf.mxu0
      %v10557 = vadd.f32 0.0, %v10556
      %v10558 = vpop.f32.mrf.mxu0
      %v10559 = vadd.f32 0.0, %v10558
      %10560 = vmatmul.bf16.gmra.mxu0 %v10468
      %v10561 = vpop.f32.mrf.mxu0
      %v10562 = vadd.f32 0.0, %v10561
      %v10563 = vpop.f32.mrf.mxu0
      %v10564 = vadd.f32 0.0, %v10563
      %10565 = vmatmul.bf16.gmra.mxu0 %v10471
      %v10566 = vpop.f32.mrf.mxu0
      %v10567 = vadd.f32 0.0, %v10566
      %v10568 = vpop.f32.mrf.mxu0
      %v10569 = vadd.f32 0.0, %v10568
      %10570 = vmatmul.bf16.gmra.mxu0 %v10474
      %v10571 = vpop.f32.mrf.mxu0
      %v10572 = vadd.f32 0.0, %v10571
      %v10573 = vpop.f32.mrf.mxu0
      %v10574 = vadd.f32 0.0, %v10573
      %10575 = vmatmul.bf16.gmra.mxu0 %v10477
      %v10576 = vpop.f32.mrf.mxu0
      %v10577 = vadd.f32 0.0, %v10576
      %v10578 = vpop.f32.mrf.mxu0
      %v10579 = vadd.f32 0.0, %v10578
      %10580 = vmatmul.bf16.gmra.mxu0 %v10480
      %v10581 = vpop.f32.mrf.mxu0
      %v10582 = vadd.f32 0.0, %v10581
      %v10583 = vpop.f32.mrf.mxu0
      %v10584 = vadd.f32 0.0, %v10583
      %10585 = vmatmul.bf16.gmra.mxu0 %v10483
      %v10586 = vpop.f32.mrf.mxu0
      %v10587 = vadd.f32 0.0, %v10586
      %v10588 = vpop.f32.mrf.mxu0
      %v10589 = vadd.f32 0.0, %v10588
      %10590 = vmatmul.bf16.gmra.mxu0 %v10486
      %v10591 = vpop.f32.mrf.mxu0
      %v10592 = vadd.f32 0.0, %v10591
      %v10593 = vpop.f32.mrf.mxu0
      %v10594 = vadd.f32 0.0, %v10593
      %10595 = vmatmul.bf16.gmra.mxu0 %v10489
      %v10596 = vpop.f32.mrf.mxu0
      %v10597 = vadd.f32 0.0, %v10596
      %v10598 = vpop.f32.mrf.mxu0
      %v10599 = vadd.f32 0.0, %v10598
      %10600 = vmatmul.bf16.gmra.mxu0 %v10492
      %v10601 = vpop.f32.mrf.mxu0
      %v10602 = vadd.f32 0.0, %v10601
      %v10603 = vpop.f32.mrf.mxu0
      %v10604 = vadd.f32 0.0, %v10603
      %10605 = vmatmul.bf16.gmra.mxu0 %v10495
      %v10606 = vpop.f32.mrf.mxu0
      %v10607 = vadd.f32 0.0, %v10606
      %v10608 = vpop.f32.mrf.mxu0
      %10609 = vdwg.mxu0
      %v10610 = vadd.f32 %v10298, %v10507
      %v10611 = vadd.f32 %v10299, %v10509
      %v10612 = vadd.f32 %v10300, %v10512
      %v10613 = vadd.f32 %v10301, %v10514
      %v10614 = vadd.f32 %v10302, %v10517
      %v10615 = vadd.f32 %v10303, %v10519
      %v10616 = vadd.f32 %v10304, %v10522
      %v10617 = vadd.f32 %v10305, %v10524
      %v10618 = vadd.f32 %v10306, %v10527
      %v10619 = vadd.f32 %v10307, %v10529
      %v10620 = vadd.f32 %v10308, %v10532
      %v10621 = vadd.f32 %v10309, %v10534
      %v10622 = vadd.f32 %v10310, %v10537
      %v10623 = vadd.f32 %v10311, %v10539
      %v10624 = vadd.f32 %v10312, %v10542
      %v10625 = vadd.f32 %v10313, %v10544
      %v10626 = vadd.f32 %v10314, %v10547
      %v10627 = vadd.f32 %v10315, %v10549
      %v10628 = vadd.f32 %v10316, %v10552
      %v10629 = vadd.f32 %v10317, %v10554
      %v10630 = vadd.f32 %v10318, %v10557
      %v10631 = vadd.f32 %v10319, %v10559
      %v10632 = vadd.f32 %v10320, %v10562
      %v10633 = vadd.f32 %v10321, %v10564
      %v10634 = vadd.f32 %v10322, %v10567
      %v10635 = vadd.f32 %v10323, %v10569
      %v10636 = vadd.f32 %v10324, %v10572
      %v10637 = vadd.f32 %v10325, %v10574
      %v10638 = vadd.f32 %v10326, %v10577
      %v10639 = vadd.f32 %v10327, %v10579
      %v10640 = vadd.f32 %v10328, %v10582
      %v10641 = vadd.f32 %v10329, %v10584
      %v10642 = vadd.f32 %v10330, %v10587
      %v10643 = vadd.f32 %v10331, %v10589
      %v10644 = vadd.f32 %v10332, %v10592
      %v10645 = vadd.f32 %v10333, %v10594
      %v10646 = vadd.f32 %v10334, %v10597
      %v10647 = vadd.f32 %v10335, %v10599
      %v10648 = vadd.f32 %v10336, %v10602
      %v10649 = vadd.f32 %v10337, %v10604
      %v10650 = vadd.f32 %v10338, %v10607
      %v10651 = vld [vmem:[#allocation2 + $0x29] sm:$0xff]
      %v10652 = vld [vmem:[#allocation2 + $0x31] sm:$0xff]
      %v10653 = vld [vmem:[#allocation2 + $0x39] sm:$0xff]
      %v10654 = vld [vmem:[#allocation2 + $0x41] sm:$0xff]
      %v10655 = vld [vmem:[#allocation2 + $0x49] sm:$0xff]
      %v10656 = vld [vmem:[#allocation2 + $0x51] sm:$0xff]
      %v10657 = vld [vmem:[#allocation2 + $0x59] sm:$0xff]
      %v10658 = vld [vmem:[#allocation2 + $0x61] sm:$0xff]
      %v10659 = vld [vmem:[#allocation2 + $0x69] sm:$0xff]
      %v10660 = vld [vmem:[#allocation2 + $0x71] sm:$0xff]
      %v10661 = vld [vmem:[#allocation2 + $0x79] sm:$0xff]
      %v10662 = vld [vmem:[#allocation2 + $0x81] sm:$0xff]
      %v10663 = vld [vmem:[#allocation2 + $0x89] sm:$0xff]
      %v10664 = vld [vmem:[#allocation2 + $0x91] sm:$0xff]
      %v10665 = vld [vmem:[#allocation2 + $0x99] sm:$0xff]
      %v10666 = vld [vmem:[#allocation2 + $0xa1] sm:$0xff]
      %v10667 = vld [vmem:[#allocation2 + $0xa9] sm:$0xff]
      %v10668 = vld [vmem:[#allocation2 + $0xb1] sm:$0xff]
      %v10669 = vld [vmem:[#allocation2 + $0xb9] sm:$0xff]
      %v10670 = vld [vmem:[#allocation2 + $0xc1] sm:$0xff]
      %v10671 = vld [vmem:[#allocation2 + $0xc9] sm:$0xff]
      %v10672 = vld [vmem:[#allocation2 + $0xd1] sm:$0xff]
      %v10673 = vld [vmem:[#allocation2 + $0xd9] sm:$0xff]
      %v10674 = vld [vmem:[#allocation2 + $0xe1] sm:$0xff]
      %v10675 = vld [vmem:[#allocation2 + $0xe9] sm:$0xff]
      %v10676 = vld [vmem:[#allocation2 + $0xf1] sm:$0xff]
      %v10677 = vld [vmem:[#allocation2 + $0xf9] sm:$0xff]
      %v10678 = vld [vmem:[#allocation2 + $0x101] sm:$0xff]
      %v10679 = vld [vmem:[#allocation2 + $0x109] sm:$0xff]
      %v10680 = vld [vmem:[#allocation2 + $0x111] sm:$0xff]
      %v10681 = vld [vmem:[#allocation2 + $0x119] sm:$0xff]
      %v10682 = vld [vmem:[#allocation2 + $0x121] sm:$0xff]
      %v10683 = vld [vmem:[#allocation2 + $0x129] sm:$0xff]
      %v10684 = vld [vmem:[#allocation2 + $0x131] sm:$0xff]
      %v10685 = vld [vmem:[#allocation2 + $0x139] sm:$0xff]
      %v10686 = vld [vmem:[#allocation2 + $0x141] sm:$0xff]
      %v10687 = vld [vmem:[#allocation2 + $0x149] sm:$0xff]
      %v10688 = vld [vmem:[#allocation2 + $0x151] sm:$0xff]
      %v10689 = vld [vmem:[#allocation2 + $0x159] sm:$0xff]
      %v10690 = vld [vmem:[#allocation2 + $0x161] sm:$0xff]
      %v10691 = vld [vmem:[#allocation2 + $0x169] sm:$0xff]
      %v10692 = vpack.c.bf16 %v10652, %v10651
      %v10693 = vpack.c.bf16 %v10654, %v10653
      %v10694 = vpack.c.bf16 %v10656, %v10655
      %v10695 = vpack.c.bf16 %v10658, %v10657
      %v10696 = vpack.c.bf16 %v10660, %v10659
      %v10697 = vpack.c.bf16 %v10662, %v10661
      %v10698 = vpack.c.bf16 %v10664, %v10663
      %v10699 = vpack.c.bf16 %v10666, %v10665
      %v10700 = vpack.c.bf16 %v10668, %v10667
      %v10701 = vpack.c.bf16 %v10670, %v10669
      %v10702 = vpack.c.bf16 %v10672, %v10671
      %v10703 = vpack.c.bf16 %v10674, %v10673
      %v10704 = vpack.c.bf16 %v10676, %v10675
      %v10705 = vpack.c.bf16 %v10678, %v10677
      %v10706 = vpack.c.bf16 %v10680, %v10679
      %v10707 = vpack.c.bf16 %v10682, %v10681
      %v10708 = vpack.c.bf16 %v10684, %v10683
      %v10709 = vpack.c.bf16 %v10686, %v10685
      %v10710 = vpack.c.bf16 %v10688, %v10687
      %v10711 = vpack.c.bf16 %v10690, %v10689
      %v10712 = vpack.c.bf16 %v10691, %v10691
      %s10713 = scalar_lea.vmem %s5, 192
      %v10714 = vld [vmem:[%s10713] sm:$0xf]
      %v10715 = vld [vmem:[%s10713 + $0x4] sm:$0xf]
      %v10716 = vld [vmem:[%s10713 + $0x8] sm:$0xf]
      %v10717 = vld [vmem:[%s10713 + $0xc] sm:$0xf]
      %v10718 = vld [vmem:[%s10713 + $0x10] sm:$0xf]
      %v10719 = vld [vmem:[%s10713 + $0x14] sm:$0xf]
      %v10720 = vld [vmem:[%s10713 + $0x18] sm:$0xf]
      %v10721 = vld [vmem:[%s10713 + $0x1c] sm:$0xf]
      %v10730 = vunpack.c.l.b16 %v10714
      %v10731 = vunpack.c.l.b16 %v10715
      %v10732 = vunpack.c.l.b16 %v10716
      %v10733 = vunpack.c.l.b16 %v10717
      %v10734 = vunpack.c.l.b16 %v10718
      %v10735 = vunpack.c.l.b16 %v10719
      %v10736 = vunpack.c.l.b16 %v10720
      %v10737 = vunpack.c.l.b16 %v10721
      %v10738 = vpack.c.b16 %v10731, %v10730
      %v10739 = vpack.c.b16 %v10733, %v10732
      %v10740 = vpack.c.b16 %v10735, %v10734
      %v10741 = vpack.c.b16 %v10737, %v10736
      %v10747 = vsel %vm3288, %v10692, 0
      %v10750 = vsel %vm3288, %v10693, 0
      %v10753 = vsel %vm3288, %v10694, 0
      %v10756 = vsel %vm3288, %v10695, 0
      %v10759 = vsel %vm3288, %v10696, 0
      %v10762 = vsel %vm3288, %v10697, 0
      %v10765 = vsel %vm3288, %v10698, 0
      %v10768 = vsel %vm3288, %v10699, 0
      %v10771 = vsel %vm3288, %v10700, 0
      %v10774 = vsel %vm3288, %v10701, 0
      %v10777 = vsel %vm3288, %v10702, 0
      %v10780 = vsel %vm3288, %v10703, 0
      %v10783 = vsel %vm3288, %v10704, 0
      %v10786 = vsel %vm3288, %v10705, 0
      %v10789 = vsel %vm3288, %v10706, 0
      %v10792 = vsel %vm3288, %v10707, 0
      %v10795 = vsel %vm3288, %v10708, 0
      %v10798 = vsel %vm3288, %v10709, 0
      %v10801 = vsel %vm3288, %v10710, 0
      %v10804 = vsel %vm3288, %v10711, 0
      %v10807 = vsel %vm3288, %v10712, 0
      %10809 = vmatpush.bf16.msra.mxu0 0
      %10810 = vmatpush.bf16.msra.mxu0 0
      %10811 = vmatpush.bf16.msra.mxu0 0
      %10812 = vmatpush.bf16.msra.mxu0 0
      %10813 = vmatpush.bf16.msra.mxu0 %v10741
      %10814 = vmatpush.bf16.msra.mxu0 %v10740
      %10815 = vmatpush.bf16.msra.mxu0 %v10739
      %10816 = vmatpush.bf16.msra.mxu0 %v10738
      %10817 = vmatmul.bf16.gmra.mxu0 %v10747
      %v10818 = vpop.f32.mrf.mxu0
      %v10819 = vadd.f32 0.0, %v10818
      %v10820 = vpop.f32.mrf.mxu0
      %v10821 = vadd.f32 0.0, %v10820
      %10822 = vmatmul.bf16.gmra.mxu0 %v10750
      %v10823 = vpop.f32.mrf.mxu0
      %v10824 = vadd.f32 0.0, %v10823
      %v10825 = vpop.f32.mrf.mxu0
      %v10826 = vadd.f32 0.0, %v10825
      %10827 = vmatmul.bf16.gmra.mxu0 %v10753
      %v10828 = vpop.f32.mrf.mxu0
      %v10829 = vadd.f32 0.0, %v10828
      %v10830 = vpop.f32.mrf.mxu0
      %v10831 = vadd.f32 0.0, %v10830
      %10832 = vmatmul.bf16.gmra.mxu0 %v10756
      %v10833 = vpop.f32.mrf.mxu0
      %v10834 = vadd.f32 0.0, %v10833
      %v10835 = vpop.f32.mrf.mxu0
      %v10836 = vadd.f32 0.0, %v10835
      %10837 = vmatmul.bf16.gmra.mxu0 %v10759
      %v10838 = vpop.f32.mrf.mxu0
      %v10839 = vadd.f32 0.0, %v10838
      %v10840 = vpop.f32.mrf.mxu0
      %v10841 = vadd.f32 0.0, %v10840
      %10842 = vmatmul.bf16.gmra.mxu0 %v10762
      %v10843 = vpop.f32.mrf.mxu0
      %v10844 = vadd.f32 0.0, %v10843
      %v10845 = vpop.f32.mrf.mxu0
      %v10846 = vadd.f32 0.0, %v10845
      %10847 = vmatmul.bf16.gmra.mxu0 %v10765
      %v10848 = vpop.f32.mrf.mxu0
      %v10849 = vadd.f32 0.0, %v10848
      %v10850 = vpop.f32.mrf.mxu0
      %v10851 = vadd.f32 0.0, %v10850
      %10852 = vmatmul.bf16.gmra.mxu0 %v10768
      %v10853 = vpop.f32.mrf.mxu0
      %v10854 = vadd.f32 0.0, %v10853
      %v10855 = vpop.f32.mrf.mxu0
      %v10856 = vadd.f32 0.0, %v10855
      %10857 = vmatmul.bf16.gmra.mxu0 %v10771
      %v10858 = vpop.f32.mrf.mxu0
      %v10859 = vadd.f32 0.0, %v10858
      %v10860 = vpop.f32.mrf.mxu0
      %v10861 = vadd.f32 0.0, %v10860
      %10862 = vmatmul.bf16.gmra.mxu0 %v10774
      %v10863 = vpop.f32.mrf.mxu0
      %v10864 = vadd.f32 0.0, %v10863
      %v10865 = vpop.f32.mrf.mxu0
      %v10866 = vadd.f32 0.0, %v10865
      %10867 = vmatmul.bf16.gmra.mxu0 %v10777
      %v10868 = vpop.f32.mrf.mxu0
      %v10869 = vadd.f32 0.0, %v10868
      %v10870 = vpop.f32.mrf.mxu0
      %v10871 = vadd.f32 0.0, %v10870
      %10872 = vmatmul.bf16.gmra.mxu0 %v10780
      %v10873 = vpop.f32.mrf.mxu0
      %v10874 = vadd.f32 0.0, %v10873
      %v10875 = vpop.f32.mrf.mxu0
      %v10876 = vadd.f32 0.0, %v10875
      %10877 = vmatmul.bf16.gmra.mxu0 %v10783
      %v10878 = vpop.f32.mrf.mxu0
      %v10879 = vadd.f32 0.0, %v10878
      %v10880 = vpop.f32.mrf.mxu0
      %v10881 = vadd.f32 0.0, %v10880
      %10882 = vmatmul.bf16.gmra.mxu0 %v10786
      %v10883 = vpop.f32.mrf.mxu0
      %v10884 = vadd.f32 0.0, %v10883
      %v10885 = vpop.f32.mrf.mxu0
      %v10886 = vadd.f32 0.0, %v10885
      %10887 = vmatmul.bf16.gmra.mxu0 %v10789
      %v10888 = vpop.f32.mrf.mxu0
      %v10889 = vadd.f32 0.0, %v10888
      %v10890 = vpop.f32.mrf.mxu0
      %v10891 = vadd.f32 0.0, %v10890
      %10892 = vmatmul.bf16.gmra.mxu0 %v10792
      %v10893 = vpop.f32.mrf.mxu0
      %v10894 = vadd.f32 0.0, %v10893
      %v10895 = vpop.f32.mrf.mxu0
      %v10896 = vadd.f32 0.0, %v10895
      %10897 = vmatmul.bf16.gmra.mxu0 %v10795
      %v10898 = vpop.f32.mrf.mxu0
      %v10899 = vadd.f32 0.0, %v10898
      %v10900 = vpop.f32.mrf.mxu0
      %v10901 = vadd.f32 0.0, %v10900
      %10902 = vmatmul.bf16.gmra.mxu0 %v10798
      %v10903 = vpop.f32.mrf.mxu0
      %v10904 = vadd.f32 0.0, %v10903
      %v10905 = vpop.f32.mrf.mxu0
      %v10906 = vadd.f32 0.0, %v10905
      %10907 = vmatmul.bf16.gmra.mxu0 %v10801
      %v10908 = vpop.f32.mrf.mxu0
      %v10909 = vadd.f32 0.0, %v10908
      %v10910 = vpop.f32.mrf.mxu0
      %v10911 = vadd.f32 0.0, %v10910
      %10912 = vmatmul.bf16.gmra.mxu0 %v10804
      %v10913 = vpop.f32.mrf.mxu0
      %v10914 = vadd.f32 0.0, %v10913
      %v10915 = vpop.f32.mrf.mxu0
      %v10916 = vadd.f32 0.0, %v10915
      %10917 = vmatmul.bf16.gmra.mxu0 %v10807
      %v10918 = vpop.f32.mrf.mxu0
      %v10919 = vadd.f32 0.0, %v10918
      %v10920 = vpop.f32.mrf.mxu0
      %10921 = vdwg.mxu0
      %v10922 = vadd.f32 %v10610, %v10819
      %v10923 = vadd.f32 %v10611, %v10821
      %v10924 = vadd.f32 %v10612, %v10824
      %v10925 = vadd.f32 %v10613, %v10826
      %v10926 = vadd.f32 %v10614, %v10829
      %v10927 = vadd.f32 %v10615, %v10831
      %v10928 = vadd.f32 %v10616, %v10834
      %v10929 = vadd.f32 %v10617, %v10836
      %v10930 = vadd.f32 %v10618, %v10839
      %v10931 = vadd.f32 %v10619, %v10841
      %v10932 = vadd.f32 %v10620, %v10844
      %v10933 = vadd.f32 %v10621, %v10846
      %v10934 = vadd.f32 %v10622, %v10849
      %v10935 = vadd.f32 %v10623, %v10851
      %v10936 = vadd.f32 %v10624, %v10854
      %v10937 = vadd.f32 %v10625, %v10856
      %v10938 = vadd.f32 %v10626, %v10859
      %v10939 = vadd.f32 %v10627, %v10861
      %v10940 = vadd.f32 %v10628, %v10864
      %v10941 = vadd.f32 %v10629, %v10866
      %v10942 = vadd.f32 %v10630, %v10869
      %v10943 = vadd.f32 %v10631, %v10871
      %v10944 = vadd.f32 %v10632, %v10874
      %v10945 = vadd.f32 %v10633, %v10876
      %v10946 = vadd.f32 %v10634, %v10879
      %v10947 = vadd.f32 %v10635, %v10881
      %v10948 = vadd.f32 %v10636, %v10884
      %v10949 = vadd.f32 %v10637, %v10886
      %v10950 = vadd.f32 %v10638, %v10889
      %v10951 = vadd.f32 %v10639, %v10891
      %v10952 = vadd.f32 %v10640, %v10894
      %v10953 = vadd.f32 %v10641, %v10896
      %v10954 = vadd.f32 %v10642, %v10899
      %v10955 = vadd.f32 %v10643, %v10901
      %v10956 = vadd.f32 %v10644, %v10904
      %v10957 = vadd.f32 %v10645, %v10906
      %v10958 = vadd.f32 %v10646, %v10909
      %v10959 = vadd.f32 %v10647, %v10911
      %v10960 = vadd.f32 %v10648, %v10914
      %v10961 = vadd.f32 %v10649, %v10916
      %v10962 = vadd.f32 %v10650, %v10919
      %v10963 = vld [vmem:[#allocation2 + $0x2a] sm:$0xff]
      %v10964 = vld [vmem:[#allocation2 + $0x32] sm:$0xff]
      %v10965 = vld [vmem:[#allocation2 + $0x3a] sm:$0xff]
      %v10966 = vld [vmem:[#allocation2 + $0x42] sm:$0xff]
      %v10967 = vld [vmem:[#allocation2 + $0x4a] sm:$0xff]
      %v10968 = vld [vmem:[#allocation2 + $0x52] sm:$0xff]
      %v10969 = vld [vmem:[#allocation2 + $0x5a] sm:$0xff]
      %v10970 = vld [vmem:[#allocation2 + $0x62] sm:$0xff]
      %v10971 = vld [vmem:[#allocation2 + $0x6a] sm:$0xff]
      %v10972 = vld [vmem:[#allocation2 + $0x72] sm:$0xff]
      %v10973 = vld [vmem:[#allocation2 + $0x7a] sm:$0xff]
      %v10974 = vld [vmem:[#allocation2 + $0x82] sm:$0xff]
      %v10975 = vld [vmem:[#allocation2 + $0x8a] sm:$0xff]
      %v10976 = vld [vmem:[#allocation2 + $0x92] sm:$0xff]
      %v10977 = vld [vmem:[#allocation2 + $0x9a] sm:$0xff]
      %v10978 = vld [vmem:[#allocation2 + $0xa2] sm:$0xff]
      %v10979 = vld [vmem:[#allocation2 + $0xaa] sm:$0xff]
      %v10980 = vld [vmem:[#allocation2 + $0xb2] sm:$0xff]
      %v10981 = vld [vmem:[#allocation2 + $0xba] sm:$0xff]
      %v10982 = vld [vmem:[#allocation2 + $0xc2] sm:$0xff]
      %v10983 = vld [vmem:[#allocation2 + $0xca] sm:$0xff]
      %v10984 = vld [vmem:[#allocation2 + $0xd2] sm:$0xff]
      %v10985 = vld [vmem:[#allocation2 + $0xda] sm:$0xff]
      %v10986 = vld [vmem:[#allocation2 + $0xe2] sm:$0xff]
      %v10987 = vld [vmem:[#allocation2 + $0xea] sm:$0xff]
      %v10988 = vld [vmem:[#allocation2 + $0xf2] sm:$0xff]
      %v10989 = vld [vmem:[#allocation2 + $0xfa] sm:$0xff]
      %v10990 = vld [vmem:[#allocation2 + $0x102] sm:$0xff]
      %v10991 = vld [vmem:[#allocation2 + $0x10a] sm:$0xff]
      %v10992 = vld [vmem:[#allocation2 + $0x112] sm:$0xff]
      %v10993 = vld [vmem:[#allocation2 + $0x11a] sm:$0xff]
      %v10994 = vld [vmem:[#allocation2 + $0x122] sm:$0xff]
      %v10995 = vld [vmem:[#allocation2 + $0x12a] sm:$0xff]
      %v10996 = vld [vmem:[#allocation2 + $0x132] sm:$0xff]
      %v10997 = vld [vmem:[#allocation2 + $0x13a] sm:$0xff]
      %v10998 = vld [vmem:[#allocation2 + $0x142] sm:$0xff]
      %v10999 = vld [vmem:[#allocation2 + $0x14a] sm:$0xff]
      %v11000 = vld [vmem:[#allocation2 + $0x152] sm:$0xff]
      %v11001 = vld [vmem:[#allocation2 + $0x15a] sm:$0xff]
      %v11002 = vld [vmem:[#allocation2 + $0x162] sm:$0xff]
      %v11003 = vld [vmem:[#allocation2 + $0x16a] sm:$0xff]
      %v11004 = vpack.c.bf16 %v10964, %v10963
      %v11005 = vpack.c.bf16 %v10966, %v10965
      %v11006 = vpack.c.bf16 %v10968, %v10967
      %v11007 = vpack.c.bf16 %v10970, %v10969
      %v11008 = vpack.c.bf16 %v10972, %v10971
      %v11009 = vpack.c.bf16 %v10974, %v10973
      %v11010 = vpack.c.bf16 %v10976, %v10975
      %v11011 = vpack.c.bf16 %v10978, %v10977
      %v11012 = vpack.c.bf16 %v10980, %v10979
      %v11013 = vpack.c.bf16 %v10982, %v10981
      %v11014 = vpack.c.bf16 %v10984, %v10983
      %v11015 = vpack.c.bf16 %v10986, %v10985
      %v11016 = vpack.c.bf16 %v10988, %v10987
      %v11017 = vpack.c.bf16 %v10990, %v10989
      %v11018 = vpack.c.bf16 %v10992, %v10991
      %v11019 = vpack.c.bf16 %v10994, %v10993
      %v11020 = vpack.c.bf16 %v10996, %v10995
      %v11021 = vpack.c.bf16 %v10998, %v10997
      %v11022 = vpack.c.bf16 %v11000, %v10999
      %v11023 = vpack.c.bf16 %v11002, %v11001
      %v11024 = vpack.c.bf16 %v11003, %v11003
      %s11025 = scalar_lea.vmem %s5, 224
      %v11026 = vld [vmem:[%s11025] sm:$0xf]
      %v11027 = vld [vmem:[%s11025 + $0x4] sm:$0xf]
      %v11028 = vld [vmem:[%s11025 + $0x8] sm:$0xf]
      %v11029 = vld [vmem:[%s11025 + $0xc] sm:$0xf]
      %v11030 = vld [vmem:[%s11025 + $0x10] sm:$0xf]
      %v11031 = vld [vmem:[%s11025 + $0x14] sm:$0xf]
      %v11032 = vld [vmem:[%s11025 + $0x18] sm:$0xf]
      %v11033 = vld [vmem:[%s11025 + $0x1c] sm:$0xf]
      %v11042 = vunpack.c.l.b16 %v11026
      %v11043 = vunpack.c.l.b16 %v11027
      %v11044 = vunpack.c.l.b16 %v11028
      %v11045 = vunpack.c.l.b16 %v11029
      %v11046 = vunpack.c.l.b16 %v11030
      %v11047 = vunpack.c.l.b16 %v11031
      %v11048 = vunpack.c.l.b16 %v11032
      %v11049 = vunpack.c.l.b16 %v11033
      %v11050 = vpack.c.b16 %v11043, %v11042
      %v11051 = vpack.c.b16 %v11045, %v11044
      %v11052 = vpack.c.b16 %v11047, %v11046
      %v11053 = vpack.c.b16 %v11049, %v11048
      %v11059 = vsel %vm3288, %v11004, 0
      %v11062 = vsel %vm3288, %v11005, 0
      %v11065 = vsel %vm3288, %v11006, 0
      %v11068 = vsel %vm3288, %v11007, 0
      %v11071 = vsel %vm3288, %v11008, 0
      %v11074 = vsel %vm3288, %v11009, 0
      %v11077 = vsel %vm3288, %v11010, 0
      %v11080 = vsel %vm3288, %v11011, 0
      %v11083 = vsel %vm3288, %v11012, 0
      %v11086 = vsel %vm3288, %v11013, 0
      %v11089 = vsel %vm3288, %v11014, 0
      %v11092 = vsel %vm3288, %v11015, 0
      %v11095 = vsel %vm3288, %v11016, 0
      %v11098 = vsel %vm3288, %v11017, 0
      %v11101 = vsel %vm3288, %v11018, 0
      %v11104 = vsel %vm3288, %v11019, 0
      %v11107 = vsel %vm3288, %v11020, 0
      %v11110 = vsel %vm3288, %v11021, 0
      %v11113 = vsel %vm3288, %v11022, 0
      %v11116 = vsel %vm3288, %v11023, 0
      %v11119 = vsel %vm3288, %v11024, 0
      %11121 = vmatpush.bf16.msra.mxu0 0
      %11122 = vmatpush.bf16.msra.mxu0 0
      %11123 = vmatpush.bf16.msra.mxu0 0
      %11124 = vmatpush.bf16.msra.mxu0 0
      %11125 = vmatpush.bf16.msra.mxu0 %v11053
      %11126 = vmatpush.bf16.msra.mxu0 %v11052
      %11127 = vmatpush.bf16.msra.mxu0 %v11051
      %11128 = vmatpush.bf16.msra.mxu0 %v11050
      %11129 = vmatmul.bf16.gmra.mxu0 %v11059
      %v11130 = vpop.f32.mrf.mxu0
      %v11131 = vadd.f32 0.0, %v11130
      %v11132 = vpop.f32.mrf.mxu0
      %v11133 = vadd.f32 0.0, %v11132
      %11134 = vmatmul.bf16.gmra.mxu0 %v11062
      %v11135 = vpop.f32.mrf.mxu0
      %v11136 = vadd.f32 0.0, %v11135
      %v11137 = vpop.f32.mrf.mxu0
      %v11138 = vadd.f32 0.0, %v11137
      %11139 = vmatmul.bf16.gmra.mxu0 %v11065
      %v11140 = vpop.f32.mrf.mxu0
      %v11141 = vadd.f32 0.0, %v11140
      %v11142 = vpop.f32.mrf.mxu0
      %v11143 = vadd.f32 0.0, %v11142
      %11144 = vmatmul.bf16.gmra.mxu0 %v11068
      %v11145 = vpop.f32.mrf.mxu0
      %v11146 = vadd.f32 0.0, %v11145
      %v11147 = vpop.f32.mrf.mxu0
      %v11148 = vadd.f32 0.0, %v11147
      %11149 = vmatmul.bf16.gmra.mxu0 %v11071
      %v11150 = vpop.f32.mrf.mxu0
      %v11151 = vadd.f32 0.0, %v11150
      %v11152 = vpop.f32.mrf.mxu0
      %v11153 = vadd.f32 0.0, %v11152
      %11154 = vmatmul.bf16.gmra.mxu0 %v11074
      %v11155 = vpop.f32.mrf.mxu0
      %v11156 = vadd.f32 0.0, %v11155
      %v11157 = vpop.f32.mrf.mxu0
      %v11158 = vadd.f32 0.0, %v11157
      %11159 = vmatmul.bf16.gmra.mxu0 %v11077
      %v11160 = vpop.f32.mrf.mxu0
      %v11161 = vadd.f32 0.0, %v11160
      %v11162 = vpop.f32.mrf.mxu0
      %v11163 = vadd.f32 0.0, %v11162
      %11164 = vmatmul.bf16.gmra.mxu0 %v11080
      %v11165 = vpop.f32.mrf.mxu0
      %v11166 = vadd.f32 0.0, %v11165
      %v11167 = vpop.f32.mrf.mxu0
      %v11168 = vadd.f32 0.0, %v11167
      %11169 = vmatmul.bf16.gmra.mxu0 %v11083
      %v11170 = vpop.f32.mrf.mxu0
      %v11171 = vadd.f32 0.0, %v11170
      %v11172 = vpop.f32.mrf.mxu0
      %v11173 = vadd.f32 0.0, %v11172
      %11174 = vmatmul.bf16.gmra.mxu0 %v11086
      %v11175 = vpop.f32.mrf.mxu0
      %v11176 = vadd.f32 0.0, %v11175
      %v11177 = vpop.f32.mrf.mxu0
      %v11178 = vadd.f32 0.0, %v11177
      %11179 = vmatmul.bf16.gmra.mxu0 %v11089
      %v11180 = vpop.f32.mrf.mxu0
      %v11181 = vadd.f32 0.0, %v11180
      %v11182 = vpop.f32.mrf.mxu0
      %v11183 = vadd.f32 0.0, %v11182
      %11184 = vmatmul.bf16.gmra.mxu0 %v11092
      %v11185 = vpop.f32.mrf.mxu0
      %v11186 = vadd.f32 0.0, %v11185
      %v11187 = vpop.f32.mrf.mxu0
      %v11188 = vadd.f32 0.0, %v11187
      %11189 = vmatmul.bf16.gmra.mxu0 %v11095
      %v11190 = vpop.f32.mrf.mxu0
      %v11191 = vadd.f32 0.0, %v11190
      %v11192 = vpop.f32.mrf.mxu0
      %v11193 = vadd.f32 0.0, %v11192
      %11194 = vmatmul.bf16.gmra.mxu0 %v11098
      %v11195 = vpop.f32.mrf.mxu0
      %v11196 = vadd.f32 0.0, %v11195
      %v11197 = vpop.f32.mrf.mxu0
      %v11198 = vadd.f32 0.0, %v11197
      %11199 = vmatmul.bf16.gmra.mxu0 %v11101
      %v11200 = vpop.f32.mrf.mxu0
      %v11201 = vadd.f32 0.0, %v11200
      %v11202 = vpop.f32.mrf.mxu0
      %v11203 = vadd.f32 0.0, %v11202
      %11204 = vmatmul.bf16.gmra.mxu0 %v11104
      %v11205 = vpop.f32.mrf.mxu0
      %v11206 = vadd.f32 0.0, %v11205
      %v11207 = vpop.f32.mrf.mxu0
      %v11208 = vadd.f32 0.0, %v11207
      %11209 = vmatmul.bf16.gmra.mxu0 %v11107
      %v11210 = vpop.f32.mrf.mxu0
      %v11211 = vadd.f32 0.0, %v11210
      %v11212 = vpop.f32.mrf.mxu0
      %v11213 = vadd.f32 0.0, %v11212
      %11214 = vmatmul.bf16.gmra.mxu0 %v11110
      %v11215 = vpop.f32.mrf.mxu0
      %v11216 = vadd.f32 0.0, %v11215
      %v11217 = vpop.f32.mrf.mxu0
      %v11218 = vadd.f32 0.0, %v11217
      %11219 = vmatmul.bf16.gmra.mxu0 %v11113
      %v11220 = vpop.f32.mrf.mxu0
      %v11221 = vadd.f32 0.0, %v11220
      %v11222 = vpop.f32.mrf.mxu0
      %v11223 = vadd.f32 0.0, %v11222
      %11224 = vmatmul.bf16.gmra.mxu0 %v11116
      %v11225 = vpop.f32.mrf.mxu0
      %v11226 = vadd.f32 0.0, %v11225
      %v11227 = vpop.f32.mrf.mxu0
      %v11228 = vadd.f32 0.0, %v11227
      %11229 = vmatmul.bf16.gmra.mxu0 %v11119
      %v11230 = vpop.f32.mrf.mxu0
      %v11231 = vadd.f32 0.0, %v11230
      %v11232 = vpop.f32.mrf.mxu0
      %11233 = vdwg.mxu0
      %v11234 = vadd.f32 %v10922, %v11131
      %v11235 = vadd.f32 %v10923, %v11133
      %v11236 = vadd.f32 %v10924, %v11136
      %v11237 = vadd.f32 %v10925, %v11138
      %v11238 = vadd.f32 %v10926, %v11141
      %v11239 = vadd.f32 %v10927, %v11143
      %v11240 = vadd.f32 %v10928, %v11146
      %v11241 = vadd.f32 %v10929, %v11148
      %v11242 = vadd.f32 %v10930, %v11151
      %v11243 = vadd.f32 %v10931, %v11153
      %v11244 = vadd.f32 %v10932, %v11156
      %v11245 = vadd.f32 %v10933, %v11158
      %v11246 = vadd.f32 %v10934, %v11161
      %v11247 = vadd.f32 %v10935, %v11163
      %v11248 = vadd.f32 %v10936, %v11166
      %v11249 = vadd.f32 %v10937, %v11168
      %v11250 = vadd.f32 %v10938, %v11171
      %v11251 = vadd.f32 %v10939, %v11173
      %v11252 = vadd.f32 %v10940, %v11176
      %v11253 = vadd.f32 %v10941, %v11178
      %v11254 = vadd.f32 %v10942, %v11181
      %v11255 = vadd.f32 %v10943, %v11183
      %v11256 = vadd.f32 %v10944, %v11186
      %v11257 = vadd.f32 %v10945, %v11188
      %v11258 = vadd.f32 %v10946, %v11191
      %v11259 = vadd.f32 %v10947, %v11193
      %v11260 = vadd.f32 %v10948, %v11196
      %v11261 = vadd.f32 %v10949, %v11198
      %v11262 = vadd.f32 %v10950, %v11201
      %v11263 = vadd.f32 %v10951, %v11203
      %v11264 = vadd.f32 %v10952, %v11206
      %v11265 = vadd.f32 %v10953, %v11208
      %v11266 = vadd.f32 %v10954, %v11211
      %v11267 = vadd.f32 %v10955, %v11213
      %v11268 = vadd.f32 %v10956, %v11216
      %v11269 = vadd.f32 %v10957, %v11218
      %v11270 = vadd.f32 %v10958, %v11221
      %v11271 = vadd.f32 %v10959, %v11223
      %v11272 = vadd.f32 %v10960, %v11226
      %v11273 = vadd.f32 %v10961, %v11228
      %v11274 = vadd.f32 %v10962, %v11231
      %v11275 = vld [vmem:[#allocation2 + $0x2b] sm:$0xff]
      %v11276 = vld [vmem:[#allocation2 + $0x33] sm:$0xff]
      %v11277 = vld [vmem:[#allocation2 + $0x3b] sm:$0xff]
      %v11278 = vld [vmem:[#allocation2 + $0x43] sm:$0xff]
      %v11279 = vld [vmem:[#allocation2 + $0x4b] sm:$0xff]
      %v11280 = vld [vmem:[#allocation2 + $0x53] sm:$0xff]
      %v11281 = vld [vmem:[#allocation2 + $0x5b] sm:$0xff]
      %v11282 = vld [vmem:[#allocation2 + $0x63] sm:$0xff]
      %v11283 = vld [vmem:[#allocation2 + $0x6b] sm:$0xff]
      %v11284 = vld [vmem:[#allocation2 + $0x73] sm:$0xff]
      %v11285 = vld [vmem:[#allocation2 + $0x7b] sm:$0xff]
      %v11286 = vld [vmem:[#allocation2 + $0x83] sm:$0xff]
      %v11287 = vld [vmem:[#allocation2 + $0x8b] sm:$0xff]
      %v11288 = vld [vmem:[#allocation2 + $0x93] sm:$0xff]
      %v11289 = vld [vmem:[#allocation2 + $0x9b] sm:$0xff]
      %v11290 = vld [vmem:[#allocation2 + $0xa3] sm:$0xff]
      %v11291 = vld [vmem:[#allocation2 + $0xab] sm:$0xff]
      %v11292 = vld [vmem:[#allocation2 + $0xb3] sm:$0xff]
      %v11293 = vld [vmem:[#allocation2 + $0xbb] sm:$0xff]
      %v11294 = vld [vmem:[#allocation2 + $0xc3] sm:$0xff]
      %v11295 = vld [vmem:[#allocation2 + $0xcb] sm:$0xff]
      %v11296 = vld [vmem:[#allocation2 + $0xd3] sm:$0xff]
      %v11297 = vld [vmem:[#allocation2 + $0xdb] sm:$0xff]
      %v11298 = vld [vmem:[#allocation2 + $0xe3] sm:$0xff]
      %v11299 = vld [vmem:[#allocation2 + $0xeb] sm:$0xff]
      %v11300 = vld [vmem:[#allocation2 + $0xf3] sm:$0xff]
      %v11301 = vld [vmem:[#allocation2 + $0xfb] sm:$0xff]
      %v11302 = vld [vmem:[#allocation2 + $0x103] sm:$0xff]
      %v11303 = vld [vmem:[#allocation2 + $0x10b] sm:$0xff]
      %v11304 = vld [vmem:[#allocation2 + $0x113] sm:$0xff]
      %v11305 = vld [vmem:[#allocation2 + $0x11b] sm:$0xff]
      %v11306 = vld [vmem:[#allocation2 + $0x123] sm:$0xff]
      %v11307 = vld [vmem:[#allocation2 + $0x12b] sm:$0xff]
      %v11308 = vld [vmem:[#allocation2 + $0x133] sm:$0xff]
      %v11309 = vld [vmem:[#allocation2 + $0x13b] sm:$0xff]
      %v11310 = vld [vmem:[#allocation2 + $0x143] sm:$0xff]
      %v11311 = vld [vmem:[#allocation2 + $0x14b] sm:$0xff]
      %v11312 = vld [vmem:[#allocation2 + $0x153] sm:$0xff]
      %v11313 = vld [vmem:[#allocation2 + $0x15b] sm:$0xff]
      %v11314 = vld [vmem:[#allocation2 + $0x163] sm:$0xff]
      %v11315 = vld [vmem:[#allocation2 + $0x16b] sm:$0xff]
      %v11316 = vpack.c.bf16 %v11276, %v11275
      %v11317 = vpack.c.bf16 %v11278, %v11277
      %v11318 = vpack.c.bf16 %v11280, %v11279
      %v11319 = vpack.c.bf16 %v11282, %v11281
      %v11320 = vpack.c.bf16 %v11284, %v11283
      %v11321 = vpack.c.bf16 %v11286, %v11285
      %v11322 = vpack.c.bf16 %v11288, %v11287
      %v11323 = vpack.c.bf16 %v11290, %v11289
      %v11324 = vpack.c.bf16 %v11292, %v11291
      %v11325 = vpack.c.bf16 %v11294, %v11293
      %v11326 = vpack.c.bf16 %v11296, %v11295
      %v11327 = vpack.c.bf16 %v11298, %v11297
      %v11328 = vpack.c.bf16 %v11300, %v11299
      %v11329 = vpack.c.bf16 %v11302, %v11301
      %v11330 = vpack.c.bf16 %v11304, %v11303
      %v11331 = vpack.c.bf16 %v11306, %v11305
      %v11332 = vpack.c.bf16 %v11308, %v11307
      %v11333 = vpack.c.bf16 %v11310, %v11309
      %v11334 = vpack.c.bf16 %v11312, %v11311
      %v11335 = vpack.c.bf16 %v11314, %v11313
      %v11336 = vpack.c.bf16 %v11315, %v11315
      %s11337 = scalar_lea.vmem %s5, 256
      %v11338 = vld [vmem:[%s11337] sm:$0xf]
      %v11339 = vld [vmem:[%s11337 + $0x4] sm:$0xf]
      %v11340 = vld [vmem:[%s11337 + $0x8] sm:$0xf]
      %v11341 = vld [vmem:[%s11337 + $0xc] sm:$0xf]
      %v11342 = vld [vmem:[%s11337 + $0x10] sm:$0xf]
      %v11343 = vld [vmem:[%s11337 + $0x14] sm:$0xf]
      %v11344 = vld [vmem:[%s11337 + $0x18] sm:$0xf]
      %v11345 = vld [vmem:[%s11337 + $0x1c] sm:$0xf]
      %v11354 = vunpack.c.l.b16 %v11338
      %v11355 = vunpack.c.l.b16 %v11339
      %v11356 = vunpack.c.l.b16 %v11340
      %v11357 = vunpack.c.l.b16 %v11341
      %v11358 = vunpack.c.l.b16 %v11342
      %v11359 = vunpack.c.l.b16 %v11343
      %v11360 = vunpack.c.l.b16 %v11344
      %v11361 = vunpack.c.l.b16 %v11345
      %v11362 = vpack.c.b16 %v11355, %v11354
      %v11363 = vpack.c.b16 %v11357, %v11356
      %v11364 = vpack.c.b16 %v11359, %v11358
      %v11365 = vpack.c.b16 %v11361, %v11360
      %v11371 = vsel %vm3288, %v11316, 0
      %v11374 = vsel %vm3288, %v11317, 0
      %v11377 = vsel %vm3288, %v11318, 0
      %v11380 = vsel %vm3288, %v11319, 0
      %v11383 = vsel %vm3288, %v11320, 0
      %v11386 = vsel %vm3288, %v11321, 0
      %v11389 = vsel %vm3288, %v11322, 0
      %v11392 = vsel %vm3288, %v11323, 0
      %v11395 = vsel %vm3288, %v11324, 0
      %v11398 = vsel %vm3288, %v11325, 0
      %v11401 = vsel %vm3288, %v11326, 0
      %v11404 = vsel %vm3288, %v11327, 0
      %v11407 = vsel %vm3288, %v11328, 0
      %v11410 = vsel %vm3288, %v11329, 0
      %v11413 = vsel %vm3288, %v11330, 0
      %v11416 = vsel %vm3288, %v11331, 0
      %v11419 = vsel %vm3288, %v11332, 0
      %v11422 = vsel %vm3288, %v11333, 0
      %v11425 = vsel %vm3288, %v11334, 0
      %v11428 = vsel %vm3288, %v11335, 0
      %v11431 = vsel %vm3288, %v11336, 0
      %11433 = vmatpush.bf16.msra.mxu0 0
      %11434 = vmatpush.bf16.msra.mxu0 0
      %11435 = vmatpush.bf16.msra.mxu0 0
      %11436 = vmatpush.bf16.msra.mxu0 0
      %11437 = vmatpush.bf16.msra.mxu0 %v11365
      %11438 = vmatpush.bf16.msra.mxu0 %v11364
      %11439 = vmatpush.bf16.msra.mxu0 %v11363
      %11440 = vmatpush.bf16.msra.mxu0 %v11362
      %11441 = vmatmul.bf16.gmra.mxu0 %v11371
      %v11442 = vpop.f32.mrf.mxu0
      %v11443 = vadd.f32 0.0, %v11442
      %v11444 = vpop.f32.mrf.mxu0
      %v11445 = vadd.f32 0.0, %v11444
      %11446 = vmatmul.bf16.gmra.mxu0 %v11374
      %v11447 = vpop.f32.mrf.mxu0
      %v11448 = vadd.f32 0.0, %v11447
      %v11449 = vpop.f32.mrf.mxu0
      %v11450 = vadd.f32 0.0, %v11449
      %11451 = vmatmul.bf16.gmra.mxu0 %v11377
      %v11452 = vpop.f32.mrf.mxu0
      %v11453 = vadd.f32 0.0, %v11452
      %v11454 = vpop.f32.mrf.mxu0
      %v11455 = vadd.f32 0.0, %v11454
      %11456 = vmatmul.bf16.gmra.mxu0 %v11380
      %v11457 = vpop.f32.mrf.mxu0
      %v11458 = vadd.f32 0.0, %v11457
      %v11459 = vpop.f32.mrf.mxu0
      %v11460 = vadd.f32 0.0, %v11459
      %11461 = vmatmul.bf16.gmra.mxu0 %v11383
      %v11462 = vpop.f32.mrf.mxu0
      %v11463 = vadd.f32 0.0, %v11462
      %v11464 = vpop.f32.mrf.mxu0
      %v11465 = vadd.f32 0.0, %v11464
      %11466 = vmatmul.bf16.gmra.mxu0 %v11386
      %v11467 = vpop.f32.mrf.mxu0
      %v11468 = vadd.f32 0.0, %v11467
      %v11469 = vpop.f32.mrf.mxu0
      %v11470 = vadd.f32 0.0, %v11469
      %11471 = vmatmul.bf16.gmra.mxu0 %v11389
      %v11472 = vpop.f32.mrf.mxu0
      %v11473 = vadd.f32 0.0, %v11472
      %v11474 = vpop.f32.mrf.mxu0
      %v11475 = vadd.f32 0.0, %v11474
      %11476 = vmatmul.bf16.gmra.mxu0 %v11392
      %v11477 = vpop.f32.mrf.mxu0
      %v11478 = vadd.f32 0.0, %v11477
      %v11479 = vpop.f32.mrf.mxu0
      %v11480 = vadd.f32 0.0, %v11479
      %11481 = vmatmul.bf16.gmra.mxu0 %v11395
      %v11482 = vpop.f32.mrf.mxu0
      %v11483 = vadd.f32 0.0, %v11482
      %v11484 = vpop.f32.mrf.mxu0
      %v11485 = vadd.f32 0.0, %v11484
      %11486 = vmatmul.bf16.gmra.mxu0 %v11398
      %v11487 = vpop.f32.mrf.mxu0
      %v11488 = vadd.f32 0.0, %v11487
      %v11489 = vpop.f32.mrf.mxu0
      %v11490 = vadd.f32 0.0, %v11489
      %11491 = vmatmul.bf16.gmra.mxu0 %v11401
      %v11492 = vpop.f32.mrf.mxu0
      %v11493 = vadd.f32 0.0, %v11492
      %v11494 = vpop.f32.mrf.mxu0
      %v11495 = vadd.f32 0.0, %v11494
      %11496 = vmatmul.bf16.gmra.mxu0 %v11404
      %v11497 = vpop.f32.mrf.mxu0
      %v11498 = vadd.f32 0.0, %v11497
      %v11499 = vpop.f32.mrf.mxu0
      %v11500 = vadd.f32 0.0, %v11499
      %11501 = vmatmul.bf16.gmra.mxu0 %v11407
      %v11502 = vpop.f32.mrf.mxu0
      %v11503 = vadd.f32 0.0, %v11502
      %v11504 = vpop.f32.mrf.mxu0
      %v11505 = vadd.f32 0.0, %v11504
      %11506 = vmatmul.bf16.gmra.mxu0 %v11410
      %v11507 = vpop.f32.mrf.mxu0
      %v11508 = vadd.f32 0.0, %v11507
      %v11509 = vpop.f32.mrf.mxu0
      %v11510 = vadd.f32 0.0, %v11509
      %11511 = vmatmul.bf16.gmra.mxu0 %v11413
      %v11512 = vpop.f32.mrf.mxu0
      %v11513 = vadd.f32 0.0, %v11512
      %v11514 = vpop.f32.mrf.mxu0
      %v11515 = vadd.f32 0.0, %v11514
      %11516 = vmatmul.bf16.gmra.mxu0 %v11416
      %v11517 = vpop.f32.mrf.mxu0
      %v11518 = vadd.f32 0.0, %v11517
      %v11519 = vpop.f32.mrf.mxu0
      %v11520 = vadd.f32 0.0, %v11519
      %11521 = vmatmul.bf16.gmra.mxu0 %v11419
      %v11522 = vpop.f32.mrf.mxu0
      %v11523 = vadd.f32 0.0, %v11522
      %v11524 = vpop.f32.mrf.mxu0
      %v11525 = vadd.f32 0.0, %v11524
      %11526 = vmatmul.bf16.gmra.mxu0 %v11422
      %v11527 = vpop.f32.mrf.mxu0
      %v11528 = vadd.f32 0.0, %v11527
      %v11529 = vpop.f32.mrf.mxu0
      %v11530 = vadd.f32 0.0, %v11529
      %11531 = vmatmul.bf16.gmra.mxu0 %v11425
      %v11532 = vpop.f32.mrf.mxu0
      %v11533 = vadd.f32 0.0, %v11532
      %v11534 = vpop.f32.mrf.mxu0
      %v11535 = vadd.f32 0.0, %v11534
      %11536 = vmatmul.bf16.gmra.mxu0 %v11428
      %v11537 = vpop.f32.mrf.mxu0
      %v11538 = vadd.f32 0.0, %v11537
      %v11539 = vpop.f32.mrf.mxu0
      %v11540 = vadd.f32 0.0, %v11539
      %11541 = vmatmul.bf16.gmra.mxu0 %v11431
      %v11542 = vpop.f32.mrf.mxu0
      %v11543 = vadd.f32 0.0, %v11542
      %v11544 = vpop.f32.mrf.mxu0
      %11545 = vdwg.mxu0
      %v11546 = vadd.f32 %v11234, %v11443
      %v11547 = vadd.f32 %v11235, %v11445
      %v11548 = vadd.f32 %v11236, %v11448
      %v11549 = vadd.f32 %v11237, %v11450
      %v11550 = vadd.f32 %v11238, %v11453
      %v11551 = vadd.f32 %v11239, %v11455
      %v11552 = vadd.f32 %v11240, %v11458
      %v11553 = vadd.f32 %v11241, %v11460
      %v11554 = vadd.f32 %v11242, %v11463
      %v11555 = vadd.f32 %v11243, %v11465
      %v11556 = vadd.f32 %v11244, %v11468
      %v11557 = vadd.f32 %v11245, %v11470
      %v11558 = vadd.f32 %v11246, %v11473
      %v11559 = vadd.f32 %v11247, %v11475
      %v11560 = vadd.f32 %v11248, %v11478
      %v11561 = vadd.f32 %v11249, %v11480
      %v11562 = vadd.f32 %v11250, %v11483
      %v11563 = vadd.f32 %v11251, %v11485
      %v11564 = vadd.f32 %v11252, %v11488
      %v11565 = vadd.f32 %v11253, %v11490
      %v11566 = vadd.f32 %v11254, %v11493
      %v11567 = vadd.f32 %v11255, %v11495
      %v11568 = vadd.f32 %v11256, %v11498
      %v11569 = vadd.f32 %v11257, %v11500
      %v11570 = vadd.f32 %v11258, %v11503
      %v11571 = vadd.f32 %v11259, %v11505
      %v11572 = vadd.f32 %v11260, %v11508
      %v11573 = vadd.f32 %v11261, %v11510
      %v11574 = vadd.f32 %v11262, %v11513
      %v11575 = vadd.f32 %v11263, %v11515
      %v11576 = vadd.f32 %v11264, %v11518
      %v11577 = vadd.f32 %v11265, %v11520
      %v11578 = vadd.f32 %v11266, %v11523
      %v11579 = vadd.f32 %v11267, %v11525
      %v11580 = vadd.f32 %v11268, %v11528
      %v11581 = vadd.f32 %v11269, %v11530
      %v11582 = vadd.f32 %v11270, %v11533
      %v11583 = vadd.f32 %v11271, %v11535
      %v11584 = vadd.f32 %v11272, %v11538
      %v11585 = vadd.f32 %v11273, %v11540
      %v11586 = vadd.f32 %v11274, %v11543
      %v11587 = vld [vmem:[%s6] sm:$0x1]
      %v11589 = vperm.slane %v11587, 0
      %v11591 = vadd.f32 %v11546, %v11589
      %v11592 = vadd.f32 %v11547, %v11589
      %v11593 = vadd.f32 %v11548, %v11589
      %v11594 = vadd.f32 %v11549, %v11589
      %v11595 = vadd.f32 %v11550, %v11589
      %v11596 = vadd.f32 %v11551, %v11589
      %v11597 = vadd.f32 %v11552, %v11589
      %v11598 = vadd.f32 %v11553, %v11589
      %v11599 = vadd.f32 %v11554, %v11589
      %v11600 = vadd.f32 %v11555, %v11589
      %v11601 = vadd.f32 %v11556, %v11589
      %v11602 = vadd.f32 %v11557, %v11589
      %v11603 = vadd.f32 %v11558, %v11589
      %v11604 = vadd.f32 %v11559, %v11589
      %v11605 = vadd.f32 %v11560, %v11589
      %v11606 = vadd.f32 %v11561, %v11589
      %v11607 = vadd.f32 %v11562, %v11589
      %v11608 = vadd.f32 %v11563, %v11589
      %v11609 = vadd.f32 %v11564, %v11589
      %v11610 = vadd.f32 %v11565, %v11589
      %v11611 = vadd.f32 %v11566, %v11589
      %v11612 = vadd.f32 %v11567, %v11589
      %v11613 = vadd.f32 %v11568, %v11589
      %v11614 = vadd.f32 %v11569, %v11589
      %v11615 = vadd.f32 %v11570, %v11589
      %v11616 = vadd.f32 %v11571, %v11589
      %v11617 = vadd.f32 %v11572, %v11589
      %v11618 = vadd.f32 %v11573, %v11589
      %v11619 = vadd.f32 %v11574, %v11589
      %v11620 = vadd.f32 %v11575, %v11589
      %v11621 = vadd.f32 %v11576, %v11589
      %v11622 = vadd.f32 %v11577, %v11589
      %v11623 = vadd.f32 %v11578, %v11589
      %v11624 = vadd.f32 %v11579, %v11589
      %v11625 = vadd.f32 %v11580, %v11589
      %v11626 = vadd.f32 %v11581, %v11589
      %v11627 = vadd.f32 %v11582, %v11589
      %v11628 = vadd.f32 %v11583, %v11589
      %v11629 = vadd.f32 %v11584, %v11589
      %v11630 = vadd.f32 %v11585, %v11589
      %v11631 = vadd.f32 %v11586, %v11589
      %v11632 = vmax.f32 %v11591, 0.0
      %v11633 = vmax.f32 %v11592, 0.0
      %v11634 = vmax.f32 %v11593, 0.0
      %v11635 = vmax.f32 %v11594, 0.0
      %v11636 = vmax.f32 %v11595, 0.0
      %v11637 = vmax.f32 %v11596, 0.0
      %v11638 = vmax.f32 %v11597, 0.0
      %v11639 = vmax.f32 %v11598, 0.0
      %v11640 = vmax.f32 %v11599, 0.0
      %v11641 = vmax.f32 %v11600, 0.0
      %v11642 = vmax.f32 %v11601, 0.0
      %v11643 = vmax.f32 %v11602, 0.0
      %v11644 = vmax.f32 %v11603, 0.0
      %v11645 = vmax.f32 %v11604, 0.0
      %v11646 = vmax.f32 %v11605, 0.0
      %v11647 = vmax.f32 %v11606, 0.0
      %v11648 = vmax.f32 %v11607, 0.0
      %v11649 = vmax.f32 %v11608, 0.0
      %v11650 = vmax.f32 %v11609, 0.0
      %v11651 = vmax.f32 %v11610, 0.0
      %v11652 = vmax.f32 %v11611, 0.0
      %v11653 = vmax.f32 %v11612, 0.0
      %v11654 = vmax.f32 %v11613, 0.0
      %v11655 = vmax.f32 %v11614, 0.0
      %v11656 = vmax.f32 %v11615, 0.0
      %v11657 = vmax.f32 %v11616, 0.0
      %v11658 = vmax.f32 %v11617, 0.0
      %v11659 = vmax.f32 %v11618, 0.0
      %v11660 = vmax.f32 %v11619, 0.0
      %v11661 = vmax.f32 %v11620, 0.0
      %v11662 = vmax.f32 %v11621, 0.0
      %v11663 = vmax.f32 %v11622, 0.0
      %v11664 = vmax.f32 %v11623, 0.0
      %v11665 = vmax.f32 %v11624, 0.0
      %v11666 = vmax.f32 %v11625, 0.0
      %v11667 = vmax.f32 %v11626, 0.0
      %v11668 = vmax.f32 %v11627, 0.0
      %v11669 = vmax.f32 %v11628, 0.0
      %v11670 = vmax.f32 %v11629, 0.0
      %v11671 = vmax.f32 %v11630, 0.0
      %v11672 = vmax.f32 %v11631, 0.0
      %v11673 = vpack.c.bf16 %v11633, %v11632
      %v11674 = vpack.c.bf16 %v11635, %v11634
      %v11675 = vpack.c.bf16 %v11637, %v11636
      %v11676 = vpack.c.bf16 %v11639, %v11638
      %v11677 = vpack.c.bf16 %v11641, %v11640
      %v11678 = vpack.c.bf16 %v11643, %v11642
      %v11679 = vpack.c.bf16 %v11645, %v11644
      %v11680 = vpack.c.bf16 %v11647, %v11646
      %v11681 = vpack.c.bf16 %v11649, %v11648
      %v11682 = vpack.c.bf16 %v11651, %v11650
      %v11683 = vpack.c.bf16 %v11653, %v11652
      %v11684 = vpack.c.bf16 %v11655, %v11654
      %v11685 = vpack.c.bf16 %v11657, %v11656
      %v11686 = vpack.c.bf16 %v11659, %v11658
      %v11687 = vpack.c.bf16 %v11661, %v11660
      %v11688 = vpack.c.bf16 %v11663, %v11662
      %v11689 = vpack.c.bf16 %v11665, %v11664
      %v11690 = vpack.c.bf16 %v11667, %v11666
      %v11691 = vpack.c.bf16 %v11669, %v11668
      %v11692 = vpack.c.bf16 %v11671, %v11670
      %v11693 = vpack.c.bf16 %v11672, %v11672
      %v11694 = vld [vmem:[%s7] sm:$0xf]
      %v11695 = vld [vmem:[%s7 + $0x4] sm:$0xf]
      %v11696 = vld [vmem:[%s7 + $0x8] sm:$0xf]
      %v11697 = vld [vmem:[%s7 + $0xc] sm:$0xf]
      %v11698 = vld [vmem:[%s7 + $0x10] sm:$0xf]
      %v11699 = vld [vmem:[%s7 + $0x14] sm:$0xf]
      %v11700 = vld [vmem:[%s7 + $0x18] sm:$0xf]
      %v11701 = vld [vmem:[%s7 + $0x1c] sm:$0xf]
      %v11702 = vld [vmem:[%s8] sm:$0x1]
      %v11704 = vperm.slane %v11702, 0
      %v11714 = vunpack.c.l.b16 %v11694
      %v11715 = vunpack.c.l.b16 %v11695
      %v11716 = vunpack.c.l.b16 %v11696
      %v11717 = vunpack.c.l.b16 %v11697
      %v11718 = vunpack.c.l.b16 %v11698
      %v11719 = vunpack.c.l.b16 %v11699
      %v11720 = vunpack.c.l.b16 %v11700
      %v11721 = vunpack.c.l.b16 %v11701
      %v11722 = vpack.c.b16 %v11715, %v11714
      %v11723 = vpack.c.b16 %v11717, %v11716
      %v11724 = vpack.c.b16 %v11719, %v11718
      %v11725 = vpack.c.b16 %v11721, %v11720
      %v11731 = vsel %vm3288, %v11673, 0
      %v11734 = vsel %vm3288, %v11674, 0
      %v11737 = vsel %vm3288, %v11675, 0
      %v11740 = vsel %vm3288, %v11676, 0
      %v11743 = vsel %vm3288, %v11677, 0
      %v11746 = vsel %vm3288, %v11678, 0
      %v11749 = vsel %vm3288, %v11679, 0
      %v11752 = vsel %vm3288, %v11680, 0
      %v11755 = vsel %vm3288, %v11681, 0
      %v11758 = vsel %vm3288, %v11682, 0
      %v11761 = vsel %vm3288, %v11683, 0
      %v11764 = vsel %vm3288, %v11684, 0
      %v11767 = vsel %vm3288, %v11685, 0
      %v11770 = vsel %vm3288, %v11686, 0
      %v11773 = vsel %vm3288, %v11687, 0
      %v11776 = vsel %vm3288, %v11688, 0
      %v11779 = vsel %vm3288, %v11689, 0
      %v11782 = vsel %vm3288, %v11690, 0
      %v11785 = vsel %vm3288, %v11691, 0
      %v11788 = vsel %vm3288, %v11692, 0
      %v11791 = vsel %vm3288, %v11693, 0
      %11793 = vmatpush.bf16.msra.mxu0 0
      %11794 = vmatpush.bf16.msra.mxu0 0
      %11795 = vmatpush.bf16.msra.mxu0 0
      %11796 = vmatpush.bf16.msra.mxu0 0
      %11797 = vmatpush.bf16.msra.mxu0 %v11725
      %11798 = vmatpush.bf16.msra.mxu0 %v11724
      %11799 = vmatpush.bf16.msra.mxu0 %v11723
      %11800 = vmatpush.bf16.msra.mxu0 %v11722
      %11801 = vmatmul.bf16.gmra.mxu0 %v11731
      %v11802 = vpop.f32.mrf.mxu0
      %v11803 = vadd.f32 %v11704, %v11802
      %v11804 = vpop.f32.mrf.mxu0
      %v11805 = vadd.f32 %v11704, %v11804
      %11806 = vmatmul.bf16.gmra.mxu0 %v11734
      %v11807 = vpop.f32.mrf.mxu0
      %v11808 = vadd.f32 %v11704, %v11807
      %v11809 = vpop.f32.mrf.mxu0
      %v11810 = vadd.f32 %v11704, %v11809
      %11811 = vmatmul.bf16.gmra.mxu0 %v11737
      %v11812 = vpop.f32.mrf.mxu0
      %v11813 = vadd.f32 %v11704, %v11812
      %v11814 = vpop.f32.mrf.mxu0
      %v11815 = vadd.f32 %v11704, %v11814
      %11816 = vmatmul.bf16.gmra.mxu0 %v11740
      %v11817 = vpop.f32.mrf.mxu0
      %v11818 = vadd.f32 %v11704, %v11817
      %v11819 = vpop.f32.mrf.mxu0
      %v11820 = vadd.f32 %v11704, %v11819
      %11821 = vmatmul.bf16.gmra.mxu0 %v11743
      %v11822 = vpop.f32.mrf.mxu0
      %v11823 = vadd.f32 %v11704, %v11822
      %v11824 = vpop.f32.mrf.mxu0
      %v11825 = vadd.f32 %v11704, %v11824
      %11826 = vmatmul.bf16.gmra.mxu0 %v11746
      %v11827 = vpop.f32.mrf.mxu0
      %v11828 = vadd.f32 %v11704, %v11827
      %v11829 = vpop.f32.mrf.mxu0
      %v11830 = vadd.f32 %v11704, %v11829
      %11831 = vmatmul.bf16.gmra.mxu0 %v11749
      %v11832 = vpop.f32.mrf.mxu0
      %v11833 = vadd.f32 %v11704, %v11832
      %v11834 = vpop.f32.mrf.mxu0
      %v11835 = vadd.f32 %v11704, %v11834
      %11836 = vmatmul.bf16.gmra.mxu0 %v11752
      %v11837 = vpop.f32.mrf.mxu0
      %v11838 = vadd.f32 %v11704, %v11837
      %v11839 = vpop.f32.mrf.mxu0
      %v11840 = vadd.f32 %v11704, %v11839
      %11841 = vmatmul.bf16.gmra.mxu0 %v11755
      %v11842 = vpop.f32.mrf.mxu0
      %v11843 = vadd.f32 %v11704, %v11842
      %v11844 = vpop.f32.mrf.mxu0
      %v11845 = vadd.f32 %v11704, %v11844
      %11846 = vmatmul.bf16.gmra.mxu0 %v11758
      %v11847 = vpop.f32.mrf.mxu0
      %v11848 = vadd.f32 %v11704, %v11847
      %v11849 = vpop.f32.mrf.mxu0
      %v11850 = vadd.f32 %v11704, %v11849
      %11851 = vmatmul.bf16.gmra.mxu0 %v11761
      %v11852 = vpop.f32.mrf.mxu0
      %v11853 = vadd.f32 %v11704, %v11852
      %v11854 = vpop.f32.mrf.mxu0
      %v11855 = vadd.f32 %v11704, %v11854
      %11856 = vmatmul.bf16.gmra.mxu0 %v11764
      %v11857 = vpop.f32.mrf.mxu0
      %v11858 = vadd.f32 %v11704, %v11857
      %v11859 = vpop.f32.mrf.mxu0
      %v11860 = vadd.f32 %v11704, %v11859
      %11861 = vmatmul.bf16.gmra.mxu0 %v11767
      %v11862 = vpop.f32.mrf.mxu0
      %v11863 = vadd.f32 %v11704, %v11862
      %v11864 = vpop.f32.mrf.mxu0
      %v11865 = vadd.f32 %v11704, %v11864
      %11866 = vmatmul.bf16.gmra.mxu0 %v11770
      %v11867 = vpop.f32.mrf.mxu0
      %v11868 = vadd.f32 %v11704, %v11867
      %v11869 = vpop.f32.mrf.mxu0
      %v11870 = vadd.f32 %v11704, %v11869
      %11871 = vmatmul.bf16.gmra.mxu0 %v11773
      %v11872 = vpop.f32.mrf.mxu0
      %v11873 = vadd.f32 %v11704, %v11872
      %v11874 = vpop.f32.mrf.mxu0
      %v11875 = vadd.f32 %v11704, %v11874
      %11876 = vmatmul.bf16.gmra.mxu0 %v11776
      %v11877 = vpop.f32.mrf.mxu0
      %v11878 = vadd.f32 %v11704, %v11877
      %v11879 = vpop.f32.mrf.mxu0
      %v11880 = vadd.f32 %v11704, %v11879
      %11881 = vmatmul.bf16.gmra.mxu0 %v11779
      %v11882 = vpop.f32.mrf.mxu0
      %v11883 = vadd.f32 %v11704, %v11882
      %v11884 = vpop.f32.mrf.mxu0
      %v11885 = vadd.f32 %v11704, %v11884
      %11886 = vmatmul.bf16.gmra.mxu0 %v11782
      %v11887 = vpop.f32.mrf.mxu0
      %v11888 = vadd.f32 %v11704, %v11887
      %v11889 = vpop.f32.mrf.mxu0
      %v11890 = vadd.f32 %v11704, %v11889
      %11891 = vmatmul.bf16.gmra.mxu0 %v11785
      %v11892 = vpop.f32.mrf.mxu0
      %v11893 = vadd.f32 %v11704, %v11892
      %v11894 = vpop.f32.mrf.mxu0
      %v11895 = vadd.f32 %v11704, %v11894
      %11896 = vmatmul.bf16.gmra.mxu0 %v11788
      %v11897 = vpop.f32.mrf.mxu0
      %v11898 = vadd.f32 %v11704, %v11897
      %v11899 = vpop.f32.mrf.mxu0
      %v11900 = vadd.f32 %v11704, %v11899
      %11901 = vmatmul.bf16.gmra.mxu0 %v11791
      %v11902 = vpop.f32.mrf.mxu0
      %v11903 = vadd.f32 %v11704, %v11902
      %v11904 = vpop.f32.mrf.mxu0
      %11905 = vdwg.mxu0
      %vm11906 = vcmask 64512
      %11907 = vst.msk [vmem:[%s332] sm:$0xff] %vm11906, %v11803
      %11908 = vst.msk [vmem:[%s332 + $0x8] sm:$0xff] %vm11906, %v11805
      %11909 = vst.msk [vmem:[%s332 + $0x10] sm:$0xff] %vm11906, %v11808
      %11910 = vst.msk [vmem:[%s332 + $0x18] sm:$0xff] %vm11906, %v11810
      %11911 = vst.msk [vmem:[%s332 + $0x20] sm:$0xff] %vm11906, %v11813
      %11912 = vst.msk [vmem:[%s332 + $0x28] sm:$0xff] %vm11906, %v11815
      %11913 = vst.msk [vmem:[%s332 + $0x30] sm:$0xff] %vm11906, %v11818
      %11914 = vst.msk [vmem:[%s332 + $0x38] sm:$0xff] %vm11906, %v11820
      %11915 = vst.msk [vmem:[%s332 + $0x40] sm:$0xff] %vm11906, %v11823
      %11916 = vst.msk [vmem:[%s332 + $0x48] sm:$0xff] %vm11906, %v11825
      %11917 = vst.msk [vmem:[%s332 + $0x50] sm:$0xff] %vm11906, %v11828
      %11918 = vst.msk [vmem:[%s332 + $0x58] sm:$0xff] %vm11906, %v11830
      %11919 = vst.msk [vmem:[%s332 + $0x60] sm:$0xff] %vm11906, %v11833
      %11920 = vst.msk [vmem:[%s332 + $0x68] sm:$0xff] %vm11906, %v11835
      %11921 = vst.msk [vmem:[%s332 + $0x70] sm:$0xff] %vm11906, %v11838
      %11922 = vst.msk [vmem:[%s332 + $0x78] sm:$0xff] %vm11906, %v11840
      %11923 = vst.msk [vmem:[%s332 + $0x80] sm:$0xff] %vm11906, %v11843
      %11924 = vst.msk [vmem:[%s332 + $0x88] sm:$0xff] %vm11906, %v11845
      %11925 = vst.msk [vmem:[%s332 + $0x90] sm:$0xff] %vm11906, %v11848
      %11926 = vst.msk [vmem:[%s332 + $0x98] sm:$0xff] %vm11906, %v11850
      %11927 = vst.msk [vmem:[%s332 + $0xa0] sm:$0xff] %vm11906, %v11853
      %11928 = vst.msk [vmem:[%s332 + $0xa8] sm:$0xff] %vm11906, %v11855
      %11929 = vst.msk [vmem:[%s332 + $0xb0] sm:$0xff] %vm11906, %v11858
      %11930 = vst.msk [vmem:[%s332 + $0xb8] sm:$0xff] %vm11906, %v11860
      %11931 = vst.msk [vmem:[%s332 + $0xc0] sm:$0xff] %vm11906, %v11863
      %11932 = vst.msk [vmem:[%s332 + $0xc8] sm:$0xff] %vm11906, %v11865
      %11933 = vst.msk [vmem:[%s332 + $0xd0] sm:$0xff] %vm11906, %v11868
      %11934 = vst.msk [vmem:[%s332 + $0xd8] sm:$0xff] %vm11906, %v11870
      %11935 = vst.msk [vmem:[%s332 + $0xe0] sm:$0xff] %vm11906, %v11873
      %11936 = vst.msk [vmem:[%s332 + $0xe8] sm:$0xff] %vm11906, %v11875
      %11937 = vst.msk [vmem:[%s332 + $0xf0] sm:$0xff] %vm11906, %v11878
      %11938 = vst.msk [vmem:[%s332 + $0xf8] sm:$0xff] %vm11906, %v11880
      %11939 = vst.msk [vmem:[%s332 + $0x100] sm:$0xff] %vm11906, %v11883
      %11940 = vst.msk [vmem:[%s332 + $0x108] sm:$0xff] %vm11906, %v11885
      %11941 = vst.msk [vmem:[%s332 + $0x110] sm:$0xff] %vm11906, %v11888
      %11942 = vst.msk [vmem:[%s332 + $0x118] sm:$0xff] %vm11906, %v11890
      %11943 = vst.msk [vmem:[%s332 + $0x120] sm:$0xff] %vm11906, %v11893
      %11944 = vst.msk [vmem:[%s332 + $0x128] sm:$0xff] %vm11906, %v11895
      %11945 = vst.msk [vmem:[%s332 + $0x130] sm:$0xff] %vm11906, %v11898
      %11946 = vst.msk [vmem:[%s332 + $0x138] sm:$0xff] %vm11906, %v11900
      %11947 = vst.msk [vmem:[%s332 + $0x140] sm:$0xff] %vm11906, %v11903
      %s11948 = smul.u32 41, %s20
      %p11949 = scmp.lt.s32.totalorder %s11948, 81
      %s11950 = scalar_select %p11949, %s11948, 81
      %s11951 = smul.addr %s11950, 8
      %s11952 = scalar_lea.vmem %s9, %s11951
      // Predicated region
      $region57: #{_dqn_forward.1} parent=55 // pred_check
        %p11953 = pneg %p232
      $region58: #{_dqn_forward.1} parent=55 // pred_check_branch
        %11955 = sbr.rel (%p11953) target = $region60
      $region59: #{_dqn_forward.1} parent=55 // pred_region
        %s11956 = smul.u32 41, %s20
      $region60: #{_dqn_forward.1} parent=55 // pred_fallthru
        _
    $region56: #{_dqn_forward.1} parent=5 // pred_fallthru
      _
    %p11957 = scmp.le.s32.totalorder 2, %s15
    // Predicated region
    $region61: #{_dqn_forward.1} parent=5 // pred_check
      %p11958 = pneg %p11957
    $region62: #{_dqn_forward.1} parent=5 // pred_check_branch
      %11960 = sbr.rel (%p11958) target = $region64
    $region63: #{_dqn_forward.1} parent=5 // pred_region
      %s11961 = ssub.s32 %s15, 2
      // Predicated region
      $region65: #{_dqn_forward.1} parent=63 // pred_check
        %p11962 = pneg %p238
      $region66: #{_dqn_forward.1} parent=63 // pred_check_branch
        %11964 = sbr.rel (%p11962) target = $region68
      $region67: #{_dqn_forward.1} parent=63 // pred_region
        %s11965 = smul.u32 41, %s21
        %p11966 = scmp.lt.s32.totalorder %s11965, 81
        %s11967 = scalar_select %p11966, %s11965, 81
        %s11968 = smul.addr %s11967, 8
        %s11969 = scalar_lea.vmem %s9, %s11968
      $region68: #{_dqn_forward.1} parent=63 // pred_fallthru
        _
    $region64: #{_dqn_forward.1} parent=5 // pred_fallthru
      _
  $region6: #{_dqn_forward.1} parent=0 // loop_footer
    %s19 = sadd.s32 1, %s15
  $region7: #{_dqn_forward.1} parent=0 // loop_footer_branch
    %14 = sbr.rel target = $region3
  $region8: #{_dqn_forward.1} parent=0 // loop_exit
    _

</llo_original>
